<compile_context>
chip_gen: v6e
topology: v6e:2x2x1
jax: 0.10.0
libtpu: 0.0.40
codegen_flags: <defaults>
</compile_context>

<pallas_src>
import functools

import jax
import jax.numpy as jnp
import numpy as np
from jax.experimental import pallas as pl
from jax.experimental.pallas import tpu as pltpu


NUM_CLASSES = 55
CLS_PAD = 128           # classifier output padded to a lane-dense width, sliced to 55
FEATURE_LEN = 128       # scaled-down stand-in for the 4096-d VGG feature
CONV_CH = (16, 32, 64)  # stand-in channel widths for the 3 conv stages
CIN_PAD = 4             # RGB padded to 4 channels so stage-1 K = W*Cin = 128
IMG = 32                # test-time H = W


# ----------------------------------------------------------------------------
# Fully fused forward kernel (single invocation, everything VMEM-resident)
# ----------------------------------------------------------------------------
def _fused_forward_kernel(x_ref, w1_ref, b1_ref, s1_ref,
                          w2_ref, b2_ref, s2_ref,
                          w3_ref, b3_ref, s3_ref,
                          fw1_ref, fb1_ref, fw2_ref, fb2_ref,
                          cw_ref, cb_ref,
                          logits_ref, lastfc_ref, xview_ref,
                          *, batch, views):
    def conv_relu_hpool(x, wcat_ref, bias_ref):
        # x: (R, L) stacked height-padded images (one zero row between images).
        # Returns the row-wise running pairwise max of
        #   conv3x3(SAME) + bias + ReLU + horizontal 2-max,
        # shape (R-3, L_out//2); valid pooled rows of image i sit at i*hp + 2q.
        r = x.shape[0]
        # lane-concat the three dh-shifted row windows -> one matmul per stage.
        xcat = jnp.concatenate([x[0:r - 2], x[1:r - 1], x[2:r]], axis=1)
        y = jnp.dot(xcat.astype(jnp.bfloat16), wcat_ref[...],
                    preferred_element_type=jnp.float32)
        z = jnp.maximum(y + bias_ref[...], 0.0)
        half = z.shape[1] // 2
        # evens|odds weight-column permutation -> horizontal pool = lane-half max
        zw = jnp.maximum(z[:, :half], z[:, half:])
        # vertical pool, step 1: pairwise running max (selection matmul picks
        # the even rows and re-inserts the zero padding rows of the next stage).
        return jnp.maximum(zw[:-1], zw[1:])

    zm1 = conv_relu_hpool(x_ref[...], w1_ref, b1_ref)
    x2 = jnp.dot(s1_ref[...], zm1, preferred_element_type=jnp.float32)
    zm2 = conv_relu_hpool(x2, w2_ref, b2_ref)
    x3 = jnp.dot(s2_ref[...], zm2, preferred_element_type=jnp.float32)
    zm3 = conv_relu_hpool(x3, w3_ref, b3_ref)

    # Flatten the last stage: for each pooled row q select all images at once
    # and lay the rows out along lanes -> (B*V, 4*256) = (B*V, 1024).
    n_pool_rows = s3_ref.shape[0]
    xfc = jnp.concatenate(
        [jnp.dot(s3_ref[q], zm3, preferred_element_type=jnp.float32)
         for q in range(n_pool_rows)],
        axis=1)

    # fc_features: [Linear + ReLU] x2 (Dropout is identity in eval).
    h1 = jnp.maximum(
        jnp.dot(xfc.astype(jnp.bfloat16), fw1_ref[...],
                preferred_element_type=jnp.float32) + fb1_ref[...], 0.0)
    h2 = jnp.maximum(
        jnp.dot(h1.astype(jnp.bfloat16), fw2_ref[...],
                preferred_element_type=jnp.float32) + fb2_ref[...], 0.0)
    xview_ref[...] = h2                                   # (B*V, F)

    # max over views per sample -> single (B, F) value, single full store.
    last_fc = jnp.concatenate(
        [jnp.max(h2[b * views:(b + 1) * views, :], axis=0, keepdims=True)
         for b in range(batch)],
        axis=0)
    lastfc_ref[...] = last_fc

    # classifier: one batched matmul, columns zero-padded to 128 lanes.
    logits_ref[...] = (
        jnp.dot(last_fc.astype(jnp.bfloat16), cw_ref[...],
                preferred_element_type=jnp.float32) + cb_ref[...])


# ----------------------------------------------------------------------------
# Host-side constant builders (banded conv weights, 0/1 pooling selectors)
# ----------------------------------------------------------------------------
def _build_banded_conv(k, width):
    """k: (3, 3, cin, cout) taps -> (3*width*cin, width*cout) banded matrix.

    Output column order puts even output width positions first and odd second,
    so the horizontal half of the 2x2 max-pool becomes a max of the two lane
    halves.  SAME zero-padding along W is folded in by dropping out-of-range
    taps.  The three dh taps are stacked along rows, matching the in-kernel
    lane-concatenation of the three row-shifted input windows.
    (Real conv biases, if ever loaded, are channel-tiled so the evens|odds
    permutation does not affect them.)
    """
    _, _, cin, cout = k.shape
    wd = np.zeros((3, width * cin, width * cout), np.float32)
    for w_o in range(width):
        p = (w_o // 2) if (w_o % 2 == 0) else (width // 2 + w_o // 2)
        for dh in range(3):
            for dw in range(3):
                w_i = w_o + dw - 1
                if 0 <= w_i < width:
                    wd[dh,
                       w_i * cin:(w_i + 1) * cin,
                       p * cout:(p + 1) * cout] = k[dh, dw]
    return np.concatenate([wd[0], wd[1], wd[2]], axis=0)


def _pool_select_padded(n, hp_in, hin):
    """0/1 matrix: (n*(hin//2+2), n*hp_in-3).

    Picks the even rows of the running pairwise max (completing the vertical
    2x2 pool) and emits one zero row above/below each image block, producing
    the height-padded stacked input of the next conv stage for free.
    """
    h2 = hin // 2
    hp_out = h2 + 2
    s = np.zeros((n * hp_out, n * hp_in - 3), np.float32)
    for i in range(n):
        for q in range(h2):
            s[i * hp_out + 1 + q, i * hp_in + 2 * q] = 1.0
    return s


def _pool_select_final(n, hp_in, hin):
    """0/1 selectors (hin//2, n, n*hp_in-3): pooled row q of every image."""
    h2 = hin // 2
    s = np.zeros((h2, n, n * hp_in - 3), np.float32)
    for q in range(h2):
        for i in range(n):
            s[q, i, i * hp_in + 2 * q] = 1.0
    return s


# ----------------------------------------------------------------------------
# Parameters (deterministic stand-in for the pretrained VGG13 backbone)
# ----------------------------------------------------------------------------
def init_params(key):
    ks = jax.random.split(key, 6)

    def dense(k, fan_in, shape):
        return jax.random.normal(k, shape, jnp.float32) / np.sqrt(float(fan_in))

    params = {}
    cin, width = CIN_PAD, IMG
    for i, cout in enumerate(CONV_CH):
        k = np.asarray(jax.random.normal(ks[i], (3, 3, cin, cout), jnp.float32))
        k = (k / np.sqrt(9.0 * cin)).astype(np.float32)
        if i == 0:
            k[:, :, 3, :] = 0.0          # taps on the zero-padded 4th channel
        params[f"conv{i + 1}_w"] = jnp.asarray(
            _build_banded_conv(k, width), jnp.bfloat16)
        params[f"conv{i + 1}_b"] = jnp.zeros((1, width * cout), jnp.float32)
        cin, width = cout, width // 2

    flat_len = width * width * cin          # 4 * 4 * 64 = 1024
    # NOTE: fc1 consumes the (h, w, c)-ordered flatten of the last conv stage;
    # the layout permutation is folded into the (randomly initialised) weights.
    params["fc1_w"] = dense(ks[3], flat_len, (flat_len, FEATURE_LEN)).astype(jnp.bfloat16)
    params["fc1_b"] = jnp.zeros((1, FEATURE_LEN), jnp.float32)
    params["fc2_w"] = dense(ks[4], FEATURE_LEN, (FEATURE_LEN, FEATURE_LEN)).astype(jnp.bfloat16)
    params["fc2_b"] = jnp.zeros((1, FEATURE_LEN), jnp.float32)
    wc = np.zeros((FEATURE_LEN, CLS_PAD), np.float32)
    wc[:, :NUM_CLASSES] = np.asarray(
        dense(ks[5], FEATURE_LEN, (FEATURE_LEN, NUM_CLASSES)))
    params["cls_w"] = jnp.asarray(wc, jnp.bfloat16)
    params["cls_b"] = jnp.zeros((1, CLS_PAD), jnp.float32)
    return params


# ----------------------------------------------------------------------------
# Forward pass (mirrors MVCNN_shrec17_xview.forward)
# ----------------------------------------------------------------------------
def mvcnn_forward(params, x):
    # x: (B, V, C, H, W)  -- PyTorch NCHW per view
    b, v, c, h, w = x.shape
    assert h == w == IMG and c <= CIN_PAD and h % 8 == 0
    n = b * v
    hp1, hp2, hp3 = h + 2, h // 2 + 2, h // 4 + 2

    # flatten views; channels-last, channels padded to 4; lanes = W*4 (=128);
    # one zero height-padding row on each side of every image; all images
    # stacked along rows -> (n*(H+2), 128).
    xi = jnp.transpose(x.reshape(n, c, h, w), (0, 2, 3, 1))
    xi = jnp.pad(xi, ((0, 0), (1, 1), (0, 0), (0, CIN_PAD - c)))
    xi = xi.reshape(n * hp1, w * CIN_PAD)

    # constant 0/1 pooling selectors (resident kernel inputs, built once).
    s1 = jnp.asarray(_pool_select_padded(n, hp1, h))
    s2 = jnp.asarray(_pool_select_padded(n, hp2, h // 2))
    s3 = jnp.asarray(_pool_select_final(n, hp3, h // 4))

    inputs = (xi,
              params["conv1_w"], params["conv1_b"], s1,
              params["conv2_w"], params["conv2_b"], s2,
              params["conv3_w"], params["conv3_b"], s3,
              params["fc1_w"], params["fc1_b"],
              params["fc2_w"], params["fc2_b"],
              params["cls_w"], params["cls_b"])

    # advisory cost estimate
    r1, r2, r3 = n * hp1 - 2, n * hp2 - 2, n * hp3 - 2
    l1 = w * CONV_CH[0]
    l2 = (w // 2) * CONV_CH[1]
    l3 = (w // 4) * CONV_CH[2]

    def mm(m_, k_, n_):
        return 2 * m_ * k_ * n_

    flops = (mm(r1, 3 * w * CIN_PAD, l1)
             + mm(n * hp2, r1 - 1, l1 // 2)
             + mm(r2, 3 * (w // 2) * CONV_CH[0], l2)
             + mm(n * hp3, r2 - 1, l2 // 2)
             + mm(r3, 3 * (w // 4) * CONV_CH[1], l3)
             + (h // 8) * mm(n, r3 - 1, l3 // 2)
             + mm(n, (h // 8) * (w // 8) * CONV_CH[2], FEATURE_LEN)
             + mm(n, FEATURE_LEN, FEATURE_LEN)
             + mm(b, FEATURE_LEN, CLS_PAD))
    bytes_acc = (sum(int(t.size) * t.dtype.itemsize for t in inputs)
                 + 4 * (b * CLS_PAD + b * FEATURE_LEN + n * FEATURE_LEN))

    vmem = pl.BlockSpec(memory_space=pltpu.MemorySpace.VMEM)
    logits_p, last_fc, xview_flat = pl.pallas_call(
        functools.partial(_fused_forward_kernel, batch=b, views=v),
        out_shape=(
            jax.ShapeDtypeStruct((b, CLS_PAD), jnp.float32),      # logits (padded)
            jax.ShapeDtypeStruct((b, FEATURE_LEN), jnp.float32),  # last_fc
            jax.ShapeDtypeStruct((n, FEATURE_LEN), jnp.float32),  # x_view (flat)
        ),
        in_specs=[vmem] * len(inputs),
        out_specs=(vmem, vmem, vmem),
        compiler_params=pltpu.CompilerParams(vmem_limit_bytes=32 * 1024 * 1024),
        cost_estimate=pl.CostEstimate(
            flops=int(flops), transcendentals=0, bytes_accessed=int(bytes_acc)),
    )(*inputs)

    logits = logits_p[:, :NUM_CLASSES]
    x_view = xview_flat.reshape(b, v, FEATURE_LEN)
    return logits, last_fc, x_view


if __name__ == "__main__":
    key = jax.random.PRNGKey(0)
    pkey, xkey = jax.random.split(key)
    params = init_params(pkey)

    B, V, C, H, W = 2, 3, 3, IMG, IMG
    x = jax.random.normal(xkey, (B, V, C, H, W), jnp.float32)

    fwd = jax.jit(mvcnn_forward)
    logits, last_fc, x_view = fwd(params, x)
    jax.block_until_ready((logits, last_fc, x_view))

    assert logits.shape == (B, NUM_CLASSES)
    assert last_fc.shape == (B, FEATURE_LEN)
    assert x_view.shape == (B, V, FEATURE_LEN)
    print("KERNEL_OK")
</pallas_src>

<mosaic_0001>
module attributes {stable_mosaic.version = 11 : i64} {
  func.func @_fused_forward_kernel(%arg0: memref<204x128xf32, #tpu.memory_space<vmem>>, %arg1: memref<384x512xbf16, #tpu.memory_space<vmem>>, %arg2: memref<1x512xf32, #tpu.memory_space<vmem>>, %arg3: memref<108x201xf32, #tpu.memory_space<vmem>>, %arg4: memref<768x512xbf16, #tpu.memory_space<vmem>>, %arg5: memref<1x512xf32, #tpu.memory_space<vmem>>, %arg6: memref<60x105xf32, #tpu.memory_space<vmem>>, %arg7: memref<768x512xbf16, #tpu.memory_space<vmem>>, %arg8: memref<1x512xf32, #tpu.memory_space<vmem>>, %arg9: memref<4x6x57xf32, #tpu.memory_space<vmem>>, %arg10: memref<1024x128xbf16, #tpu.memory_space<vmem>>, %arg11: memref<1x128xf32, #tpu.memory_space<vmem>>, %arg12: memref<128x128xbf16, #tpu.memory_space<vmem>>, %arg13: memref<1x128xf32, #tpu.memory_space<vmem>>, %arg14: memref<128x128xbf16, #tpu.memory_space<vmem>>, %arg15: memref<1x128xf32, #tpu.memory_space<vmem>>, %arg16: memref<2x128xf32, #tpu.memory_space<vmem>>, %arg17: memref<2x128xf32, #tpu.memory_space<vmem>>, %arg18: memref<6x128xf32, #tpu.memory_space<vmem>>) attributes {dimension_semantics = [], scalar_prefetch = 0 : i64, scratch_operands = 0 : i64, tpu.core_type = #tpu.core_type<tc>} {
    %c0 = arith.constant 0 : index
    %c0_0 = arith.constant 0 : index
    %0 = vector.load %arg0[%c0, %c0_0] : memref<204x128xf32, #tpu.memory_space<vmem>>, vector<204x128xf32>
    %1 = vector.extract_strided_slice %0 {offsets = [0, 0], sizes = [202, 128], strides = [1, 1]} : vector<204x128xf32> to vector<202x128xf32>
    %2 = vector.extract_strided_slice %0 {offsets = [1, 0], sizes = [202, 128], strides = [1, 1]} : vector<204x128xf32> to vector<202x128xf32>
    %3 = vector.extract_strided_slice %0 {offsets = [2, 0], sizes = [202, 128], strides = [1, 1]} : vector<204x128xf32> to vector<202x128xf32>
    %4 = tpu.concatenate %1, %2, %3 in 1 : vector<202x128xf32>, vector<202x128xf32>, vector<202x128xf32> -> vector<202x384xf32>
    %5 = arith.truncf %4 : vector<202x384xf32> to vector<202x384xbf16>
    %c0_1 = arith.constant 0 : index
    %c0_2 = arith.constant 0 : index
    %6 = vector.load %arg1[%c0_1, %c0_2] : memref<384x512xbf16, #tpu.memory_space<vmem>>, vector<384x512xbf16>
    %cst = arith.constant dense<0.000000e+00> : vector<202x512xf32>
    %7 = tpu.matmul %5, %6, %cst {dimension_numbers = #tpu.dot_dimension_numbers<[1], [0], [0], [1], [0, 0, 1, 1], [], []>} : vector<202x384xbf16>, vector<384x512xbf16>, vector<202x512xf32> -> vector<202x512xf32>
    %c0_3 = arith.constant 0 : index
    %c0_4 = arith.constant 0 : index
    %8 = vector.load %arg2[%c0_3, %c0_4] : memref<1x512xf32, #tpu.memory_space<vmem>>, vector<1x512xf32>
    %9 = vector.broadcast %8 : vector<1x512xf32> to vector<202x512xf32>
    %10 = arith.addf %7, %9 : vector<202x512xf32>
    %cst_5 = arith.constant 0.000000e+00 : f32
    %11 = vector.broadcast %cst_5 : f32 to vector<202x512xf32>
    %12 = arith.maximumf %10, %11 : vector<202x512xf32>
    %13 = vector.extract_strided_slice %12 {offsets = [0, 0], sizes = [202, 256], strides = [1, 1]} : vector<202x512xf32> to vector<202x256xf32>
    %14 = vector.extract_strided_slice %12 {offsets = [0, 256], sizes = [202, 256], strides = [1, 1]} : vector<202x512xf32> to vector<202x256xf32>
    %15 = arith.maximumf %13, %14 : vector<202x256xf32>
    %16 = vector.extract_strided_slice %15 {offsets = [0, 0], sizes = [201, 256], strides = [1, 1]} : vector<202x256xf32> to vector<201x256xf32>
    %17 = vector.extract_strided_slice %15 {offsets = [1, 0], sizes = [201, 256], strides = [1, 1]} : vector<202x256xf32> to vector<201x256xf32>
    %18 = arith.maximumf %16, %17 : vector<201x256xf32>
    %c0_6 = arith.constant 0 : index
    %c0_7 = arith.constant 0 : index
    %19 = vector.load %arg3[%c0_6, %c0_7] : memref<108x201xf32, #tpu.memory_space<vmem>>, vector<108x201xf32>
    %cst_8 = arith.constant dense<0.000000e+00> : vector<108x256xf32>
    %20 = tpu.matmul %19, %18, %cst_8 {dimension_numbers = #tpu.dot_dimension_numbers<[1], [0], [0], [1], [0, 0, 1, 1], [], []>} : vector<108x201xf32>, vector<201x256xf32>, vector<108x256xf32> -> vector<108x256xf32>
    %21 = vector.extract_strided_slice %20 {offsets = [0, 0], sizes = [106, 256], strides = [1, 1]} : vector<108x256xf32> to vector<106x256xf32>
    %22 = vector.extract_strided_slice %20 {offsets = [1, 0], sizes = [106, 256], strides = [1, 1]} : vector<108x256xf32> to vector<106x256xf32>
    %23 = vector.extract_strided_slice %20 {offsets = [2, 0], sizes = [106, 256], strides = [1, 1]} : vector<108x256xf32> to vector<106x256xf32>
    %24 = tpu.concatenate %21, %22, %23 in 1 : vector<106x256xf32>, vector<106x256xf32>, vector<106x256xf32> -> vector<106x768xf32>
    %25 = arith.truncf %24 : vector<106x768xf32> to vector<106x768xbf16>
    %c0_9 = arith.constant 0 : index
    %c0_10 = arith.constant 0 : index
    %26 = vector.load %arg4[%c0_9, %c0_10] : memref<768x512xbf16, #tpu.memory_space<vmem>>, vector<768x512xbf16>
    %cst_11 = arith.constant dense<0.000000e+00> : vector<106x512xf32>
    %27 = tpu.matmul %25, %26, %cst_11 {dimension_numbers = #tpu.dot_dimension_numbers<[1], [0], [0], [1], [0, 0, 1, 1], [], []>} : vector<106x768xbf16>, vector<768x512xbf16>, vector<106x512xf32> -> vector<106x512xf32>
    %c0_12 = arith.constant 0 : index
    %c0_13 = arith.constant 0 : index
    %28 = vector.load %arg5[%c0_12, %c0_13] : memref<1x512xf32, #tpu.memory_space<vmem>>, vector<1x512xf32>
    %29 = vector.broadcast %28 : vector<1x512xf32> to vector<106x512xf32>
    %30 = arith.addf %27, %29 : vector<106x512xf32>
    %cst_14 = arith.constant 0.000000e+00 : f32
    %31 = vector.broadcast %cst_14 : f32 to vector<106x512xf32>
    %32 = arith.maximumf %30, %31 : vector<106x512xf32>
    %33 = vector.extract_strided_slice %32 {offsets = [0, 0], sizes = [106, 256], strides = [1, 1]} : vector<106x512xf32> to vector<106x256xf32>
    %34 = vector.extract_strided_slice %32 {offsets = [0, 256], sizes = [106, 256], strides = [1, 1]} : vector<106x512xf32> to vector<106x256xf32>
    %35 = arith.maximumf %33, %34 : vector<106x256xf32>
    %36 = vector.extract_strided_slice %35 {offsets = [0, 0], sizes = [105, 256], strides = [1, 1]} : vector<106x256xf32> to vector<105x256xf32>
    %37 = vector.extract_strided_slice %35 {offsets = [1, 0], sizes = [105, 256], strides = [1, 1]} : vector<106x256xf32> to vector<105x256xf32>
    %38 = arith.maximumf %36, %37 : vector<105x256xf32>
    %c0_15 = arith.constant 0 : index
    %c0_16 = arith.constant 0 : index
    %39 = vector.load %arg6[%c0_15, %c0_16] : memref<60x105xf32, #tpu.memory_space<vmem>>, vector<60x105xf32>
    %cst_17 = arith.constant dense<0.000000e+00> : vector<60x256xf32>
    %40 = tpu.matmul %39, %38, %cst_17 {dimension_numbers = #tpu.dot_dimension_numbers<[1], [0], [0], [1], [0, 0, 1, 1], [], []>} : vector<60x105xf32>, vector<105x256xf32>, vector<60x256xf32> -> vector<60x256xf32>
    %41 = vector.extract_strided_slice %40 {offsets = [0, 0], sizes = [58, 256], strides = [1, 1]} : vector<60x256xf32> to vector<58x256xf32>
    %42 = vector.extract_strided_slice %40 {offsets = [1, 0], sizes = [58, 256], strides = [1, 1]} : vector<60x256xf32> to vector<58x256xf32>
    %43 = vector.extract_strided_slice %40 {offsets = [2, 0], sizes = [58, 256], strides = [1, 1]} : vector<60x256xf32> to vector<58x256xf32>
    %44 = tpu.concatenate %41, %42, %43 in 1 : vector<58x256xf32>, vector<58x256xf32>, vector<58x256xf32> -> vector<58x768xf32>
    %45 = arith.truncf %44 : vector<58x768xf32> to vector<58x768xbf16>
    %c0_18 = arith.constant 0 : index
    %c0_19 = arith.constant 0 : index
    %46 = vector.load %arg7[%c0_18, %c0_19] : memref<768x512xbf16, #tpu.memory_space<vmem>>, vector<768x512xbf16>
    %cst_20 = arith.constant dense<0.000000e+00> : vector<58x512xf32>
    %47 = tpu.matmul %45, %46, %cst_20 {dimension_numbers = #tpu.dot_dimension_numbers<[1], [0], [0], [1], [0, 0, 1, 1], [], []>} : vector<58x768xbf16>, vector<768x512xbf16>, vector<58x512xf32> -> vector<58x512xf32>
    %c0_21 = arith.constant 0 : index
    %c0_22 = arith.constant 0 : index
    %48 = vector.load %arg8[%c0_21, %c0_22] : memref<1x512xf32, #tpu.memory_space<vmem>>, vector<1x512xf32>
    %49 = vector.broadcast %48 : vector<1x512xf32> to vector<58x512xf32>
    %50 = arith.addf %47, %49 : vector<58x512xf32>
    %cst_23 = arith.constant 0.000000e+00 : f32
    %51 = vector.broadcast %cst_23 : f32 to vector<58x512xf32>
    %52 = arith.maximumf %50, %51 : vector<58x512xf32>
    %53 = vector.extract_strided_slice %52 {offsets = [0, 0], sizes = [58, 256], strides = [1, 1]} : vector<58x512xf32> to vector<58x256xf32>
    %54 = vector.extract_strided_slice %52 {offsets = [0, 256], sizes = [58, 256], strides = [1, 1]} : vector<58x512xf32> to vector<58x256xf32>
    %55 = arith.maximumf %53, %54 : vector<58x256xf32>
    %56 = vector.extract_strided_slice %55 {offsets = [0, 0], sizes = [57, 256], strides = [1, 1]} : vector<58x256xf32> to vector<57x256xf32>
    %57 = vector.extract_strided_slice %55 {offsets = [1, 0], sizes = [57, 256], strides = [1, 1]} : vector<58x256xf32> to vector<57x256xf32>
    %58 = arith.maximumf %56, %57 : vector<57x256xf32>
    %c0_24 = arith.constant 0 : index
    %c0_25 = arith.constant 0 : index
    %c0_26 = arith.constant 0 : index
    %59 = vector.load %arg9[%c0_24, %c0_25, %c0_26] : memref<4x6x57xf32, #tpu.memory_space<vmem>>, vector<1x6x57xf32>
    %60 = vector.shape_cast %59 : vector<1x6x57xf32> to vector<6x57xf32>
    %cst_27 = arith.constant dense<0.000000e+00> : vector<6x256xf32>
    %61 = tpu.matmul %60, %58, %cst_27 {dimension_numbers = #tpu.dot_dimension_numbers<[1], [0], [0], [1], [0, 0, 1, 1], [], []>} : vector<6x57xf32>, vector<57x256xf32>, vector<6x256xf32> -> vector<6x256xf32>
    %c1 = arith.constant 1 : index
    %c0_28 = arith.constant 0 : index
    %c0_29 = arith.constant 0 : index
    %62 = vector.load %arg9[%c1, %c0_28, %c0_29] : memref<4x6x57xf32, #tpu.memory_space<vmem>>, vector<1x6x57xf32>
    %63 = vector.shape_cast %62 : vector<1x6x57xf32> to vector<6x57xf32>
    %cst_30 = arith.constant dense<0.000000e+00> : vector<6x256xf32>
    %64 = tpu.matmul %63, %58, %cst_30 {dimension_numbers = #tpu.dot_dimension_numbers<[1], [0], [0], [1], [0, 0, 1, 1], [], []>} : vector<6x57xf32>, vector<57x256xf32>, vector<6x256xf32> -> vector<6x256xf32>
    %c2 = arith.constant 2 : index
    %c0_31 = arith.constant 0 : index
    %c0_32 = arith.constant 0 : index
    %65 = vector.load %arg9[%c2, %c0_31, %c0_32] : memref<4x6x57xf32, #tpu.memory_space<vmem>>, vector<1x6x57xf32>
    %66 = vector.shape_cast %65 : vector<1x6x57xf32> to vector<6x57xf32>
    %cst_33 = arith.constant dense<0.000000e+00> : vector<6x256xf32>
    %67 = tpu.matmul %66, %58, %cst_33 {dimension_numbers = #tpu.dot_dimension_numbers<[1], [0], [0], [1], [0, 0, 1, 1], [], []>} : vector<6x57xf32>, vector<57x256xf32>, vector<6x256xf32> -> vector<6x256xf32>
    %c3 = arith.constant 3 : index
    %c0_34 = arith.constant 0 : index
    %c0_35 = arith.constant 0 : index
    %68 = vector.load %arg9[%c3, %c0_34, %c0_35] : memref<4x6x57xf32, #tpu.memory_space<vmem>>, vector<1x6x57xf32>
    %69 = vector.shape_cast %68 : vector<1x6x57xf32> to vector<6x57xf32>
    %cst_36 = arith.constant dense<0.000000e+00> : vector<6x256xf32>
    %70 = tpu.matmul %69, %58, %cst_36 {dimension_numbers = #tpu.dot_dimension_numbers<[1], [0], [0], [1], [0, 0, 1, 1], [], []>} : vector<6x57xf32>, vector<57x256xf32>, vector<6x256xf32> -> vector<6x256xf32>
    %71 = tpu.concatenate %61, %64, %67, %70 in 1 : vector<6x256xf32>, vector<6x256xf32>, vector<6x256xf32>, vector<6x256xf32> -> vector<6x1024xf32>
    %72 = arith.truncf %71 : vector<6x1024xf32> to vector<6x1024xbf16>
    %c0_37 = arith.constant 0 : index
    %c0_38 = arith.constant 0 : index
    %73 = vector.load %arg10[%c0_37, %c0_38] : memref<1024x128xbf16, #tpu.memory_space<vmem>>, vector<1024x128xbf16>
    %cst_39 = arith.constant dense<0.000000e+00> : vector<6x128xf32>
    %74 = tpu.matmul %72, %73, %cst_39 {dimension_numbers = #tpu.dot_dimension_numbers<[1], [0], [0], [1], [0, 0, 1, 1], [], []>} : vector<6x1024xbf16>, vector<1024x128xbf16>, vector<6x128xf32> -> vector<6x128xf32>
    %c0_40 = arith.constant 0 : index
    %c0_41 = arith.constant 0 : index
    %75 = vector.load %arg11[%c0_40, %c0_41] : memref<1x128xf32, #tpu.memory_space<vmem>>, vector<1x128xf32>
    %76 = vector.broadcast %75 : vector<1x128xf32> to vector<6x128xf32>
    %77 = arith.addf %74, %76 : vector<6x128xf32>
    %cst_42 = arith.constant 0.000000e+00 : f32
    %78 = vector.broadcast %cst_42 : f32 to vector<6x128xf32>
    %79 = arith.maximumf %77, %78 : vector<6x128xf32>
    %80 = arith.truncf %79 : vector<6x128xf32> to vector<6x128xbf16>
    %c0_43 = arith.constant 0 : index
    %c0_44 = arith.constant 0 : index
    %81 = vector.load %arg12[%c0_43, %c0_44] : memref<128x128xbf16, #tpu.memory_space<vmem>>, vector<128x128xbf16>
    %cst_45 = arith.constant dense<0.000000e+00> : vector<6x128xf32>
    %82 = tpu.matmul %80, %81, %cst_45 {dimension_numbers = #tpu.dot_dimension_numbers<[1], [0], [0], [1], [0, 0, 1, 1], [], []>} : vector<6x128xbf16>, vector<128x128xbf16>, vector<6x128xf32> -> vector<6x128xf32>
    %c0_46 = arith.constant 0 : index
    %c0_47 = arith.constant 0 : index
    %83 = vector.load %arg13[%c0_46, %c0_47] : memref<1x128xf32, #tpu.memory_space<vmem>>, vector<1x128xf32>
    %84 = vector.broadcast %83 : vector<1x128xf32> to vector<6x128xf32>
    %85 = arith.addf %82, %84 : vector<6x128xf32>
    %cst_48 = arith.constant 0.000000e+00 : f32
    %86 = vector.broadcast %cst_48 : f32 to vector<6x128xf32>
    %87 = arith.maximumf %85, %86 : vector<6x128xf32>
    %c0_49 = arith.constant 0 : index
    %c0_50 = arith.constant 0 : index
    %88 = vector.load %arg18[%c0_49, %c0_50] : memref<6x128xf32, #tpu.memory_space<vmem>>, vector<6x128xf32>
    tpu.vector_store %arg18[%c0_49, %c0_50], %87 {strides = array<i32>} : memref<6x128xf32, #tpu.memory_space<vmem>>, vector<6x128xf32>,
    %89 = vector.extract_strided_slice %87 {offsets = [0, 0], sizes = [3, 128], strides = [1, 1]} : vector<6x128xf32> to vector<3x128xf32>
    %cst_51 = arith.constant dense<0xFF800000> : vector<128xf32>
    %90 = vector.multi_reduction <maximumf>, %89, %cst_51 [0] : vector<3x128xf32> to vector<128xf32>
    %91 = vector.shape_cast %90 : vector<128xf32> to vector<1x128xf32>
    %92 = vector.extract_strided_slice %87 {offsets = [3, 0], sizes = [3, 128], strides = [1, 1]} : vector<6x128xf32> to vector<3x128xf32>
    %cst_52 = arith.constant dense<0xFF800000> : vector<128xf32>
    %93 = vector.multi_reduction <maximumf>, %92, %cst_52 [0] : vector<3x128xf32> to vector<128xf32>
    %94 = vector.shape_cast %93 : vector<128xf32> to vector<1x128xf32>
    %95 = tpu.concatenate %91, %94 in 0 : vector<1x128xf32>, vector<1x128xf32> -> vector<2x128xf32>
    %c0_53 = arith.constant 0 : index
    %c0_54 = arith.constant 0 : index
    %96 = vector.load %arg17[%c0_53, %c0_54] : memref<2x128xf32, #tpu.memory_space<vmem>>, vector<2x128xf32>
    tpu.vector_store %arg17[%c0_53, %c0_54], %95 {strides = array<i32>} : memref<2x128xf32, #tpu.memory_space<vmem>>, vector<2x128xf32>,
    %97 = arith.truncf %95 : vector<2x128xf32> to vector<2x128xbf16>
    %c0_55 = arith.constant 0 : index
    %c0_56 = arith.constant 0 : index
    %98 = vector.load %arg14[%c0_55, %c0_56] : memref<128x128xbf16, #tpu.memory_space<vmem>>, vector<128x128xbf16>
    %cst_57 = arith.constant dense<0.000000e+00> : vector<2x128xf32>
    %99 = tpu.matmul %97, %98, %cst_57 {dimension_numbers = #tpu.dot_dimension_numbers<[1], [0], [0], [1], [0, 0, 1, 1], [], []>} : vector<2x128xbf16>, vector<128x128xbf16>, vector<2x128xf32> -> vector<2x128xf32>
    %c0_58 = arith.constant 0 : index
    %c0_59 = arith.constant 0 : index
    %100 = vector.load %arg15[%c0_58, %c0_59] : memref<1x128xf32, #tpu.memory_space<vmem>>, vector<1x128xf32>
    %101 = vector.broadcast %100 : vector<1x128xf32> to vector<2x128xf32>
    %102 = arith.addf %99, %101 : vector<2x128xf32>
    %c0_60 = arith.constant 0 : index
    %c0_61 = arith.constant 0 : index
    %103 = vector.load %arg16[%c0_60, %c0_61] : memref<2x128xf32, #tpu.memory_space<vmem>>, vector<2x128xf32>
    tpu.vector_store %arg16[%c0_60, %c0_61], %102 {strides = array<i32>} : memref<2x128xf32, #tpu.memory_space<vmem>>, vector<2x128xf32>,
    return
  }
}

</mosaic_0001>

<llo_original>
// kernel: mvcnn_forward.1
$region0: #{mvcnn_forward.1}
  #allocation0 [shape = 'u32[]', space=smem, size = 0x4, offset = 0x4, fixed_abs, tag = 'smem constant byte address 0x4 - core index']
  #allocation1 [shape = 'u32[144,128]{1,0:T(1,128)}', space=vmem, size = 0x12000, scoped, tag = 'internal scratch']
  %s0 = inlined_call_operand.vmem [shape: f32[204,128], index: 0, kind: input, shape index: {}]
  %s1 = inlined_call_operand.vmem [shape: bf16[384,512], index: 1, kind: input, shape index: {}]
  %s2 = inlined_call_operand.vmem [shape: f32[1,512], index: 2, kind: input, shape index: {}]
  %s3 = inlined_call_operand.vmem [shape: f32[108,201], index: 3, kind: input, shape index: {}]
  %s4 = inlined_call_operand.vmem [shape: bf16[768,512], index: 4, kind: input, shape index: {}]
  %s5 = inlined_call_operand.vmem [shape: f32[1,512], index: 5, kind: input, shape index: {}]
  %s6 = inlined_call_operand.vmem [shape: f32[60,105], index: 6, kind: input, shape index: {}]
  %s7 = inlined_call_operand.vmem [shape: bf16[768,512], index: 7, kind: input, shape index: {}]
  %s8 = inlined_call_operand.vmem [shape: f32[1,512], index: 8, kind: input, shape index: {}]
  %s9 = inlined_call_operand.vmem [shape: f32[4,6,57], index: 9, kind: input, shape index: {}]
  %s10 = inlined_call_operand.vmem [shape: bf16[1024,128], index: 10, kind: input, shape index: {}]
  %s11 = inlined_call_operand.vmem [shape: f32[1,128], index: 11, kind: input, shape index: {}]
  %s12 = inlined_call_operand.vmem [shape: bf16[128,128], index: 12, kind: input, shape index: {}]
  %s13 = inlined_call_operand.vmem [shape: f32[1,128], index: 13, kind: input, shape index: {}]
  %s14 = inlined_call_operand.vmem [shape: bf16[128,128], index: 14, kind: input, shape index: {}]
  %s15 = inlined_call_operand.vmem [shape: f32[1,128], index: 15, kind: input, shape index: {}]
  %s16 = inlined_call_operand.hbm [shape: f32[2,128], index: 16, kind: output, shape index: {0}]
  %s17 = inlined_call_operand.hbm [shape: f32[2,128], index: 17, kind: output, shape index: {1}]
  %s18 = inlined_call_operand.vmem [shape: f32[6,128], index: 18, kind: output, shape index: {2}]
  %19 = xla_tuple %s16, %s17, %s18
  %s20 = sld [smem:[#allocation0]]
  $region90: #{mvcnn_forward.1} parent=0
    _
  %s22 = ssub.s32 1, %s20
  %s23 = scalar_select 0, %s22, %s20
  $region1: #{mvcnn_forward.1} parent=0
    #allocation2 [shape = 'u8[1024]{0}', space=vmem, size = 0x400, scoped, tag = 'output window, operand 0, single buffered']
    #allocation3 [shape = 's32[1]{0}', space=sflag, size = 0x4, scoped, tag = 'scoped memory for mvcnn_forward.1']
    #allocation4 [shape = 'u8[1024]{0}', space=vmem, size = 0x400, scoped, tag = 'output window, operand 1, single buffered']
    #allocation5 [shape = 's32[1]{0}', space=sflag, size = 0x4, scoped, tag = 'scoped memory for mvcnn_forward.1']
    %24 = vsyncpa [#allocation3], 0
    %25 = vsyncpa [#allocation5], 0
    // Predicated region
    $region2: #{mvcnn_forward.1} parent=1 // pred_check
      _
    $region3: #{mvcnn_forward.1} parent=1 // pred_check_branch
      %27 = sbr.rel (0) target = $region5
    $region4: #{mvcnn_forward.1} parent=1 // pred_region
      _
    $region5: #{mvcnn_forward.1} parent=1 // pred_fallthru
      _
    // Predicated region
    $region6: #{mvcnn_forward.1} parent=1 // pred_check
      _
    $region7: #{mvcnn_forward.1} parent=1 // pred_check_branch
      %29 = sbr.rel (0) target = $region9
    $region8: #{mvcnn_forward.1} parent=1 // pred_region
      _
    $region9: #{mvcnn_forward.1} parent=1 // pred_fallthru
      _
    // Predicated region
    $region10: #{mvcnn_forward.1} parent=1 // pred_check
      _
    $region11: #{mvcnn_forward.1} parent=1 // pred_check_branch
      %31 = sbr.rel (0) target = $region13
    $region12: #{mvcnn_forward.1} parent=1 // pred_region
      _
    $region13: #{mvcnn_forward.1} parent=1 // pred_fallthru
      _
    // Predicated region
    $region14: #{mvcnn_forward.1} parent=1 // pred_check
      _
    $region15: #{mvcnn_forward.1} parent=1 // pred_check_branch
      %33 = sbr.rel (0) target = $region17
    $region16: #{mvcnn_forward.1} parent=1 // pred_region
      _
    $region17: #{mvcnn_forward.1} parent=1 // pred_fallthru
      _
    // Predicated region
    $region18: #{mvcnn_forward.1} parent=1 // pred_check
      _
    $region19: #{mvcnn_forward.1} parent=1 // pred_check_branch
      %35 = sbr.rel (0) target = $region21
    $region20: #{mvcnn_forward.1} parent=1 // pred_region
      _
    $region21: #{mvcnn_forward.1} parent=1 // pred_fallthru
      _
    // Predicated region
    $region22: #{mvcnn_forward.1} parent=1 // pred_check
      _
    $region23: #{mvcnn_forward.1} parent=1 // pred_check_branch
      %37 = sbr.rel (0) target = $region25
    $region24: #{mvcnn_forward.1} parent=1 // pred_region
      _
    $region25: #{mvcnn_forward.1} parent=1 // pred_fallthru
      _
    // Predicated region
    $region26: #{mvcnn_forward.1} parent=1 // pred_check
      _
    $region27: #{mvcnn_forward.1} parent=1 // pred_check_branch
      %39 = sbr.rel (0) target = $region29
    $region28: #{mvcnn_forward.1} parent=1 // pred_region
      _
    $region29: #{mvcnn_forward.1} parent=1 // pred_fallthru
      _
    // Predicated region
    $region30: #{mvcnn_forward.1} parent=1 // pred_check
      _
    $region31: #{mvcnn_forward.1} parent=1 // pred_check_branch
      %41 = sbr.rel (0) target = $region33
    $region32: #{mvcnn_forward.1} parent=1 // pred_region
      _
    $region33: #{mvcnn_forward.1} parent=1 // pred_fallthru
      _
    // Predicated region
    $region34: #{mvcnn_forward.1} parent=1 // pred_check
      _
    $region35: #{mvcnn_forward.1} parent=1 // pred_check_branch
      %43 = sbr.rel (0) target = $region37
    $region36: #{mvcnn_forward.1} parent=1 // pred_region
      _
    $region37: #{mvcnn_forward.1} parent=1 // pred_fallthru
      _
    // Predicated region
    $region38: #{mvcnn_forward.1} parent=1 // pred_check
      _
    $region39: #{mvcnn_forward.1} parent=1 // pred_check_branch
      %45 = sbr.rel (0) target = $region41
    $region40: #{mvcnn_forward.1} parent=1 // pred_region
      _
    $region41: #{mvcnn_forward.1} parent=1 // pred_fallthru
      _
    // Predicated region
    $region42: #{mvcnn_forward.1} parent=1 // pred_check
      _
    $region43: #{mvcnn_forward.1} parent=1 // pred_check_branch
      %47 = sbr.rel (0) target = $region45
    $region44: #{mvcnn_forward.1} parent=1 // pred_region
      _
    $region45: #{mvcnn_forward.1} parent=1 // pred_fallthru
      _
    // Predicated region
    $region46: #{mvcnn_forward.1} parent=1 // pred_check
      _
    $region47: #{mvcnn_forward.1} parent=1 // pred_check_branch
      %49 = sbr.rel (0) target = $region49
    $region48: #{mvcnn_forward.1} parent=1 // pred_region
      _
    $region49: #{mvcnn_forward.1} parent=1 // pred_fallthru
      _
    // Predicated region
    $region50: #{mvcnn_forward.1} parent=1 // pred_check
      _
    $region51: #{mvcnn_forward.1} parent=1 // pred_check_branch
      %51 = sbr.rel (0) target = $region53
    $region52: #{mvcnn_forward.1} parent=1 // pred_region
      _
    $region53: #{mvcnn_forward.1} parent=1 // pred_fallthru
      _
    // Predicated region
    $region54: #{mvcnn_forward.1} parent=1 // pred_check
      _
    $region55: #{mvcnn_forward.1} parent=1 // pred_check_branch
      %53 = sbr.rel (0) target = $region57
    $region56: #{mvcnn_forward.1} parent=1 // pred_region
      _
    $region57: #{mvcnn_forward.1} parent=1 // pred_fallthru
      _
    // Predicated region
    $region58: #{mvcnn_forward.1} parent=1 // pred_check
      _
    $region59: #{mvcnn_forward.1} parent=1 // pred_check_branch
      %55 = sbr.rel (0) target = $region61
    $region60: #{mvcnn_forward.1} parent=1 // pred_region
      _
    $region61: #{mvcnn_forward.1} parent=1 // pred_fallthru
      _
    // Predicated region
    $region62: #{mvcnn_forward.1} parent=1 // pred_check
      _
    $region63: #{mvcnn_forward.1} parent=1 // pred_check_branch
      %57 = sbr.rel (0) target = $region65
    $region64: #{mvcnn_forward.1} parent=1 // pred_region
      _
    $region65: #{mvcnn_forward.1} parent=1 // pred_fallthru
      _
    %v59 = vld [vmem:[%s0] sm:$0xff]
    %v60 = vld [vmem:[%s0 + $0x8] sm:$0xff]
    %v61 = vld [vmem:[%s0 + $0x10] sm:$0xff]
    %v62 = vld [vmem:[%s0 + $0x18] sm:$0xff]
    %v63 = vld [vmem:[%s0 + $0x20] sm:$0xff]
    %v64 = vld [vmem:[%s0 + $0x28] sm:$0xff]
    %v65 = vld [vmem:[%s0 + $0x30] sm:$0xff]
    %v66 = vld [vmem:[%s0 + $0x38] sm:$0xff]
    %v67 = vld [vmem:[%s0 + $0x40] sm:$0xff]
    %v68 = vld [vmem:[%s0 + $0x48] sm:$0xff]
    %v69 = vld [vmem:[%s0 + $0x50] sm:$0xff]
    %v70 = vld [vmem:[%s0 + $0x58] sm:$0xff]
    %v71 = vld [vmem:[%s0 + $0x60] sm:$0xff]
    %v72 = vld [vmem:[%s0 + $0x68] sm:$0xff]
    %v73 = vld [vmem:[%s0 + $0x70] sm:$0xff]
    %v74 = vld [vmem:[%s0 + $0x78] sm:$0xff]
    %v75 = vld [vmem:[%s0 + $0x80] sm:$0xff]
    %v76 = vld [vmem:[%s0 + $0x88] sm:$0xff]
    %v77 = vld [vmem:[%s0 + $0x90] sm:$0xff]
    %v78 = vld [vmem:[%s0 + $0x98] sm:$0xff]
    %v79 = vld [vmem:[%s0 + $0xa0] sm:$0xff]
    %v80 = vld [vmem:[%s0 + $0xa8] sm:$0xff]
    %v81 = vld [vmem:[%s0 + $0xb0] sm:$0xff]
    %v82 = vld [vmem:[%s0 + $0xb8] sm:$0xff]
    %v83 = vld [vmem:[%s0 + $0xc0] sm:$0xff]
    %v84 = vld [vmem:[%s0 + $0xc8] sm:$0xf]
    %vm111 = vcmask 1046528
    %v112 = vrot.slane %v59, 1
    %v113 = vrot.slane %v60, 1
    %v114 = vsel %vm111, %v112, %v113
    %v115 = vrot.slane %v61, 1
    %v116 = vsel %vm111, %v113, %v115
    %v117 = vrot.slane %v62, 1
    %v118 = vsel %vm111, %v115, %v117
    %v119 = vrot.slane %v63, 1
    %v120 = vsel %vm111, %v117, %v119
    %v121 = vrot.slane %v64, 1
    %v122 = vsel %vm111, %v119, %v121
    %v123 = vrot.slane %v65, 1
    %v124 = vsel %vm111, %v121, %v123
    %v125 = vrot.slane %v66, 1
    %v126 = vsel %vm111, %v123, %v125
    %v127 = vrot.slane %v67, 1
    %v128 = vsel %vm111, %v125, %v127
    %v129 = vrot.slane %v68, 1
    %v130 = vsel %vm111, %v127, %v129
    %v131 = vrot.slane %v69, 1
    %v132 = vsel %vm111, %v129, %v131
    %v133 = vrot.slane %v70, 1
    %v134 = vsel %vm111, %v131, %v133
    %v135 = vrot.slane %v71, 1
    %v136 = vsel %vm111, %v133, %v135
    %v137 = vrot.slane %v72, 1
    %v138 = vsel %vm111, %v135, %v137
    %v139 = vrot.slane %v73, 1
    %v140 = vsel %vm111, %v137, %v139
    %v141 = vrot.slane %v74, 1
    %v142 = vsel %vm111, %v139, %v141
    %v143 = vrot.slane %v75, 1
    %v144 = vsel %vm111, %v141, %v143
    %v145 = vrot.slane %v76, 1
    %v146 = vsel %vm111, %v143, %v145
    %v147 = vrot.slane %v77, 1
    %v148 = vsel %vm111, %v145, %v147
    %v149 = vrot.slane %v78, 1
    %v150 = vsel %vm111, %v147, %v149
    %v151 = vrot.slane %v79, 1
    %v152 = vsel %vm111, %v149, %v151
    %v153 = vrot.slane %v80, 1
    %v154 = vsel %vm111, %v151, %v153
    %v155 = vrot.slane %v81, 1
    %v156 = vsel %vm111, %v153, %v155
    %v157 = vrot.slane %v82, 1
    %v158 = vsel %vm111, %v155, %v157
    %v159 = vrot.slane %v83, 1
    %v160 = vsel %vm111, %v157, %v159
    %v161 = vrot.slane %v84, 1
    %v162 = vsel %vm111, %v159, %v161
    %vm189 = vcmask 1045504
    %v190 = vrot.slane %v59, 2
    %v191 = vrot.slane %v60, 2
    %v192 = vsel %vm189, %v190, %v191
    %v193 = vrot.slane %v61, 2
    %v194 = vsel %vm189, %v191, %v193
    %v195 = vrot.slane %v62, 2
    %v196 = vsel %vm189, %v193, %v195
    %v197 = vrot.slane %v63, 2
    %v198 = vsel %vm189, %v195, %v197
    %v199 = vrot.slane %v64, 2
    %v200 = vsel %vm189, %v197, %v199
    %v201 = vrot.slane %v65, 2
    %v202 = vsel %vm189, %v199, %v201
    %v203 = vrot.slane %v66, 2
    %v204 = vsel %vm189, %v201, %v203
    %v205 = vrot.slane %v67, 2
    %v206 = vsel %vm189, %v203, %v205
    %v207 = vrot.slane %v68, 2
    %v208 = vsel %vm189, %v205, %v207
    %v209 = vrot.slane %v69, 2
    %v210 = vsel %vm189, %v207, %v209
    %v211 = vrot.slane %v70, 2
    %v212 = vsel %vm189, %v209, %v211
    %v213 = vrot.slane %v71, 2
    %v214 = vsel %vm189, %v211, %v213
    %v215 = vrot.slane %v72, 2
    %v216 = vsel %vm189, %v213, %v215
    %v217 = vrot.slane %v73, 2
    %v218 = vsel %vm189, %v215, %v217
    %v219 = vrot.slane %v74, 2
    %v220 = vsel %vm189, %v217, %v219
    %v221 = vrot.slane %v75, 2
    %v222 = vsel %vm189, %v219, %v221
    %v223 = vrot.slane %v76, 2
    %v224 = vsel %vm189, %v221, %v223
    %v225 = vrot.slane %v77, 2
    %v226 = vsel %vm189, %v223, %v225
    %v227 = vrot.slane %v78, 2
    %v228 = vsel %vm189, %v225, %v227
    %v229 = vrot.slane %v79, 2
    %v230 = vsel %vm189, %v227, %v229
    %v231 = vrot.slane %v80, 2
    %v232 = vsel %vm189, %v229, %v231
    %v233 = vrot.slane %v81, 2
    %v234 = vsel %vm189, %v231, %v233
    %v235 = vrot.slane %v82, 2
    %v236 = vsel %vm189, %v233, %v235
    %v237 = vrot.slane %v83, 2
    %v238 = vsel %vm189, %v235, %v237
    %v239 = vrot.slane %v84, 2
    %v240 = vsel %vm189, %v237, %v239
    %v267 = vpack.c.bf16 %v60, %v59
    %v268 = vpack.c.bf16 %v116, %v114
    %v269 = vpack.c.bf16 %v194, %v192
    %v270 = vpack.c.bf16 %v62, %v61
    %v271 = vpack.c.bf16 %v120, %v118
    %v272 = vpack.c.bf16 %v198, %v196
    %v273 = vpack.c.bf16 %v64, %v63
    %v274 = vpack.c.bf16 %v124, %v122
    %v275 = vpack.c.bf16 %v202, %v200
    %v276 = vpack.c.bf16 %v66, %v65
    %v277 = vpack.c.bf16 %v128, %v126
    %v278 = vpack.c.bf16 %v206, %v204
    %v279 = vpack.c.bf16 %v68, %v67
    %v280 = vpack.c.bf16 %v132, %v130
    %v281 = vpack.c.bf16 %v210, %v208
    %v282 = vpack.c.bf16 %v70, %v69
    %v283 = vpack.c.bf16 %v136, %v134
    %v284 = vpack.c.bf16 %v214, %v212
    %v285 = vpack.c.bf16 %v72, %v71
    %v286 = vpack.c.bf16 %v140, %v138
    %v287 = vpack.c.bf16 %v218, %v216
    %v288 = vpack.c.bf16 %v74, %v73
    %v289 = vpack.c.bf16 %v144, %v142
    %v290 = vpack.c.bf16 %v222, %v220
    %v291 = vpack.c.bf16 %v76, %v75
    %v292 = vpack.c.bf16 %v148, %v146
    %v293 = vpack.c.bf16 %v226, %v224
    %v294 = vpack.c.bf16 %v78, %v77
    %v295 = vpack.c.bf16 %v152, %v150
    %v296 = vpack.c.bf16 %v230, %v228
    %v297 = vpack.c.bf16 %v80, %v79
    %v298 = vpack.c.bf16 %v156, %v154
    %v299 = vpack.c.bf16 %v234, %v232
    %v300 = vpack.c.bf16 %v82, %v81
    %v301 = vpack.c.bf16 %v160, %v158
    %v302 = vpack.c.bf16 %v238, %v236
    %v303 = vpack.c.bf16 %v84, %v83
    %v304 = vpack.c.bf16 %v161, %v162
    %v305 = vpack.c.bf16 %v239, %v240
    %v306 = vld [vmem:[%s1] sm:$0xff]
    %v307 = vld [vmem:[%s1 + $0x8] sm:$0xff]
    %v308 = vld [vmem:[%s1 + $0x10] sm:$0xff]
    %v309 = vld [vmem:[%s1 + $0x18] sm:$0xff]
    %v310 = vld [vmem:[%s1 + $0x20] sm:$0xff]
    %v311 = vld [vmem:[%s1 + $0x28] sm:$0xff]
    %v312 = vld [vmem:[%s1 + $0x30] sm:$0xff]
    %v313 = vld [vmem:[%s1 + $0x38] sm:$0xff]
    %v314 = vld [vmem:[%s1 + $0x40] sm:$0xff]
    %v315 = vld [vmem:[%s1 + $0x48] sm:$0xff]
    %v316 = vld [vmem:[%s1 + $0x50] sm:$0xff]
    %v317 = vld [vmem:[%s1 + $0x58] sm:$0xff]
    %v318 = vld [vmem:[%s1 + $0x60] sm:$0xff]
    %v319 = vld [vmem:[%s1 + $0x68] sm:$0xff]
    %v320 = vld [vmem:[%s1 + $0x70] sm:$0xff]
    %v321 = vld [vmem:[%s1 + $0x78] sm:$0xff]
    %v322 = vld [vmem:[%s1 + $0x80] sm:$0xff]
    %v323 = vld [vmem:[%s1 + $0x88] sm:$0xff]
    %v324 = vld [vmem:[%s1 + $0x90] sm:$0xff]
    %v325 = vld [vmem:[%s1 + $0x98] sm:$0xff]
    %v326 = vld [vmem:[%s1 + $0xa0] sm:$0xff]
    %v327 = vld [vmem:[%s1 + $0xa8] sm:$0xff]
    %v328 = vld [vmem:[%s1 + $0xb0] sm:$0xff]
    %v329 = vld [vmem:[%s1 + $0xb8] sm:$0xff]
    %v330 = vld [vmem:[%s1 + $0xc0] sm:$0xff]
    %v331 = vld [vmem:[%s1 + $0xc8] sm:$0xff]
    %v332 = vld [vmem:[%s1 + $0xd0] sm:$0xff]
    %v333 = vld [vmem:[%s1 + $0xd8] sm:$0xff]
    %v334 = vld [vmem:[%s1 + $0xe0] sm:$0xff]
    %v335 = vld [vmem:[%s1 + $0xe8] sm:$0xff]
    %v336 = vld [vmem:[%s1 + $0xf0] sm:$0xff]
    %v337 = vld [vmem:[%s1 + $0xf8] sm:$0xff]
    %v338 = vld [vmem:[%s1 + $0x100] sm:$0xff]
    %v339 = vld [vmem:[%s1 + $0x108] sm:$0xff]
    %v340 = vld [vmem:[%s1 + $0x110] sm:$0xff]
    %v341 = vld [vmem:[%s1 + $0x118] sm:$0xff]
    %v342 = vld [vmem:[%s1 + $0x120] sm:$0xff]
    %v343 = vld [vmem:[%s1 + $0x128] sm:$0xff]
    %v344 = vld [vmem:[%s1 + $0x130] sm:$0xff]
    %v345 = vld [vmem:[%s1 + $0x138] sm:$0xff]
    %v346 = vld [vmem:[%s1 + $0x140] sm:$0xff]
    %v347 = vld [vmem:[%s1 + $0x148] sm:$0xff]
    %v348 = vld [vmem:[%s1 + $0x150] sm:$0xff]
    %v349 = vld [vmem:[%s1 + $0x158] sm:$0xff]
    %v350 = vld [vmem:[%s1 + $0x160] sm:$0xff]
    %v351 = vld [vmem:[%s1 + $0x168] sm:$0xff]
    %v352 = vld [vmem:[%s1 + $0x170] sm:$0xff]
    %v353 = vld [vmem:[%s1 + $0x178] sm:$0xff]
    %v354 = vld [vmem:[%s1 + $0x180] sm:$0xff]
    %v355 = vld [vmem:[%s1 + $0x188] sm:$0xff]
    %v356 = vld [vmem:[%s1 + $0x190] sm:$0xff]
    %v357 = vld [vmem:[%s1 + $0x198] sm:$0xff]
    %v358 = vld [vmem:[%s1 + $0x1a0] sm:$0xff]
    %v359 = vld [vmem:[%s1 + $0x1a8] sm:$0xff]
    %v360 = vld [vmem:[%s1 + $0x1b0] sm:$0xff]
    %v361 = vld [vmem:[%s1 + $0x1b8] sm:$0xff]
    %v362 = vld [vmem:[%s1 + $0x1c0] sm:$0xff]
    %v363 = vld [vmem:[%s1 + $0x1c8] sm:$0xff]
    %v364 = vld [vmem:[%s1 + $0x1d0] sm:$0xff]
    %v365 = vld [vmem:[%s1 + $0x1d8] sm:$0xff]
    %v366 = vld [vmem:[%s1 + $0x1e0] sm:$0xff]
    %v367 = vld [vmem:[%s1 + $0x1e8] sm:$0xff]
    %v368 = vld [vmem:[%s1 + $0x1f0] sm:$0xff]
    %v369 = vld [vmem:[%s1 + $0x1f8] sm:$0xff]
    %v370 = vld [vmem:[%s1 + $0x200] sm:$0xff]
    %v371 = vld [vmem:[%s1 + $0x208] sm:$0xff]
    %v372 = vld [vmem:[%s1 + $0x210] sm:$0xff]
    %v373 = vld [vmem:[%s1 + $0x218] sm:$0xff]
    %v374 = vld [vmem:[%s1 + $0x220] sm:$0xff]
    %v375 = vld [vmem:[%s1 + $0x228] sm:$0xff]
    %v376 = vld [vmem:[%s1 + $0x230] sm:$0xff]
    %v377 = vld [vmem:[%s1 + $0x238] sm:$0xff]
    %v378 = vld [vmem:[%s1 + $0x240] sm:$0xff]
    %v379 = vld [vmem:[%s1 + $0x248] sm:$0xff]
    %v380 = vld [vmem:[%s1 + $0x250] sm:$0xff]
    %v381 = vld [vmem:[%s1 + $0x258] sm:$0xff]
    %v382 = vld [vmem:[%s1 + $0x260] sm:$0xff]
    %v383 = vld [vmem:[%s1 + $0x268] sm:$0xff]
    %v384 = vld [vmem:[%s1 + $0x270] sm:$0xff]
    %v385 = vld [vmem:[%s1 + $0x278] sm:$0xff]
    %v386 = vld [vmem:[%s1 + $0x280] sm:$0xff]
    %v387 = vld [vmem:[%s1 + $0x288] sm:$0xff]
    %v388 = vld [vmem:[%s1 + $0x290] sm:$0xff]
    %v389 = vld [vmem:[%s1 + $0x298] sm:$0xff]
    %v390 = vld [vmem:[%s1 + $0x2a0] sm:$0xff]
    %v391 = vld [vmem:[%s1 + $0x2a8] sm:$0xff]
    %v392 = vld [vmem:[%s1 + $0x2b0] sm:$0xff]
    %v393 = vld [vmem:[%s1 + $0x2b8] sm:$0xff]
    %v394 = vld [vmem:[%s1 + $0x2c0] sm:$0xff]
    %v395 = vld [vmem:[%s1 + $0x2c8] sm:$0xff]
    %v396 = vld [vmem:[%s1 + $0x2d0] sm:$0xff]
    %v397 = vld [vmem:[%s1 + $0x2d8] sm:$0xff]
    %v398 = vld [vmem:[%s1 + $0x2e0] sm:$0xff]
    %v399 = vld [vmem:[%s1 + $0x2e8] sm:$0xff]
    %v400 = vld [vmem:[%s1 + $0x2f0] sm:$0xff]
    %v401 = vld [vmem:[%s1 + $0x2f8] sm:$0xff]
    %v402 = vld [vmem:[%s2] sm:$0xf]
    %v404 = vlaneseq
    %v405 = vshrl.u32 %v404, 7
    %v406 = vsub.s32 0, %v405
    %v407 = vrot.slane %v402, %v406
    %v408 = vlaneseq
    %v409 = vshrl.u32 %v408, 7
    %v410 = vsub.s32 1, %v409
    %v411 = vrot.slane %v402, %v410
    %v412 = vlaneseq
    %v413 = vshrl.u32 %v412, 7
    %v414 = vsub.s32 2, %v413
    %v415 = vrot.slane %v402, %v414
    %v416 = vlaneseq
    %v417 = vshrl.u32 %v416, 7
    %v418 = vsub.s32 3, %v417
    %v419 = vrot.slane %v402, %v418
    %v520 = vunpack.c.l.b16 %v306
    %v521 = vunpack.c.h.b16 %v306
    %v522 = vunpack.c.l.b16 %v307
    %v523 = vunpack.c.h.b16 %v307
    %v524 = vunpack.c.l.b16 %v308
    %v525 = vunpack.c.h.b16 %v308
    %v526 = vunpack.c.l.b16 %v309
    %v527 = vunpack.c.h.b16 %v309
    %v528 = vunpack.c.l.b16 %v310
    %v529 = vunpack.c.h.b16 %v310
    %v530 = vunpack.c.l.b16 %v311
    %v531 = vunpack.c.h.b16 %v311
    %v532 = vunpack.c.l.b16 %v312
    %v533 = vunpack.c.h.b16 %v312
    %v534 = vunpack.c.l.b16 %v313
    %v535 = vunpack.c.h.b16 %v313
    %v536 = vunpack.c.l.b16 %v314
    %v537 = vunpack.c.h.b16 %v314
    %v538 = vunpack.c.l.b16 %v315
    %v539 = vunpack.c.h.b16 %v315
    %v540 = vunpack.c.l.b16 %v316
    %v541 = vunpack.c.h.b16 %v316
    %v542 = vunpack.c.l.b16 %v317
    %v543 = vunpack.c.h.b16 %v317
    %v544 = vunpack.c.l.b16 %v318
    %v545 = vunpack.c.h.b16 %v318
    %v546 = vunpack.c.l.b16 %v319
    %v547 = vunpack.c.h.b16 %v319
    %v548 = vunpack.c.l.b16 %v320
    %v549 = vunpack.c.h.b16 %v320
    %v550 = vunpack.c.l.b16 %v321
    %v551 = vunpack.c.h.b16 %v321
    %v552 = vunpack.c.l.b16 %v322
    %v553 = vunpack.c.h.b16 %v322
    %v554 = vunpack.c.l.b16 %v323
    %v555 = vunpack.c.h.b16 %v323
    %v556 = vunpack.c.l.b16 %v324
    %v557 = vunpack.c.h.b16 %v324
    %v558 = vunpack.c.l.b16 %v325
    %v559 = vunpack.c.h.b16 %v325
    %v560 = vunpack.c.l.b16 %v326
    %v561 = vunpack.c.h.b16 %v326
    %v562 = vunpack.c.l.b16 %v327
    %v563 = vunpack.c.h.b16 %v327
    %v564 = vunpack.c.l.b16 %v328
    %v565 = vunpack.c.h.b16 %v328
    %v566 = vunpack.c.l.b16 %v329
    %v567 = vunpack.c.h.b16 %v329
    %v568 = vunpack.c.l.b16 %v330
    %v569 = vunpack.c.h.b16 %v330
    %v570 = vunpack.c.l.b16 %v331
    %v571 = vunpack.c.h.b16 %v331
    %v572 = vunpack.c.l.b16 %v332
    %v573 = vunpack.c.h.b16 %v332
    %v574 = vunpack.c.l.b16 %v333
    %v575 = vunpack.c.h.b16 %v333
    %v576 = vunpack.c.l.b16 %v334
    %v577 = vunpack.c.h.b16 %v334
    %v578 = vunpack.c.l.b16 %v335
    %v579 = vunpack.c.h.b16 %v335
    %v580 = vunpack.c.l.b16 %v336
    %v581 = vunpack.c.h.b16 %v336
    %v582 = vunpack.c.l.b16 %v337
    %v583 = vunpack.c.h.b16 %v337
    %v584 = vunpack.c.l.b16 %v338
    %v585 = vunpack.c.h.b16 %v338
    %v586 = vunpack.c.l.b16 %v339
    %v587 = vunpack.c.h.b16 %v339
    %v588 = vunpack.c.l.b16 %v340
    %v589 = vunpack.c.h.b16 %v340
    %v590 = vunpack.c.l.b16 %v341
    %v591 = vunpack.c.h.b16 %v341
    %v592 = vunpack.c.l.b16 %v342
    %v593 = vunpack.c.h.b16 %v342
    %v594 = vunpack.c.l.b16 %v343
    %v595 = vunpack.c.h.b16 %v343
    %v596 = vunpack.c.l.b16 %v344
    %v597 = vunpack.c.h.b16 %v344
    %v598 = vunpack.c.l.b16 %v345
    %v599 = vunpack.c.h.b16 %v345
    %v600 = vunpack.c.l.b16 %v346
    %v601 = vunpack.c.h.b16 %v346
    %v602 = vunpack.c.l.b16 %v347
    %v603 = vunpack.c.h.b16 %v347
    %v604 = vunpack.c.l.b16 %v348
    %v605 = vunpack.c.h.b16 %v348
    %v606 = vunpack.c.l.b16 %v349
    %v607 = vunpack.c.h.b16 %v349
    %v608 = vunpack.c.l.b16 %v350
    %v609 = vunpack.c.h.b16 %v350
    %v610 = vunpack.c.l.b16 %v351
    %v611 = vunpack.c.h.b16 %v351
    %v612 = vunpack.c.l.b16 %v352
    %v613 = vunpack.c.h.b16 %v352
    %v614 = vunpack.c.l.b16 %v353
    %v615 = vunpack.c.h.b16 %v353
    %v616 = vunpack.c.l.b16 %v354
    %v617 = vunpack.c.h.b16 %v354
    %v618 = vunpack.c.l.b16 %v355
    %v619 = vunpack.c.h.b16 %v355
    %v620 = vunpack.c.l.b16 %v356
    %v621 = vunpack.c.h.b16 %v356
    %v622 = vunpack.c.l.b16 %v357
    %v623 = vunpack.c.h.b16 %v357
    %v624 = vunpack.c.l.b16 %v358
    %v625 = vunpack.c.h.b16 %v358
    %v626 = vunpack.c.l.b16 %v359
    %v627 = vunpack.c.h.b16 %v359
    %v628 = vunpack.c.l.b16 %v360
    %v629 = vunpack.c.h.b16 %v360
    %v630 = vunpack.c.l.b16 %v361
    %v631 = vunpack.c.h.b16 %v361
    %v632 = vunpack.c.l.b16 %v362
    %v633 = vunpack.c.h.b16 %v362
    %v634 = vunpack.c.l.b16 %v363
    %v635 = vunpack.c.h.b16 %v363
    %v636 = vunpack.c.l.b16 %v364
    %v637 = vunpack.c.h.b16 %v364
    %v638 = vunpack.c.l.b16 %v365
    %v639 = vunpack.c.h.b16 %v365
    %v640 = vunpack.c.l.b16 %v366
    %v641 = vunpack.c.h.b16 %v366
    %v642 = vunpack.c.l.b16 %v367
    %v643 = vunpack.c.h.b16 %v367
    %v644 = vunpack.c.l.b16 %v368
    %v645 = vunpack.c.h.b16 %v368
    %v646 = vunpack.c.l.b16 %v369
    %v647 = vunpack.c.h.b16 %v369
    %v648 = vunpack.c.l.b16 %v370
    %v649 = vunpack.c.h.b16 %v370
    %v650 = vunpack.c.l.b16 %v371
    %v651 = vunpack.c.h.b16 %v371
    %v652 = vunpack.c.l.b16 %v372
    %v653 = vunpack.c.h.b16 %v372
    %v654 = vunpack.c.l.b16 %v373
    %v655 = vunpack.c.h.b16 %v373
    %v656 = vunpack.c.l.b16 %v374
    %v657 = vunpack.c.h.b16 %v374
    %v658 = vunpack.c.l.b16 %v375
    %v659 = vunpack.c.h.b16 %v375
    %v660 = vunpack.c.l.b16 %v376
    %v661 = vunpack.c.h.b16 %v376
    %v662 = vunpack.c.l.b16 %v377
    %v663 = vunpack.c.h.b16 %v377
    %v664 = vunpack.c.l.b16 %v378
    %v665 = vunpack.c.h.b16 %v378
    %v666 = vunpack.c.l.b16 %v379
    %v667 = vunpack.c.h.b16 %v379
    %v668 = vunpack.c.l.b16 %v380
    %v669 = vunpack.c.h.b16 %v380
    %v670 = vunpack.c.l.b16 %v381
    %v671 = vunpack.c.h.b16 %v381
    %v672 = vunpack.c.l.b16 %v382
    %v673 = vunpack.c.h.b16 %v382
    %v674 = vunpack.c.l.b16 %v383
    %v675 = vunpack.c.h.b16 %v383
    %v676 = vunpack.c.l.b16 %v384
    %v677 = vunpack.c.h.b16 %v384
    %v678 = vunpack.c.l.b16 %v385
    %v679 = vunpack.c.h.b16 %v385
    %v680 = vunpack.c.l.b16 %v386
    %v681 = vunpack.c.h.b16 %v386
    %v682 = vunpack.c.l.b16 %v387
    %v683 = vunpack.c.h.b16 %v387
    %v684 = vunpack.c.l.b16 %v388
    %v685 = vunpack.c.h.b16 %v388
    %v686 = vunpack.c.l.b16 %v389
    %v687 = vunpack.c.h.b16 %v389
    %v688 = vunpack.c.l.b16 %v390
    %v689 = vunpack.c.h.b16 %v390
    %v690 = vunpack.c.l.b16 %v391
    %v691 = vunpack.c.h.b16 %v391
    %v692 = vunpack.c.l.b16 %v392
    %v693 = vunpack.c.h.b16 %v392
    %v694 = vunpack.c.l.b16 %v393
    %v695 = vunpack.c.h.b16 %v393
    %v696 = vunpack.c.l.b16 %v394
    %v697 = vunpack.c.h.b16 %v394
    %v698 = vunpack.c.l.b16 %v395
    %v699 = vunpack.c.h.b16 %v395
    %v700 = vunpack.c.l.b16 %v396
    %v701 = vunpack.c.h.b16 %v396
    %v702 = vunpack.c.l.b16 %v397
    %v703 = vunpack.c.h.b16 %v397
    %v704 = vunpack.c.l.b16 %v398
    %v705 = vunpack.c.h.b16 %v398
    %v706 = vunpack.c.l.b16 %v399
    %v707 = vunpack.c.h.b16 %v399
    %v708 = vunpack.c.l.b16 %v400
    %v709 = vunpack.c.h.b16 %v400
    %v710 = vunpack.c.l.b16 %v401
    %v711 = vunpack.c.h.b16 %v401
    %v712 = vpack.c.b16 %v524, %v520
    %v713 = vpack.c.b16 %v525, %v521
    %v714 = vpack.c.b16 %v526, %v522
    %v715 = vpack.c.b16 %v527, %v523
    %v716 = vpack.c.b16 %v532, %v528
    %v717 = vpack.c.b16 %v533, %v529
    %v718 = vpack.c.b16 %v534, %v530
    %v719 = vpack.c.b16 %v535, %v531
    %v720 = vpack.c.b16 %v540, %v536
    %v721 = vpack.c.b16 %v541, %v537
    %v722 = vpack.c.b16 %v542, %v538
    %v723 = vpack.c.b16 %v543, %v539
    %v724 = vpack.c.b16 %v548, %v544
    %v725 = vpack.c.b16 %v549, %v545
    %v726 = vpack.c.b16 %v550, %v546
    %v727 = vpack.c.b16 %v551, %v547
    %v728 = vpack.c.b16 %v556, %v552
    %v729 = vpack.c.b16 %v557, %v553
    %v730 = vpack.c.b16 %v558, %v554
    %v731 = vpack.c.b16 %v559, %v555
    %v732 = vpack.c.b16 %v564, %v560
    %v733 = vpack.c.b16 %v565, %v561
    %v734 = vpack.c.b16 %v566, %v562
    %v735 = vpack.c.b16 %v567, %v563
    %v736 = vpack.c.b16 %v572, %v568
    %v737 = vpack.c.b16 %v573, %v569
    %v738 = vpack.c.b16 %v574, %v570
    %v739 = vpack.c.b16 %v575, %v571
    %v740 = vpack.c.b16 %v580, %v576
    %v741 = vpack.c.b16 %v581, %v577
    %v742 = vpack.c.b16 %v582, %v578
    %v743 = vpack.c.b16 %v583, %v579
    %v744 = vpack.c.b16 %v588, %v584
    %v745 = vpack.c.b16 %v589, %v585
    %v746 = vpack.c.b16 %v590, %v586
    %v747 = vpack.c.b16 %v591, %v587
    %v748 = vpack.c.b16 %v596, %v592
    %v749 = vpack.c.b16 %v597, %v593
    %v750 = vpack.c.b16 %v598, %v594
    %v751 = vpack.c.b16 %v599, %v595
    %v752 = vpack.c.b16 %v604, %v600
    %v753 = vpack.c.b16 %v605, %v601
    %v754 = vpack.c.b16 %v606, %v602
    %v755 = vpack.c.b16 %v607, %v603
    %v756 = vpack.c.b16 %v612, %v608
    %v757 = vpack.c.b16 %v613, %v609
    %v758 = vpack.c.b16 %v614, %v610
    %v759 = vpack.c.b16 %v615, %v611
    %v760 = vpack.c.b16 %v620, %v616
    %v761 = vpack.c.b16 %v621, %v617
    %v762 = vpack.c.b16 %v622, %v618
    %v763 = vpack.c.b16 %v623, %v619
    %v764 = vpack.c.b16 %v628, %v624
    %v765 = vpack.c.b16 %v629, %v625
    %v766 = vpack.c.b16 %v630, %v626
    %v767 = vpack.c.b16 %v631, %v627
    %v768 = vpack.c.b16 %v636, %v632
    %v769 = vpack.c.b16 %v637, %v633
    %v770 = vpack.c.b16 %v638, %v634
    %v771 = vpack.c.b16 %v639, %v635
    %v772 = vpack.c.b16 %v644, %v640
    %v773 = vpack.c.b16 %v645, %v641
    %v774 = vpack.c.b16 %v646, %v642
    %v775 = vpack.c.b16 %v647, %v643
    %v776 = vpack.c.b16 %v652, %v648
    %v777 = vpack.c.b16 %v653, %v649
    %v778 = vpack.c.b16 %v654, %v650
    %v779 = vpack.c.b16 %v655, %v651
    %v780 = vpack.c.b16 %v660, %v656
    %v781 = vpack.c.b16 %v661, %v657
    %v782 = vpack.c.b16 %v662, %v658
    %v783 = vpack.c.b16 %v663, %v659
    %v784 = vpack.c.b16 %v668, %v664
    %v785 = vpack.c.b16 %v669, %v665
    %v786 = vpack.c.b16 %v670, %v666
    %v787 = vpack.c.b16 %v671, %v667
    %v788 = vpack.c.b16 %v676, %v672
    %v789 = vpack.c.b16 %v677, %v673
    %v790 = vpack.c.b16 %v678, %v674
    %v791 = vpack.c.b16 %v679, %v675
    %v792 = vpack.c.b16 %v684, %v680
    %v793 = vpack.c.b16 %v685, %v681
    %v794 = vpack.c.b16 %v686, %v682
    %v795 = vpack.c.b16 %v687, %v683
    %v796 = vpack.c.b16 %v692, %v688
    %v797 = vpack.c.b16 %v693, %v689
    %v798 = vpack.c.b16 %v694, %v690
    %v799 = vpack.c.b16 %v695, %v691
    %v800 = vpack.c.b16 %v700, %v696
    %v801 = vpack.c.b16 %v701, %v697
    %v802 = vpack.c.b16 %v702, %v698
    %v803 = vpack.c.b16 %v703, %v699
    %v804 = vpack.c.b16 %v708, %v704
    %v805 = vpack.c.b16 %v709, %v705
    %v806 = vpack.c.b16 %v710, %v706
    %v807 = vpack.c.b16 %v711, %v707
    %904 = vmatprep.subr.bf16.mxu0 %v741
    %905 = vmatpush1.bf16.msra.mxu0 %v740
    %906 = vmatprep.subr.bf16.mxu0 %v737
    %907 = vmatpush1.bf16.msra.mxu0 %v736
    %908 = vmatprep.subr.bf16.mxu0 %v733
    %909 = vmatpush1.bf16.msra.mxu0 %v732
    %910 = vmatprep.subr.bf16.mxu0 %v729
    %911 = vmatpush1.bf16.msra.mxu0 %v728
    %912 = vmatprep.subr.bf16.mxu0 %v725
    %913 = vmatpush1.bf16.msra.mxu0 %v724
    %914 = vmatprep.subr.bf16.mxu0 %v721
    %915 = vmatpush1.bf16.msra.mxu0 %v720
    %916 = vmatprep.subr.bf16.mxu0 %v717
    %917 = vmatpush1.bf16.msra.mxu0 %v716
    %918 = vmatprep.subr.bf16.mxu0 %v713
    %919 = vmatpush1.bf16.msra.mxu0 %v712
    %920 = vmatprep.subr.bf16.mxu0 %v773
    %921 = vmatpush2.bf16.msra.mxu0 %v772
    %922 = vmatprep.subr.bf16.mxu0 %v769
    %923 = vmatpush2.bf16.msra.mxu0 %v768
    %924 = vmatprep.subr.bf16.mxu0 %v765
    %925 = vmatpush2.bf16.msra.mxu0 %v764
    %926 = vmatprep.subr.bf16.mxu0 %v761
    %927 = vmatpush2.bf16.msra.mxu0 %v760
    %928 = vmatprep.subr.bf16.mxu0 %v757
    %929 = vmatpush2.bf16.msra.mxu0 %v756
    %930 = vmatprep.subr.bf16.mxu0 %v753
    %931 = vmatpush2.bf16.msra.mxu0 %v752
    %932 = vmatprep.subr.bf16.mxu0 %v749
    %933 = vmatpush2.bf16.msra.mxu0 %v748
    %934 = vmatprep.subr.bf16.mxu0 %v745
    %935 = vmatpush2.bf16.msra.mxu0 %v744
    %936 = vmatprep.mubr.bf16.mxu0 %v268
    %937 = vmatmul.mubr.bf16.gmra.mxu0 %v267
    %v938 = vpop.f32.mrf.mxu0
    %v939 = vadd.f32 %v407, %v938
    %v940 = vpop.f32.mrf.mxu0
    %v941 = vadd.f32 %v411, %v940
    %v942 = vpop.f32.mrf.mxu0
    %v943 = vadd.f32 %v407, %v942
    %v944 = vpop.f32.mrf.mxu0
    %v945 = vadd.f32 %v411, %v944
    %946 = vmatprep.mubr.bf16.mxu0 %v271
    %947 = vmatmul.mubr.bf16.gmra.mxu0 %v270
    %v948 = vpop.f32.mrf.mxu0
    %v949 = vadd.f32 %v407, %v948
    %v950 = vpop.f32.mrf.mxu0
    %v951 = vadd.f32 %v411, %v950
    %v952 = vpop.f32.mrf.mxu0
    %v953 = vadd.f32 %v407, %v952
    %v954 = vpop.f32.mrf.mxu0
    %v955 = vadd.f32 %v411, %v954
    %956 = vmatprep.mubr.bf16.mxu0 %v274
    %957 = vmatmul.mubr.bf16.gmra.mxu0 %v273
    %v958 = vpop.f32.mrf.mxu0
    %v959 = vadd.f32 %v407, %v958
    %v960 = vpop.f32.mrf.mxu0
    %v961 = vadd.f32 %v411, %v960
    %v962 = vpop.f32.mrf.mxu0
    %v963 = vadd.f32 %v407, %v962
    %v964 = vpop.f32.mrf.mxu0
    %v965 = vadd.f32 %v411, %v964
    %966 = vmatprep.mubr.bf16.mxu0 %v277
    %967 = vmatmul.mubr.bf16.gmra.mxu0 %v276
    %v968 = vpop.f32.mrf.mxu0
    %v969 = vadd.f32 %v407, %v968
    %v970 = vpop.f32.mrf.mxu0
    %v971 = vadd.f32 %v411, %v970
    %v972 = vpop.f32.mrf.mxu0
    %v973 = vadd.f32 %v407, %v972
    %v974 = vpop.f32.mrf.mxu0
    %v975 = vadd.f32 %v411, %v974
    %976 = vmatprep.mubr.bf16.mxu0 %v280
    %977 = vmatmul.mubr.bf16.gmra.mxu0 %v279
    %v978 = vpop.f32.mrf.mxu0
    %v979 = vadd.f32 %v407, %v978
    %v980 = vpop.f32.mrf.mxu0
    %v981 = vadd.f32 %v411, %v980
    %v982 = vpop.f32.mrf.mxu0
    %v983 = vadd.f32 %v407, %v982
    %v984 = vpop.f32.mrf.mxu0
    %v985 = vadd.f32 %v411, %v984
    %986 = vmatprep.mubr.bf16.mxu0 %v283
    %987 = vmatmul.mubr.bf16.gmra.mxu0 %v282
    %v988 = vpop.f32.mrf.mxu0
    %v989 = vadd.f32 %v407, %v988
    %v990 = vpop.f32.mrf.mxu0
    %v991 = vadd.f32 %v411, %v990
    %v992 = vpop.f32.mrf.mxu0
    %v993 = vadd.f32 %v407, %v992
    %v994 = vpop.f32.mrf.mxu0
    %v995 = vadd.f32 %v411, %v994
    %996 = vmatprep.mubr.bf16.mxu0 %v286
    %997 = vmatmul.mubr.bf16.gmra.mxu0 %v285
    %v998 = vpop.f32.mrf.mxu0
    %v999 = vadd.f32 %v407, %v998
    %v1000 = vpop.f32.mrf.mxu0
    %v1001 = vadd.f32 %v411, %v1000
    %v1002 = vpop.f32.mrf.mxu0
    %v1003 = vadd.f32 %v407, %v1002
    %v1004 = vpop.f32.mrf.mxu0
    %v1005 = vadd.f32 %v411, %v1004
    %1006 = vmatprep.mubr.bf16.mxu0 %v289
    %1007 = vmatmul.mubr.bf16.gmra.mxu0 %v288
    %v1008 = vpop.f32.mrf.mxu0
    %v1009 = vadd.f32 %v407, %v1008
    %v1010 = vpop.f32.mrf.mxu0
    %v1011 = vadd.f32 %v411, %v1010
    %v1012 = vpop.f32.mrf.mxu0
    %v1013 = vadd.f32 %v407, %v1012
    %v1014 = vpop.f32.mrf.mxu0
    %v1015 = vadd.f32 %v411, %v1014
    %1016 = vmatprep.mubr.bf16.mxu0 %v292
    %1017 = vmatmul.mubr.bf16.gmra.mxu0 %v291
    %v1018 = vpop.f32.mrf.mxu0
    %v1019 = vadd.f32 %v407, %v1018
    %v1020 = vpop.f32.mrf.mxu0
    %v1021 = vadd.f32 %v411, %v1020
    %v1022 = vpop.f32.mrf.mxu0
    %v1023 = vadd.f32 %v407, %v1022
    %v1024 = vpop.f32.mrf.mxu0
    %v1025 = vadd.f32 %v411, %v1024
    %1026 = vmatprep.mubr.bf16.mxu0 %v295
    %1027 = vmatmul.mubr.bf16.gmra.mxu0 %v294
    %v1028 = vpop.f32.mrf.mxu0
    %v1029 = vadd.f32 %v407, %v1028
    %v1030 = vpop.f32.mrf.mxu0
    %v1031 = vadd.f32 %v411, %v1030
    %v1032 = vpop.f32.mrf.mxu0
    %v1033 = vadd.f32 %v407, %v1032
    %v1034 = vpop.f32.mrf.mxu0
    %v1035 = vadd.f32 %v411, %v1034
    %1036 = vmatprep.mubr.bf16.mxu0 %v298
    %1037 = vmatmul.mubr.bf16.gmra.mxu0 %v297
    %v1038 = vpop.f32.mrf.mxu0
    %v1039 = vadd.f32 %v407, %v1038
    %v1040 = vpop.f32.mrf.mxu0
    %v1041 = vadd.f32 %v411, %v1040
    %v1042 = vpop.f32.mrf.mxu0
    %v1043 = vadd.f32 %v407, %v1042
    %v1044 = vpop.f32.mrf.mxu0
    %v1045 = vadd.f32 %v411, %v1044
    %1046 = vmatprep.mubr.bf16.mxu0 %v301
    %1047 = vmatmul.mubr.bf16.gmra.mxu0 %v300
    %v1048 = vpop.f32.mrf.mxu0
    %v1049 = vadd.f32 %v407, %v1048
    %v1050 = vpop.f32.mrf.mxu0
    %v1051 = vadd.f32 %v411, %v1050
    %v1052 = vpop.f32.mrf.mxu0
    %v1053 = vadd.f32 %v407, %v1052
    %v1054 = vpop.f32.mrf.mxu0
    %v1055 = vadd.f32 %v411, %v1054
    %1056 = vmatprep.mubr.bf16.mxu0 %v304
    %1057 = vmatmul.mubr.bf16.gmra.mxu0 %v303
    %v1058 = vpop.f32.mrf.mxu0
    %v1059 = vadd.f32 %v407, %v1058
    %v1060 = vpop.f32.mrf.mxu0
    %v1061 = vadd.f32 %v411, %v1060
    %v1062 = vpop.f32.mrf.mxu0
    %v1063 = vadd.f32 %v407, %v1062
    %v1064 = vpop.f32.mrf.mxu0
    %v1065 = vadd.f32 %v411, %v1064
    %1066 = vdwg.mxu0
    %1067 = vmatprep.subr.bf16.mxu0 %v805
    %1068 = vmatpush1.bf16.msra.mxu0 %v804
    %1069 = vmatprep.subr.bf16.mxu0 %v801
    %1070 = vmatpush1.bf16.msra.mxu0 %v800
    %1071 = vmatprep.subr.bf16.mxu0 %v797
    %1072 = vmatpush1.bf16.msra.mxu0 %v796
    %1073 = vmatprep.subr.bf16.mxu0 %v793
    %1074 = vmatpush1.bf16.msra.mxu0 %v792
    %1075 = vmatprep.subr.bf16.mxu0 %v789
    %1076 = vmatpush1.bf16.msra.mxu0 %v788
    %1077 = vmatprep.subr.bf16.mxu0 %v785
    %1078 = vmatpush1.bf16.msra.mxu0 %v784
    %1079 = vmatprep.subr.bf16.mxu0 %v781
    %1080 = vmatpush1.bf16.msra.mxu0 %v780
    %1081 = vmatprep.subr.bf16.mxu0 %v777
    %1082 = vmatpush1.bf16.msra.mxu0 %v776
    %1083 = vmatprep.subr.bf16.mxu0 0
    %1084 = vmatpush2.bf16.msra.mxu0 0
    %1085 = vmatprep.subr.bf16.mxu0 0
    %1086 = vmatpush2.bf16.msra.mxu0 0
    %1087 = vmatprep.subr.bf16.mxu0 0
    %1088 = vmatpush2.bf16.msra.mxu0 0
    %1089 = vmatprep.subr.bf16.mxu0 0
    %1090 = vmatpush2.bf16.msra.mxu0 0
    %1091 = vmatprep.subr.bf16.mxu0 0
    %1092 = vmatpush2.bf16.msra.mxu0 0
    %1093 = vmatprep.subr.bf16.mxu0 0
    %1094 = vmatpush2.bf16.msra.mxu0 0
    %1095 = vmatprep.subr.bf16.mxu0 0
    %1096 = vmatpush2.bf16.msra.mxu0 0
    %1097 = vmatprep.subr.bf16.mxu0 0
    %1098 = vmatpush2.bf16.msra.mxu0 0
    %1099 = vmatprep.mubr.bf16.mxu0 0
    %1100 = vmatmul.mubr.bf16.gmra.mxu0 %v269
    %v1101 = vpop.f32.mrf.mxu0
    %v1102 = vadd.f32 %v939, %v1101
    %v1103 = vpop.f32.mrf.mxu0
    %v1104 = vadd.f32 %v941, %v1103
    %v1105 = vpop.f32.mrf.mxu0
    %v1106 = vadd.f32 %v943, %v1105
    %v1107 = vpop.f32.mrf.mxu0
    %v1108 = vadd.f32 %v945, %v1107
    %1109 = vmatprep.mubr.bf16.mxu0 0
    %1110 = vmatmul.mubr.bf16.gmra.mxu0 %v272
    %v1111 = vpop.f32.mrf.mxu0
    %v1112 = vadd.f32 %v949, %v1111
    %v1113 = vpop.f32.mrf.mxu0
    %v1114 = vadd.f32 %v951, %v1113
    %v1115 = vpop.f32.mrf.mxu0
    %v1116 = vadd.f32 %v953, %v1115
    %v1117 = vpop.f32.mrf.mxu0
    %v1118 = vadd.f32 %v955, %v1117
    %1119 = vmatprep.mubr.bf16.mxu0 0
    %1120 = vmatmul.mubr.bf16.gmra.mxu0 %v275
    %v1121 = vpop.f32.mrf.mxu0
    %v1122 = vadd.f32 %v959, %v1121
    %v1123 = vpop.f32.mrf.mxu0
    %v1124 = vadd.f32 %v961, %v1123
    %v1125 = vpop.f32.mrf.mxu0
    %v1126 = vadd.f32 %v963, %v1125
    %v1127 = vpop.f32.mrf.mxu0
    %v1128 = vadd.f32 %v965, %v1127
    %1129 = vmatprep.mubr.bf16.mxu0 0
    %1130 = vmatmul.mubr.bf16.gmra.mxu0 %v278
    %v1131 = vpop.f32.mrf.mxu0
    %v1132 = vadd.f32 %v969, %v1131
    %v1133 = vpop.f32.mrf.mxu0
    %v1134 = vadd.f32 %v971, %v1133
    %v1135 = vpop.f32.mrf.mxu0
    %v1136 = vadd.f32 %v973, %v1135
    %v1137 = vpop.f32.mrf.mxu0
    %v1138 = vadd.f32 %v975, %v1137
    %1139 = vmatprep.mubr.bf16.mxu0 0
    %1140 = vmatmul.mubr.bf16.gmra.mxu0 %v281
    %v1141 = vpop.f32.mrf.mxu0
    %v1142 = vadd.f32 %v979, %v1141
    %v1143 = vpop.f32.mrf.mxu0
    %v1144 = vadd.f32 %v981, %v1143
    %v1145 = vpop.f32.mrf.mxu0
    %v1146 = vadd.f32 %v983, %v1145
    %v1147 = vpop.f32.mrf.mxu0
    %v1148 = vadd.f32 %v985, %v1147
    %1149 = vmatprep.mubr.bf16.mxu0 0
    %1150 = vmatmul.mubr.bf16.gmra.mxu0 %v284
    %v1151 = vpop.f32.mrf.mxu0
    %v1152 = vadd.f32 %v989, %v1151
    %v1153 = vpop.f32.mrf.mxu0
    %v1154 = vadd.f32 %v991, %v1153
    %v1155 = vpop.f32.mrf.mxu0
    %v1156 = vadd.f32 %v993, %v1155
    %v1157 = vpop.f32.mrf.mxu0
    %v1158 = vadd.f32 %v995, %v1157
    %1159 = vmatprep.mubr.bf16.mxu0 0
    %1160 = vmatmul.mubr.bf16.gmra.mxu0 %v287
    %v1161 = vpop.f32.mrf.mxu0
    %v1162 = vadd.f32 %v999, %v1161
    %v1163 = vpop.f32.mrf.mxu0
    %v1164 = vadd.f32 %v1001, %v1163
    %v1165 = vpop.f32.mrf.mxu0
    %v1166 = vadd.f32 %v1003, %v1165
    %v1167 = vpop.f32.mrf.mxu0
    %v1168 = vadd.f32 %v1005, %v1167
    %1169 = vmatprep.mubr.bf16.mxu0 0
    %1170 = vmatmul.mubr.bf16.gmra.mxu0 %v290
    %v1171 = vpop.f32.mrf.mxu0
    %v1172 = vadd.f32 %v1009, %v1171
    %v1173 = vpop.f32.mrf.mxu0
    %v1174 = vadd.f32 %v1011, %v1173
    %v1175 = vpop.f32.mrf.mxu0
    %v1176 = vadd.f32 %v1013, %v1175
    %v1177 = vpop.f32.mrf.mxu0
    %v1178 = vadd.f32 %v1015, %v1177
    %1179 = vmatprep.mubr.bf16.mxu0 0
    %1180 = vmatmul.mubr.bf16.gmra.mxu0 %v293
    %v1181 = vpop.f32.mrf.mxu0
    %v1182 = vadd.f32 %v1019, %v1181
    %v1183 = vpop.f32.mrf.mxu0
    %v1184 = vadd.f32 %v1021, %v1183
    %v1185 = vpop.f32.mrf.mxu0
    %v1186 = vadd.f32 %v1023, %v1185
    %v1187 = vpop.f32.mrf.mxu0
    %v1188 = vadd.f32 %v1025, %v1187
    %1189 = vmatprep.mubr.bf16.mxu0 0
    %1190 = vmatmul.mubr.bf16.gmra.mxu0 %v296
    %v1191 = vpop.f32.mrf.mxu0
    %v1192 = vadd.f32 %v1029, %v1191
    %v1193 = vpop.f32.mrf.mxu0
    %v1194 = vadd.f32 %v1031, %v1193
    %v1195 = vpop.f32.mrf.mxu0
    %v1196 = vadd.f32 %v1033, %v1195
    %v1197 = vpop.f32.mrf.mxu0
    %v1198 = vadd.f32 %v1035, %v1197
    %1199 = vmatprep.mubr.bf16.mxu0 0
    %1200 = vmatmul.mubr.bf16.gmra.mxu0 %v299
    %v1201 = vpop.f32.mrf.mxu0
    %v1202 = vadd.f32 %v1039, %v1201
    %v1203 = vpop.f32.mrf.mxu0
    %v1204 = vadd.f32 %v1041, %v1203
    %v1205 = vpop.f32.mrf.mxu0
    %v1206 = vadd.f32 %v1043, %v1205
    %v1207 = vpop.f32.mrf.mxu0
    %v1208 = vadd.f32 %v1045, %v1207
    %1209 = vmatprep.mubr.bf16.mxu0 0
    %1210 = vmatmul.mubr.bf16.gmra.mxu0 %v302
    %v1211 = vpop.f32.mrf.mxu0
    %v1212 = vadd.f32 %v1049, %v1211
    %v1213 = vpop.f32.mrf.mxu0
    %v1214 = vadd.f32 %v1051, %v1213
    %v1215 = vpop.f32.mrf.mxu0
    %v1216 = vadd.f32 %v1053, %v1215
    %v1217 = vpop.f32.mrf.mxu0
    %v1218 = vadd.f32 %v1055, %v1217
    %1219 = vmatprep.mubr.bf16.mxu0 0
    %1220 = vmatmul.mubr.bf16.gmra.mxu0 %v305
    %v1221 = vpop.f32.mrf.mxu0
    %v1222 = vadd.f32 %v1059, %v1221
    %v1223 = vpop.f32.mrf.mxu0
    %v1224 = vadd.f32 %v1061, %v1223
    %v1225 = vpop.f32.mrf.mxu0
    %v1226 = vadd.f32 %v1063, %v1225
    %v1227 = vpop.f32.mrf.mxu0
    %v1228 = vadd.f32 %v1065, %v1227
    %1229 = vdwg.mxu0
    %1230 = vmatprep.subr.bf16.mxu0 %v743
    %1231 = vmatpush1.bf16.msra.mxu0 %v742
    %1232 = vmatprep.subr.bf16.mxu0 %v739
    %1233 = vmatpush1.bf16.msra.mxu0 %v738
    %1234 = vmatprep.subr.bf16.mxu0 %v735
    %1235 = vmatpush1.bf16.msra.mxu0 %v734
    %1236 = vmatprep.subr.bf16.mxu0 %v731
    %1237 = vmatpush1.bf16.msra.mxu0 %v730
    %1238 = vmatprep.subr.bf16.mxu0 %v727
    %1239 = vmatpush1.bf16.msra.mxu0 %v726
    %1240 = vmatprep.subr.bf16.mxu0 %v723
    %1241 = vmatpush1.bf16.msra.mxu0 %v722
    %1242 = vmatprep.subr.bf16.mxu0 %v719
    %1243 = vmatpush1.bf16.msra.mxu0 %v718
    %1244 = vmatprep.subr.bf16.mxu0 %v715
    %1245 = vmatpush1.bf16.msra.mxu0 %v714
    %1246 = vmatprep.subr.bf16.mxu0 %v775
    %1247 = vmatpush2.bf16.msra.mxu0 %v774
    %1248 = vmatprep.subr.bf16.mxu0 %v771
    %1249 = vmatpush2.bf16.msra.mxu0 %v770
    %1250 = vmatprep.subr.bf16.mxu0 %v767
    %1251 = vmatpush2.bf16.msra.mxu0 %v766
    %1252 = vmatprep.subr.bf16.mxu0 %v763
    %1253 = vmatpush2.bf16.msra.mxu0 %v762
    %1254 = vmatprep.subr.bf16.mxu0 %v759
    %1255 = vmatpush2.bf16.msra.mxu0 %v758
    %1256 = vmatprep.subr.bf16.mxu0 %v755
    %1257 = vmatpush2.bf16.msra.mxu0 %v754
    %1258 = vmatprep.subr.bf16.mxu0 %v751
    %1259 = vmatpush2.bf16.msra.mxu0 %v750
    %1260 = vmatprep.subr.bf16.mxu0 %v747
    %1261 = vmatpush2.bf16.msra.mxu0 %v746
    %1262 = vmatprep.mubr.bf16.mxu0 %v268
    %1263 = vmatmul.mubr.bf16.gmra.mxu0 %v267
    %v1264 = vpop.f32.mrf.mxu0
    %v1265 = vadd.f32 %v415, %v1264
    %v1266 = vpop.f32.mrf.mxu0
    %v1267 = vadd.f32 %v419, %v1266
    %v1268 = vpop.f32.mrf.mxu0
    %v1269 = vadd.f32 %v415, %v1268
    %v1270 = vpop.f32.mrf.mxu0
    %v1271 = vadd.f32 %v419, %v1270
    %1272 = vmatprep.mubr.bf16.mxu0 %v271
    %1273 = vmatmul.mubr.bf16.gmra.mxu0 %v270
    %v1274 = vpop.f32.mrf.mxu0
    %v1275 = vadd.f32 %v415, %v1274
    %v1276 = vpop.f32.mrf.mxu0
    %v1277 = vadd.f32 %v419, %v1276
    %v1278 = vpop.f32.mrf.mxu0
    %v1279 = vadd.f32 %v415, %v1278
    %v1280 = vpop.f32.mrf.mxu0
    %v1281 = vadd.f32 %v419, %v1280
    %1282 = vmatprep.mubr.bf16.mxu0 %v274
    %1283 = vmatmul.mubr.bf16.gmra.mxu0 %v273
    %v1284 = vpop.f32.mrf.mxu0
    %v1285 = vadd.f32 %v415, %v1284
    %v1286 = vpop.f32.mrf.mxu0
    %v1287 = vadd.f32 %v419, %v1286
    %v1288 = vpop.f32.mrf.mxu0
    %v1289 = vadd.f32 %v415, %v1288
    %v1290 = vpop.f32.mrf.mxu0
    %v1291 = vadd.f32 %v419, %v1290
    %1292 = vmatprep.mubr.bf16.mxu0 %v277
    %1293 = vmatmul.mubr.bf16.gmra.mxu0 %v276
    %v1294 = vpop.f32.mrf.mxu0
    %v1295 = vadd.f32 %v415, %v1294
    %v1296 = vpop.f32.mrf.mxu0
    %v1297 = vadd.f32 %v419, %v1296
    %v1298 = vpop.f32.mrf.mxu0
    %v1299 = vadd.f32 %v415, %v1298
    %v1300 = vpop.f32.mrf.mxu0
    %v1301 = vadd.f32 %v419, %v1300
    %1302 = vmatprep.mubr.bf16.mxu0 %v280
    %1303 = vmatmul.mubr.bf16.gmra.mxu0 %v279
    %v1304 = vpop.f32.mrf.mxu0
    %v1305 = vadd.f32 %v415, %v1304
    %v1306 = vpop.f32.mrf.mxu0
    %v1307 = vadd.f32 %v419, %v1306
    %v1308 = vpop.f32.mrf.mxu0
    %v1309 = vadd.f32 %v415, %v1308
    %v1310 = vpop.f32.mrf.mxu0
    %v1311 = vadd.f32 %v419, %v1310
    %1312 = vmatprep.mubr.bf16.mxu0 %v283
    %1313 = vmatmul.mubr.bf16.gmra.mxu0 %v282
    %v1314 = vpop.f32.mrf.mxu0
    %v1315 = vadd.f32 %v415, %v1314
    %v1316 = vpop.f32.mrf.mxu0
    %v1317 = vadd.f32 %v419, %v1316
    %v1318 = vpop.f32.mrf.mxu0
    %v1319 = vadd.f32 %v415, %v1318
    %v1320 = vpop.f32.mrf.mxu0
    %v1321 = vadd.f32 %v419, %v1320
    %1322 = vmatprep.mubr.bf16.mxu0 %v286
    %1323 = vmatmul.mubr.bf16.gmra.mxu0 %v285
    %v1324 = vpop.f32.mrf.mxu0
    %v1325 = vadd.f32 %v415, %v1324
    %v1326 = vpop.f32.mrf.mxu0
    %v1327 = vadd.f32 %v419, %v1326
    %v1328 = vpop.f32.mrf.mxu0
    %v1329 = vadd.f32 %v415, %v1328
    %v1330 = vpop.f32.mrf.mxu0
    %v1331 = vadd.f32 %v419, %v1330
    %1332 = vmatprep.mubr.bf16.mxu0 %v289
    %1333 = vmatmul.mubr.bf16.gmra.mxu0 %v288
    %v1334 = vpop.f32.mrf.mxu0
    %v1335 = vadd.f32 %v415, %v1334
    %v1336 = vpop.f32.mrf.mxu0
    %v1337 = vadd.f32 %v419, %v1336
    %v1338 = vpop.f32.mrf.mxu0
    %v1339 = vadd.f32 %v415, %v1338
    %v1340 = vpop.f32.mrf.mxu0
    %v1341 = vadd.f32 %v419, %v1340
    %1342 = vmatprep.mubr.bf16.mxu0 %v292
    %1343 = vmatmul.mubr.bf16.gmra.mxu0 %v291
    %v1344 = vpop.f32.mrf.mxu0
    %v1345 = vadd.f32 %v415, %v1344
    %v1346 = vpop.f32.mrf.mxu0
    %v1347 = vadd.f32 %v419, %v1346
    %v1348 = vpop.f32.mrf.mxu0
    %v1349 = vadd.f32 %v415, %v1348
    %v1350 = vpop.f32.mrf.mxu0
    %v1351 = vadd.f32 %v419, %v1350
    %1352 = vmatprep.mubr.bf16.mxu0 %v295
    %1353 = vmatmul.mubr.bf16.gmra.mxu0 %v294
    %v1354 = vpop.f32.mrf.mxu0
    %v1355 = vadd.f32 %v415, %v1354
    %v1356 = vpop.f32.mrf.mxu0
    %v1357 = vadd.f32 %v419, %v1356
    %v1358 = vpop.f32.mrf.mxu0
    %v1359 = vadd.f32 %v415, %v1358
    %v1360 = vpop.f32.mrf.mxu0
    %v1361 = vadd.f32 %v419, %v1360
    %1362 = vmatprep.mubr.bf16.mxu0 %v298
    %1363 = vmatmul.mubr.bf16.gmra.mxu0 %v297
    %v1364 = vpop.f32.mrf.mxu0
    %v1365 = vadd.f32 %v415, %v1364
    %v1366 = vpop.f32.mrf.mxu0
    %v1367 = vadd.f32 %v419, %v1366
    %v1368 = vpop.f32.mrf.mxu0
    %v1369 = vadd.f32 %v415, %v1368
    %v1370 = vpop.f32.mrf.mxu0
    %v1371 = vadd.f32 %v419, %v1370
    %1372 = vmatprep.mubr.bf16.mxu0 %v301
    %1373 = vmatmul.mubr.bf16.gmra.mxu0 %v300
    %v1374 = vpop.f32.mrf.mxu0
    %v1375 = vadd.f32 %v415, %v1374
    %v1376 = vpop.f32.mrf.mxu0
    %v1377 = vadd.f32 %v419, %v1376
    %v1378 = vpop.f32.mrf.mxu0
    %v1379 = vadd.f32 %v415, %v1378
    %v1380 = vpop.f32.mrf.mxu0
    %v1381 = vadd.f32 %v419, %v1380
    %1382 = vmatprep.mubr.bf16.mxu0 %v304
    %1383 = vmatmul.mubr.bf16.gmra.mxu0 %v303
    %v1384 = vpop.f32.mrf.mxu0
    %v1385 = vadd.f32 %v415, %v1384
    %v1386 = vpop.f32.mrf.mxu0
    %v1387 = vadd.f32 %v419, %v1386
    %v1388 = vpop.f32.mrf.mxu0
    %v1389 = vadd.f32 %v415, %v1388
    %v1390 = vpop.f32.mrf.mxu0
    %v1391 = vadd.f32 %v419, %v1390
    %1392 = vdwg.mxu0
    %1393 = vmatprep.subr.bf16.mxu0 %v807
    %1394 = vmatpush1.bf16.msra.mxu0 %v806
    %1395 = vmatprep.subr.bf16.mxu0 %v803
    %1396 = vmatpush1.bf16.msra.mxu0 %v802
    %1397 = vmatprep.subr.bf16.mxu0 %v799
    %1398 = vmatpush1.bf16.msra.mxu0 %v798
    %1399 = vmatprep.subr.bf16.mxu0 %v795
    %1400 = vmatpush1.bf16.msra.mxu0 %v794
    %1401 = vmatprep.subr.bf16.mxu0 %v791
    %1402 = vmatpush1.bf16.msra.mxu0 %v790
    %1403 = vmatprep.subr.bf16.mxu0 %v787
    %1404 = vmatpush1.bf16.msra.mxu0 %v786
    %1405 = vmatprep.subr.bf16.mxu0 %v783
    %1406 = vmatpush1.bf16.msra.mxu0 %v782
    %1407 = vmatprep.subr.bf16.mxu0 %v779
    %1408 = vmatpush1.bf16.msra.mxu0 %v778
    %1409 = vmatprep.subr.bf16.mxu0 0
    %1410 = vmatpush2.bf16.msra.mxu0 0
    %1411 = vmatprep.subr.bf16.mxu0 0
    %1412 = vmatpush2.bf16.msra.mxu0 0
    %1413 = vmatprep.subr.bf16.mxu0 0
    %1414 = vmatpush2.bf16.msra.mxu0 0
    %1415 = vmatprep.subr.bf16.mxu0 0
    %1416 = vmatpush2.bf16.msra.mxu0 0
    %1417 = vmatprep.subr.bf16.mxu0 0
    %1418 = vmatpush2.bf16.msra.mxu0 0
    %1419 = vmatprep.subr.bf16.mxu0 0
    %1420 = vmatpush2.bf16.msra.mxu0 0
    %1421 = vmatprep.subr.bf16.mxu0 0
    %1422 = vmatpush2.bf16.msra.mxu0 0
    %1423 = vmatprep.subr.bf16.mxu0 0
    %1424 = vmatpush2.bf16.msra.mxu0 0
    %1425 = vmatprep.mubr.bf16.mxu0 0
    %1426 = vmatmul.mubr.bf16.gmra.mxu0 %v269
    %v1427 = vpop.f32.mrf.mxu0
    %v1428 = vadd.f32 %v1265, %v1427
    %v1429 = vpop.f32.mrf.mxu0
    %v1430 = vadd.f32 %v1267, %v1429
    %v1431 = vpop.f32.mrf.mxu0
    %v1432 = vadd.f32 %v1269, %v1431
    %v1433 = vpop.f32.mrf.mxu0
    %v1434 = vadd.f32 %v1271, %v1433
    %1435 = vmatprep.mubr.bf16.mxu0 0
    %1436 = vmatmul.mubr.bf16.gmra.mxu0 %v272
    %v1437 = vpop.f32.mrf.mxu0
    %v1438 = vadd.f32 %v1275, %v1437
    %v1439 = vpop.f32.mrf.mxu0
    %v1440 = vadd.f32 %v1277, %v1439
    %v1441 = vpop.f32.mrf.mxu0
    %v1442 = vadd.f32 %v1279, %v1441
    %v1443 = vpop.f32.mrf.mxu0
    %v1444 = vadd.f32 %v1281, %v1443
    %1445 = vmatprep.mubr.bf16.mxu0 0
    %1446 = vmatmul.mubr.bf16.gmra.mxu0 %v275
    %v1447 = vpop.f32.mrf.mxu0
    %v1448 = vadd.f32 %v1285, %v1447
    %v1449 = vpop.f32.mrf.mxu0
    %v1450 = vadd.f32 %v1287, %v1449
    %v1451 = vpop.f32.mrf.mxu0
    %v1452 = vadd.f32 %v1289, %v1451
    %v1453 = vpop.f32.mrf.mxu0
    %v1454 = vadd.f32 %v1291, %v1453
    %1455 = vmatprep.mubr.bf16.mxu0 0
    %1456 = vmatmul.mubr.bf16.gmra.mxu0 %v278
    %v1457 = vpop.f32.mrf.mxu0
    %v1458 = vadd.f32 %v1295, %v1457
    %v1459 = vpop.f32.mrf.mxu0
    %v1460 = vadd.f32 %v1297, %v1459
    %v1461 = vpop.f32.mrf.mxu0
    %v1462 = vadd.f32 %v1299, %v1461
    %v1463 = vpop.f32.mrf.mxu0
    %v1464 = vadd.f32 %v1301, %v1463
    %1465 = vmatprep.mubr.bf16.mxu0 0
    %1466 = vmatmul.mubr.bf16.gmra.mxu0 %v281
    %v1467 = vpop.f32.mrf.mxu0
    %v1468 = vadd.f32 %v1305, %v1467
    %v1469 = vpop.f32.mrf.mxu0
    %v1470 = vadd.f32 %v1307, %v1469
    %v1471 = vpop.f32.mrf.mxu0
    %v1472 = vadd.f32 %v1309, %v1471
    %v1473 = vpop.f32.mrf.mxu0
    %v1474 = vadd.f32 %v1311, %v1473
    %1475 = vmatprep.mubr.bf16.mxu0 0
    %1476 = vmatmul.mubr.bf16.gmra.mxu0 %v284
    %v1477 = vpop.f32.mrf.mxu0
    %v1478 = vadd.f32 %v1315, %v1477
    %v1479 = vpop.f32.mrf.mxu0
    %v1480 = vadd.f32 %v1317, %v1479
    %v1481 = vpop.f32.mrf.mxu0
    %v1482 = vadd.f32 %v1319, %v1481
    %v1483 = vpop.f32.mrf.mxu0
    %v1484 = vadd.f32 %v1321, %v1483
    %1485 = vmatprep.mubr.bf16.mxu0 0
    %1486 = vmatmul.mubr.bf16.gmra.mxu0 %v287
    %v1487 = vpop.f32.mrf.mxu0
    %v1488 = vadd.f32 %v1325, %v1487
    %v1489 = vpop.f32.mrf.mxu0
    %v1490 = vadd.f32 %v1327, %v1489
    %v1491 = vpop.f32.mrf.mxu0
    %v1492 = vadd.f32 %v1329, %v1491
    %v1493 = vpop.f32.mrf.mxu0
    %v1494 = vadd.f32 %v1331, %v1493
    %1495 = vmatprep.mubr.bf16.mxu0 0
    %1496 = vmatmul.mubr.bf16.gmra.mxu0 %v290
    %v1497 = vpop.f32.mrf.mxu0
    %v1498 = vadd.f32 %v1335, %v1497
    %v1499 = vpop.f32.mrf.mxu0
    %v1500 = vadd.f32 %v1337, %v1499
    %v1501 = vpop.f32.mrf.mxu0
    %v1502 = vadd.f32 %v1339, %v1501
    %v1503 = vpop.f32.mrf.mxu0
    %v1504 = vadd.f32 %v1341, %v1503
    %1505 = vmatprep.mubr.bf16.mxu0 0
    %1506 = vmatmul.mubr.bf16.gmra.mxu0 %v293
    %v1507 = vpop.f32.mrf.mxu0
    %v1508 = vadd.f32 %v1345, %v1507
    %v1509 = vpop.f32.mrf.mxu0
    %v1510 = vadd.f32 %v1347, %v1509
    %v1511 = vpop.f32.mrf.mxu0
    %v1512 = vadd.f32 %v1349, %v1511
    %v1513 = vpop.f32.mrf.mxu0
    %v1514 = vadd.f32 %v1351, %v1513
    %1515 = vmatprep.mubr.bf16.mxu0 0
    %1516 = vmatmul.mubr.bf16.gmra.mxu0 %v296
    %v1517 = vpop.f32.mrf.mxu0
    %v1518 = vadd.f32 %v1355, %v1517
    %v1519 = vpop.f32.mrf.mxu0
    %v1520 = vadd.f32 %v1357, %v1519
    %v1521 = vpop.f32.mrf.mxu0
    %v1522 = vadd.f32 %v1359, %v1521
    %v1523 = vpop.f32.mrf.mxu0
    %v1524 = vadd.f32 %v1361, %v1523
    %1525 = vmatprep.mubr.bf16.mxu0 0
    %1526 = vmatmul.mubr.bf16.gmra.mxu0 %v299
    %v1527 = vpop.f32.mrf.mxu0
    %v1528 = vadd.f32 %v1365, %v1527
    %v1529 = vpop.f32.mrf.mxu0
    %v1530 = vadd.f32 %v1367, %v1529
    %v1531 = vpop.f32.mrf.mxu0
    %v1532 = vadd.f32 %v1369, %v1531
    %v1533 = vpop.f32.mrf.mxu0
    %v1534 = vadd.f32 %v1371, %v1533
    %1535 = vmatprep.mubr.bf16.mxu0 0
    %1536 = vmatmul.mubr.bf16.gmra.mxu0 %v302
    %v1537 = vpop.f32.mrf.mxu0
    %v1538 = vadd.f32 %v1375, %v1537
    %v1539 = vpop.f32.mrf.mxu0
    %v1540 = vadd.f32 %v1377, %v1539
    %v1541 = vpop.f32.mrf.mxu0
    %v1542 = vadd.f32 %v1379, %v1541
    %v1543 = vpop.f32.mrf.mxu0
    %v1544 = vadd.f32 %v1381, %v1543
    %1545 = vmatprep.mubr.bf16.mxu0 0
    %1546 = vmatmul.mubr.bf16.gmra.mxu0 %v305
    %v1547 = vpop.f32.mrf.mxu0
    %v1548 = vadd.f32 %v1385, %v1547
    %v1549 = vpop.f32.mrf.mxu0
    %v1550 = vadd.f32 %v1387, %v1549
    %v1551 = vpop.f32.mrf.mxu0
    %v1552 = vadd.f32 %v1389, %v1551
    %v1553 = vpop.f32.mrf.mxu0
    %v1554 = vadd.f32 %v1391, %v1553
    %1555 = vdwg.mxu0
    %v1556 = vmax.f32 %v1102, 0.0
    %v1557 = vmax.f32 %v1104, 0.0
    %v1558 = vmax.f32 %v1428, 0.0
    %v1559 = vmax.f32 %v1430, 0.0
    %v1560 = vmax.f32 %v1106, 0.0
    %v1561 = vmax.f32 %v1108, 0.0
    %v1562 = vmax.f32 %v1432, 0.0
    %v1563 = vmax.f32 %v1434, 0.0
    %v1564 = vmax.f32 %v1112, 0.0
    %v1565 = vmax.f32 %v1114, 0.0
    %v1566 = vmax.f32 %v1438, 0.0
    %v1567 = vmax.f32 %v1440, 0.0
    %v1568 = vmax.f32 %v1116, 0.0
    %v1569 = vmax.f32 %v1118, 0.0
    %v1570 = vmax.f32 %v1442, 0.0
    %v1571 = vmax.f32 %v1444, 0.0
    %v1572 = vmax.f32 %v1122, 0.0
    %v1573 = vmax.f32 %v1124, 0.0
    %v1574 = vmax.f32 %v1448, 0.0
    %v1575 = vmax.f32 %v1450, 0.0
    %v1576 = vmax.f32 %v1126, 0.0
    %v1577 = vmax.f32 %v1128, 0.0
    %v1578 = vmax.f32 %v1452, 0.0
    %v1579 = vmax.f32 %v1454, 0.0
    %v1580 = vmax.f32 %v1132, 0.0
    %v1581 = vmax.f32 %v1134, 0.0
    %v1582 = vmax.f32 %v1458, 0.0
    %v1583 = vmax.f32 %v1460, 0.0
    %v1584 = vmax.f32 %v1136, 0.0
    %v1585 = vmax.f32 %v1138, 0.0
    %v1586 = vmax.f32 %v1462, 0.0
    %v1587 = vmax.f32 %v1464, 0.0
    %v1588 = vmax.f32 %v1142, 0.0
    %v1589 = vmax.f32 %v1144, 0.0
    %v1590 = vmax.f32 %v1468, 0.0
    %v1591 = vmax.f32 %v1470, 0.0
    %v1592 = vmax.f32 %v1146, 0.0
    %v1593 = vmax.f32 %v1148, 0.0
    %v1594 = vmax.f32 %v1472, 0.0
    %v1595 = vmax.f32 %v1474, 0.0
    %v1596 = vmax.f32 %v1152, 0.0
    %v1597 = vmax.f32 %v1154, 0.0
    %v1598 = vmax.f32 %v1478, 0.0
    %v1599 = vmax.f32 %v1480, 0.0
    %v1600 = vmax.f32 %v1156, 0.0
    %v1601 = vmax.f32 %v1158, 0.0
    %v1602 = vmax.f32 %v1482, 0.0
    %v1603 = vmax.f32 %v1484, 0.0
    %v1604 = vmax.f32 %v1162, 0.0
    %v1605 = vmax.f32 %v1164, 0.0
    %v1606 = vmax.f32 %v1488, 0.0
    %v1607 = vmax.f32 %v1490, 0.0
    %v1608 = vmax.f32 %v1166, 0.0
    %v1609 = vmax.f32 %v1168, 0.0
    %v1610 = vmax.f32 %v1492, 0.0
    %v1611 = vmax.f32 %v1494, 0.0
    %v1612 = vmax.f32 %v1172, 0.0
    %v1613 = vmax.f32 %v1174, 0.0
    %v1614 = vmax.f32 %v1498, 0.0
    %v1615 = vmax.f32 %v1500, 0.0
    %v1616 = vmax.f32 %v1176, 0.0
    %v1617 = vmax.f32 %v1178, 0.0
    %v1618 = vmax.f32 %v1502, 0.0
    %v1619 = vmax.f32 %v1504, 0.0
    %v1620 = vmax.f32 %v1182, 0.0
    %v1621 = vmax.f32 %v1184, 0.0
    %v1622 = vmax.f32 %v1508, 0.0
    %v1623 = vmax.f32 %v1510, 0.0
    %v1624 = vmax.f32 %v1186, 0.0
    %v1625 = vmax.f32 %v1188, 0.0
    %v1626 = vmax.f32 %v1512, 0.0
    %v1627 = vmax.f32 %v1514, 0.0
    %v1628 = vmax.f32 %v1192, 0.0
    %v1629 = vmax.f32 %v1194, 0.0
    %v1630 = vmax.f32 %v1518, 0.0
    %v1631 = vmax.f32 %v1520, 0.0
    %v1632 = vmax.f32 %v1196, 0.0
    %v1633 = vmax.f32 %v1198, 0.0
    %v1634 = vmax.f32 %v1522, 0.0
    %v1635 = vmax.f32 %v1524, 0.0
    %v1636 = vmax.f32 %v1202, 0.0
    %v1637 = vmax.f32 %v1204, 0.0
    %v1638 = vmax.f32 %v1528, 0.0
    %v1639 = vmax.f32 %v1530, 0.0
    %v1640 = vmax.f32 %v1206, 0.0
    %v1641 = vmax.f32 %v1208, 0.0
    %v1642 = vmax.f32 %v1532, 0.0
    %v1643 = vmax.f32 %v1534, 0.0
    %v1644 = vmax.f32 %v1212, 0.0
    %v1645 = vmax.f32 %v1214, 0.0
    %v1646 = vmax.f32 %v1538, 0.0
    %v1647 = vmax.f32 %v1540, 0.0
    %v1648 = vmax.f32 %v1216, 0.0
    %v1649 = vmax.f32 %v1218, 0.0
    %v1650 = vmax.f32 %v1542, 0.0
    %v1651 = vmax.f32 %v1544, 0.0
    %v1652 = vmax.f32 %v1222, 0.0
    %v1653 = vmax.f32 %v1224, 0.0
    %v1654 = vmax.f32 %v1548, 0.0
    %v1655 = vmax.f32 %v1550, 0.0
    %v1656 = vmax.f32 %v1226, 0.0
    %v1657 = vmax.f32 %v1228, 0.0
    %v1658 = vmax.f32 %v1552, 0.0
    %v1659 = vmax.f32 %v1554, 0.0
    %v1660 = vmax.f32 %v1556, %v1558
    %v1661 = vmax.f32 %v1557, %v1559
    %v1662 = vmax.f32 %v1560, %v1562
    %v1663 = vmax.f32 %v1561, %v1563
    %v1664 = vmax.f32 %v1564, %v1566
    %v1665 = vmax.f32 %v1565, %v1567
    %v1666 = vmax.f32 %v1568, %v1570
    %v1667 = vmax.f32 %v1569, %v1571
    %v1668 = vmax.f32 %v1572, %v1574
    %v1669 = vmax.f32 %v1573, %v1575
    %v1670 = vmax.f32 %v1576, %v1578
    %v1671 = vmax.f32 %v1577, %v1579
    %v1672 = vmax.f32 %v1580, %v1582
    %v1673 = vmax.f32 %v1581, %v1583
    %v1674 = vmax.f32 %v1584, %v1586
    %v1675 = vmax.f32 %v1585, %v1587
    %v1676 = vmax.f32 %v1588, %v1590
    %v1677 = vmax.f32 %v1589, %v1591
    %v1678 = vmax.f32 %v1592, %v1594
    %v1679 = vmax.f32 %v1593, %v1595
    %v1680 = vmax.f32 %v1596, %v1598
    %v1681 = vmax.f32 %v1597, %v1599
    %v1682 = vmax.f32 %v1600, %v1602
    %v1683 = vmax.f32 %v1601, %v1603
    %v1684 = vmax.f32 %v1604, %v1606
    %v1685 = vmax.f32 %v1605, %v1607
    %v1686 = vmax.f32 %v1608, %v1610
    %v1687 = vmax.f32 %v1609, %v1611
    %v1688 = vmax.f32 %v1612, %v1614
    %v1689 = vmax.f32 %v1613, %v1615
    %v1690 = vmax.f32 %v1616, %v1618
    %v1691 = vmax.f32 %v1617, %v1619
    %v1692 = vmax.f32 %v1620, %v1622
    %v1693 = vmax.f32 %v1621, %v1623
    %v1694 = vmax.f32 %v1624, %v1626
    %v1695 = vmax.f32 %v1625, %v1627
    %v1696 = vmax.f32 %v1628, %v1630
    %v1697 = vmax.f32 %v1629, %v1631
    %v1698 = vmax.f32 %v1632, %v1634
    %v1699 = vmax.f32 %v1633, %v1635
    %v1700 = vmax.f32 %v1636, %v1638
    %v1701 = vmax.f32 %v1637, %v1639
    %v1702 = vmax.f32 %v1640, %v1642
    %v1703 = vmax.f32 %v1641, %v1643
    %v1704 = vmax.f32 %v1644, %v1646
    %v1705 = vmax.f32 %v1645, %v1647
    %v1706 = vmax.f32 %v1648, %v1650
    %v1707 = vmax.f32 %v1649, %v1651
    %v1708 = vmax.f32 %v1652, %v1654
    %v1709 = vmax.f32 %v1653, %v1655
    %v1710 = vmax.f32 %v1656, %v1658
    %v1711 = vmax.f32 %v1657, %v1659
    %v1764 = vrot.slane %v1660, 1
    %v1765 = vrot.slane %v1662, 1
    %v1766 = vsel %vm111, %v1764, %v1765
    %v1767 = vrot.slane %v1661, 1
    %v1768 = vrot.slane %v1663, 1
    %v1769 = vsel %vm111, %v1767, %v1768
    %v1770 = vrot.slane %v1664, 1
    %v1771 = vsel %vm111, %v1765, %v1770
    %v1772 = vrot.slane %v1665, 1
    %v1773 = vsel %vm111, %v1768, %v1772
    %v1774 = vrot.slane %v1666, 1
    %v1775 = vsel %vm111, %v1770, %v1774
    %v1776 = vrot.slane %v1667, 1
    %v1777 = vsel %vm111, %v1772, %v1776
    %v1778 = vrot.slane %v1668, 1
    %v1779 = vsel %vm111, %v1774, %v1778
    %v1780 = vrot.slane %v1669, 1
    %v1781 = vsel %vm111, %v1776, %v1780
    %v1782 = vrot.slane %v1670, 1
    %v1783 = vsel %vm111, %v1778, %v1782
    %v1784 = vrot.slane %v1671, 1
    %v1785 = vsel %vm111, %v1780, %v1784
    %v1786 = vrot.slane %v1672, 1
    %v1787 = vsel %vm111, %v1782, %v1786
    %v1788 = vrot.slane %v1673, 1
    %v1789 = vsel %vm111, %v1784, %v1788
    %v1790 = vrot.slane %v1674, 1
    %v1791 = vsel %vm111, %v1786, %v1790
    %v1792 = vrot.slane %v1675, 1
    %v1793 = vsel %vm111, %v1788, %v1792
    %v1794 = vrot.slane %v1676, 1
    %v1795 = vsel %vm111, %v1790, %v1794
    %v1796 = vrot.slane %v1677, 1
    %v1797 = vsel %vm111, %v1792, %v1796
    %v1798 = vrot.slane %v1678, 1
    %v1799 = vsel %vm111, %v1794, %v1798
    %v1800 = vrot.slane %v1679, 1
    %v1801 = vsel %vm111, %v1796, %v1800
    %v1802 = vrot.slane %v1680, 1
    %v1803 = vsel %vm111, %v1798, %v1802
    %v1804 = vrot.slane %v1681, 1
    %v1805 = vsel %vm111, %v1800, %v1804
    %v1806 = vrot.slane %v1682, 1
    %v1807 = vsel %vm111, %v1802, %v1806
    %v1808 = vrot.slane %v1683, 1
    %v1809 = vsel %vm111, %v1804, %v1808
    %v1810 = vrot.slane %v1684, 1
    %v1811 = vsel %vm111, %v1806, %v1810
    %v1812 = vrot.slane %v1685, 1
    %v1813 = vsel %vm111, %v1808, %v1812
    %v1814 = vrot.slane %v1686, 1
    %v1815 = vsel %vm111, %v1810, %v1814
    %v1816 = vrot.slane %v1687, 1
    %v1817 = vsel %vm111, %v1812, %v1816
    %v1818 = vrot.slane %v1688, 1
    %v1819 = vsel %vm111, %v1814, %v1818
    %v1820 = vrot.slane %v1689, 1
    %v1821 = vsel %vm111, %v1816, %v1820
    %v1822 = vrot.slane %v1690, 1
    %v1823 = vsel %vm111, %v1818, %v1822
    %v1824 = vrot.slane %v1691, 1
    %v1825 = vsel %vm111, %v1820, %v1824
    %v1826 = vrot.slane %v1692, 1
    %v1827 = vsel %vm111, %v1822, %v1826
    %v1828 = vrot.slane %v1693, 1
    %v1829 = vsel %vm111, %v1824, %v1828
    %v1830 = vrot.slane %v1694, 1
    %v1831 = vsel %vm111, %v1826, %v1830
    %v1832 = vrot.slane %v1695, 1
    %v1833 = vsel %vm111, %v1828, %v1832
    %v1834 = vrot.slane %v1696, 1
    %v1835 = vsel %vm111, %v1830, %v1834
    %v1836 = vrot.slane %v1697, 1
    %v1837 = vsel %vm111, %v1832, %v1836
    %v1838 = vrot.slane %v1698, 1
    %v1839 = vsel %vm111, %v1834, %v1838
    %v1840 = vrot.slane %v1699, 1
    %v1841 = vsel %vm111, %v1836, %v1840
    %v1842 = vrot.slane %v1700, 1
    %v1843 = vsel %vm111, %v1838, %v1842
    %v1844 = vrot.slane %v1701, 1
    %v1845 = vsel %vm111, %v1840, %v1844
    %v1846 = vrot.slane %v1702, 1
    %v1847 = vsel %vm111, %v1842, %v1846
    %v1848 = vrot.slane %v1703, 1
    %v1849 = vsel %vm111, %v1844, %v1848
    %v1850 = vrot.slane %v1704, 1
    %v1851 = vsel %vm111, %v1846, %v1850
    %v1852 = vrot.slane %v1705, 1
    %v1853 = vsel %vm111, %v1848, %v1852
    %v1854 = vrot.slane %v1706, 1
    %v1855 = vsel %vm111, %v1850, %v1854
    %v1856 = vrot.slane %v1707, 1
    %v1857 = vsel %vm111, %v1852, %v1856
    %v1858 = vrot.slane %v1708, 1
    %v1859 = vsel %vm111, %v1854, %v1858
    %v1860 = vrot.slane %v1709, 1
    %v1861 = vsel %vm111, %v1856, %v1860
    %v1862 = vrot.slane %v1710, 1
    %v1863 = vsel %vm111, %v1858, %v1862
    %v1864 = vrot.slane %v1711, 1
    %v1865 = vsel %vm111, %v1860, %v1864
    %v1918 = vmax.f32 %v1660, %v1766
    %v1919 = vmax.f32 %v1661, %v1769
    %v1920 = vmax.f32 %v1662, %v1771
    %v1921 = vmax.f32 %v1663, %v1773
    %v1922 = vmax.f32 %v1664, %v1775
    %v1923 = vmax.f32 %v1665, %v1777
    %v1924 = vmax.f32 %v1666, %v1779
    %v1925 = vmax.f32 %v1667, %v1781
    %v1926 = vmax.f32 %v1668, %v1783
    %v1927 = vmax.f32 %v1669, %v1785
    %v1928 = vmax.f32 %v1670, %v1787
    %v1929 = vmax.f32 %v1671, %v1789
    %v1930 = vmax.f32 %v1672, %v1791
    %v1931 = vmax.f32 %v1673, %v1793
    %v1932 = vmax.f32 %v1674, %v1795
    %v1933 = vmax.f32 %v1675, %v1797
    %v1934 = vmax.f32 %v1676, %v1799
    %v1935 = vmax.f32 %v1677, %v1801
    %v1936 = vmax.f32 %v1678, %v1803
    %v1937 = vmax.f32 %v1679, %v1805
    %v1938 = vmax.f32 %v1680, %v1807
    %v1939 = vmax.f32 %v1681, %v1809
    %v1940 = vmax.f32 %v1682, %v1811
    %v1941 = vmax.f32 %v1683, %v1813
    %v1942 = vmax.f32 %v1684, %v1815
    %v1943 = vmax.f32 %v1685, %v1817
    %v1944 = vmax.f32 %v1686, %v1819
    %v1945 = vmax.f32 %v1687, %v1821
    %v1946 = vmax.f32 %v1688, %v1823
    %v1947 = vmax.f32 %v1689, %v1825
    %v1948 = vmax.f32 %v1690, %v1827
    %v1949 = vmax.f32 %v1691, %v1829
    %v1950 = vmax.f32 %v1692, %v1831
    %v1951 = vmax.f32 %v1693, %v1833
    %v1952 = vmax.f32 %v1694, %v1835
    %v1953 = vmax.f32 %v1695, %v1837
    %v1954 = vmax.f32 %v1696, %v1839
    %v1955 = vmax.f32 %v1697, %v1841
    %v1956 = vmax.f32 %v1698, %v1843
    %v1957 = vmax.f32 %v1699, %v1845
    %v1958 = vmax.f32 %v1700, %v1847
    %v1959 = vmax.f32 %v1701, %v1849
    %v1960 = vmax.f32 %v1702, %v1851
    %v1961 = vmax.f32 %v1703, %v1853
    %v1962 = vmax.f32 %v1704, %v1855
    %v1963 = vmax.f32 %v1705, %v1857
    %v1964 = vmax.f32 %v1706, %v1859
    %v1965 = vmax.f32 %v1707, %v1861
    %v1966 = vmax.f32 %v1708, %v1863
    %v1967 = vmax.f32 %v1709, %v1865
    %v1968 = vmax.f32 %v1710, %v1862
    %v1969 = vmax.f32 %v1711, %v1864
    %v1970 = vld [vmem:[%s3] sm:$0xff]
    %v1971 = vld [vmem:[%s3 + $0x8] sm:$0xff]
    %v1972 = vld [vmem:[%s3 + $0x10] sm:$0xff]
    %v1973 = vld [vmem:[%s3 + $0x18] sm:$0xff]
    %v1974 = vld [vmem:[%s3 + $0x20] sm:$0xff]
    %v1975 = vld [vmem:[%s3 + $0x28] sm:$0xff]
    %v1976 = vld [vmem:[%s3 + $0x30] sm:$0xff]
    %v1977 = vld [vmem:[%s3 + $0x38] sm:$0xff]
    %v1978 = vld [vmem:[%s3 + $0x40] sm:$0xff]
    %v1979 = vld [vmem:[%s3 + $0x48] sm:$0xff]
    %v1980 = vld [vmem:[%s3 + $0x50] sm:$0xff]
    %v1981 = vld [vmem:[%s3 + $0x58] sm:$0xff]
    %v1982 = vld [vmem:[%s3 + $0x60] sm:$0xff]
    %v1983 = vld [vmem:[%s3 + $0x68] sm:$0xff]
    %v1984 = vld [vmem:[%s3 + $0x70] sm:$0xff]
    %v1985 = vld [vmem:[%s3 + $0x78] sm:$0xff]
    %v1986 = vld [vmem:[%s3 + $0x80] sm:$0xff]
    %v1987 = vld [vmem:[%s3 + $0x88] sm:$0xff]
    %v1988 = vld [vmem:[%s3 + $0x90] sm:$0xff]
    %v1989 = vld [vmem:[%s3 + $0x98] sm:$0xff]
    %v1990 = vld [vmem:[%s3 + $0xa0] sm:$0xff]
    %v1991 = vld [vmem:[%s3 + $0xa8] sm:$0xff]
    %v1992 = vld [vmem:[%s3 + $0xb0] sm:$0xff]
    %v1993 = vld [vmem:[%s3 + $0xb8] sm:$0xff]
    %v1994 = vld [vmem:[%s3 + $0xc0] sm:$0xff]
    %v1995 = vld [vmem:[%s3 + $0xc8] sm:$0xff]
    %v1996 = vld [vmem:[%s3 + $0xd0] sm:$0xf]
    %v1997 = vld [vmem:[%s3 + $0xd8] sm:$0xf]
    %vm1998 = vcmask 596992
    %v2000 = vsel %vm1998, %v1971, 0
    %v2003 = vsel %vm1998, %v1973, 0
    %v2006 = vsel %vm1998, %v1975, 0
    %v2009 = vsel %vm1998, %v1977, 0
    %v2012 = vsel %vm1998, %v1979, 0
    %v2015 = vsel %vm1998, %v1981, 0
    %v2018 = vsel %vm1998, %v1983, 0
    %v2021 = vsel %vm1998, %v1985, 0
    %v2024 = vsel %vm1998, %v1987, 0
    %v2027 = vsel %vm1998, %v1989, 0
    %v2030 = vsel %vm1998, %v1991, 0
    %v2033 = vsel %vm1998, %v1993, 0
    %v2036 = vsel %vm1998, %v1995, 0
    %v2039 = vsel %vm1998, %v1997, 0
    %vm2041 = vcmask 1040384
    %v2043 = vsel %vm2041, %v1968, 0
    %v2046 = vsel %vm2041, %v1969, 0
    %2048 = vmatprep.subr.mxu0 %v1949
    %2049 = vmatpush1.msra.mxu0 %v1948
    %2050 = vmatprep.subr.mxu0 %v1947
    %2051 = vmatpush1.msra.mxu0 %v1946
    %2052 = vmatprep.subr.mxu0 %v1945
    %2053 = vmatpush1.msra.mxu0 %v1944
    %2054 = vmatprep.subr.mxu0 %v1943
    %2055 = vmatpush1.msra.mxu0 %v1942
    %2056 = vmatprep.subr.mxu0 %v1941
    %2057 = vmatpush1.msra.mxu0 %v1940
    %2058 = vmatprep.subr.mxu0 %v1939
    %2059 = vmatpush1.msra.mxu0 %v1938
    %2060 = vmatprep.subr.mxu0 %v1937
    %2061 = vmatpush1.msra.mxu0 %v1936
    %2062 = vmatprep.subr.mxu0 %v1935
    %2063 = vmatpush1.msra.mxu0 %v1934
    %2064 = vmatprep.subr.mxu0 %v1933
    %2065 = vmatpush1.msra.mxu0 %v1932
    %2066 = vmatprep.subr.mxu0 %v1931
    %2067 = vmatpush1.msra.mxu0 %v1930
    %2068 = vmatprep.subr.mxu0 %v1929
    %2069 = vmatpush1.msra.mxu0 %v1928
    %2070 = vmatprep.subr.mxu0 %v1927
    %2071 = vmatpush1.msra.mxu0 %v1926
    %2072 = vmatprep.subr.mxu0 %v1925
    %2073 = vmatpush1.msra.mxu0 %v1924
    %2074 = vmatprep.subr.mxu0 %v1923
    %2075 = vmatpush1.msra.mxu0 %v1922
    %2076 = vmatprep.subr.mxu0 %v1921
    %2077 = vmatpush1.msra.mxu0 %v1920
    %2078 = vmatprep.subr.mxu0 %v1919
    %2079 = vmatpush1.msra.mxu0 %v1918
    %2080 = vmatprep.subr.mxu0 0.0
    %2081 = vmatpush2.msra.mxu0 0.0
    %2082 = vmatprep.subr.mxu0 0.0
    %2083 = vmatpush2.msra.mxu0 0.0
    %2084 = vmatprep.subr.mxu0 0.0
    %2085 = vmatpush2.msra.mxu0 0.0
    %2086 = vmatprep.subr.mxu0 0.0
    %2087 = vmatpush2.msra.mxu0 0.0
    %2088 = vmatprep.subr.mxu0 0.0
    %2089 = vmatpush2.msra.mxu0 0.0
    %2090 = vmatprep.subr.mxu0 0.0
    %2091 = vmatpush2.msra.mxu0 0.0
    %2092 = vmatprep.subr.mxu0 %v2046
    %2093 = vmatpush2.msra.mxu0 %v2043
    %2094 = vmatprep.subr.mxu0 %v1967
    %2095 = vmatpush2.msra.mxu0 %v1966
    %2096 = vmatprep.subr.mxu0 %v1965
    %2097 = vmatpush2.msra.mxu0 %v1964
    %2098 = vmatprep.subr.mxu0 %v1963
    %2099 = vmatpush2.msra.mxu0 %v1962
    %2100 = vmatprep.subr.mxu0 %v1961
    %2101 = vmatpush2.msra.mxu0 %v1960
    %2102 = vmatprep.subr.mxu0 %v1959
    %2103 = vmatpush2.msra.mxu0 %v1958
    %2104 = vmatprep.subr.mxu0 %v1957
    %2105 = vmatpush2.msra.mxu0 %v1956
    %2106 = vmatprep.subr.mxu0 %v1955
    %2107 = vmatpush2.msra.mxu0 %v1954
    %2108 = vmatprep.subr.mxu0 %v1953
    %2109 = vmatpush2.msra.mxu0 %v1952
    %2110 = vmatprep.subr.mxu0 %v1951
    %2111 = vmatpush2.msra.mxu0 %v1950
    %2112 = vmatprep.mubr.f32.mxu0 %v2000
    %2113 = vmatmul.mubr.f32.gmra.mxu0 %v1970
    %v2114 = vpop.f32.mrf.mxu0
    %v2115 = vadd.f32 0.0, %v2114
    %v2116 = vpop.f32.mrf.mxu0
    %v2117 = vadd.f32 0.0, %v2116
    %2118 = vmatprep.mubr.f32.mxu0 %v2003
    %2119 = vmatmul.mubr.f32.gmra.mxu0 %v1972
    %v2120 = vpop.f32.mrf.mxu0
    %v2121 = vadd.f32 0.0, %v2120
    %v2122 = vpop.f32.mrf.mxu0
    %v2123 = vadd.f32 0.0, %v2122
    %2124 = vmatprep.mubr.f32.mxu0 %v2006
    %2125 = vmatmul.mubr.f32.gmra.mxu0 %v1974
    %v2126 = vpop.f32.mrf.mxu0
    %v2127 = vadd.f32 0.0, %v2126
    %v2128 = vpop.f32.mrf.mxu0
    %v2129 = vadd.f32 0.0, %v2128
    %2130 = vmatprep.mubr.f32.mxu0 %v2009
    %2131 = vmatmul.mubr.f32.gmra.mxu0 %v1976
    %v2132 = vpop.f32.mrf.mxu0
    %v2133 = vadd.f32 0.0, %v2132
    %v2134 = vpop.f32.mrf.mxu0
    %v2135 = vadd.f32 0.0, %v2134
    %2136 = vmatprep.mubr.f32.mxu0 %v2012
    %2137 = vmatmul.mubr.f32.gmra.mxu0 %v1978
    %v2138 = vpop.f32.mrf.mxu0
    %v2139 = vadd.f32 0.0, %v2138
    %v2140 = vpop.f32.mrf.mxu0
    %v2141 = vadd.f32 0.0, %v2140
    %2142 = vmatprep.mubr.f32.mxu0 %v2015
    %2143 = vmatmul.mubr.f32.gmra.mxu0 %v1980
    %v2144 = vpop.f32.mrf.mxu0
    %v2145 = vadd.f32 0.0, %v2144
    %v2146 = vpop.f32.mrf.mxu0
    %v2147 = vadd.f32 0.0, %v2146
    %2148 = vmatprep.mubr.f32.mxu0 %v2018
    %2149 = vmatmul.mubr.f32.gmra.mxu0 %v1982
    %v2150 = vpop.f32.mrf.mxu0
    %v2151 = vadd.f32 0.0, %v2150
    %v2152 = vpop.f32.mrf.mxu0
    %v2153 = vadd.f32 0.0, %v2152
    %2154 = vmatprep.mubr.f32.mxu0 %v2021
    %2155 = vmatmul.mubr.f32.gmra.mxu0 %v1984
    %v2156 = vpop.f32.mrf.mxu0
    %v2157 = vadd.f32 0.0, %v2156
    %v2158 = vpop.f32.mrf.mxu0
    %v2159 = vadd.f32 0.0, %v2158
    %2160 = vmatprep.mubr.f32.mxu0 %v2024
    %2161 = vmatmul.mubr.f32.gmra.mxu0 %v1986
    %v2162 = vpop.f32.mrf.mxu0
    %v2163 = vadd.f32 0.0, %v2162
    %v2164 = vpop.f32.mrf.mxu0
    %v2165 = vadd.f32 0.0, %v2164
    %2166 = vmatprep.mubr.f32.mxu0 %v2027
    %2167 = vmatmul.mubr.f32.gmra.mxu0 %v1988
    %v2168 = vpop.f32.mrf.mxu0
    %v2169 = vadd.f32 0.0, %v2168
    %v2170 = vpop.f32.mrf.mxu0
    %v2171 = vadd.f32 0.0, %v2170
    %2172 = vmatprep.mubr.f32.mxu0 %v2030
    %2173 = vmatmul.mubr.f32.gmra.mxu0 %v1990
    %v2174 = vpop.f32.mrf.mxu0
    %v2175 = vadd.f32 0.0, %v2174
    %v2176 = vpop.f32.mrf.mxu0
    %v2177 = vadd.f32 0.0, %v2176
    %2178 = vmatprep.mubr.f32.mxu0 %v2033
    %2179 = vmatmul.mubr.f32.gmra.mxu0 %v1992
    %v2180 = vpop.f32.mrf.mxu0
    %v2181 = vadd.f32 0.0, %v2180
    %v2182 = vpop.f32.mrf.mxu0
    %v2183 = vadd.f32 0.0, %v2182
    %2184 = vmatprep.mubr.f32.mxu0 %v2036
    %2185 = vmatmul.mubr.f32.gmra.mxu0 %v1994
    %v2186 = vpop.f32.mrf.mxu0
    %v2187 = vadd.f32 0.0, %v2186
    %v2188 = vpop.f32.mrf.mxu0
    %v2189 = vadd.f32 0.0, %v2188
    %2190 = vmatprep.mubr.f32.mxu0 %v2039
    %2191 = vmatmul.mubr.f32.gmra.mxu0 %v1996
    %v2192 = vpop.f32.mrf.mxu0
    %v2193 = vadd.f32 0.0, %v2192
    %v2194 = vpop.f32.mrf.mxu0
    %v2195 = vadd.f32 0.0, %v2194
    %2196 = vdwg.mxu0
    %v2225 = vrot.slane %v2115, 1
    %v2226 = vrot.slane %v2121, 1
    %v2227 = vsel %vm111, %v2225, %v2226
    %v2228 = vrot.slane %v2117, 1
    %v2229 = vrot.slane %v2123, 1
    %v2230 = vsel %vm111, %v2228, %v2229
    %v2231 = vrot.slane %v2127, 1
    %v2232 = vsel %vm111, %v2226, %v2231
    %v2233 = vrot.slane %v2129, 1
    %v2234 = vsel %vm111, %v2229, %v2233
    %v2235 = vrot.slane %v2133, 1
    %v2236 = vsel %vm111, %v2231, %v2235
    %v2237 = vrot.slane %v2135, 1
    %v2238 = vsel %vm111, %v2233, %v2237
    %v2239 = vrot.slane %v2139, 1
    %v2240 = vsel %vm111, %v2235, %v2239
    %v2241 = vrot.slane %v2141, 1
    %v2242 = vsel %vm111, %v2237, %v2241
    %v2243 = vrot.slane %v2145, 1
    %v2244 = vsel %vm111, %v2239, %v2243
    %v2245 = vrot.slane %v2147, 1
    %v2246 = vsel %vm111, %v2241, %v2245
    %v2247 = vrot.slane %v2151, 1
    %v2248 = vsel %vm111, %v2243, %v2247
    %v2249 = vrot.slane %v2153, 1
    %v2250 = vsel %vm111, %v2245, %v2249
    %v2251 = vrot.slane %v2157, 1
    %v2252 = vsel %vm111, %v2247, %v2251
    %v2253 = vrot.slane %v2159, 1
    %v2254 = vsel %vm111, %v2249, %v2253
    %v2255 = vrot.slane %v2163, 1
    %v2256 = vsel %vm111, %v2251, %v2255
    %v2257 = vrot.slane %v2165, 1
    %v2258 = vsel %vm111, %v2253, %v2257
    %v2259 = vrot.slane %v2169, 1
    %v2260 = vsel %vm111, %v2255, %v2259
    %v2261 = vrot.slane %v2171, 1
    %v2262 = vsel %vm111, %v2257, %v2261
    %v2263 = vrot.slane %v2175, 1
    %v2264 = vsel %vm111, %v2259, %v2263
    %v2265 = vrot.slane %v2177, 1
    %v2266 = vsel %vm111, %v2261, %v2265
    %v2267 = vrot.slane %v2181, 1
    %v2268 = vsel %vm111, %v2263, %v2267
    %v2269 = vrot.slane %v2183, 1
    %v2270 = vsel %vm111, %v2265, %v2269
    %v2271 = vrot.slane %v2187, 1
    %v2272 = vsel %vm111, %v2267, %v2271
    %v2273 = vrot.slane %v2189, 1
    %v2274 = vsel %vm111, %v2269, %v2273
    %v2275 = vrot.slane %v2193, 1
    %v2276 = vsel %vm111, %v2271, %v2275
    %v2277 = vrot.slane %v2195, 1
    %v2278 = vsel %vm111, %v2273, %v2277
    %v2307 = vrot.slane %v2115, 2
    %v2308 = vrot.slane %v2121, 2
    %v2309 = vsel %vm189, %v2307, %v2308
    %v2310 = vrot.slane %v2117, 2
    %v2311 = vrot.slane %v2123, 2
    %v2312 = vsel %vm189, %v2310, %v2311
    %v2313 = vrot.slane %v2127, 2
    %v2314 = vsel %vm189, %v2308, %v2313
    %v2315 = vrot.slane %v2129, 2
    %v2316 = vsel %vm189, %v2311, %v2315
    %v2317 = vrot.slane %v2133, 2
    %v2318 = vsel %vm189, %v2313, %v2317
    %v2319 = vrot.slane %v2135, 2
    %v2320 = vsel %vm189, %v2315, %v2319
    %v2321 = vrot.slane %v2139, 2
    %v2322 = vsel %vm189, %v2317, %v2321
    %v2323 = vrot.slane %v2141, 2
    %v2324 = vsel %vm189, %v2319, %v2323
    %v2325 = vrot.slane %v2145, 2
    %v2326 = vsel %vm189, %v2321, %v2325
    %v2327 = vrot.slane %v2147, 2
    %v2328 = vsel %vm189, %v2323, %v2327
    %v2329 = vrot.slane %v2151, 2
    %v2330 = vsel %vm189, %v2325, %v2329
    %v2331 = vrot.slane %v2153, 2
    %v2332 = vsel %vm189, %v2327, %v2331
    %v2333 = vrot.slane %v2157, 2
    %v2334 = vsel %vm189, %v2329, %v2333
    %v2335 = vrot.slane %v2159, 2
    %v2336 = vsel %vm189, %v2331, %v2335
    %v2337 = vrot.slane %v2163, 2
    %v2338 = vsel %vm189, %v2333, %v2337
    %v2339 = vrot.slane %v2165, 2
    %v2340 = vsel %vm189, %v2335, %v2339
    %v2341 = vrot.slane %v2169, 2
    %v2342 = vsel %vm189, %v2337, %v2341
    %v2343 = vrot.slane %v2171, 2
    %v2344 = vsel %vm189, %v2339, %v2343
    %v2345 = vrot.slane %v2175, 2
    %v2346 = vsel %vm189, %v2341, %v2345
    %v2347 = vrot.slane %v2177, 2
    %v2348 = vsel %vm189, %v2343, %v2347
    %v2349 = vrot.slane %v2181, 2
    %v2350 = vsel %vm189, %v2345, %v2349
    %v2351 = vrot.slane %v2183, 2
    %v2352 = vsel %vm189, %v2347, %v2351
    %v2353 = vrot.slane %v2187, 2
    %v2354 = vsel %vm189, %v2349, %v2353
    %v2355 = vrot.slane %v2189, 2
    %v2356 = vsel %vm189, %v2351, %v2355
    %v2357 = vrot.slane %v2193, 2
    %v2358 = vsel %vm189, %v2353, %v2357
    %v2359 = vrot.slane %v2195, 2
    %v2360 = vsel %vm189, %v2355, %v2359
    %v2389 = vpack.c.bf16 %v2121, %v2115
    %v2390 = vpack.c.bf16 %v2123, %v2117
    %v2391 = vpack.c.bf16 %v2232, %v2227
    %v2392 = vpack.c.bf16 %v2234, %v2230
    %v2393 = vpack.c.bf16 %v2314, %v2309
    %v2394 = vpack.c.bf16 %v2316, %v2312
    %v2395 = vpack.c.bf16 %v2133, %v2127
    %v2396 = vpack.c.bf16 %v2135, %v2129
    %v2397 = vpack.c.bf16 %v2240, %v2236
    %v2398 = vpack.c.bf16 %v2242, %v2238
    %v2399 = vpack.c.bf16 %v2322, %v2318
    %v2400 = vpack.c.bf16 %v2324, %v2320
    %v2401 = vpack.c.bf16 %v2145, %v2139
    %v2402 = vpack.c.bf16 %v2147, %v2141
    %v2403 = vpack.c.bf16 %v2248, %v2244
    %v2404 = vpack.c.bf16 %v2250, %v2246
    %v2405 = vpack.c.bf16 %v2330, %v2326
    %v2406 = vpack.c.bf16 %v2332, %v2328
    %v2407 = vpack.c.bf16 %v2157, %v2151
    %v2408 = vpack.c.bf16 %v2159, %v2153
    %v2409 = vpack.c.bf16 %v2256, %v2252
    %v2410 = vpack.c.bf16 %v2258, %v2254
    %v2411 = vpack.c.bf16 %v2338, %v2334
    %v2412 = vpack.c.bf16 %v2340, %v2336
    %v2413 = vpack.c.bf16 %v2169, %v2163
    %v2414 = vpack.c.bf16 %v2171, %v2165
    %v2415 = vpack.c.bf16 %v2264, %v2260
    %v2416 = vpack.c.bf16 %v2266, %v2262
    %v2417 = vpack.c.bf16 %v2346, %v2342
    %v2418 = vpack.c.bf16 %v2348, %v2344
    %v2419 = vpack.c.bf16 %v2181, %v2175
    %v2420 = vpack.c.bf16 %v2183, %v2177
    %v2421 = vpack.c.bf16 %v2272, %v2268
    %v2422 = vpack.c.bf16 %v2274, %v2270
    %v2423 = vpack.c.bf16 %v2354, %v2350
    %v2424 = vpack.c.bf16 %v2356, %v2352
    %v2425 = vpack.c.bf16 %v2193, %v2187
    %v2426 = vpack.c.bf16 %v2195, %v2189
    %v2427 = vpack.c.bf16 %v2275, %v2276
    %v2428 = vpack.c.bf16 %v2277, %v2278
    %v2429 = vpack.c.bf16 %v2357, %v2358
    %v2430 = vpack.c.bf16 %v2359, %v2360
    %v2431 = vld [vmem:[%s4] sm:$0xff]
    %v2432 = vld [vmem:[%s4 + $0x8] sm:$0xff]
    %v2433 = vld [vmem:[%s4 + $0x10] sm:$0xff]
    %v2434 = vld [vmem:[%s4 + $0x18] sm:$0xff]
    %v2435 = vld [vmem:[%s4 + $0x20] sm:$0xff]
    %v2436 = vld [vmem:[%s4 + $0x28] sm:$0xff]
    %v2437 = vld [vmem:[%s4 + $0x30] sm:$0xff]
    %v2438 = vld [vmem:[%s4 + $0x38] sm:$0xff]
    %v2439 = vld [vmem:[%s4 + $0x40] sm:$0xff]
    %v2440 = vld [vmem:[%s4 + $0x48] sm:$0xff]
    %v2441 = vld [vmem:[%s4 + $0x50] sm:$0xff]
    %v2442 = vld [vmem:[%s4 + $0x58] sm:$0xff]
    %v2443 = vld [vmem:[%s4 + $0x60] sm:$0xff]
    %v2444 = vld [vmem:[%s4 + $0x68] sm:$0xff]
    %v2445 = vld [vmem:[%s4 + $0x70] sm:$0xff]
    %v2446 = vld [vmem:[%s4 + $0x78] sm:$0xff]
    %v2447 = vld [vmem:[%s4 + $0x80] sm:$0xff]
    %v2448 = vld [vmem:[%s4 + $0x88] sm:$0xff]
    %v2449 = vld [vmem:[%s4 + $0x90] sm:$0xff]
    %v2450 = vld [vmem:[%s4 + $0x98] sm:$0xff]
    %v2451 = vld [vmem:[%s4 + $0xa0] sm:$0xff]
    %v2452 = vld [vmem:[%s4 + $0xa8] sm:$0xff]
    %v2453 = vld [vmem:[%s4 + $0xb0] sm:$0xff]
    %v2454 = vld [vmem:[%s4 + $0xb8] sm:$0xff]
    %v2455 = vld [vmem:[%s4 + $0xc0] sm:$0xff]
    %v2456 = vld [vmem:[%s4 + $0xc8] sm:$0xff]
    %v2457 = vld [vmem:[%s4 + $0xd0] sm:$0xff]
    %v2458 = vld [vmem:[%s4 + $0xd8] sm:$0xff]
    %v2459 = vld [vmem:[%s4 + $0xe0] sm:$0xff]
    %v2460 = vld [vmem:[%s4 + $0xe8] sm:$0xff]
    %v2461 = vld [vmem:[%s4 + $0xf0] sm:$0xff]
    %v2462 = vld [vmem:[%s4 + $0xf8] sm:$0xff]
    %v2463 = vld [vmem:[%s4 + $0x100] sm:$0xff]
    %v2464 = vld [vmem:[%s4 + $0x108] sm:$0xff]
    %v2465 = vld [vmem:[%s4 + $0x110] sm:$0xff]
    %v2466 = vld [vmem:[%s4 + $0x118] sm:$0xff]
    %v2467 = vld [vmem:[%s4 + $0x120] sm:$0xff]
    %v2468 = vld [vmem:[%s4 + $0x128] sm:$0xff]
    %v2469 = vld [vmem:[%s4 + $0x130] sm:$0xff]
    %v2470 = vld [vmem:[%s4 + $0x138] sm:$0xff]
    %v2471 = vld [vmem:[%s4 + $0x140] sm:$0xff]
    %v2472 = vld [vmem:[%s4 + $0x148] sm:$0xff]
    %v2473 = vld [vmem:[%s4 + $0x150] sm:$0xff]
    %v2474 = vld [vmem:[%s4 + $0x158] sm:$0xff]
    %v2475 = vld [vmem:[%s4 + $0x160] sm:$0xff]
    %v2476 = vld [vmem:[%s4 + $0x168] sm:$0xff]
    %v2477 = vld [vmem:[%s4 + $0x170] sm:$0xff]
    %v2478 = vld [vmem:[%s4 + $0x178] sm:$0xff]
    %v2479 = vld [vmem:[%s4 + $0x180] sm:$0xff]
    %v2480 = vld [vmem:[%s4 + $0x188] sm:$0xff]
    %v2481 = vld [vmem:[%s4 + $0x190] sm:$0xff]
    %v2482 = vld [vmem:[%s4 + $0x198] sm:$0xff]
    %v2483 = vld [vmem:[%s4 + $0x1a0] sm:$0xff]
    %v2484 = vld [vmem:[%s4 + $0x1a8] sm:$0xff]
    %v2485 = vld [vmem:[%s4 + $0x1b0] sm:$0xff]
    %v2486 = vld [vmem:[%s4 + $0x1b8] sm:$0xff]
    %v2487 = vld [vmem:[%s4 + $0x1c0] sm:$0xff]
    %v2488 = vld [vmem:[%s4 + $0x1c8] sm:$0xff]
    %v2489 = vld [vmem:[%s4 + $0x1d0] sm:$0xff]
    %v2490 = vld [vmem:[%s4 + $0x1d8] sm:$0xff]
    %v2491 = vld [vmem:[%s4 + $0x1e0] sm:$0xff]
    %v2492 = vld [vmem:[%s4 + $0x1e8] sm:$0xff]
    %v2493 = vld [vmem:[%s4 + $0x1f0] sm:$0xff]
    %v2494 = vld [vmem:[%s4 + $0x1f8] sm:$0xff]
    %v2495 = vld [vmem:[%s4 + $0x200] sm:$0xff]
    %v2496 = vld [vmem:[%s4 + $0x208] sm:$0xff]
    %v2497 = vld [vmem:[%s4 + $0x210] sm:$0xff]
    %v2498 = vld [vmem:[%s4 + $0x218] sm:$0xff]
    %v2499 = vld [vmem:[%s4 + $0x220] sm:$0xff]
    %v2500 = vld [vmem:[%s4 + $0x228] sm:$0xff]
    %v2501 = vld [vmem:[%s4 + $0x230] sm:$0xff]
    %v2502 = vld [vmem:[%s4 + $0x238] sm:$0xff]
    %v2503 = vld [vmem:[%s4 + $0x240] sm:$0xff]
    %v2504 = vld [vmem:[%s4 + $0x248] sm:$0xff]
    %v2505 = vld [vmem:[%s4 + $0x250] sm:$0xff]
    %v2506 = vld [vmem:[%s4 + $0x258] sm:$0xff]
    %v2507 = vld [vmem:[%s4 + $0x260] sm:$0xff]
    %v2508 = vld [vmem:[%s4 + $0x268] sm:$0xff]
    %v2509 = vld [vmem:[%s4 + $0x270] sm:$0xff]
    %v2510 = vld [vmem:[%s4 + $0x278] sm:$0xff]
    %v2511 = vld [vmem:[%s4 + $0x280] sm:$0xff]
    %v2512 = vld [vmem:[%s4 + $0x288] sm:$0xff]
    %v2513 = vld [vmem:[%s4 + $0x290] sm:$0xff]
    %v2514 = vld [vmem:[%s4 + $0x298] sm:$0xff]
    %v2515 = vld [vmem:[%s4 + $0x2a0] sm:$0xff]
    %v2516 = vld [vmem:[%s4 + $0x2a8] sm:$0xff]
    %v2517 = vld [vmem:[%s4 + $0x2b0] sm:$0xff]
    %v2518 = vld [vmem:[%s4 + $0x2b8] sm:$0xff]
    %v2519 = vld [vmem:[%s4 + $0x2c0] sm:$0xff]
    %v2520 = vld [vmem:[%s4 + $0x2c8] sm:$0xff]
    %v2521 = vld [vmem:[%s4 + $0x2d0] sm:$0xff]
    %v2522 = vld [vmem:[%s4 + $0x2d8] sm:$0xff]
    %v2523 = vld [vmem:[%s4 + $0x2e0] sm:$0xff]
    %v2524 = vld [vmem:[%s4 + $0x2e8] sm:$0xff]
    %v2525 = vld [vmem:[%s4 + $0x2f0] sm:$0xff]
    %v2526 = vld [vmem:[%s4 + $0x2f8] sm:$0xff]
    %v2527 = vld [vmem:[%s4 + $0x300] sm:$0xff]
    %v2528 = vld [vmem:[%s4 + $0x308] sm:$0xff]
    %v2529 = vld [vmem:[%s4 + $0x310] sm:$0xff]
    %v2530 = vld [vmem:[%s4 + $0x318] sm:$0xff]
    %v2531 = vld [vmem:[%s4 + $0x320] sm:$0xff]
    %v2532 = vld [vmem:[%s4 + $0x328] sm:$0xff]
    %v2533 = vld [vmem:[%s4 + $0x330] sm:$0xff]
    %v2534 = vld [vmem:[%s4 + $0x338] sm:$0xff]
    %v2535 = vld [vmem:[%s4 + $0x340] sm:$0xff]
    %v2536 = vld [vmem:[%s4 + $0x348] sm:$0xff]
    %v2537 = vld [vmem:[%s4 + $0x350] sm:$0xff]
    %v2538 = vld [vmem:[%s4 + $0x358] sm:$0xff]
    %v2539 = vld [vmem:[%s4 + $0x360] sm:$0xff]
    %v2540 = vld [vmem:[%s4 + $0x368] sm:$0xff]
    %v2541 = vld [vmem:[%s4 + $0x370] sm:$0xff]
    %v2542 = vld [vmem:[%s4 + $0x378] sm:$0xff]
    %v2543 = vld [vmem:[%s4 + $0x380] sm:$0xff]
    %v2544 = vld [vmem:[%s4 + $0x388] sm:$0xff]
    %v2545 = vld [vmem:[%s4 + $0x390] sm:$0xff]
    %v2546 = vld [vmem:[%s4 + $0x398] sm:$0xff]
    %v2547 = vld [vmem:[%s4 + $0x3a0] sm:$0xff]
    %v2548 = vld [vmem:[%s4 + $0x3a8] sm:$0xff]
    %v2549 = vld [vmem:[%s4 + $0x3b0] sm:$0xff]
    %v2550 = vld [vmem:[%s4 + $0x3b8] sm:$0xff]
    %v2551 = vld [vmem:[%s4 + $0x3c0] sm:$0xff]
    %v2552 = vld [vmem:[%s4 + $0x3c8] sm:$0xff]
    %v2553 = vld [vmem:[%s4 + $0x3d0] sm:$0xff]
    %v2554 = vld [vmem:[%s4 + $0x3d8] sm:$0xff]
    %v2555 = vld [vmem:[%s4 + $0x3e0] sm:$0xff]
    %v2556 = vld [vmem:[%s4 + $0x3e8] sm:$0xff]
    %v2557 = vld [vmem:[%s4 + $0x3f0] sm:$0xff]
    %v2558 = vld [vmem:[%s4 + $0x3f8] sm:$0xff]
    %v2559 = vld [vmem:[%s4 + $0x400] sm:$0xff]
    %v2560 = vld [vmem:[%s4 + $0x408] sm:$0xff]
    %v2561 = vld [vmem:[%s4 + $0x410] sm:$0xff]
    %v2562 = vld [vmem:[%s4 + $0x418] sm:$0xff]
    %v2563 = vld [vmem:[%s4 + $0x420] sm:$0xff]
    %v2564 = vld [vmem:[%s4 + $0x428] sm:$0xff]
    %v2565 = vld [vmem:[%s4 + $0x430] sm:$0xff]
    %v2566 = vld [vmem:[%s4 + $0x438] sm:$0xff]
    %v2567 = vld [vmem:[%s4 + $0x440] sm:$0xff]
    %v2568 = vld [vmem:[%s4 + $0x448] sm:$0xff]
    %v2569 = vld [vmem:[%s4 + $0x450] sm:$0xff]
    %v2570 = vld [vmem:[%s4 + $0x458] sm:$0xff]
    %v2571 = vld [vmem:[%s4 + $0x460] sm:$0xff]
    %v2572 = vld [vmem:[%s4 + $0x468] sm:$0xff]
    %v2573 = vld [vmem:[%s4 + $0x470] sm:$0xff]
    %v2574 = vld [vmem:[%s4 + $0x478] sm:$0xff]
    %v2575 = vld [vmem:[%s4 + $0x480] sm:$0xff]
    %v2576 = vld [vmem:[%s4 + $0x488] sm:$0xff]
    %v2577 = vld [vmem:[%s4 + $0x490] sm:$0xff]
    %v2578 = vld [vmem:[%s4 + $0x498] sm:$0xff]
    %v2579 = vld [vmem:[%s4 + $0x4a0] sm:$0xff]
    %v2580 = vld [vmem:[%s4 + $0x4a8] sm:$0xff]
    %v2581 = vld [vmem:[%s4 + $0x4b0] sm:$0xff]
    %v2582 = vld [vmem:[%s4 + $0x4b8] sm:$0xff]
    %v2583 = vld [vmem:[%s4 + $0x4c0] sm:$0xff]
    %v2584 = vld [vmem:[%s4 + $0x4c8] sm:$0xff]
    %v2585 = vld [vmem:[%s4 + $0x4d0] sm:$0xff]
    %v2586 = vld [vmem:[%s4 + $0x4d8] sm:$0xff]
    %v2587 = vld [vmem:[%s4 + $0x4e0] sm:$0xff]
    %v2588 = vld [vmem:[%s4 + $0x4e8] sm:$0xff]
    %v2589 = vld [vmem:[%s4 + $0x4f0] sm:$0xff]
    %v2590 = vld [vmem:[%s4 + $0x4f8] sm:$0xff]
    %v2591 = vld [vmem:[%s4 + $0x500] sm:$0xff]
    %v2592 = vld [vmem:[%s4 + $0x508] sm:$0xff]
    %v2593 = vld [vmem:[%s4 + $0x510] sm:$0xff]
    %v2594 = vld [vmem:[%s4 + $0x518] sm:$0xff]
    %v2595 = vld [vmem:[%s4 + $0x520] sm:$0xff]
    %v2596 = vld [vmem:[%s4 + $0x528] sm:$0xff]
    %v2597 = vld [vmem:[%s4 + $0x530] sm:$0xff]
    %v2598 = vld [vmem:[%s4 + $0x538] sm:$0xff]
    %v2599 = vld [vmem:[%s4 + $0x540] sm:$0xff]
    %v2600 = vld [vmem:[%s4 + $0x548] sm:$0xff]
    %v2601 = vld [vmem:[%s4 + $0x550] sm:$0xff]
    %v2602 = vld [vmem:[%s4 + $0x558] sm:$0xff]
    %v2603 = vld [vmem:[%s4 + $0x560] sm:$0xff]
    %v2604 = vld [vmem:[%s4 + $0x568] sm:$0xff]
    %v2605 = vld [vmem:[%s4 + $0x570] sm:$0xff]
    %v2606 = vld [vmem:[%s4 + $0x578] sm:$0xff]
    %v2607 = vld [vmem:[%s4 + $0x580] sm:$0xff]
    %v2608 = vld [vmem:[%s4 + $0x588] sm:$0xff]
    %v2609 = vld [vmem:[%s4 + $0x590] sm:$0xff]
    %v2610 = vld [vmem:[%s4 + $0x598] sm:$0xff]
    %v2611 = vld [vmem:[%s4 + $0x5a0] sm:$0xff]
    %v2612 = vld [vmem:[%s4 + $0x5a8] sm:$0xff]
    %v2613 = vld [vmem:[%s4 + $0x5b0] sm:$0xff]
    %v2614 = vld [vmem:[%s4 + $0x5b8] sm:$0xff]
    %v2615 = vld [vmem:[%s4 + $0x5c0] sm:$0xff]
    %v2616 = vld [vmem:[%s4 + $0x5c8] sm:$0xff]
    %v2617 = vld [vmem:[%s4 + $0x5d0] sm:$0xff]
    %v2618 = vld [vmem:[%s4 + $0x5d8] sm:$0xff]
    %v2619 = vld [vmem:[%s4 + $0x5e0] sm:$0xff]
    %v2620 = vld [vmem:[%s4 + $0x5e8] sm:$0xff]
    %v2621 = vld [vmem:[%s4 + $0x5f0] sm:$0xff]
    %v2622 = vld [vmem:[%s4 + $0x5f8] sm:$0xff]
    %v2623 = vld [vmem:[%s5] sm:$0xf]
    %v2625 = vlaneseq
    %v2626 = vshrl.u32 %v2625, 7
    %v2627 = vsub.s32 0, %v2626
    %v2628 = vrot.slane %v2623, %v2627
    %v2629 = vlaneseq
    %v2630 = vshrl.u32 %v2629, 7
    %v2631 = vsub.s32 1, %v2630
    %v2632 = vrot.slane %v2623, %v2631
    %v2633 = vlaneseq
    %v2634 = vshrl.u32 %v2633, 7
    %v2635 = vsub.s32 2, %v2634
    %v2636 = vrot.slane %v2623, %v2635
    %v2637 = vlaneseq
    %v2638 = vshrl.u32 %v2637, 7
    %v2639 = vsub.s32 3, %v2638
    %v2640 = vrot.slane %v2623, %v2639
    %v2837 = vunpack.c.l.b16 %v2431
    %v2838 = vunpack.c.h.b16 %v2431
    %v2839 = vunpack.c.l.b16 %v2432
    %v2840 = vunpack.c.h.b16 %v2432
    %v2841 = vunpack.c.l.b16 %v2433
    %v2842 = vunpack.c.h.b16 %v2433
    %v2843 = vunpack.c.l.b16 %v2434
    %v2844 = vunpack.c.h.b16 %v2434
    %v2845 = vunpack.c.l.b16 %v2435
    %v2846 = vunpack.c.h.b16 %v2435
    %v2847 = vunpack.c.l.b16 %v2436
    %v2848 = vunpack.c.h.b16 %v2436
    %v2849 = vunpack.c.l.b16 %v2437
    %v2850 = vunpack.c.h.b16 %v2437
    %v2851 = vunpack.c.l.b16 %v2438
    %v2852 = vunpack.c.h.b16 %v2438
    %v2853 = vunpack.c.l.b16 %v2439
    %v2854 = vunpack.c.h.b16 %v2439
    %v2855 = vunpack.c.l.b16 %v2440
    %v2856 = vunpack.c.h.b16 %v2440
    %v2857 = vunpack.c.l.b16 %v2441
    %v2858 = vunpack.c.h.b16 %v2441
    %v2859 = vunpack.c.l.b16 %v2442
    %v2860 = vunpack.c.h.b16 %v2442
    %v2861 = vunpack.c.l.b16 %v2443
    %v2862 = vunpack.c.h.b16 %v2443
    %v2863 = vunpack.c.l.b16 %v2444
    %v2864 = vunpack.c.h.b16 %v2444
    %v2865 = vunpack.c.l.b16 %v2445
    %v2866 = vunpack.c.h.b16 %v2445
    %v2867 = vunpack.c.l.b16 %v2446
    %v2868 = vunpack.c.h.b16 %v2446
    %v2869 = vunpack.c.l.b16 %v2447
    %v2870 = vunpack.c.h.b16 %v2447
    %v2871 = vunpack.c.l.b16 %v2448
    %v2872 = vunpack.c.h.b16 %v2448
    %v2873 = vunpack.c.l.b16 %v2449
    %v2874 = vunpack.c.h.b16 %v2449
    %v2875 = vunpack.c.l.b16 %v2450
    %v2876 = vunpack.c.h.b16 %v2450
    %v2877 = vunpack.c.l.b16 %v2451
    %v2878 = vunpack.c.h.b16 %v2451
    %v2879 = vunpack.c.l.b16 %v2452
    %v2880 = vunpack.c.h.b16 %v2452
    %v2881 = vunpack.c.l.b16 %v2453
    %v2882 = vunpack.c.h.b16 %v2453
    %v2883 = vunpack.c.l.b16 %v2454
    %v2884 = vunpack.c.h.b16 %v2454
    %v2885 = vunpack.c.l.b16 %v2455
    %v2886 = vunpack.c.h.b16 %v2455
    %v2887 = vunpack.c.l.b16 %v2456
    %v2888 = vunpack.c.h.b16 %v2456
    %v2889 = vunpack.c.l.b16 %v2457
    %v2890 = vunpack.c.h.b16 %v2457
    %v2891 = vunpack.c.l.b16 %v2458
    %v2892 = vunpack.c.h.b16 %v2458
    %v2893 = vunpack.c.l.b16 %v2459
    %v2894 = vunpack.c.h.b16 %v2459
    %v2895 = vunpack.c.l.b16 %v2460
    %v2896 = vunpack.c.h.b16 %v2460
    %v2897 = vunpack.c.l.b16 %v2461
    %v2898 = vunpack.c.h.b16 %v2461
    %v2899 = vunpack.c.l.b16 %v2462
    %v2900 = vunpack.c.h.b16 %v2462
    %v2901 = vunpack.c.l.b16 %v2463
    %v2902 = vunpack.c.h.b16 %v2463
    %v2903 = vunpack.c.l.b16 %v2464
    %v2904 = vunpack.c.h.b16 %v2464
    %v2905 = vunpack.c.l.b16 %v2465
    %v2906 = vunpack.c.h.b16 %v2465
    %v2907 = vunpack.c.l.b16 %v2466
    %v2908 = vunpack.c.h.b16 %v2466
    %v2909 = vunpack.c.l.b16 %v2467
    %v2910 = vunpack.c.h.b16 %v2467
    %v2911 = vunpack.c.l.b16 %v2468
    %v2912 = vunpack.c.h.b16 %v2468
    %v2913 = vunpack.c.l.b16 %v2469
    %v2914 = vunpack.c.h.b16 %v2469
    %v2915 = vunpack.c.l.b16 %v2470
    %v2916 = vunpack.c.h.b16 %v2470
    %v2917 = vunpack.c.l.b16 %v2471
    %v2918 = vunpack.c.h.b16 %v2471
    %v2919 = vunpack.c.l.b16 %v2472
    %v2920 = vunpack.c.h.b16 %v2472
    %v2921 = vunpack.c.l.b16 %v2473
    %v2922 = vunpack.c.h.b16 %v2473
    %v2923 = vunpack.c.l.b16 %v2474
    %v2924 = vunpack.c.h.b16 %v2474
    %v2925 = vunpack.c.l.b16 %v2475
    %v2926 = vunpack.c.h.b16 %v2475
    %v2927 = vunpack.c.l.b16 %v2476
    %v2928 = vunpack.c.h.b16 %v2476
    %v2929 = vunpack.c.l.b16 %v2477
    %v2930 = vunpack.c.h.b16 %v2477
    %v2931 = vunpack.c.l.b16 %v2478
    %v2932 = vunpack.c.h.b16 %v2478
    %v2933 = vunpack.c.l.b16 %v2479
    %v2934 = vunpack.c.h.b16 %v2479
    %v2935 = vunpack.c.l.b16 %v2480
    %v2936 = vunpack.c.h.b16 %v2480
    %v2937 = vunpack.c.l.b16 %v2481
    %v2938 = vunpack.c.h.b16 %v2481
    %v2939 = vunpack.c.l.b16 %v2482
    %v2940 = vunpack.c.h.b16 %v2482
    %v2941 = vunpack.c.l.b16 %v2483
    %v2942 = vunpack.c.h.b16 %v2483
    %v2943 = vunpack.c.l.b16 %v2484
    %v2944 = vunpack.c.h.b16 %v2484
    %v2945 = vunpack.c.l.b16 %v2485
    %v2946 = vunpack.c.h.b16 %v2485
    %v2947 = vunpack.c.l.b16 %v2486
    %v2948 = vunpack.c.h.b16 %v2486
    %v2949 = vunpack.c.l.b16 %v2487
    %v2950 = vunpack.c.h.b16 %v2487
    %v2951 = vunpack.c.l.b16 %v2488
    %v2952 = vunpack.c.h.b16 %v2488
    %v2953 = vunpack.c.l.b16 %v2489
    %v2954 = vunpack.c.h.b16 %v2489
    %v2955 = vunpack.c.l.b16 %v2490
    %v2956 = vunpack.c.h.b16 %v2490
    %v2957 = vunpack.c.l.b16 %v2491
    %v2958 = vunpack.c.h.b16 %v2491
    %v2959 = vunpack.c.l.b16 %v2492
    %v2960 = vunpack.c.h.b16 %v2492
    %v2961 = vunpack.c.l.b16 %v2493
    %v2962 = vunpack.c.h.b16 %v2493
    %v2963 = vunpack.c.l.b16 %v2494
    %v2964 = vunpack.c.h.b16 %v2494
    %v2965 = vunpack.c.l.b16 %v2495
    %v2966 = vunpack.c.h.b16 %v2495
    %v2967 = vunpack.c.l.b16 %v2496
    %v2968 = vunpack.c.h.b16 %v2496
    %v2969 = vunpack.c.l.b16 %v2497
    %v2970 = vunpack.c.h.b16 %v2497
    %v2971 = vunpack.c.l.b16 %v2498
    %v2972 = vunpack.c.h.b16 %v2498
    %v2973 = vunpack.c.l.b16 %v2499
    %v2974 = vunpack.c.h.b16 %v2499
    %v2975 = vunpack.c.l.b16 %v2500
    %v2976 = vunpack.c.h.b16 %v2500
    %v2977 = vunpack.c.l.b16 %v2501
    %v2978 = vunpack.c.h.b16 %v2501
    %v2979 = vunpack.c.l.b16 %v2502
    %v2980 = vunpack.c.h.b16 %v2502
    %v2981 = vunpack.c.l.b16 %v2503
    %v2982 = vunpack.c.h.b16 %v2503
    %v2983 = vunpack.c.l.b16 %v2504
    %v2984 = vunpack.c.h.b16 %v2504
    %v2985 = vunpack.c.l.b16 %v2505
    %v2986 = vunpack.c.h.b16 %v2505
    %v2987 = vunpack.c.l.b16 %v2506
    %v2988 = vunpack.c.h.b16 %v2506
    %v2989 = vunpack.c.l.b16 %v2507
    %v2990 = vunpack.c.h.b16 %v2507
    %v2991 = vunpack.c.l.b16 %v2508
    %v2992 = vunpack.c.h.b16 %v2508
    %v2993 = vunpack.c.l.b16 %v2509
    %v2994 = vunpack.c.h.b16 %v2509
    %v2995 = vunpack.c.l.b16 %v2510
    %v2996 = vunpack.c.h.b16 %v2510
    %v2997 = vunpack.c.l.b16 %v2511
    %v2998 = vunpack.c.h.b16 %v2511
    %v2999 = vunpack.c.l.b16 %v2512
    %v3000 = vunpack.c.h.b16 %v2512
    %v3001 = vunpack.c.l.b16 %v2513
    %v3002 = vunpack.c.h.b16 %v2513
    %v3003 = vunpack.c.l.b16 %v2514
    %v3004 = vunpack.c.h.b16 %v2514
    %v3005 = vunpack.c.l.b16 %v2515
    %v3006 = vunpack.c.h.b16 %v2515
    %v3007 = vunpack.c.l.b16 %v2516
    %v3008 = vunpack.c.h.b16 %v2516
    %v3009 = vunpack.c.l.b16 %v2517
    %v3010 = vunpack.c.h.b16 %v2517
    %v3011 = vunpack.c.l.b16 %v2518
    %v3012 = vunpack.c.h.b16 %v2518
    %v3013 = vunpack.c.l.b16 %v2519
    %v3014 = vunpack.c.h.b16 %v2519
    %v3015 = vunpack.c.l.b16 %v2520
    %v3016 = vunpack.c.h.b16 %v2520
    %v3017 = vunpack.c.l.b16 %v2521
    %v3018 = vunpack.c.h.b16 %v2521
    %v3019 = vunpack.c.l.b16 %v2522
    %v3020 = vunpack.c.h.b16 %v2522
    %v3021 = vunpack.c.l.b16 %v2523
    %v3022 = vunpack.c.h.b16 %v2523
    %v3023 = vunpack.c.l.b16 %v2524
    %v3024 = vunpack.c.h.b16 %v2524
    %v3025 = vunpack.c.l.b16 %v2525
    %v3026 = vunpack.c.h.b16 %v2525
    %v3027 = vunpack.c.l.b16 %v2526
    %v3028 = vunpack.c.h.b16 %v2526
    %v3029 = vunpack.c.l.b16 %v2527
    %v3030 = vunpack.c.h.b16 %v2527
    %v3031 = vunpack.c.l.b16 %v2528
    %v3032 = vunpack.c.h.b16 %v2528
    %v3033 = vunpack.c.l.b16 %v2529
    %v3034 = vunpack.c.h.b16 %v2529
    %v3035 = vunpack.c.l.b16 %v2530
    %v3036 = vunpack.c.h.b16 %v2530
    %v3037 = vunpack.c.l.b16 %v2531
    %v3038 = vunpack.c.h.b16 %v2531
    %v3039 = vunpack.c.l.b16 %v2532
    %v3040 = vunpack.c.h.b16 %v2532
    %v3041 = vunpack.c.l.b16 %v2533
    %v3042 = vunpack.c.h.b16 %v2533
    %v3043 = vunpack.c.l.b16 %v2534
    %v3044 = vunpack.c.h.b16 %v2534
    %v3045 = vunpack.c.l.b16 %v2535
    %v3046 = vunpack.c.h.b16 %v2535
    %v3047 = vunpack.c.l.b16 %v2536
    %v3048 = vunpack.c.h.b16 %v2536
    %v3049 = vunpack.c.l.b16 %v2537
    %v3050 = vunpack.c.h.b16 %v2537
    %v3051 = vunpack.c.l.b16 %v2538
    %v3052 = vunpack.c.h.b16 %v2538
    %v3053 = vunpack.c.l.b16 %v2539
    %v3054 = vunpack.c.h.b16 %v2539
    %v3055 = vunpack.c.l.b16 %v2540
    %v3056 = vunpack.c.h.b16 %v2540
    %v3057 = vunpack.c.l.b16 %v2541
    %v3058 = vunpack.c.h.b16 %v2541
    %v3059 = vunpack.c.l.b16 %v2542
    %v3060 = vunpack.c.h.b16 %v2542
    %v3061 = vunpack.c.l.b16 %v2543
    %v3062 = vunpack.c.h.b16 %v2543
    %v3063 = vunpack.c.l.b16 %v2544
    %v3064 = vunpack.c.h.b16 %v2544
    %v3065 = vunpack.c.l.b16 %v2545
    %v3066 = vunpack.c.h.b16 %v2545
    %v3067 = vunpack.c.l.b16 %v2546
    %v3068 = vunpack.c.h.b16 %v2546
    %v3069 = vunpack.c.l.b16 %v2547
    %v3070 = vunpack.c.h.b16 %v2547
    %v3071 = vunpack.c.l.b16 %v2548
    %v3072 = vunpack.c.h.b16 %v2548
    %v3073 = vunpack.c.l.b16 %v2549
    %v3074 = vunpack.c.h.b16 %v2549
    %v3075 = vunpack.c.l.b16 %v2550
    %v3076 = vunpack.c.h.b16 %v2550
    %v3077 = vunpack.c.l.b16 %v2551
    %v3078 = vunpack.c.h.b16 %v2551
    %v3079 = vunpack.c.l.b16 %v2552
    %v3080 = vunpack.c.h.b16 %v2552
    %v3081 = vunpack.c.l.b16 %v2553
    %v3082 = vunpack.c.h.b16 %v2553
    %v3083 = vunpack.c.l.b16 %v2554
    %v3084 = vunpack.c.h.b16 %v2554
    %v3085 = vunpack.c.l.b16 %v2555
    %v3086 = vunpack.c.h.b16 %v2555
    %v3087 = vunpack.c.l.b16 %v2556
    %v3088 = vunpack.c.h.b16 %v2556
    %v3089 = vunpack.c.l.b16 %v2557
    %v3090 = vunpack.c.h.b16 %v2557
    %v3091 = vunpack.c.l.b16 %v2558
    %v3092 = vunpack.c.h.b16 %v2558
    %v3093 = vunpack.c.l.b16 %v2559
    %v3094 = vunpack.c.h.b16 %v2559
    %v3095 = vunpack.c.l.b16 %v2560
    %v3096 = vunpack.c.h.b16 %v2560
    %v3097 = vunpack.c.l.b16 %v2561
    %v3098 = vunpack.c.h.b16 %v2561
    %v3099 = vunpack.c.l.b16 %v2562
    %v3100 = vunpack.c.h.b16 %v2562
    %v3101 = vunpack.c.l.b16 %v2563
    %v3102 = vunpack.c.h.b16 %v2563
    %v3103 = vunpack.c.l.b16 %v2564
    %v3104 = vunpack.c.h.b16 %v2564
    %v3105 = vunpack.c.l.b16 %v2565
    %v3106 = vunpack.c.h.b16 %v2565
    %v3107 = vunpack.c.l.b16 %v2566
    %v3108 = vunpack.c.h.b16 %v2566
    %v3109 = vunpack.c.l.b16 %v2567
    %v3110 = vunpack.c.h.b16 %v2567
    %v3111 = vunpack.c.l.b16 %v2568
    %v3112 = vunpack.c.h.b16 %v2568
    %v3113 = vunpack.c.l.b16 %v2569
    %v3114 = vunpack.c.h.b16 %v2569
    %v3115 = vunpack.c.l.b16 %v2570
    %v3116 = vunpack.c.h.b16 %v2570
    %v3117 = vunpack.c.l.b16 %v2571
    %v3118 = vunpack.c.h.b16 %v2571
    %v3119 = vunpack.c.l.b16 %v2572
    %v3120 = vunpack.c.h.b16 %v2572
    %v3121 = vunpack.c.l.b16 %v2573
    %v3122 = vunpack.c.h.b16 %v2573
    %v3123 = vunpack.c.l.b16 %v2574
    %v3124 = vunpack.c.h.b16 %v2574
    %v3125 = vunpack.c.l.b16 %v2575
    %v3126 = vunpack.c.h.b16 %v2575
    %v3127 = vunpack.c.l.b16 %v2576
    %v3128 = vunpack.c.h.b16 %v2576
    %v3129 = vunpack.c.l.b16 %v2577
    %v3130 = vunpack.c.h.b16 %v2577
    %v3131 = vunpack.c.l.b16 %v2578
    %v3132 = vunpack.c.h.b16 %v2578
    %v3133 = vunpack.c.l.b16 %v2579
    %v3134 = vunpack.c.h.b16 %v2579
    %v3135 = vunpack.c.l.b16 %v2580
    %v3136 = vunpack.c.h.b16 %v2580
    %v3137 = vunpack.c.l.b16 %v2581
    %v3138 = vunpack.c.h.b16 %v2581
    %v3139 = vunpack.c.l.b16 %v2582
    %v3140 = vunpack.c.h.b16 %v2582
    %v3141 = vunpack.c.l.b16 %v2583
    %v3142 = vunpack.c.h.b16 %v2583
    %v3143 = vunpack.c.l.b16 %v2584
    %v3144 = vunpack.c.h.b16 %v2584
    %v3145 = vunpack.c.l.b16 %v2585
    %v3146 = vunpack.c.h.b16 %v2585
    %v3147 = vunpack.c.l.b16 %v2586
    %v3148 = vunpack.c.h.b16 %v2586
    %v3149 = vunpack.c.l.b16 %v2587
    %v3150 = vunpack.c.h.b16 %v2587
    %v3151 = vunpack.c.l.b16 %v2588
    %v3152 = vunpack.c.h.b16 %v2588
    %v3153 = vunpack.c.l.b16 %v2589
    %v3154 = vunpack.c.h.b16 %v2589
    %v3155 = vunpack.c.l.b16 %v2590
    %v3156 = vunpack.c.h.b16 %v2590
    %v3157 = vunpack.c.l.b16 %v2591
    %v3158 = vunpack.c.h.b16 %v2591
    %v3159 = vunpack.c.l.b16 %v2592
    %v3160 = vunpack.c.h.b16 %v2592
    %v3161 = vunpack.c.l.b16 %v2593
    %v3162 = vunpack.c.h.b16 %v2593
    %v3163 = vunpack.c.l.b16 %v2594
    %v3164 = vunpack.c.h.b16 %v2594
    %v3165 = vunpack.c.l.b16 %v2595
    %v3166 = vunpack.c.h.b16 %v2595
    %v3167 = vunpack.c.l.b16 %v2596
    %v3168 = vunpack.c.h.b16 %v2596
    %v3169 = vunpack.c.l.b16 %v2597
    %v3170 = vunpack.c.h.b16 %v2597
    %v3171 = vunpack.c.l.b16 %v2598
    %v3172 = vunpack.c.h.b16 %v2598
    %v3173 = vunpack.c.l.b16 %v2599
    %v3174 = vunpack.c.h.b16 %v2599
    %v3175 = vunpack.c.l.b16 %v2600
    %v3176 = vunpack.c.h.b16 %v2600
    %v3177 = vunpack.c.l.b16 %v2601
    %v3178 = vunpack.c.h.b16 %v2601
    %v3179 = vunpack.c.l.b16 %v2602
    %v3180 = vunpack.c.h.b16 %v2602
    %v3181 = vunpack.c.l.b16 %v2603
    %v3182 = vunpack.c.h.b16 %v2603
    %v3183 = vunpack.c.l.b16 %v2604
    %v3184 = vunpack.c.h.b16 %v2604
    %v3185 = vunpack.c.l.b16 %v2605
    %v3186 = vunpack.c.h.b16 %v2605
    %v3187 = vunpack.c.l.b16 %v2606
    %v3188 = vunpack.c.h.b16 %v2606
    %v3189 = vunpack.c.l.b16 %v2607
    %v3190 = vunpack.c.h.b16 %v2607
    %v3191 = vunpack.c.l.b16 %v2608
    %v3192 = vunpack.c.h.b16 %v2608
    %v3193 = vunpack.c.l.b16 %v2609
    %v3194 = vunpack.c.h.b16 %v2609
    %v3195 = vunpack.c.l.b16 %v2610
    %v3196 = vunpack.c.h.b16 %v2610
    %v3197 = vunpack.c.l.b16 %v2611
    %v3198 = vunpack.c.h.b16 %v2611
    %v3199 = vunpack.c.l.b16 %v2612
    %v3200 = vunpack.c.h.b16 %v2612
    %v3201 = vunpack.c.l.b16 %v2613
    %v3202 = vunpack.c.h.b16 %v2613
    %v3203 = vunpack.c.l.b16 %v2614
    %v3204 = vunpack.c.h.b16 %v2614
    %v3205 = vunpack.c.l.b16 %v2615
    %v3206 = vunpack.c.h.b16 %v2615
    %v3207 = vunpack.c.l.b16 %v2616
    %v3208 = vunpack.c.h.b16 %v2616
    %v3209 = vunpack.c.l.b16 %v2617
    %v3210 = vunpack.c.h.b16 %v2617
    %v3211 = vunpack.c.l.b16 %v2618
    %v3212 = vunpack.c.h.b16 %v2618
    %v3213 = vunpack.c.l.b16 %v2619
    %v3214 = vunpack.c.h.b16 %v2619
    %v3215 = vunpack.c.l.b16 %v2620
    %v3216 = vunpack.c.h.b16 %v2620
    %v3217 = vunpack.c.l.b16 %v2621
    %v3218 = vunpack.c.h.b16 %v2621
    %v3219 = vunpack.c.l.b16 %v2622
    %v3220 = vunpack.c.h.b16 %v2622
    %v3221 = vpack.c.b16 %v2841, %v2837
    %v3222 = vpack.c.b16 %v2842, %v2838
    %v3223 = vpack.c.b16 %v2843, %v2839
    %v3224 = vpack.c.b16 %v2844, %v2840
    %v3225 = vpack.c.b16 %v2849, %v2845
    %v3226 = vpack.c.b16 %v2850, %v2846
    %v3227 = vpack.c.b16 %v2851, %v2847
    %v3228 = vpack.c.b16 %v2852, %v2848
    %v3229 = vpack.c.b16 %v2857, %v2853
    %v3230 = vpack.c.b16 %v2858, %v2854
    %v3231 = vpack.c.b16 %v2859, %v2855
    %v3232 = vpack.c.b16 %v2860, %v2856
    %v3233 = vpack.c.b16 %v2865, %v2861
    %v3234 = vpack.c.b16 %v2866, %v2862
    %v3235 = vpack.c.b16 %v2867, %v2863
    %v3236 = vpack.c.b16 %v2868, %v2864
    %v3237 = vpack.c.b16 %v2873, %v2869
    %v3238 = vpack.c.b16 %v2874, %v2870
    %v3239 = vpack.c.b16 %v2875, %v2871
    %v3240 = vpack.c.b16 %v2876, %v2872
    %v3241 = vpack.c.b16 %v2881, %v2877
    %v3242 = vpack.c.b16 %v2882, %v2878
    %v3243 = vpack.c.b16 %v2883, %v2879
    %v3244 = vpack.c.b16 %v2884, %v2880
    %v3245 = vpack.c.b16 %v2889, %v2885
    %v3246 = vpack.c.b16 %v2890, %v2886
    %v3247 = vpack.c.b16 %v2891, %v2887
    %v3248 = vpack.c.b16 %v2892, %v2888
    %v3249 = vpack.c.b16 %v2897, %v2893
    %v3250 = vpack.c.b16 %v2898, %v2894
    %v3251 = vpack.c.b16 %v2899, %v2895
    %v3252 = vpack.c.b16 %v2900, %v2896
    %v3253 = vpack.c.b16 %v2905, %v2901
    %v3254 = vpack.c.b16 %v2906, %v2902
    %v3255 = vpack.c.b16 %v2907, %v2903
    %v3256 = vpack.c.b16 %v2908, %v2904
    %v3257 = vpack.c.b16 %v2913, %v2909
    %v3258 = vpack.c.b16 %v2914, %v2910
    %v3259 = vpack.c.b16 %v2915, %v2911
    %v3260 = vpack.c.b16 %v2916, %v2912
    %v3261 = vpack.c.b16 %v2921, %v2917
    %v3262 = vpack.c.b16 %v2922, %v2918
    %v3263 = vpack.c.b16 %v2923, %v2919
    %v3264 = vpack.c.b16 %v2924, %v2920
    %v3265 = vpack.c.b16 %v2929, %v2925
    %v3266 = vpack.c.b16 %v2930, %v2926
    %v3267 = vpack.c.b16 %v2931, %v2927
    %v3268 = vpack.c.b16 %v2932, %v2928
    %v3269 = vpack.c.b16 %v2937, %v2933
    %v3270 = vpack.c.b16 %v2938, %v2934
    %v3271 = vpack.c.b16 %v2939, %v2935
    %v3272 = vpack.c.b16 %v2940, %v2936
    %v3273 = vpack.c.b16 %v2945, %v2941
    %v3274 = vpack.c.b16 %v2946, %v2942
    %v3275 = vpack.c.b16 %v2947, %v2943
    %v3276 = vpack.c.b16 %v2948, %v2944
    %v3277 = vpack.c.b16 %v2953, %v2949
    %v3278 = vpack.c.b16 %v2954, %v2950
    %v3279 = vpack.c.b16 %v2955, %v2951
    %v3280 = vpack.c.b16 %v2956, %v2952
    %v3281 = vpack.c.b16 %v2961, %v2957
    %v3282 = vpack.c.b16 %v2962, %v2958
    %v3283 = vpack.c.b16 %v2963, %v2959
    %v3284 = vpack.c.b16 %v2964, %v2960
    %v3285 = vpack.c.b16 %v2969, %v2965
    %v3286 = vpack.c.b16 %v2970, %v2966
    %v3287 = vpack.c.b16 %v2971, %v2967
    %v3288 = vpack.c.b16 %v2972, %v2968
    %v3289 = vpack.c.b16 %v2977, %v2973
    %v3290 = vpack.c.b16 %v2978, %v2974
    %v3291 = vpack.c.b16 %v2979, %v2975
    %v3292 = vpack.c.b16 %v2980, %v2976
    %v3293 = vpack.c.b16 %v2985, %v2981
    %v3294 = vpack.c.b16 %v2986, %v2982
    %v3295 = vpack.c.b16 %v2987, %v2983
    %v3296 = vpack.c.b16 %v2988, %v2984
    %v3297 = vpack.c.b16 %v2993, %v2989
    %v3298 = vpack.c.b16 %v2994, %v2990
    %v3299 = vpack.c.b16 %v2995, %v2991
    %v3300 = vpack.c.b16 %v2996, %v2992
    %v3301 = vpack.c.b16 %v3001, %v2997
    %v3302 = vpack.c.b16 %v3002, %v2998
    %v3303 = vpack.c.b16 %v3003, %v2999
    %v3304 = vpack.c.b16 %v3004, %v3000
    %v3305 = vpack.c.b16 %v3009, %v3005
    %v3306 = vpack.c.b16 %v3010, %v3006
    %v3307 = vpack.c.b16 %v3011, %v3007
    %v3308 = vpack.c.b16 %v3012, %v3008
    %v3309 = vpack.c.b16 %v3017, %v3013
    %v3310 = vpack.c.b16 %v3018, %v3014
    %v3311 = vpack.c.b16 %v3019, %v3015
    %v3312 = vpack.c.b16 %v3020, %v3016
    %v3313 = vpack.c.b16 %v3025, %v3021
    %v3314 = vpack.c.b16 %v3026, %v3022
    %v3315 = vpack.c.b16 %v3027, %v3023
    %v3316 = vpack.c.b16 %v3028, %v3024
    %v3317 = vpack.c.b16 %v3033, %v3029
    %v3318 = vpack.c.b16 %v3034, %v3030
    %v3319 = vpack.c.b16 %v3035, %v3031
    %v3320 = vpack.c.b16 %v3036, %v3032
    %v3321 = vpack.c.b16 %v3041, %v3037
    %v3322 = vpack.c.b16 %v3042, %v3038
    %v3323 = vpack.c.b16 %v3043, %v3039
    %v3324 = vpack.c.b16 %v3044, %v3040
    %v3325 = vpack.c.b16 %v3049, %v3045
    %v3326 = vpack.c.b16 %v3050, %v3046
    %v3327 = vpack.c.b16 %v3051, %v3047
    %v3328 = vpack.c.b16 %v3052, %v3048
    %v3329 = vpack.c.b16 %v3057, %v3053
    %v3330 = vpack.c.b16 %v3058, %v3054
    %v3331 = vpack.c.b16 %v3059, %v3055
    %v3332 = vpack.c.b16 %v3060, %v3056
    %v3333 = vpack.c.b16 %v3065, %v3061
    %v3334 = vpack.c.b16 %v3066, %v3062
    %v3335 = vpack.c.b16 %v3067, %v3063
    %v3336 = vpack.c.b16 %v3068, %v3064
    %v3337 = vpack.c.b16 %v3073, %v3069
    %v3338 = vpack.c.b16 %v3074, %v3070
    %v3339 = vpack.c.b16 %v3075, %v3071
    %v3340 = vpack.c.b16 %v3076, %v3072
    %v3341 = vpack.c.b16 %v3081, %v3077
    %v3342 = vpack.c.b16 %v3082, %v3078
    %v3343 = vpack.c.b16 %v3083, %v3079
    %v3344 = vpack.c.b16 %v3084, %v3080
    %v3345 = vpack.c.b16 %v3089, %v3085
    %v3346 = vpack.c.b16 %v3090, %v3086
    %v3347 = vpack.c.b16 %v3091, %v3087
    %v3348 = vpack.c.b16 %v3092, %v3088
    %v3349 = vpack.c.b16 %v3097, %v3093
    %v3350 = vpack.c.b16 %v3098, %v3094
    %v3351 = vpack.c.b16 %v3099, %v3095
    %v3352 = vpack.c.b16 %v3100, %v3096
    %v3353 = vpack.c.b16 %v3105, %v3101
    %v3354 = vpack.c.b16 %v3106, %v3102
    %v3355 = vpack.c.b16 %v3107, %v3103
    %v3356 = vpack.c.b16 %v3108, %v3104
    %v3357 = vpack.c.b16 %v3113, %v3109
    %v3358 = vpack.c.b16 %v3114, %v3110
    %v3359 = vpack.c.b16 %v3115, %v3111
    %v3360 = vpack.c.b16 %v3116, %v3112
    %v3361 = vpack.c.b16 %v3121, %v3117
    %v3362 = vpack.c.b16 %v3122, %v3118
    %v3363 = vpack.c.b16 %v3123, %v3119
    %v3364 = vpack.c.b16 %v3124, %v3120
    %v3365 = vpack.c.b16 %v3129, %v3125
    %v3366 = vpack.c.b16 %v3130, %v3126
    %v3367 = vpack.c.b16 %v3131, %v3127
    %v3368 = vpack.c.b16 %v3132, %v3128
    %v3369 = vpack.c.b16 %v3137, %v3133
    %v3370 = vpack.c.b16 %v3138, %v3134
    %v3371 = vpack.c.b16 %v3139, %v3135
    %v3372 = vpack.c.b16 %v3140, %v3136
    %v3373 = vpack.c.b16 %v3145, %v3141
    %v3374 = vpack.c.b16 %v3146, %v3142
    %v3375 = vpack.c.b16 %v3147, %v3143
    %v3376 = vpack.c.b16 %v3148, %v3144
    %v3377 = vpack.c.b16 %v3153, %v3149
    %v3378 = vpack.c.b16 %v3154, %v3150
    %v3379 = vpack.c.b16 %v3155, %v3151
    %v3380 = vpack.c.b16 %v3156, %v3152
    %v3381 = vpack.c.b16 %v3161, %v3157
    %v3382 = vpack.c.b16 %v3162, %v3158
    %v3383 = vpack.c.b16 %v3163, %v3159
    %v3384 = vpack.c.b16 %v3164, %v3160
    %v3385 = vpack.c.b16 %v3169, %v3165
    %v3386 = vpack.c.b16 %v3170, %v3166
    %v3387 = vpack.c.b16 %v3171, %v3167
    %v3388 = vpack.c.b16 %v3172, %v3168
    %v3389 = vpack.c.b16 %v3177, %v3173
    %v3390 = vpack.c.b16 %v3178, %v3174
    %v3391 = vpack.c.b16 %v3179, %v3175
    %v3392 = vpack.c.b16 %v3180, %v3176
    %v3393 = vpack.c.b16 %v3185, %v3181
    %v3394 = vpack.c.b16 %v3186, %v3182
    %v3395 = vpack.c.b16 %v3187, %v3183
    %v3396 = vpack.c.b16 %v3188, %v3184
    %v3397 = vpack.c.b16 %v3193, %v3189
    %v3398 = vpack.c.b16 %v3194, %v3190
    %v3399 = vpack.c.b16 %v3195, %v3191
    %v3400 = vpack.c.b16 %v3196, %v3192
    %v3401 = vpack.c.b16 %v3201, %v3197
    %v3402 = vpack.c.b16 %v3202, %v3198
    %v3403 = vpack.c.b16 %v3203, %v3199
    %v3404 = vpack.c.b16 %v3204, %v3200
    %v3405 = vpack.c.b16 %v3209, %v3205
    %v3406 = vpack.c.b16 %v3210, %v3206
    %v3407 = vpack.c.b16 %v3211, %v3207
    %v3408 = vpack.c.b16 %v3212, %v3208
    %v3409 = vpack.c.b16 %v3217, %v3213
    %v3410 = vpack.c.b16 %v3218, %v3214
    %v3411 = vpack.c.b16 %v3219, %v3215
    %v3412 = vpack.c.b16 %v3220, %v3216
    %3605 = vmatprep.subr.bf16.mxu0 %v3250
    %3606 = vmatpush1.bf16.msra.mxu0 %v3249
    %3607 = vmatprep.subr.bf16.mxu0 %v3246
    %3608 = vmatpush1.bf16.msra.mxu0 %v3245
    %3609 = vmatprep.subr.bf16.mxu0 %v3242
    %3610 = vmatpush1.bf16.msra.mxu0 %v3241
    %3611 = vmatprep.subr.bf16.mxu0 %v3238
    %3612 = vmatpush1.bf16.msra.mxu0 %v3237
    %3613 = vmatprep.subr.bf16.mxu0 %v3234
    %3614 = vmatpush1.bf16.msra.mxu0 %v3233
    %3615 = vmatprep.subr.bf16.mxu0 %v3230
    %3616 = vmatpush1.bf16.msra.mxu0 %v3229
    %3617 = vmatprep.subr.bf16.mxu0 %v3226
    %3618 = vmatpush1.bf16.msra.mxu0 %v3225
    %3619 = vmatprep.subr.bf16.mxu0 %v3222
    %3620 = vmatpush1.bf16.msra.mxu0 %v3221
    %3621 = vmatprep.subr.bf16.mxu0 %v3282
    %3622 = vmatpush2.bf16.msra.mxu0 %v3281
    %3623 = vmatprep.subr.bf16.mxu0 %v3278
    %3624 = vmatpush2.bf16.msra.mxu0 %v3277
    %3625 = vmatprep.subr.bf16.mxu0 %v3274
    %3626 = vmatpush2.bf16.msra.mxu0 %v3273
    %3627 = vmatprep.subr.bf16.mxu0 %v3270
    %3628 = vmatpush2.bf16.msra.mxu0 %v3269
    %3629 = vmatprep.subr.bf16.mxu0 %v3266
    %3630 = vmatpush2.bf16.msra.mxu0 %v3265
    %3631 = vmatprep.subr.bf16.mxu0 %v3262
    %3632 = vmatpush2.bf16.msra.mxu0 %v3261
    %3633 = vmatprep.subr.bf16.mxu0 %v3258
    %3634 = vmatpush2.bf16.msra.mxu0 %v3257
    %3635 = vmatprep.subr.bf16.mxu0 %v3254
    %3636 = vmatpush2.bf16.msra.mxu0 %v3253
    %3637 = vmatprep.mubr.bf16.mxu0 %v2390
    %3638 = vmatmul.mubr.bf16.gmra.mxu0 %v2389
    %v3639 = vpop.f32.mrf.mxu0
    %v3640 = vadd.f32 %v2628, %v3639
    %v3641 = vpop.f32.mrf.mxu0
    %v3642 = vadd.f32 %v2632, %v3641
    %v3643 = vpop.f32.mrf.mxu0
    %v3644 = vadd.f32 %v2628, %v3643
    %v3645 = vpop.f32.mrf.mxu0
    %v3646 = vadd.f32 %v2632, %v3645
    %3647 = vmatprep.mubr.bf16.mxu0 %v2396
    %3648 = vmatmul.mubr.bf16.gmra.mxu0 %v2395
    %v3649 = vpop.f32.mrf.mxu0
    %v3650 = vadd.f32 %v2628, %v3649
    %v3651 = vpop.f32.mrf.mxu0
    %v3652 = vadd.f32 %v2632, %v3651
    %v3653 = vpop.f32.mrf.mxu0
    %v3654 = vadd.f32 %v2628, %v3653
    %v3655 = vpop.f32.mrf.mxu0
    %v3656 = vadd.f32 %v2632, %v3655
    %3657 = vmatprep.mubr.bf16.mxu0 %v2402
    %3658 = vmatmul.mubr.bf16.gmra.mxu0 %v2401
    %v3659 = vpop.f32.mrf.mxu0
    %v3660 = vadd.f32 %v2628, %v3659
    %v3661 = vpop.f32.mrf.mxu0
    %v3662 = vadd.f32 %v2632, %v3661
    %v3663 = vpop.f32.mrf.mxu0
    %v3664 = vadd.f32 %v2628, %v3663
    %v3665 = vpop.f32.mrf.mxu0
    %v3666 = vadd.f32 %v2632, %v3665
    %3667 = vmatprep.mubr.bf16.mxu0 %v2408
    %3668 = vmatmul.mubr.bf16.gmra.mxu0 %v2407
    %v3669 = vpop.f32.mrf.mxu0
    %v3670 = vadd.f32 %v2628, %v3669
    %v3671 = vpop.f32.mrf.mxu0
    %v3672 = vadd.f32 %v2632, %v3671
    %v3673 = vpop.f32.mrf.mxu0
    %v3674 = vadd.f32 %v2628, %v3673
    %v3675 = vpop.f32.mrf.mxu0
    %v3676 = vadd.f32 %v2632, %v3675
    %3677 = vmatprep.mubr.bf16.mxu0 %v2414
    %3678 = vmatmul.mubr.bf16.gmra.mxu0 %v2413
    %v3679 = vpop.f32.mrf.mxu0
    %v3680 = vadd.f32 %v2628, %v3679
    %v3681 = vpop.f32.mrf.mxu0
    %v3682 = vadd.f32 %v2632, %v3681
    %v3683 = vpop.f32.mrf.mxu0
    %v3684 = vadd.f32 %v2628, %v3683
    %v3685 = vpop.f32.mrf.mxu0
    %v3686 = vadd.f32 %v2632, %v3685
    %3687 = vmatprep.mubr.bf16.mxu0 %v2420
    %3688 = vmatmul.mubr.bf16.gmra.mxu0 %v2419
    %v3689 = vpop.f32.mrf.mxu0
    %v3690 = vadd.f32 %v2628, %v3689
    %v3691 = vpop.f32.mrf.mxu0
    %v3692 = vadd.f32 %v2632, %v3691
    %v3693 = vpop.f32.mrf.mxu0
    %v3694 = vadd.f32 %v2628, %v3693
    %v3695 = vpop.f32.mrf.mxu0
    %v3696 = vadd.f32 %v2632, %v3695
    %3697 = vmatprep.mubr.bf16.mxu0 %v2426
    %3698 = vmatmul.mubr.bf16.gmra.mxu0 %v2425
    %v3699 = vpop.f32.mrf.mxu0
    %v3700 = vadd.f32 %v2628, %v3699
    %v3701 = vpop.f32.mrf.mxu0
    %v3702 = vadd.f32 %v2632, %v3701
    %v3703 = vpop.f32.mrf.mxu0
    %v3704 = vadd.f32 %v2628, %v3703
    %v3705 = vpop.f32.mrf.mxu0
    %v3706 = vadd.f32 %v2632, %v3705
    %3707 = vdwg.mxu0
    %3708 = vmatprep.subr.bf16.mxu0 %v3314
    %3709 = vmatpush1.bf16.msra.mxu0 %v3313
    %3710 = vmatprep.subr.bf16.mxu0 %v3310
    %3711 = vmatpush1.bf16.msra.mxu0 %v3309
    %3712 = vmatprep.subr.bf16.mxu0 %v3306
    %3713 = vmatpush1.bf16.msra.mxu0 %v3305
    %3714 = vmatprep.subr.bf16.mxu0 %v3302
    %3715 = vmatpush1.bf16.msra.mxu0 %v3301
    %3716 = vmatprep.subr.bf16.mxu0 %v3298
    %3717 = vmatpush1.bf16.msra.mxu0 %v3297
    %3718 = vmatprep.subr.bf16.mxu0 %v3294
    %3719 = vmatpush1.bf16.msra.mxu0 %v3293
    %3720 = vmatprep.subr.bf16.mxu0 %v3290
    %3721 = vmatpush1.bf16.msra.mxu0 %v3289
    %3722 = vmatprep.subr.bf16.mxu0 %v3286
    %3723 = vmatpush1.bf16.msra.mxu0 %v3285
    %3724 = vmatprep.subr.bf16.mxu0 %v3346
    %3725 = vmatpush2.bf16.msra.mxu0 %v3345
    %3726 = vmatprep.subr.bf16.mxu0 %v3342
    %3727 = vmatpush2.bf16.msra.mxu0 %v3341
    %3728 = vmatprep.subr.bf16.mxu0 %v3338
    %3729 = vmatpush2.bf16.msra.mxu0 %v3337
    %3730 = vmatprep.subr.bf16.mxu0 %v3334
    %3731 = vmatpush2.bf16.msra.mxu0 %v3333
    %3732 = vmatprep.subr.bf16.mxu0 %v3330
    %3733 = vmatpush2.bf16.msra.mxu0 %v3329
    %3734 = vmatprep.subr.bf16.mxu0 %v3326
    %3735 = vmatpush2.bf16.msra.mxu0 %v3325
    %3736 = vmatprep.subr.bf16.mxu0 %v3322
    %3737 = vmatpush2.bf16.msra.mxu0 %v3321
    %3738 = vmatprep.subr.bf16.mxu0 %v3318
    %3739 = vmatpush2.bf16.msra.mxu0 %v3317
    %3740 = vmatprep.mubr.bf16.mxu0 %v2392
    %3741 = vmatmul.mubr.bf16.gmra.mxu0 %v2391
    %v3742 = vpop.f32.mrf.mxu0
    %v3743 = vadd.f32 %v3640, %v3742
    %v3744 = vpop.f32.mrf.mxu0
    %v3745 = vadd.f32 %v3642, %v3744
    %v3746 = vpop.f32.mrf.mxu0
    %v3747 = vadd.f32 %v3644, %v3746
    %v3748 = vpop.f32.mrf.mxu0
    %v3749 = vadd.f32 %v3646, %v3748
    %3750 = vmatprep.mubr.bf16.mxu0 %v2398
    %3751 = vmatmul.mubr.bf16.gmra.mxu0 %v2397
    %v3752 = vpop.f32.mrf.mxu0
    %v3753 = vadd.f32 %v3650, %v3752
    %v3754 = vpop.f32.mrf.mxu0
    %v3755 = vadd.f32 %v3652, %v3754
    %v3756 = vpop.f32.mrf.mxu0
    %v3757 = vadd.f32 %v3654, %v3756
    %v3758 = vpop.f32.mrf.mxu0
    %v3759 = vadd.f32 %v3656, %v3758
    %3760 = vmatprep.mubr.bf16.mxu0 %v2404
    %3761 = vmatmul.mubr.bf16.gmra.mxu0 %v2403
    %v3762 = vpop.f32.mrf.mxu0
    %v3763 = vadd.f32 %v3660, %v3762
    %v3764 = vpop.f32.mrf.mxu0
    %v3765 = vadd.f32 %v3662, %v3764
    %v3766 = vpop.f32.mrf.mxu0
    %v3767 = vadd.f32 %v3664, %v3766
    %v3768 = vpop.f32.mrf.mxu0
    %v3769 = vadd.f32 %v3666, %v3768
    %3770 = vmatprep.mubr.bf16.mxu0 %v2410
    %3771 = vmatmul.mubr.bf16.gmra.mxu0 %v2409
    %v3772 = vpop.f32.mrf.mxu0
    %v3773 = vadd.f32 %v3670, %v3772
    %v3774 = vpop.f32.mrf.mxu0
    %v3775 = vadd.f32 %v3672, %v3774
    %v3776 = vpop.f32.mrf.mxu0
    %v3777 = vadd.f32 %v3674, %v3776
    %v3778 = vpop.f32.mrf.mxu0
    %v3779 = vadd.f32 %v3676, %v3778
    %3780 = vmatprep.mubr.bf16.mxu0 %v2416
    %3781 = vmatmul.mubr.bf16.gmra.mxu0 %v2415
    %v3782 = vpop.f32.mrf.mxu0
    %v3783 = vadd.f32 %v3680, %v3782
    %v3784 = vpop.f32.mrf.mxu0
    %v3785 = vadd.f32 %v3682, %v3784
    %v3786 = vpop.f32.mrf.mxu0
    %v3787 = vadd.f32 %v3684, %v3786
    %v3788 = vpop.f32.mrf.mxu0
    %v3789 = vadd.f32 %v3686, %v3788
    %3790 = vmatprep.mubr.bf16.mxu0 %v2422
    %3791 = vmatmul.mubr.bf16.gmra.mxu0 %v2421
    %v3792 = vpop.f32.mrf.mxu0
    %v3793 = vadd.f32 %v3690, %v3792
    %v3794 = vpop.f32.mrf.mxu0
    %v3795 = vadd.f32 %v3692, %v3794
    %v3796 = vpop.f32.mrf.mxu0
    %v3797 = vadd.f32 %v3694, %v3796
    %v3798 = vpop.f32.mrf.mxu0
    %v3799 = vadd.f32 %v3696, %v3798
    %3800 = vmatprep.mubr.bf16.mxu0 %v2428
    %3801 = vmatmul.mubr.bf16.gmra.mxu0 %v2427
    %v3802 = vpop.f32.mrf.mxu0
    %v3803 = vadd.f32 %v3700, %v3802
    %v3804 = vpop.f32.mrf.mxu0
    %v3805 = vadd.f32 %v3702, %v3804
    %v3806 = vpop.f32.mrf.mxu0
    %v3807 = vadd.f32 %v3704, %v3806
    %v3808 = vpop.f32.mrf.mxu0
    %v3809 = vadd.f32 %v3706, %v3808
    %3810 = vdwg.mxu0
    %3811 = vmatprep.subr.bf16.mxu0 %v3378
    %3812 = vmatpush1.bf16.msra.mxu0 %v3377
    %3813 = vmatprep.subr.bf16.mxu0 %v3374
    %3814 = vmatpush1.bf16.msra.mxu0 %v3373
    %3815 = vmatprep.subr.bf16.mxu0 %v3370
    %3816 = vmatpush1.bf16.msra.mxu0 %v3369
    %3817 = vmatprep.subr.bf16.mxu0 %v3366
    %3818 = vmatpush1.bf16.msra.mxu0 %v3365
    %3819 = vmatprep.subr.bf16.mxu0 %v3362
    %3820 = vmatpush1.bf16.msra.mxu0 %v3361
    %3821 = vmatprep.subr.bf16.mxu0 %v3358
    %3822 = vmatpush1.bf16.msra.mxu0 %v3357
    %3823 = vmatprep.subr.bf16.mxu0 %v3354
    %3824 = vmatpush1.bf16.msra.mxu0 %v3353
    %3825 = vmatprep.subr.bf16.mxu0 %v3350
    %3826 = vmatpush1.bf16.msra.mxu0 %v3349
    %3827 = vmatprep.subr.bf16.mxu0 %v3410
    %3828 = vmatpush2.bf16.msra.mxu0 %v3409
    %3829 = vmatprep.subr.bf16.mxu0 %v3406
    %3830 = vmatpush2.bf16.msra.mxu0 %v3405
    %3831 = vmatprep.subr.bf16.mxu0 %v3402
    %3832 = vmatpush2.bf16.msra.mxu0 %v3401
    %3833 = vmatprep.subr.bf16.mxu0 %v3398
    %3834 = vmatpush2.bf16.msra.mxu0 %v3397
    %3835 = vmatprep.subr.bf16.mxu0 %v3394
    %3836 = vmatpush2.bf16.msra.mxu0 %v3393
    %3837 = vmatprep.subr.bf16.mxu0 %v3390
    %3838 = vmatpush2.bf16.msra.mxu0 %v3389
    %3839 = vmatprep.subr.bf16.mxu0 %v3386
    %3840 = vmatpush2.bf16.msra.mxu0 %v3385
    %3841 = vmatprep.subr.bf16.mxu0 %v3382
    %3842 = vmatpush2.bf16.msra.mxu0 %v3381
    %3843 = vmatprep.mubr.bf16.mxu0 %v2394
    %3844 = vmatmul.mubr.bf16.gmra.mxu0 %v2393
    %v3845 = vpop.f32.mrf.mxu0
    %v3846 = vadd.f32 %v3743, %v3845
    %v3847 = vpop.f32.mrf.mxu0
    %v3848 = vadd.f32 %v3745, %v3847
    %v3849 = vpop.f32.mrf.mxu0
    %v3850 = vadd.f32 %v3747, %v3849
    %v3851 = vpop.f32.mrf.mxu0
    %v3852 = vadd.f32 %v3749, %v3851
    %3853 = vmatprep.mubr.bf16.mxu0 %v2400
    %3854 = vmatmul.mubr.bf16.gmra.mxu0 %v2399
    %v3855 = vpop.f32.mrf.mxu0
    %v3856 = vadd.f32 %v3753, %v3855
    %v3857 = vpop.f32.mrf.mxu0
    %v3858 = vadd.f32 %v3755, %v3857
    %v3859 = vpop.f32.mrf.mxu0
    %v3860 = vadd.f32 %v3757, %v3859
    %v3861 = vpop.f32.mrf.mxu0
    %v3862 = vadd.f32 %v3759, %v3861
    %3863 = vmatprep.mubr.bf16.mxu0 %v2406
    %3864 = vmatmul.mubr.bf16.gmra.mxu0 %v2405
    %v3865 = vpop.f32.mrf.mxu0
    %v3866 = vadd.f32 %v3763, %v3865
    %v3867 = vpop.f32.mrf.mxu0
    %v3868 = vadd.f32 %v3765, %v3867
    %v3869 = vpop.f32.mrf.mxu0
    %v3870 = vadd.f32 %v3767, %v3869
    %v3871 = vpop.f32.mrf.mxu0
    %v3872 = vadd.f32 %v3769, %v3871
    %3873 = vmatprep.mubr.bf16.mxu0 %v2412
    %3874 = vmatmul.mubr.bf16.gmra.mxu0 %v2411
    %v3875 = vpop.f32.mrf.mxu0
    %v3876 = vadd.f32 %v3773, %v3875
    %v3877 = vpop.f32.mrf.mxu0
    %v3878 = vadd.f32 %v3775, %v3877
    %v3879 = vpop.f32.mrf.mxu0
    %v3880 = vadd.f32 %v3777, %v3879
    %v3881 = vpop.f32.mrf.mxu0
    %v3882 = vadd.f32 %v3779, %v3881
    %3883 = vmatprep.mubr.bf16.mxu0 %v2418
    %3884 = vmatmul.mubr.bf16.gmra.mxu0 %v2417
    %v3885 = vpop.f32.mrf.mxu0
    %v3886 = vadd.f32 %v3783, %v3885
    %v3887 = vpop.f32.mrf.mxu0
    %v3888 = vadd.f32 %v3785, %v3887
    %v3889 = vpop.f32.mrf.mxu0
    %v3890 = vadd.f32 %v3787, %v3889
    %v3891 = vpop.f32.mrf.mxu0
    %v3892 = vadd.f32 %v3789, %v3891
    %3893 = vmatprep.mubr.bf16.mxu0 %v2424
    %3894 = vmatmul.mubr.bf16.gmra.mxu0 %v2423
    %v3895 = vpop.f32.mrf.mxu0
    %v3896 = vadd.f32 %v3793, %v3895
    %v3897 = vpop.f32.mrf.mxu0
    %v3898 = vadd.f32 %v3795, %v3897
    %v3899 = vpop.f32.mrf.mxu0
    %v3900 = vadd.f32 %v3797, %v3899
    %v3901 = vpop.f32.mrf.mxu0
    %v3902 = vadd.f32 %v3799, %v3901
    %3903 = vmatprep.mubr.bf16.mxu0 %v2430
    %3904 = vmatmul.mubr.bf16.gmra.mxu0 %v2429
    %v3905 = vpop.f32.mrf.mxu0
    %v3906 = vadd.f32 %v3803, %v3905
    %v3907 = vpop.f32.mrf.mxu0
    %v3908 = vadd.f32 %v3805, %v3907
    %v3909 = vpop.f32.mrf.mxu0
    %v3910 = vadd.f32 %v3807, %v3909
    %v3911 = vpop.f32.mrf.mxu0
    %v3912 = vadd.f32 %v3809, %v3911
    %3913 = vdwg.mxu0
    %3914 = vmatprep.subr.bf16.mxu0 %v3252
    %3915 = vmatpush1.bf16.msra.mxu0 %v3251
    %3916 = vmatprep.subr.bf16.mxu0 %v3248
    %3917 = vmatpush1.bf16.msra.mxu0 %v3247
    %3918 = vmatprep.subr.bf16.mxu0 %v3244
    %3919 = vmatpush1.bf16.msra.mxu0 %v3243
    %3920 = vmatprep.subr.bf16.mxu0 %v3240
    %3921 = vmatpush1.bf16.msra.mxu0 %v3239
    %3922 = vmatprep.subr.bf16.mxu0 %v3236
    %3923 = vmatpush1.bf16.msra.mxu0 %v3235
    %3924 = vmatprep.subr.bf16.mxu0 %v3232
    %3925 = vmatpush1.bf16.msra.mxu0 %v3231
    %3926 = vmatprep.subr.bf16.mxu0 %v3228
    %3927 = vmatpush1.bf16.msra.mxu0 %v3227
    %3928 = vmatprep.subr.bf16.mxu0 %v3224
    %3929 = vmatpush1.bf16.msra.mxu0 %v3223
    %3930 = vmatprep.subr.bf16.mxu0 %v3284
    %3931 = vmatpush2.bf16.msra.mxu0 %v3283
    %3932 = vmatprep.subr.bf16.mxu0 %v3280
    %3933 = vmatpush2.bf16.msra.mxu0 %v3279
    %3934 = vmatprep.subr.bf16.mxu0 %v3276
    %3935 = vmatpush2.bf16.msra.mxu0 %v3275
    %3936 = vmatprep.subr.bf16.mxu0 %v3272
    %3937 = vmatpush2.bf16.msra.mxu0 %v3271
    %3938 = vmatprep.subr.bf16.mxu0 %v3268
    %3939 = vmatpush2.bf16.msra.mxu0 %v3267
    %3940 = vmatprep.subr.bf16.mxu0 %v3264
    %3941 = vmatpush2.bf16.msra.mxu0 %v3263
    %3942 = vmatprep.subr.bf16.mxu0 %v3260
    %3943 = vmatpush2.bf16.msra.mxu0 %v3259
    %3944 = vmatprep.subr.bf16.mxu0 %v3256
    %3945 = vmatpush2.bf16.msra.mxu0 %v3255
    %3946 = vmatprep.mubr.bf16.mxu0 %v2390
    %3947 = vmatmul.mubr.bf16.gmra.mxu0 %v2389
    %v3948 = vpop.f32.mrf.mxu0
    %v3949 = vadd.f32 %v2636, %v3948
    %v3950 = vpop.f32.mrf.mxu0
    %v3951 = vadd.f32 %v2640, %v3950
    %v3952 = vpop.f32.mrf.mxu0
    %v3953 = vadd.f32 %v2636, %v3952
    %v3954 = vpop.f32.mrf.mxu0
    %v3955 = vadd.f32 %v2640, %v3954
    %3956 = vmatprep.mubr.bf16.mxu0 %v2396
    %3957 = vmatmul.mubr.bf16.gmra.mxu0 %v2395
    %v3958 = vpop.f32.mrf.mxu0
    %v3959 = vadd.f32 %v2636, %v3958
    %v3960 = vpop.f32.mrf.mxu0
    %v3961 = vadd.f32 %v2640, %v3960
    %v3962 = vpop.f32.mrf.mxu0
    %v3963 = vadd.f32 %v2636, %v3962
    %v3964 = vpop.f32.mrf.mxu0
    %v3965 = vadd.f32 %v2640, %v3964
    %3966 = vmatprep.mubr.bf16.mxu0 %v2402
    %3967 = vmatmul.mubr.bf16.gmra.mxu0 %v2401
    %v3968 = vpop.f32.mrf.mxu0
    %v3969 = vadd.f32 %v2636, %v3968
    %v3970 = vpop.f32.mrf.mxu0
    %v3971 = vadd.f32 %v2640, %v3970
    %v3972 = vpop.f32.mrf.mxu0
    %v3973 = vadd.f32 %v2636, %v3972
    %v3974 = vpop.f32.mrf.mxu0
    %v3975 = vadd.f32 %v2640, %v3974
    %3976 = vmatprep.mubr.bf16.mxu0 %v2408
    %3977 = vmatmul.mubr.bf16.gmra.mxu0 %v2407
    %v3978 = vpop.f32.mrf.mxu0
    %v3979 = vadd.f32 %v2636, %v3978
    %v3980 = vpop.f32.mrf.mxu0
    %v3981 = vadd.f32 %v2640, %v3980
    %v3982 = vpop.f32.mrf.mxu0
    %v3983 = vadd.f32 %v2636, %v3982
    %v3984 = vpop.f32.mrf.mxu0
    %v3985 = vadd.f32 %v2640, %v3984
    %3986 = vmatprep.mubr.bf16.mxu0 %v2414
    %3987 = vmatmul.mubr.bf16.gmra.mxu0 %v2413
    %v3988 = vpop.f32.mrf.mxu0
    %v3989 = vadd.f32 %v2636, %v3988
    %v3990 = vpop.f32.mrf.mxu0
    %v3991 = vadd.f32 %v2640, %v3990
    %v3992 = vpop.f32.mrf.mxu0
    %v3993 = vadd.f32 %v2636, %v3992
    %v3994 = vpop.f32.mrf.mxu0
    %v3995 = vadd.f32 %v2640, %v3994
    %3996 = vmatprep.mubr.bf16.mxu0 %v2420
    %3997 = vmatmul.mubr.bf16.gmra.mxu0 %v2419
    %v3998 = vpop.f32.mrf.mxu0
    %v3999 = vadd.f32 %v2636, %v3998
    %v4000 = vpop.f32.mrf.mxu0
    %v4001 = vadd.f32 %v2640, %v4000
    %v4002 = vpop.f32.mrf.mxu0
    %v4003 = vadd.f32 %v2636, %v4002
    %v4004 = vpop.f32.mrf.mxu0
    %v4005 = vadd.f32 %v2640, %v4004
    %4006 = vmatprep.mubr.bf16.mxu0 %v2426
    %4007 = vmatmul.mubr.bf16.gmra.mxu0 %v2425
    %v4008 = vpop.f32.mrf.mxu0
    %v4009 = vadd.f32 %v2636, %v4008
    %v4010 = vpop.f32.mrf.mxu0
    %v4011 = vadd.f32 %v2640, %v4010
    %v4012 = vpop.f32.mrf.mxu0
    %v4013 = vadd.f32 %v2636, %v4012
    %v4014 = vpop.f32.mrf.mxu0
    %v4015 = vadd.f32 %v2640, %v4014
    %4016 = vdwg.mxu0
    %4017 = vmatprep.subr.bf16.mxu0 %v3316
    %4018 = vmatpush1.bf16.msra.mxu0 %v3315
    %4019 = vmatprep.subr.bf16.mxu0 %v3312
    %4020 = vmatpush1.bf16.msra.mxu0 %v3311
    %4021 = vmatprep.subr.bf16.mxu0 %v3308
    %4022 = vmatpush1.bf16.msra.mxu0 %v3307
    %4023 = vmatprep.subr.bf16.mxu0 %v3304
    %4024 = vmatpush1.bf16.msra.mxu0 %v3303
    %4025 = vmatprep.subr.bf16.mxu0 %v3300
    %4026 = vmatpush1.bf16.msra.mxu0 %v3299
    %4027 = vmatprep.subr.bf16.mxu0 %v3296
    %4028 = vmatpush1.bf16.msra.mxu0 %v3295
    %4029 = vmatprep.subr.bf16.mxu0 %v3292
    %4030 = vmatpush1.bf16.msra.mxu0 %v3291
    %4031 = vmatprep.subr.bf16.mxu0 %v3288
    %4032 = vmatpush1.bf16.msra.mxu0 %v3287
    %4033 = vmatprep.subr.bf16.mxu0 %v3348
    %4034 = vmatpush2.bf16.msra.mxu0 %v3347
    %4035 = vmatprep.subr.bf16.mxu0 %v3344
    %4036 = vmatpush2.bf16.msra.mxu0 %v3343
    %4037 = vmatprep.subr.bf16.mxu0 %v3340
    %4038 = vmatpush2.bf16.msra.mxu0 %v3339
    %4039 = vmatprep.subr.bf16.mxu0 %v3336
    %4040 = vmatpush2.bf16.msra.mxu0 %v3335
    %4041 = vmatprep.subr.bf16.mxu0 %v3332
    %4042 = vmatpush2.bf16.msra.mxu0 %v3331
    %4043 = vmatprep.subr.bf16.mxu0 %v3328
    %4044 = vmatpush2.bf16.msra.mxu0 %v3327
    %4045 = vmatprep.subr.bf16.mxu0 %v3324
    %4046 = vmatpush2.bf16.msra.mxu0 %v3323
    %4047 = vmatprep.subr.bf16.mxu0 %v3320
    %4048 = vmatpush2.bf16.msra.mxu0 %v3319
    %4049 = vmatprep.mubr.bf16.mxu0 %v2392
    %4050 = vmatmul.mubr.bf16.gmra.mxu0 %v2391
    %v4051 = vpop.f32.mrf.mxu0
    %v4052 = vadd.f32 %v3949, %v4051
    %v4053 = vpop.f32.mrf.mxu0
    %v4054 = vadd.f32 %v3951, %v4053
    %v4055 = vpop.f32.mrf.mxu0
    %v4056 = vadd.f32 %v3953, %v4055
    %v4057 = vpop.f32.mrf.mxu0
    %v4058 = vadd.f32 %v3955, %v4057
    %4059 = vmatprep.mubr.bf16.mxu0 %v2398
    %4060 = vmatmul.mubr.bf16.gmra.mxu0 %v2397
    %v4061 = vpop.f32.mrf.mxu0
    %v4062 = vadd.f32 %v3959, %v4061
    %v4063 = vpop.f32.mrf.mxu0
    %v4064 = vadd.f32 %v3961, %v4063
    %v4065 = vpop.f32.mrf.mxu0
    %v4066 = vadd.f32 %v3963, %v4065
    %v4067 = vpop.f32.mrf.mxu0
    %v4068 = vadd.f32 %v3965, %v4067
    %4069 = vmatprep.mubr.bf16.mxu0 %v2404
    %4070 = vmatmul.mubr.bf16.gmra.mxu0 %v2403
    %v4071 = vpop.f32.mrf.mxu0
    %v4072 = vadd.f32 %v3969, %v4071
    %v4073 = vpop.f32.mrf.mxu0
    %v4074 = vadd.f32 %v3971, %v4073
    %v4075 = vpop.f32.mrf.mxu0
    %v4076 = vadd.f32 %v3973, %v4075
    %v4077 = vpop.f32.mrf.mxu0
    %v4078 = vadd.f32 %v3975, %v4077
    %4079 = vmatprep.mubr.bf16.mxu0 %v2410
    %4080 = vmatmul.mubr.bf16.gmra.mxu0 %v2409
    %v4081 = vpop.f32.mrf.mxu0
    %v4082 = vadd.f32 %v3979, %v4081
    %v4083 = vpop.f32.mrf.mxu0
    %v4084 = vadd.f32 %v3981, %v4083
    %v4085 = vpop.f32.mrf.mxu0
    %v4086 = vadd.f32 %v3983, %v4085
    %v4087 = vpop.f32.mrf.mxu0
    %v4088 = vadd.f32 %v3985, %v4087
    %4089 = vmatprep.mubr.bf16.mxu0 %v2416
    %4090 = vmatmul.mubr.bf16.gmra.mxu0 %v2415
    %v4091 = vpop.f32.mrf.mxu0
    %v4092 = vadd.f32 %v3989, %v4091
    %v4093 = vpop.f32.mrf.mxu0
    %v4094 = vadd.f32 %v3991, %v4093
    %v4095 = vpop.f32.mrf.mxu0
    %v4096 = vadd.f32 %v3993, %v4095
    %v4097 = vpop.f32.mrf.mxu0
    %v4098 = vadd.f32 %v3995, %v4097
    %4099 = vmatprep.mubr.bf16.mxu0 %v2422
    %4100 = vmatmul.mubr.bf16.gmra.mxu0 %v2421
    %v4101 = vpop.f32.mrf.mxu0
    %v4102 = vadd.f32 %v3999, %v4101
    %v4103 = vpop.f32.mrf.mxu0
    %v4104 = vadd.f32 %v4001, %v4103
    %v4105 = vpop.f32.mrf.mxu0
    %v4106 = vadd.f32 %v4003, %v4105
    %v4107 = vpop.f32.mrf.mxu0
    %v4108 = vadd.f32 %v4005, %v4107
    %4109 = vmatprep.mubr.bf16.mxu0 %v2428
    %4110 = vmatmul.mubr.bf16.gmra.mxu0 %v2427
    %v4111 = vpop.f32.mrf.mxu0
    %v4112 = vadd.f32 %v4009, %v4111
    %v4113 = vpop.f32.mrf.mxu0
    %v4114 = vadd.f32 %v4011, %v4113
    %v4115 = vpop.f32.mrf.mxu0
    %v4116 = vadd.f32 %v4013, %v4115
    %v4117 = vpop.f32.mrf.mxu0
    %v4118 = vadd.f32 %v4015, %v4117
    %4119 = vdwg.mxu0
    %4120 = vmatprep.subr.bf16.mxu0 %v3380
    %4121 = vmatpush1.bf16.msra.mxu0 %v3379
    %4122 = vmatprep.subr.bf16.mxu0 %v3376
    %4123 = vmatpush1.bf16.msra.mxu0 %v3375
    %4124 = vmatprep.subr.bf16.mxu0 %v3372
    %4125 = vmatpush1.bf16.msra.mxu0 %v3371
    %4126 = vmatprep.subr.bf16.mxu0 %v3368
    %4127 = vmatpush1.bf16.msra.mxu0 %v3367
    %4128 = vmatprep.subr.bf16.mxu0 %v3364
    %4129 = vmatpush1.bf16.msra.mxu0 %v3363
    %4130 = vmatprep.subr.bf16.mxu0 %v3360
    %4131 = vmatpush1.bf16.msra.mxu0 %v3359
    %4132 = vmatprep.subr.bf16.mxu0 %v3356
    %4133 = vmatpush1.bf16.msra.mxu0 %v3355
    %4134 = vmatprep.subr.bf16.mxu0 %v3352
    %4135 = vmatpush1.bf16.msra.mxu0 %v3351
    %4136 = vmatprep.subr.bf16.mxu0 %v3412
    %4137 = vmatpush2.bf16.msra.mxu0 %v3411
    %4138 = vmatprep.subr.bf16.mxu0 %v3408
    %4139 = vmatpush2.bf16.msra.mxu0 %v3407
    %4140 = vmatprep.subr.bf16.mxu0 %v3404
    %4141 = vmatpush2.bf16.msra.mxu0 %v3403
    %4142 = vmatprep.subr.bf16.mxu0 %v3400
    %4143 = vmatpush2.bf16.msra.mxu0 %v3399
    %4144 = vmatprep.subr.bf16.mxu0 %v3396
    %4145 = vmatpush2.bf16.msra.mxu0 %v3395
    %4146 = vmatprep.subr.bf16.mxu0 %v3392
    %4147 = vmatpush2.bf16.msra.mxu0 %v3391
    %4148 = vmatprep.subr.bf16.mxu0 %v3388
    %4149 = vmatpush2.bf16.msra.mxu0 %v3387
    %4150 = vmatprep.subr.bf16.mxu0 %v3384
    %4151 = vmatpush2.bf16.msra.mxu0 %v3383
    %4152 = vmatprep.mubr.bf16.mxu0 %v2394
    %4153 = vmatmul.mubr.bf16.gmra.mxu0 %v2393
    %v4154 = vpop.f32.mrf.mxu0
    %v4155 = vadd.f32 %v4052, %v4154
    %v4156 = vpop.f32.mrf.mxu0
    %v4157 = vadd.f32 %v4054, %v4156
    %v4158 = vpop.f32.mrf.mxu0
    %v4159 = vadd.f32 %v4056, %v4158
    %v4160 = vpop.f32.mrf.mxu0
    %v4161 = vadd.f32 %v4058, %v4160
    %4162 = vmatprep.mubr.bf16.mxu0 %v2400
    %4163 = vmatmul.mubr.bf16.gmra.mxu0 %v2399
    %v4164 = vpop.f32.mrf.mxu0
    %v4165 = vadd.f32 %v4062, %v4164
    %v4166 = vpop.f32.mrf.mxu0
    %v4167 = vadd.f32 %v4064, %v4166
    %v4168 = vpop.f32.mrf.mxu0
    %v4169 = vadd.f32 %v4066, %v4168
    %v4170 = vpop.f32.mrf.mxu0
    %v4171 = vadd.f32 %v4068, %v4170
    %4172 = vmatprep.mubr.bf16.mxu0 %v2406
    %4173 = vmatmul.mubr.bf16.gmra.mxu0 %v2405
    %v4174 = vpop.f32.mrf.mxu0
    %v4175 = vadd.f32 %v4072, %v4174
    %v4176 = vpop.f32.mrf.mxu0
    %v4177 = vadd.f32 %v4074, %v4176
    %v4178 = vpop.f32.mrf.mxu0
    %v4179 = vadd.f32 %v4076, %v4178
    %v4180 = vpop.f32.mrf.mxu0
    %v4181 = vadd.f32 %v4078, %v4180
    %4182 = vmatprep.mubr.bf16.mxu0 %v2412
    %4183 = vmatmul.mubr.bf16.gmra.mxu0 %v2411
    %v4184 = vpop.f32.mrf.mxu0
    %v4185 = vadd.f32 %v4082, %v4184
    %v4186 = vpop.f32.mrf.mxu0
    %v4187 = vadd.f32 %v4084, %v4186
    %v4188 = vpop.f32.mrf.mxu0
    %v4189 = vadd.f32 %v4086, %v4188
    %v4190 = vpop.f32.mrf.mxu0
    %v4191 = vadd.f32 %v4088, %v4190
    %4192 = vmatprep.mubr.bf16.mxu0 %v2418
    %4193 = vmatmul.mubr.bf16.gmra.mxu0 %v2417
    %v4194 = vpop.f32.mrf.mxu0
    %v4195 = vadd.f32 %v4092, %v4194
    %v4196 = vpop.f32.mrf.mxu0
    %v4197 = vadd.f32 %v4094, %v4196
    %v4198 = vpop.f32.mrf.mxu0
    %v4199 = vadd.f32 %v4096, %v4198
    %v4200 = vpop.f32.mrf.mxu0
    %v4201 = vadd.f32 %v4098, %v4200
    %4202 = vmatprep.mubr.bf16.mxu0 %v2424
    %4203 = vmatmul.mubr.bf16.gmra.mxu0 %v2423
    %v4204 = vpop.f32.mrf.mxu0
    %v4205 = vadd.f32 %v4102, %v4204
    %v4206 = vpop.f32.mrf.mxu0
    %v4207 = vadd.f32 %v4104, %v4206
    %v4208 = vpop.f32.mrf.mxu0
    %v4209 = vadd.f32 %v4106, %v4208
    %v4210 = vpop.f32.mrf.mxu0
    %v4211 = vadd.f32 %v4108, %v4210
    %4212 = vmatprep.mubr.bf16.mxu0 %v2430
    %4213 = vmatmul.mubr.bf16.gmra.mxu0 %v2429
    %v4214 = vpop.f32.mrf.mxu0
    %v4215 = vadd.f32 %v4112, %v4214
    %v4216 = vpop.f32.mrf.mxu0
    %v4217 = vadd.f32 %v4114, %v4216
    %v4218 = vpop.f32.mrf.mxu0
    %v4219 = vadd.f32 %v4116, %v4218
    %v4220 = vpop.f32.mrf.mxu0
    %v4221 = vadd.f32 %v4118, %v4220
    %4222 = vdwg.mxu0
    %v4223 = vmax.f32 %v3846, 0.0
    %v4224 = vmax.f32 %v3848, 0.0
    %v4225 = vmax.f32 %v4155, 0.0
    %v4226 = vmax.f32 %v4157, 0.0
    %v4227 = vmax.f32 %v3850, 0.0
    %v4228 = vmax.f32 %v3852, 0.0
    %v4229 = vmax.f32 %v4159, 0.0
    %v4230 = vmax.f32 %v4161, 0.0
    %v4231 = vmax.f32 %v3856, 0.0
    %v4232 = vmax.f32 %v3858, 0.0
    %v4233 = vmax.f32 %v4165, 0.0
    %v4234 = vmax.f32 %v4167, 0.0
    %v4235 = vmax.f32 %v3860, 0.0
    %v4236 = vmax.f32 %v3862, 0.0
    %v4237 = vmax.f32 %v4169, 0.0
    %v4238 = vmax.f32 %v4171, 0.0
    %v4239 = vmax.f32 %v3866, 0.0
    %v4240 = vmax.f32 %v3868, 0.0
    %v4241 = vmax.f32 %v4175, 0.0
    %v4242 = vmax.f32 %v4177, 0.0
    %v4243 = vmax.f32 %v3870, 0.0
    %v4244 = vmax.f32 %v3872, 0.0
    %v4245 = vmax.f32 %v4179, 0.0
    %v4246 = vmax.f32 %v4181, 0.0
    %v4247 = vmax.f32 %v3876, 0.0
    %v4248 = vmax.f32 %v3878, 0.0
    %v4249 = vmax.f32 %v4185, 0.0
    %v4250 = vmax.f32 %v4187, 0.0
    %v4251 = vmax.f32 %v3880, 0.0
    %v4252 = vmax.f32 %v3882, 0.0
    %v4253 = vmax.f32 %v4189, 0.0
    %v4254 = vmax.f32 %v4191, 0.0
    %v4255 = vmax.f32 %v3886, 0.0
    %v4256 = vmax.f32 %v3888, 0.0
    %v4257 = vmax.f32 %v4195, 0.0
    %v4258 = vmax.f32 %v4197, 0.0
    %v4259 = vmax.f32 %v3890, 0.0
    %v4260 = vmax.f32 %v3892, 0.0
    %v4261 = vmax.f32 %v4199, 0.0
    %v4262 = vmax.f32 %v4201, 0.0
    %v4263 = vmax.f32 %v3896, 0.0
    %v4264 = vmax.f32 %v3898, 0.0
    %v4265 = vmax.f32 %v4205, 0.0
    %v4266 = vmax.f32 %v4207, 0.0
    %v4267 = vmax.f32 %v3900, 0.0
    %v4268 = vmax.f32 %v3902, 0.0
    %v4269 = vmax.f32 %v4209, 0.0
    %v4270 = vmax.f32 %v4211, 0.0
    %v4271 = vmax.f32 %v3906, 0.0
    %v4272 = vmax.f32 %v3908, 0.0
    %v4273 = vmax.f32 %v4215, 0.0
    %v4274 = vmax.f32 %v4217, 0.0
    %v4275 = vmax.f32 %v3910, 0.0
    %v4276 = vmax.f32 %v3912, 0.0
    %v4277 = vmax.f32 %v4219, 0.0
    %v4278 = vmax.f32 %v4221, 0.0
    %v4279 = vmax.f32 %v4223, %v4225
    %v4280 = vmax.f32 %v4224, %v4226
    %v4281 = vmax.f32 %v4227, %v4229
    %v4282 = vmax.f32 %v4228, %v4230
    %v4283 = vmax.f32 %v4231, %v4233
    %v4284 = vmax.f32 %v4232, %v4234
    %v4285 = vmax.f32 %v4235, %v4237
    %v4286 = vmax.f32 %v4236, %v4238
    %v4287 = vmax.f32 %v4239, %v4241
    %v4288 = vmax.f32 %v4240, %v4242
    %v4289 = vmax.f32 %v4243, %v4245
    %v4290 = vmax.f32 %v4244, %v4246
    %v4291 = vmax.f32 %v4247, %v4249
    %v4292 = vmax.f32 %v4248, %v4250
    %v4293 = vmax.f32 %v4251, %v4253
    %v4294 = vmax.f32 %v4252, %v4254
    %v4295 = vmax.f32 %v4255, %v4257
    %v4296 = vmax.f32 %v4256, %v4258
    %v4297 = vmax.f32 %v4259, %v4261
    %v4298 = vmax.f32 %v4260, %v4262
    %v4299 = vmax.f32 %v4263, %v4265
    %v4300 = vmax.f32 %v4264, %v4266
    %v4301 = vmax.f32 %v4267, %v4269
    %v4302 = vmax.f32 %v4268, %v4270
    %v4303 = vmax.f32 %v4271, %v4273
    %v4304 = vmax.f32 %v4272, %v4274
    %v4305 = vmax.f32 %v4275, %v4277
    %v4306 = vmax.f32 %v4276, %v4278
    %v4335 = vrot.slane %v4279, 1
    %v4336 = vrot.slane %v4281, 1
    %v4337 = vsel %vm111, %v4335, %v4336
    %v4338 = vrot.slane %v4280, 1
    %v4339 = vrot.slane %v4282, 1
    %v4340 = vsel %vm111, %v4338, %v4339
    %v4341 = vrot.slane %v4283, 1
    %v4342 = vsel %vm111, %v4336, %v4341
    %v4343 = vrot.slane %v4284, 1
    %v4344 = vsel %vm111, %v4339, %v4343
    %v4345 = vrot.slane %v4285, 1
    %v4346 = vsel %vm111, %v4341, %v4345
    %v4347 = vrot.slane %v4286, 1
    %v4348 = vsel %vm111, %v4343, %v4347
    %v4349 = vrot.slane %v4287, 1
    %v4350 = vsel %vm111, %v4345, %v4349
    %v4351 = vrot.slane %v4288, 1
    %v4352 = vsel %vm111, %v4347, %v4351
    %v4353 = vrot.slane %v4289, 1
    %v4354 = vsel %vm111, %v4349, %v4353
    %v4355 = vrot.slane %v4290, 1
    %v4356 = vsel %vm111, %v4351, %v4355
    %v4357 = vrot.slane %v4291, 1
    %v4358 = vsel %vm111, %v4353, %v4357
    %v4359 = vrot.slane %v4292, 1
    %v4360 = vsel %vm111, %v4355, %v4359
    %v4361 = vrot.slane %v4293, 1
    %v4362 = vsel %vm111, %v4357, %v4361
    %v4363 = vrot.slane %v4294, 1
    %v4364 = vsel %vm111, %v4359, %v4363
    %v4365 = vrot.slane %v4295, 1
    %v4366 = vsel %vm111, %v4361, %v4365
    %v4367 = vrot.slane %v4296, 1
    %v4368 = vsel %vm111, %v4363, %v4367
    %v4369 = vrot.slane %v4297, 1
    %v4370 = vsel %vm111, %v4365, %v4369
    %v4371 = vrot.slane %v4298, 1
    %v4372 = vsel %vm111, %v4367, %v4371
    %v4373 = vrot.slane %v4299, 1
    %v4374 = vsel %vm111, %v4369, %v4373
    %v4375 = vrot.slane %v4300, 1
    %v4376 = vsel %vm111, %v4371, %v4375
    %v4377 = vrot.slane %v4301, 1
    %v4378 = vsel %vm111, %v4373, %v4377
    %v4379 = vrot.slane %v4302, 1
    %v4380 = vsel %vm111, %v4375, %v4379
    %v4381 = vrot.slane %v4303, 1
    %v4382 = vsel %vm111, %v4377, %v4381
    %v4383 = vrot.slane %v4304, 1
    %v4384 = vsel %vm111, %v4379, %v4383
    %v4385 = vrot.slane %v4305, 1
    %v4386 = vsel %vm111, %v4381, %v4385
    %v4387 = vrot.slane %v4306, 1
    %v4388 = vsel %vm111, %v4383, %v4387
    %v4417 = vmax.f32 %v4279, %v4337
    %v4418 = vmax.f32 %v4280, %v4340
    %v4419 = vmax.f32 %v4281, %v4342
    %v4420 = vmax.f32 %v4282, %v4344
    %v4421 = vmax.f32 %v4283, %v4346
    %v4422 = vmax.f32 %v4284, %v4348
    %v4423 = vmax.f32 %v4285, %v4350
    %v4424 = vmax.f32 %v4286, %v4352
    %v4425 = vmax.f32 %v4287, %v4354
    %v4426 = vmax.f32 %v4288, %v4356
    %v4427 = vmax.f32 %v4289, %v4358
    %v4428 = vmax.f32 %v4290, %v4360
    %v4429 = vmax.f32 %v4291, %v4362
    %v4430 = vmax.f32 %v4292, %v4364
    %v4431 = vmax.f32 %v4293, %v4366
    %v4432 = vmax.f32 %v4294, %v4368
    %v4433 = vmax.f32 %v4295, %v4370
    %v4434 = vmax.f32 %v4296, %v4372
    %v4435 = vmax.f32 %v4297, %v4374
    %v4436 = vmax.f32 %v4298, %v4376
    %v4437 = vmax.f32 %v4299, %v4378
    %v4438 = vmax.f32 %v4300, %v4380
    %v4439 = vmax.f32 %v4301, %v4382
    %v4440 = vmax.f32 %v4302, %v4384
    %v4441 = vmax.f32 %v4303, %v4386
    %v4442 = vmax.f32 %v4304, %v4388
    %v4443 = vmax.f32 %v4305, %v4385
    %v4444 = vmax.f32 %v4306, %v4387
    %v4445 = vld [vmem:[%s6] sm:$0xff]
    %v4446 = vld [vmem:[%s6 + $0x8] sm:$0xff]
    %v4447 = vld [vmem:[%s6 + $0x10] sm:$0xff]
    %v4448 = vld [vmem:[%s6 + $0x18] sm:$0xff]
    %v4449 = vld [vmem:[%s6 + $0x20] sm:$0xff]
    %v4450 = vld [vmem:[%s6 + $0x28] sm:$0xff]
    %v4451 = vld [vmem:[%s6 + $0x30] sm:$0xff]
    %v4452 = vld [vmem:[%s6 + $0x38] sm:$0xf]
    %vm4453 = vcmask 859136
    %v4455 = vsel %vm4453, %v4445, 0
    %v4458 = vsel %vm4453, %v4446, 0
    %v4461 = vsel %vm4453, %v4447, 0
    %v4464 = vsel %vm4453, %v4448, 0
    %v4467 = vsel %vm4453, %v4449, 0
    %v4470 = vsel %vm4453, %v4450, 0
    %v4473 = vsel %vm4453, %v4451, 0
    %v4476 = vsel %vm4453, %v4452, 0
    %v4479 = vsel %vm2041, %v4443, 0
    %v4482 = vsel %vm2041, %v4444, 0
    %4484 = vmatprep.subr.mxu0 0.0
    %4485 = vmatpush1.msra.mxu0 0.0
    %4486 = vmatprep.subr.mxu0 0.0
    %4487 = vmatpush1.msra.mxu0 0.0
    %4488 = vmatprep.subr.mxu0 %v4482
    %4489 = vmatpush1.msra.mxu0 %v4479
    %4490 = vmatprep.subr.mxu0 %v4442
    %4491 = vmatpush1.msra.mxu0 %v4441
    %4492 = vmatprep.subr.mxu0 %v4440
    %4493 = vmatpush1.msra.mxu0 %v4439
    %4494 = vmatprep.subr.mxu0 %v4438
    %4495 = vmatpush1.msra.mxu0 %v4437
    %4496 = vmatprep.subr.mxu0 %v4436
    %4497 = vmatpush1.msra.mxu0 %v4435
    %4498 = vmatprep.subr.mxu0 %v4434
    %4499 = vmatpush1.msra.mxu0 %v4433
    %4500 = vmatprep.subr.mxu0 %v4432
    %4501 = vmatpush1.msra.mxu0 %v4431
    %4502 = vmatprep.subr.mxu0 %v4430
    %4503 = vmatpush1.msra.mxu0 %v4429
    %4504 = vmatprep.subr.mxu0 %v4428
    %4505 = vmatpush1.msra.mxu0 %v4427
    %4506 = vmatprep.subr.mxu0 %v4426
    %4507 = vmatpush1.msra.mxu0 %v4425
    %4508 = vmatprep.subr.mxu0 %v4424
    %4509 = vmatpush1.msra.mxu0 %v4423
    %4510 = vmatprep.subr.mxu0 %v4422
    %4511 = vmatpush1.msra.mxu0 %v4421
    %4512 = vmatprep.subr.mxu0 %v4420
    %4513 = vmatpush1.msra.mxu0 %v4419
    %4514 = vmatprep.subr.mxu0 %v4418
    %4515 = vmatpush1.msra.mxu0 %v4417
    %4516 = vmatprep.subr.mxu0 0.0
    %4517 = vmatpush2.msra.mxu0 0.0
    %4518 = vmatprep.subr.mxu0 0.0
    %4519 = vmatpush2.msra.mxu0 0.0
    %4520 = vmatprep.subr.mxu0 0.0
    %4521 = vmatpush2.msra.mxu0 0.0
    %4522 = vmatprep.subr.mxu0 0.0
    %4523 = vmatpush2.msra.mxu0 0.0
    %4524 = vmatprep.subr.mxu0 0.0
    %4525 = vmatpush2.msra.mxu0 0.0
    %4526 = vmatprep.subr.mxu0 0.0
    %4527 = vmatpush2.msra.mxu0 0.0
    %4528 = vmatprep.subr.mxu0 0.0
    %4529 = vmatpush2.msra.mxu0 0.0
    %4530 = vmatprep.subr.mxu0 0.0
    %4531 = vmatpush2.msra.mxu0 0.0
    %4532 = vmatprep.subr.mxu0 0.0
    %4533 = vmatpush2.msra.mxu0 0.0
    %4534 = vmatprep.subr.mxu0 0.0
    %4535 = vmatpush2.msra.mxu0 0.0
    %4536 = vmatprep.subr.mxu0 0.0
    %4537 = vmatpush2.msra.mxu0 0.0
    %4538 = vmatprep.subr.mxu0 0.0
    %4539 = vmatpush2.msra.mxu0 0.0
    %4540 = vmatprep.subr.mxu0 0.0
    %4541 = vmatpush2.msra.mxu0 0.0
    %4542 = vmatprep.subr.mxu0 0.0
    %4543 = vmatpush2.msra.mxu0 0.0
    %4544 = vmatprep.subr.mxu0 0.0
    %4545 = vmatpush2.msra.mxu0 0.0
    %4546 = vmatprep.subr.mxu0 0.0
    %4547 = vmatpush2.msra.mxu0 0.0
    %4548 = vmatprep.mubr.f32.mxu0 0.0
    %4549 = vmatmul.mubr.f32.gmra.mxu0 %v4455
    %v4550 = vpop.f32.mrf.mxu0
    %v4551 = vadd.f32 0.0, %v4550
    %v4552 = vpop.f32.mrf.mxu0
    %v4553 = vadd.f32 0.0, %v4552
    %4554 = vmatprep.mubr.f32.mxu0 0.0
    %4555 = vmatmul.mubr.f32.gmra.mxu0 %v4458
    %v4556 = vpop.f32.mrf.mxu0
    %v4557 = vadd.f32 0.0, %v4556
    %v4558 = vpop.f32.mrf.mxu0
    %v4559 = vadd.f32 0.0, %v4558
    %4560 = vmatprep.mubr.f32.mxu0 0.0
    %4561 = vmatmul.mubr.f32.gmra.mxu0 %v4461
    %v4562 = vpop.f32.mrf.mxu0
    %v4563 = vadd.f32 0.0, %v4562
    %v4564 = vpop.f32.mrf.mxu0
    %v4565 = vadd.f32 0.0, %v4564
    %4566 = vmatprep.mubr.f32.mxu0 0.0
    %4567 = vmatmul.mubr.f32.gmra.mxu0 %v4464
    %v4568 = vpop.f32.mrf.mxu0
    %v4569 = vadd.f32 0.0, %v4568
    %v4570 = vpop.f32.mrf.mxu0
    %v4571 = vadd.f32 0.0, %v4570
    %4572 = vmatprep.mubr.f32.mxu0 0.0
    %4573 = vmatmul.mubr.f32.gmra.mxu0 %v4467
    %v4574 = vpop.f32.mrf.mxu0
    %v4575 = vadd.f32 0.0, %v4574
    %v4576 = vpop.f32.mrf.mxu0
    %v4577 = vadd.f32 0.0, %v4576
    %4578 = vmatprep.mubr.f32.mxu0 0.0
    %4579 = vmatmul.mubr.f32.gmra.mxu0 %v4470
    %v4580 = vpop.f32.mrf.mxu0
    %v4581 = vadd.f32 0.0, %v4580
    %v4582 = vpop.f32.mrf.mxu0
    %v4583 = vadd.f32 0.0, %v4582
    %4584 = vmatprep.mubr.f32.mxu0 0.0
    %4585 = vmatmul.mubr.f32.gmra.mxu0 %v4473
    %v4586 = vpop.f32.mrf.mxu0
    %v4587 = vadd.f32 0.0, %v4586
    %v4588 = vpop.f32.mrf.mxu0
    %v4589 = vadd.f32 0.0, %v4588
    %4590 = vmatprep.mubr.f32.mxu0 0.0
    %4591 = vmatmul.mubr.f32.gmra.mxu0 %v4476
    %v4592 = vpop.f32.mrf.mxu0
    %v4593 = vadd.f32 0.0, %v4592
    %v4594 = vpop.f32.mrf.mxu0
    %v4595 = vadd.f32 0.0, %v4594
    %4596 = vdwg.mxu0
    %v4613 = vrot.slane %v4551, 1
    %v4614 = vrot.slane %v4557, 1
    %v4615 = vsel %vm111, %v4613, %v4614
    %v4616 = vrot.slane %v4553, 1
    %v4617 = vrot.slane %v4559, 1
    %v4618 = vsel %vm111, %v4616, %v4617
    %v4619 = vrot.slane %v4563, 1
    %v4620 = vsel %vm111, %v4614, %v4619
    %v4621 = vrot.slane %v4565, 1
    %v4622 = vsel %vm111, %v4617, %v4621
    %v4623 = vrot.slane %v4569, 1
    %v4624 = vsel %vm111, %v4619, %v4623
    %v4625 = vrot.slane %v4571, 1
    %v4626 = vsel %vm111, %v4621, %v4625
    %v4627 = vrot.slane %v4575, 1
    %v4628 = vsel %vm111, %v4623, %v4627
    %v4629 = vrot.slane %v4577, 1
    %v4630 = vsel %vm111, %v4625, %v4629
    %v4631 = vrot.slane %v4581, 1
    %v4632 = vsel %vm111, %v4627, %v4631
    %v4633 = vrot.slane %v4583, 1
    %v4634 = vsel %vm111, %v4629, %v4633
    %v4635 = vrot.slane %v4587, 1
    %v4636 = vsel %vm111, %v4631, %v4635
    %v4637 = vrot.slane %v4589, 1
    %v4638 = vsel %vm111, %v4633, %v4637
    %v4639 = vrot.slane %v4593, 1
    %v4640 = vsel %vm111, %v4635, %v4639
    %v4641 = vrot.slane %v4595, 1
    %v4642 = vsel %vm111, %v4637, %v4641
    %v4659 = vrot.slane %v4551, 2
    %v4660 = vrot.slane %v4557, 2
    %v4661 = vsel %vm189, %v4659, %v4660
    %v4662 = vrot.slane %v4553, 2
    %v4663 = vrot.slane %v4559, 2
    %v4664 = vsel %vm189, %v4662, %v4663
    %v4665 = vrot.slane %v4563, 2
    %v4666 = vsel %vm189, %v4660, %v4665
    %v4667 = vrot.slane %v4565, 2
    %v4668 = vsel %vm189, %v4663, %v4667
    %v4669 = vrot.slane %v4569, 2
    %v4670 = vsel %vm189, %v4665, %v4669
    %v4671 = vrot.slane %v4571, 2
    %v4672 = vsel %vm189, %v4667, %v4671
    %v4673 = vrot.slane %v4575, 2
    %v4674 = vsel %vm189, %v4669, %v4673
    %v4675 = vrot.slane %v4577, 2
    %v4676 = vsel %vm189, %v4671, %v4675
    %v4677 = vrot.slane %v4581, 2
    %v4678 = vsel %vm189, %v4673, %v4677
    %v4679 = vrot.slane %v4583, 2
    %v4680 = vsel %vm189, %v4675, %v4679
    %v4681 = vrot.slane %v4587, 2
    %v4682 = vsel %vm189, %v4677, %v4681
    %v4683 = vrot.slane %v4589, 2
    %v4684 = vsel %vm189, %v4679, %v4683
    %v4685 = vrot.slane %v4593, 2
    %v4686 = vsel %vm189, %v4681, %v4685
    %v4687 = vrot.slane %v4595, 2
    %v4688 = vsel %vm189, %v4683, %v4687
    %v4705 = vpack.c.bf16 %v4557, %v4551
    %v4706 = vpack.c.bf16 %v4559, %v4553
    %v4707 = vpack.c.bf16 %v4620, %v4615
    %v4708 = vpack.c.bf16 %v4622, %v4618
    %v4709 = vpack.c.bf16 %v4666, %v4661
    %v4710 = vpack.c.bf16 %v4668, %v4664
    %v4711 = vpack.c.bf16 %v4569, %v4563
    %v4712 = vpack.c.bf16 %v4571, %v4565
    %v4713 = vpack.c.bf16 %v4628, %v4624
    %v4714 = vpack.c.bf16 %v4630, %v4626
    %v4715 = vpack.c.bf16 %v4674, %v4670
    %v4716 = vpack.c.bf16 %v4676, %v4672
    %v4717 = vpack.c.bf16 %v4581, %v4575
    %v4718 = vpack.c.bf16 %v4583, %v4577
    %v4719 = vpack.c.bf16 %v4636, %v4632
    %v4720 = vpack.c.bf16 %v4638, %v4634
    %v4721 = vpack.c.bf16 %v4682, %v4678
    %v4722 = vpack.c.bf16 %v4684, %v4680
    %v4723 = vpack.c.bf16 %v4593, %v4587
    %v4724 = vpack.c.bf16 %v4595, %v4589
    %v4725 = vpack.c.bf16 %v4639, %v4640
    %v4726 = vpack.c.bf16 %v4641, %v4642
    %v4727 = vpack.c.bf16 %v4685, %v4686
    %v4728 = vpack.c.bf16 %v4687, %v4688
    %v4729 = vld [vmem:[%s7] sm:$0xff]
    %v4730 = vld [vmem:[%s7 + $0x8] sm:$0xff]
    %v4731 = vld [vmem:[%s7 + $0x10] sm:$0xff]
    %v4732 = vld [vmem:[%s7 + $0x18] sm:$0xff]
    %v4733 = vld [vmem:[%s7 + $0x20] sm:$0xff]
    %v4734 = vld [vmem:[%s7 + $0x28] sm:$0xff]
    %v4735 = vld [vmem:[%s7 + $0x30] sm:$0xff]
    %v4736 = vld [vmem:[%s7 + $0x38] sm:$0xff]
    %v4737 = vld [vmem:[%s7 + $0x40] sm:$0xff]
    %v4738 = vld [vmem:[%s7 + $0x48] sm:$0xff]
    %v4739 = vld [vmem:[%s7 + $0x50] sm:$0xff]
    %v4740 = vld [vmem:[%s7 + $0x58] sm:$0xff]
    %v4741 = vld [vmem:[%s7 + $0x60] sm:$0xff]
    %v4742 = vld [vmem:[%s7 + $0x68] sm:$0xff]
    %v4743 = vld [vmem:[%s7 + $0x70] sm:$0xff]
    %v4744 = vld [vmem:[%s7 + $0x78] sm:$0xff]
    %v4745 = vld [vmem:[%s7 + $0x80] sm:$0xff]
    %v4746 = vld [vmem:[%s7 + $0x88] sm:$0xff]
    %v4747 = vld [vmem:[%s7 + $0x90] sm:$0xff]
    %v4748 = vld [vmem:[%s7 + $0x98] sm:$0xff]
    %v4749 = vld [vmem:[%s7 + $0xa0] sm:$0xff]
    %v4750 = vld [vmem:[%s7 + $0xa8] sm:$0xff]
    %v4751 = vld [vmem:[%s7 + $0xb0] sm:$0xff]
    %v4752 = vld [vmem:[%s7 + $0xb8] sm:$0xff]
    %v4753 = vld [vmem:[%s7 + $0xc0] sm:$0xff]
    %v4754 = vld [vmem:[%s7 + $0xc8] sm:$0xff]
    %v4755 = vld [vmem:[%s7 + $0xd0] sm:$0xff]
    %v4756 = vld [vmem:[%s7 + $0xd8] sm:$0xff]
    %v4757 = vld [vmem:[%s7 + $0xe0] sm:$0xff]
    %v4758 = vld [vmem:[%s7 + $0xe8] sm:$0xff]
    %v4759 = vld [vmem:[%s7 + $0xf0] sm:$0xff]
    %v4760 = vld [vmem:[%s7 + $0xf8] sm:$0xff]
    %v4761 = vld [vmem:[%s7 + $0x100] sm:$0xff]
    %v4762 = vld [vmem:[%s7 + $0x108] sm:$0xff]
    %v4763 = vld [vmem:[%s7 + $0x110] sm:$0xff]
    %v4764 = vld [vmem:[%s7 + $0x118] sm:$0xff]
    %v4765 = vld [vmem:[%s7 + $0x120] sm:$0xff]
    %v4766 = vld [vmem:[%s7 + $0x128] sm:$0xff]
    %v4767 = vld [vmem:[%s7 + $0x130] sm:$0xff]
    %v4768 = vld [vmem:[%s7 + $0x138] sm:$0xff]
    %v4769 = vld [vmem:[%s7 + $0x140] sm:$0xff]
    %v4770 = vld [vmem:[%s7 + $0x148] sm:$0xff]
    %v4771 = vld [vmem:[%s7 + $0x150] sm:$0xff]
    %v4772 = vld [vmem:[%s7 + $0x158] sm:$0xff]
    %v4773 = vld [vmem:[%s7 + $0x160] sm:$0xff]
    %v4774 = vld [vmem:[%s7 + $0x168] sm:$0xff]
    %v4775 = vld [vmem:[%s7 + $0x170] sm:$0xff]
    %v4776 = vld [vmem:[%s7 + $0x178] sm:$0xff]
    %v4777 = vld [vmem:[%s7 + $0x180] sm:$0xff]
    %v4778 = vld [vmem:[%s7 + $0x188] sm:$0xff]
    %v4779 = vld [vmem:[%s7 + $0x190] sm:$0xff]
    %v4780 = vld [vmem:[%s7 + $0x198] sm:$0xff]
    %v4781 = vld [vmem:[%s7 + $0x1a0] sm:$0xff]
    %v4782 = vld [vmem:[%s7 + $0x1a8] sm:$0xff]
    %v4783 = vld [vmem:[%s7 + $0x1b0] sm:$0xff]
    %v4784 = vld [vmem:[%s7 + $0x1b8] sm:$0xff]
    %v4785 = vld [vmem:[%s7 + $0x1c0] sm:$0xff]
    %v4786 = vld [vmem:[%s7 + $0x1c8] sm:$0xff]
    %v4787 = vld [vmem:[%s7 + $0x1d0] sm:$0xff]
    %v4788 = vld [vmem:[%s7 + $0x1d8] sm:$0xff]
    %v4789 = vld [vmem:[%s7 + $0x1e0] sm:$0xff]
    %v4790 = vld [vmem:[%s7 + $0x1e8] sm:$0xff]
    %v4791 = vld [vmem:[%s7 + $0x1f0] sm:$0xff]
    %v4792 = vld [vmem:[%s7 + $0x1f8] sm:$0xff]
    %v4793 = vld [vmem:[%s7 + $0x200] sm:$0xff]
    %v4794 = vld [vmem:[%s7 + $0x208] sm:$0xff]
    %v4795 = vld [vmem:[%s7 + $0x210] sm:$0xff]
    %v4796 = vld [vmem:[%s7 + $0x218] sm:$0xff]
    %v4797 = vld [vmem:[%s7 + $0x220] sm:$0xff]
    %v4798 = vld [vmem:[%s7 + $0x228] sm:$0xff]
    %v4799 = vld [vmem:[%s7 + $0x230] sm:$0xff]
    %v4800 = vld [vmem:[%s7 + $0x238] sm:$0xff]
    %v4801 = vld [vmem:[%s7 + $0x240] sm:$0xff]
    %v4802 = vld [vmem:[%s7 + $0x248] sm:$0xff]
    %v4803 = vld [vmem:[%s7 + $0x250] sm:$0xff]
    %v4804 = vld [vmem:[%s7 + $0x258] sm:$0xff]
    %v4805 = vld [vmem:[%s7 + $0x260] sm:$0xff]
    %v4806 = vld [vmem:[%s7 + $0x268] sm:$0xff]
    %v4807 = vld [vmem:[%s7 + $0x270] sm:$0xff]
    %v4808 = vld [vmem:[%s7 + $0x278] sm:$0xff]
    %v4809 = vld [vmem:[%s7 + $0x280] sm:$0xff]
    %v4810 = vld [vmem:[%s7 + $0x288] sm:$0xff]
    %v4811 = vld [vmem:[%s7 + $0x290] sm:$0xff]
    %v4812 = vld [vmem:[%s7 + $0x298] sm:$0xff]
    %v4813 = vld [vmem:[%s7 + $0x2a0] sm:$0xff]
    %v4814 = vld [vmem:[%s7 + $0x2a8] sm:$0xff]
    %v4815 = vld [vmem:[%s7 + $0x2b0] sm:$0xff]
    %v4816 = vld [vmem:[%s7 + $0x2b8] sm:$0xff]
    %v4817 = vld [vmem:[%s7 + $0x2c0] sm:$0xff]
    %v4818 = vld [vmem:[%s7 + $0x2c8] sm:$0xff]
    %v4819 = vld [vmem:[%s7 + $0x2d0] sm:$0xff]
    %v4820 = vld [vmem:[%s7 + $0x2d8] sm:$0xff]
    %v4821 = vld [vmem:[%s7 + $0x2e0] sm:$0xff]
    %v4822 = vld [vmem:[%s7 + $0x2e8] sm:$0xff]
    %v4823 = vld [vmem:[%s7 + $0x2f0] sm:$0xff]
    %v4824 = vld [vmem:[%s7 + $0x2f8] sm:$0xff]
    %v4825 = vld [vmem:[%s7 + $0x300] sm:$0xff]
    %v4826 = vld [vmem:[%s7 + $0x308] sm:$0xff]
    %v4827 = vld [vmem:[%s7 + $0x310] sm:$0xff]
    %v4828 = vld [vmem:[%s7 + $0x318] sm:$0xff]
    %v4829 = vld [vmem:[%s7 + $0x320] sm:$0xff]
    %v4830 = vld [vmem:[%s7 + $0x328] sm:$0xff]
    %v4831 = vld [vmem:[%s7 + $0x330] sm:$0xff]
    %v4832 = vld [vmem:[%s7 + $0x338] sm:$0xff]
    %v4833 = vld [vmem:[%s7 + $0x340] sm:$0xff]
    %v4834 = vld [vmem:[%s7 + $0x348] sm:$0xff]
    %v4835 = vld [vmem:[%s7 + $0x350] sm:$0xff]
    %v4836 = vld [vmem:[%s7 + $0x358] sm:$0xff]
    %v4837 = vld [vmem:[%s7 + $0x360] sm:$0xff]
    %v4838 = vld [vmem:[%s7 + $0x368] sm:$0xff]
    %v4839 = vld [vmem:[%s7 + $0x370] sm:$0xff]
    %v4840 = vld [vmem:[%s7 + $0x378] sm:$0xff]
    %v4841 = vld [vmem:[%s7 + $0x380] sm:$0xff]
    %v4842 = vld [vmem:[%s7 + $0x388] sm:$0xff]
    %v4843 = vld [vmem:[%s7 + $0x390] sm:$0xff]
    %v4844 = vld [vmem:[%s7 + $0x398] sm:$0xff]
    %v4845 = vld [vmem:[%s7 + $0x3a0] sm:$0xff]
    %v4846 = vld [vmem:[%s7 + $0x3a8] sm:$0xff]
    %v4847 = vld [vmem:[%s7 + $0x3b0] sm:$0xff]
    %v4848 = vld [vmem:[%s7 + $0x3b8] sm:$0xff]
    %v4849 = vld [vmem:[%s7 + $0x3c0] sm:$0xff]
    %v4850 = vld [vmem:[%s7 + $0x3c8] sm:$0xff]
    %v4851 = vld [vmem:[%s7 + $0x3d0] sm:$0xff]
    %v4852 = vld [vmem:[%s7 + $0x3d8] sm:$0xff]
    %v4853 = vld [vmem:[%s7 + $0x3e0] sm:$0xff]
    %v4854 = vld [vmem:[%s7 + $0x3e8] sm:$0xff]
    %v4855 = vld [vmem:[%s7 + $0x3f0] sm:$0xff]
    %v4856 = vld [vmem:[%s7 + $0x3f8] sm:$0xff]
    %v4857 = vld [vmem:[%s7 + $0x400] sm:$0xff]
    %v4858 = vld [vmem:[%s7 + $0x408] sm:$0xff]
    %v4859 = vld [vmem:[%s7 + $0x410] sm:$0xff]
    %v4860 = vld [vmem:[%s7 + $0x418] sm:$0xff]
    %v4861 = vld [vmem:[%s7 + $0x420] sm:$0xff]
    %v4862 = vld [vmem:[%s7 + $0x428] sm:$0xff]
    %v4863 = vld [vmem:[%s7 + $0x430] sm:$0xff]
    %v4864 = vld [vmem:[%s7 + $0x438] sm:$0xff]
    %v4865 = vld [vmem:[%s7 + $0x440] sm:$0xff]
    %v4866 = vld [vmem:[%s7 + $0x448] sm:$0xff]
    %v4867 = vld [vmem:[%s7 + $0x450] sm:$0xff]
    %v4868 = vld [vmem:[%s7 + $0x458] sm:$0xff]
    %v4869 = vld [vmem:[%s7 + $0x460] sm:$0xff]
    %v4870 = vld [vmem:[%s7 + $0x468] sm:$0xff]
    %v4871 = vld [vmem:[%s7 + $0x470] sm:$0xff]
    %v4872 = vld [vmem:[%s7 + $0x478] sm:$0xff]
    %v4873 = vld [vmem:[%s7 + $0x480] sm:$0xff]
    %v4874 = vld [vmem:[%s7 + $0x488] sm:$0xff]
    %v4875 = vld [vmem:[%s7 + $0x490] sm:$0xff]
    %v4876 = vld [vmem:[%s7 + $0x498] sm:$0xff]
    %v4877 = vld [vmem:[%s7 + $0x4a0] sm:$0xff]
    %v4878 = vld [vmem:[%s7 + $0x4a8] sm:$0xff]
    %v4879 = vld [vmem:[%s7 + $0x4b0] sm:$0xff]
    %v4880 = vld [vmem:[%s7 + $0x4b8] sm:$0xff]
    %v4881 = vld [vmem:[%s7 + $0x4c0] sm:$0xff]
    %v4882 = vld [vmem:[%s7 + $0x4c8] sm:$0xff]
    %v4883 = vld [vmem:[%s7 + $0x4d0] sm:$0xff]
    %v4884 = vld [vmem:[%s7 + $0x4d8] sm:$0xff]
    %v4885 = vld [vmem:[%s7 + $0x4e0] sm:$0xff]
    %v4886 = vld [vmem:[%s7 + $0x4e8] sm:$0xff]
    %v4887 = vld [vmem:[%s7 + $0x4f0] sm:$0xff]
    %v4888 = vld [vmem:[%s7 + $0x4f8] sm:$0xff]
    %v4889 = vld [vmem:[%s7 + $0x500] sm:$0xff]
    %v4890 = vld [vmem:[%s7 + $0x508] sm:$0xff]
    %v4891 = vld [vmem:[%s7 + $0x510] sm:$0xff]
    %v4892 = vld [vmem:[%s7 + $0x518] sm:$0xff]
    %v4893 = vld [vmem:[%s7 + $0x520] sm:$0xff]
    %v4894 = vld [vmem:[%s7 + $0x528] sm:$0xff]
    %v4895 = vld [vmem:[%s7 + $0x530] sm:$0xff]
    %v4896 = vld [vmem:[%s7 + $0x538] sm:$0xff]
    %v4897 = vld [vmem:[%s7 + $0x540] sm:$0xff]
    %v4898 = vld [vmem:[%s7 + $0x548] sm:$0xff]
    %v4899 = vld [vmem:[%s7 + $0x550] sm:$0xff]
    %v4900 = vld [vmem:[%s7 + $0x558] sm:$0xff]
    %v4901 = vld [vmem:[%s7 + $0x560] sm:$0xff]
    %v4902 = vld [vmem:[%s7 + $0x568] sm:$0xff]
    %v4903 = vld [vmem:[%s7 + $0x570] sm:$0xff]
    %v4904 = vld [vmem:[%s7 + $0x578] sm:$0xff]
    %v4905 = vld [vmem:[%s7 + $0x580] sm:$0xff]
    %v4906 = vld [vmem:[%s7 + $0x588] sm:$0xff]
    %v4907 = vld [vmem:[%s7 + $0x590] sm:$0xff]
    %v4908 = vld [vmem:[%s7 + $0x598] sm:$0xff]
    %v4909 = vld [vmem:[%s7 + $0x5a0] sm:$0xff]
    %v4910 = vld [vmem:[%s7 + $0x5a8] sm:$0xff]
    %v4911 = vld [vmem:[%s7 + $0x5b0] sm:$0xff]
    %v4912 = vld [vmem:[%s7 + $0x5b8] sm:$0xff]
    %v4913 = vld [vmem:[%s7 + $0x5c0] sm:$0xff]
    %v4914 = vld [vmem:[%s7 + $0x5c8] sm:$0xff]
    %v4915 = vld [vmem:[%s7 + $0x5d0] sm:$0xff]
    %v4916 = vld [vmem:[%s7 + $0x5d8] sm:$0xff]
    %v4917 = vld [vmem:[%s7 + $0x5e0] sm:$0xff]
    %v4918 = vld [vmem:[%s7 + $0x5e8] sm:$0xff]
    %v4919 = vld [vmem:[%s7 + $0x5f0] sm:$0xff]
    %v4920 = vld [vmem:[%s7 + $0x5f8] sm:$0xff]
    %v4921 = vld [vmem:[%s8] sm:$0xf]
    %v4923 = vlaneseq
    %v4924 = vshrl.u32 %v4923, 7
    %v4925 = vsub.s32 0, %v4924
    %v4926 = vrot.slane %v4921, %v4925
    %v4927 = vlaneseq
    %v4928 = vshrl.u32 %v4927, 7
    %v4929 = vsub.s32 1, %v4928
    %v4930 = vrot.slane %v4921, %v4929
    %v4931 = vlaneseq
    %v4932 = vshrl.u32 %v4931, 7
    %v4933 = vsub.s32 2, %v4932
    %v4934 = vrot.slane %v4921, %v4933
    %v4935 = vlaneseq
    %v4936 = vshrl.u32 %v4935, 7
    %v4937 = vsub.s32 3, %v4936
    %v4938 = vrot.slane %v4921, %v4937
    %v5135 = vunpack.c.l.b16 %v4729
    %v5136 = vunpack.c.h.b16 %v4729
    %v5137 = vunpack.c.l.b16 %v4730
    %v5138 = vunpack.c.h.b16 %v4730
    %v5139 = vunpack.c.l.b16 %v4731
    %v5140 = vunpack.c.h.b16 %v4731
    %v5141 = vunpack.c.l.b16 %v4732
    %v5142 = vunpack.c.h.b16 %v4732
    %v5143 = vunpack.c.l.b16 %v4733
    %v5144 = vunpack.c.h.b16 %v4733
    %v5145 = vunpack.c.l.b16 %v4734
    %v5146 = vunpack.c.h.b16 %v4734
    %v5147 = vunpack.c.l.b16 %v4735
    %v5148 = vunpack.c.h.b16 %v4735
    %v5149 = vunpack.c.l.b16 %v4736
    %v5150 = vunpack.c.h.b16 %v4736
    %v5151 = vunpack.c.l.b16 %v4737
    %v5152 = vunpack.c.h.b16 %v4737
    %v5153 = vunpack.c.l.b16 %v4738
    %v5154 = vunpack.c.h.b16 %v4738
    %v5155 = vunpack.c.l.b16 %v4739
    %v5156 = vunpack.c.h.b16 %v4739
    %v5157 = vunpack.c.l.b16 %v4740
    %v5158 = vunpack.c.h.b16 %v4740
    %v5159 = vunpack.c.l.b16 %v4741
    %v5160 = vunpack.c.h.b16 %v4741
    %v5161 = vunpack.c.l.b16 %v4742
    %v5162 = vunpack.c.h.b16 %v4742
    %v5163 = vunpack.c.l.b16 %v4743
    %v5164 = vunpack.c.h.b16 %v4743
    %v5165 = vunpack.c.l.b16 %v4744
    %v5166 = vunpack.c.h.b16 %v4744
    %v5167 = vunpack.c.l.b16 %v4745
    %v5168 = vunpack.c.h.b16 %v4745
    %v5169 = vunpack.c.l.b16 %v4746
    %v5170 = vunpack.c.h.b16 %v4746
    %v5171 = vunpack.c.l.b16 %v4747
    %v5172 = vunpack.c.h.b16 %v4747
    %v5173 = vunpack.c.l.b16 %v4748
    %v5174 = vunpack.c.h.b16 %v4748
    %v5175 = vunpack.c.l.b16 %v4749
    %v5176 = vunpack.c.h.b16 %v4749
    %v5177 = vunpack.c.l.b16 %v4750
    %v5178 = vunpack.c.h.b16 %v4750
    %v5179 = vunpack.c.l.b16 %v4751
    %v5180 = vunpack.c.h.b16 %v4751
    %v5181 = vunpack.c.l.b16 %v4752
    %v5182 = vunpack.c.h.b16 %v4752
    %v5183 = vunpack.c.l.b16 %v4753
    %v5184 = vunpack.c.h.b16 %v4753
    %v5185 = vunpack.c.l.b16 %v4754
    %v5186 = vunpack.c.h.b16 %v4754
    %v5187 = vunpack.c.l.b16 %v4755
    %v5188 = vunpack.c.h.b16 %v4755
    %v5189 = vunpack.c.l.b16 %v4756
    %v5190 = vunpack.c.h.b16 %v4756
    %v5191 = vunpack.c.l.b16 %v4757
    %v5192 = vunpack.c.h.b16 %v4757
    %v5193 = vunpack.c.l.b16 %v4758
    %v5194 = vunpack.c.h.b16 %v4758
    %v5195 = vunpack.c.l.b16 %v4759
    %v5196 = vunpack.c.h.b16 %v4759
    %v5197 = vunpack.c.l.b16 %v4760
    %v5198 = vunpack.c.h.b16 %v4760
    %v5199 = vunpack.c.l.b16 %v4761
    %v5200 = vunpack.c.h.b16 %v4761
    %v5201 = vunpack.c.l.b16 %v4762
    %v5202 = vunpack.c.h.b16 %v4762
    %v5203 = vunpack.c.l.b16 %v4763
    %v5204 = vunpack.c.h.b16 %v4763
    %v5205 = vunpack.c.l.b16 %v4764
    %v5206 = vunpack.c.h.b16 %v4764
    %v5207 = vunpack.c.l.b16 %v4765
    %v5208 = vunpack.c.h.b16 %v4765
    %v5209 = vunpack.c.l.b16 %v4766
    %v5210 = vunpack.c.h.b16 %v4766
    %v5211 = vunpack.c.l.b16 %v4767
    %v5212 = vunpack.c.h.b16 %v4767
    %v5213 = vunpack.c.l.b16 %v4768
    %v5214 = vunpack.c.h.b16 %v4768
    %v5215 = vunpack.c.l.b16 %v4769
    %v5216 = vunpack.c.h.b16 %v4769
    %v5217 = vunpack.c.l.b16 %v4770
    %v5218 = vunpack.c.h.b16 %v4770
    %v5219 = vunpack.c.l.b16 %v4771
    %v5220 = vunpack.c.h.b16 %v4771
    %v5221 = vunpack.c.l.b16 %v4772
    %v5222 = vunpack.c.h.b16 %v4772
    %v5223 = vunpack.c.l.b16 %v4773
    %v5224 = vunpack.c.h.b16 %v4773
    %v5225 = vunpack.c.l.b16 %v4774
    %v5226 = vunpack.c.h.b16 %v4774
    %v5227 = vunpack.c.l.b16 %v4775
    %v5228 = vunpack.c.h.b16 %v4775
    %v5229 = vunpack.c.l.b16 %v4776
    %v5230 = vunpack.c.h.b16 %v4776
    %v5231 = vunpack.c.l.b16 %v4777
    %v5232 = vunpack.c.h.b16 %v4777
    %v5233 = vunpack.c.l.b16 %v4778
    %v5234 = vunpack.c.h.b16 %v4778
    %v5235 = vunpack.c.l.b16 %v4779
    %v5236 = vunpack.c.h.b16 %v4779
    %v5237 = vunpack.c.l.b16 %v4780
    %v5238 = vunpack.c.h.b16 %v4780
    %v5239 = vunpack.c.l.b16 %v4781
    %v5240 = vunpack.c.h.b16 %v4781
    %v5241 = vunpack.c.l.b16 %v4782
    %v5242 = vunpack.c.h.b16 %v4782
    %v5243 = vunpack.c.l.b16 %v4783
    %v5244 = vunpack.c.h.b16 %v4783
    %v5245 = vunpack.c.l.b16 %v4784
    %v5246 = vunpack.c.h.b16 %v4784
    %v5247 = vunpack.c.l.b16 %v4785
    %v5248 = vunpack.c.h.b16 %v4785
    %v5249 = vunpack.c.l.b16 %v4786
    %v5250 = vunpack.c.h.b16 %v4786
    %v5251 = vunpack.c.l.b16 %v4787
    %v5252 = vunpack.c.h.b16 %v4787
    %v5253 = vunpack.c.l.b16 %v4788
    %v5254 = vunpack.c.h.b16 %v4788
    %v5255 = vunpack.c.l.b16 %v4789
    %v5256 = vunpack.c.h.b16 %v4789
    %v5257 = vunpack.c.l.b16 %v4790
    %v5258 = vunpack.c.h.b16 %v4790
    %v5259 = vunpack.c.l.b16 %v4791
    %v5260 = vunpack.c.h.b16 %v4791
    %v5261 = vunpack.c.l.b16 %v4792
    %v5262 = vunpack.c.h.b16 %v4792
    %v5263 = vunpack.c.l.b16 %v4793
    %v5264 = vunpack.c.h.b16 %v4793
    %v5265 = vunpack.c.l.b16 %v4794
    %v5266 = vunpack.c.h.b16 %v4794
    %v5267 = vunpack.c.l.b16 %v4795
    %v5268 = vunpack.c.h.b16 %v4795
    %v5269 = vunpack.c.l.b16 %v4796
    %v5270 = vunpack.c.h.b16 %v4796
    %v5271 = vunpack.c.l.b16 %v4797
    %v5272 = vunpack.c.h.b16 %v4797
    %v5273 = vunpack.c.l.b16 %v4798
    %v5274 = vunpack.c.h.b16 %v4798
    %v5275 = vunpack.c.l.b16 %v4799
    %v5276 = vunpack.c.h.b16 %v4799
    %v5277 = vunpack.c.l.b16 %v4800
    %v5278 = vunpack.c.h.b16 %v4800
    %v5279 = vunpack.c.l.b16 %v4801
    %v5280 = vunpack.c.h.b16 %v4801
    %v5281 = vunpack.c.l.b16 %v4802
    %v5282 = vunpack.c.h.b16 %v4802
    %v5283 = vunpack.c.l.b16 %v4803
    %v5284 = vunpack.c.h.b16 %v4803
    %v5285 = vunpack.c.l.b16 %v4804
    %v5286 = vunpack.c.h.b16 %v4804
    %v5287 = vunpack.c.l.b16 %v4805
    %v5288 = vunpack.c.h.b16 %v4805
    %v5289 = vunpack.c.l.b16 %v4806
    %v5290 = vunpack.c.h.b16 %v4806
    %v5291 = vunpack.c.l.b16 %v4807
    %v5292 = vunpack.c.h.b16 %v4807
    %v5293 = vunpack.c.l.b16 %v4808
    %v5294 = vunpack.c.h.b16 %v4808
    %v5295 = vunpack.c.l.b16 %v4809
    %v5296 = vunpack.c.h.b16 %v4809
    %v5297 = vunpack.c.l.b16 %v4810
    %v5298 = vunpack.c.h.b16 %v4810
    %v5299 = vunpack.c.l.b16 %v4811
    %v5300 = vunpack.c.h.b16 %v4811
    %v5301 = vunpack.c.l.b16 %v4812
    %v5302 = vunpack.c.h.b16 %v4812
    %v5303 = vunpack.c.l.b16 %v4813
    %v5304 = vunpack.c.h.b16 %v4813
    %v5305 = vunpack.c.l.b16 %v4814
    %v5306 = vunpack.c.h.b16 %v4814
    %v5307 = vunpack.c.l.b16 %v4815
    %v5308 = vunpack.c.h.b16 %v4815
    %v5309 = vunpack.c.l.b16 %v4816
    %v5310 = vunpack.c.h.b16 %v4816
    %v5311 = vunpack.c.l.b16 %v4817
    %v5312 = vunpack.c.h.b16 %v4817
    %v5313 = vunpack.c.l.b16 %v4818
    %v5314 = vunpack.c.h.b16 %v4818
    %v5315 = vunpack.c.l.b16 %v4819
    %v5316 = vunpack.c.h.b16 %v4819
    %v5317 = vunpack.c.l.b16 %v4820
    %v5318 = vunpack.c.h.b16 %v4820
    %v5319 = vunpack.c.l.b16 %v4821
    %v5320 = vunpack.c.h.b16 %v4821
    %v5321 = vunpack.c.l.b16 %v4822
    %v5322 = vunpack.c.h.b16 %v4822
    %v5323 = vunpack.c.l.b16 %v4823
    %v5324 = vunpack.c.h.b16 %v4823
    %v5325 = vunpack.c.l.b16 %v4824
    %v5326 = vunpack.c.h.b16 %v4824
    %v5327 = vunpack.c.l.b16 %v4825
    %v5328 = vunpack.c.h.b16 %v4825
    %v5329 = vunpack.c.l.b16 %v4826
    %v5330 = vunpack.c.h.b16 %v4826
    %v5331 = vunpack.c.l.b16 %v4827
    %v5332 = vunpack.c.h.b16 %v4827
    %v5333 = vunpack.c.l.b16 %v4828
    %v5334 = vunpack.c.h.b16 %v4828
    %v5335 = vunpack.c.l.b16 %v4829
    %v5336 = vunpack.c.h.b16 %v4829
    %v5337 = vunpack.c.l.b16 %v4830
    %v5338 = vunpack.c.h.b16 %v4830
    %v5339 = vunpack.c.l.b16 %v4831
    %v5340 = vunpack.c.h.b16 %v4831
    %v5341 = vunpack.c.l.b16 %v4832
    %v5342 = vunpack.c.h.b16 %v4832
    %v5343 = vunpack.c.l.b16 %v4833
    %v5344 = vunpack.c.h.b16 %v4833
    %v5345 = vunpack.c.l.b16 %v4834
    %v5346 = vunpack.c.h.b16 %v4834
    %v5347 = vunpack.c.l.b16 %v4835
    %v5348 = vunpack.c.h.b16 %v4835
    %v5349 = vunpack.c.l.b16 %v4836
    %v5350 = vunpack.c.h.b16 %v4836
    %v5351 = vunpack.c.l.b16 %v4837
    %v5352 = vunpack.c.h.b16 %v4837
    %v5353 = vunpack.c.l.b16 %v4838
    %v5354 = vunpack.c.h.b16 %v4838
    %v5355 = vunpack.c.l.b16 %v4839
    %v5356 = vunpack.c.h.b16 %v4839
    %v5357 = vunpack.c.l.b16 %v4840
    %v5358 = vunpack.c.h.b16 %v4840
    %v5359 = vunpack.c.l.b16 %v4841
    %v5360 = vunpack.c.h.b16 %v4841
    %v5361 = vunpack.c.l.b16 %v4842
    %v5362 = vunpack.c.h.b16 %v4842
    %v5363 = vunpack.c.l.b16 %v4843
    %v5364 = vunpack.c.h.b16 %v4843
    %v5365 = vunpack.c.l.b16 %v4844
    %v5366 = vunpack.c.h.b16 %v4844
    %v5367 = vunpack.c.l.b16 %v4845
    %v5368 = vunpack.c.h.b16 %v4845
    %v5369 = vunpack.c.l.b16 %v4846
    %v5370 = vunpack.c.h.b16 %v4846
    %v5371 = vunpack.c.l.b16 %v4847
    %v5372 = vunpack.c.h.b16 %v4847
    %v5373 = vunpack.c.l.b16 %v4848
    %v5374 = vunpack.c.h.b16 %v4848
    %v5375 = vunpack.c.l.b16 %v4849
    %v5376 = vunpack.c.h.b16 %v4849
    %v5377 = vunpack.c.l.b16 %v4850
    %v5378 = vunpack.c.h.b16 %v4850
    %v5379 = vunpack.c.l.b16 %v4851
    %v5380 = vunpack.c.h.b16 %v4851
    %v5381 = vunpack.c.l.b16 %v4852
    %v5382 = vunpack.c.h.b16 %v4852
    %v5383 = vunpack.c.l.b16 %v4853
    %v5384 = vunpack.c.h.b16 %v4853
    %v5385 = vunpack.c.l.b16 %v4854
    %v5386 = vunpack.c.h.b16 %v4854
    %v5387 = vunpack.c.l.b16 %v4855
    %v5388 = vunpack.c.h.b16 %v4855
    %v5389 = vunpack.c.l.b16 %v4856
    %v5390 = vunpack.c.h.b16 %v4856
    %v5391 = vunpack.c.l.b16 %v4857
    %v5392 = vunpack.c.h.b16 %v4857
    %v5393 = vunpack.c.l.b16 %v4858
    %v5394 = vunpack.c.h.b16 %v4858
    %v5395 = vunpack.c.l.b16 %v4859
    %v5396 = vunpack.c.h.b16 %v4859
    %v5397 = vunpack.c.l.b16 %v4860
    %v5398 = vunpack.c.h.b16 %v4860
    %v5399 = vunpack.c.l.b16 %v4861
    %v5400 = vunpack.c.h.b16 %v4861
    %v5401 = vunpack.c.l.b16 %v4862
    %v5402 = vunpack.c.h.b16 %v4862
    %v5403 = vunpack.c.l.b16 %v4863
    %v5404 = vunpack.c.h.b16 %v4863
    %v5405 = vunpack.c.l.b16 %v4864
    %v5406 = vunpack.c.h.b16 %v4864
    %v5407 = vunpack.c.l.b16 %v4865
    %v5408 = vunpack.c.h.b16 %v4865
    %v5409 = vunpack.c.l.b16 %v4866
    %v5410 = vunpack.c.h.b16 %v4866
    %v5411 = vunpack.c.l.b16 %v4867
    %v5412 = vunpack.c.h.b16 %v4867
    %v5413 = vunpack.c.l.b16 %v4868
    %v5414 = vunpack.c.h.b16 %v4868
    %v5415 = vunpack.c.l.b16 %v4869
    %v5416 = vunpack.c.h.b16 %v4869
    %v5417 = vunpack.c.l.b16 %v4870
    %v5418 = vunpack.c.h.b16 %v4870
    %v5419 = vunpack.c.l.b16 %v4871
    %v5420 = vunpack.c.h.b16 %v4871
    %v5421 = vunpack.c.l.b16 %v4872
    %v5422 = vunpack.c.h.b16 %v4872
    %v5423 = vunpack.c.l.b16 %v4873
    %v5424 = vunpack.c.h.b16 %v4873
    %v5425 = vunpack.c.l.b16 %v4874
    %v5426 = vunpack.c.h.b16 %v4874
    %v5427 = vunpack.c.l.b16 %v4875
    %v5428 = vunpack.c.h.b16 %v4875
    %v5429 = vunpack.c.l.b16 %v4876
    %v5430 = vunpack.c.h.b16 %v4876
    %v5431 = vunpack.c.l.b16 %v4877
    %v5432 = vunpack.c.h.b16 %v4877
    %v5433 = vunpack.c.l.b16 %v4878
    %v5434 = vunpack.c.h.b16 %v4878
    %v5435 = vunpack.c.l.b16 %v4879
    %v5436 = vunpack.c.h.b16 %v4879
    %v5437 = vunpack.c.l.b16 %v4880
    %v5438 = vunpack.c.h.b16 %v4880
    %v5439 = vunpack.c.l.b16 %v4881
    %v5440 = vunpack.c.h.b16 %v4881
    %v5441 = vunpack.c.l.b16 %v4882
    %v5442 = vunpack.c.h.b16 %v4882
    %v5443 = vunpack.c.l.b16 %v4883
    %v5444 = vunpack.c.h.b16 %v4883
    %v5445 = vunpack.c.l.b16 %v4884
    %v5446 = vunpack.c.h.b16 %v4884
    %v5447 = vunpack.c.l.b16 %v4885
    %v5448 = vunpack.c.h.b16 %v4885
    %v5449 = vunpack.c.l.b16 %v4886
    %v5450 = vunpack.c.h.b16 %v4886
    %v5451 = vunpack.c.l.b16 %v4887
    %v5452 = vunpack.c.h.b16 %v4887
    %v5453 = vunpack.c.l.b16 %v4888
    %v5454 = vunpack.c.h.b16 %v4888
    %v5455 = vunpack.c.l.b16 %v4889
    %v5456 = vunpack.c.h.b16 %v4889
    %v5457 = vunpack.c.l.b16 %v4890
    %v5458 = vunpack.c.h.b16 %v4890
    %v5459 = vunpack.c.l.b16 %v4891
    %v5460 = vunpack.c.h.b16 %v4891
    %v5461 = vunpack.c.l.b16 %v4892
    %v5462 = vunpack.c.h.b16 %v4892
    %v5463 = vunpack.c.l.b16 %v4893
    %v5464 = vunpack.c.h.b16 %v4893
    %v5465 = vunpack.c.l.b16 %v4894
    %v5466 = vunpack.c.h.b16 %v4894
    %v5467 = vunpack.c.l.b16 %v4895
    %v5468 = vunpack.c.h.b16 %v4895
    %v5469 = vunpack.c.l.b16 %v4896
    %v5470 = vunpack.c.h.b16 %v4896
    %v5471 = vunpack.c.l.b16 %v4897
    %v5472 = vunpack.c.h.b16 %v4897
    %v5473 = vunpack.c.l.b16 %v4898
    %v5474 = vunpack.c.h.b16 %v4898
    %v5475 = vunpack.c.l.b16 %v4899
    %v5476 = vunpack.c.h.b16 %v4899
    %v5477 = vunpack.c.l.b16 %v4900
    %v5478 = vunpack.c.h.b16 %v4900
    %v5479 = vunpack.c.l.b16 %v4901
    %v5480 = vunpack.c.h.b16 %v4901
    %v5481 = vunpack.c.l.b16 %v4902
    %v5482 = vunpack.c.h.b16 %v4902
    %v5483 = vunpack.c.l.b16 %v4903
    %v5484 = vunpack.c.h.b16 %v4903
    %v5485 = vunpack.c.l.b16 %v4904
    %v5486 = vunpack.c.h.b16 %v4904
    %v5487 = vunpack.c.l.b16 %v4905
    %v5488 = vunpack.c.h.b16 %v4905
    %v5489 = vunpack.c.l.b16 %v4906
    %v5490 = vunpack.c.h.b16 %v4906
    %v5491 = vunpack.c.l.b16 %v4907
    %v5492 = vunpack.c.h.b16 %v4907
    %v5493 = vunpack.c.l.b16 %v4908
    %v5494 = vunpack.c.h.b16 %v4908
    %v5495 = vunpack.c.l.b16 %v4909
    %v5496 = vunpack.c.h.b16 %v4909
    %v5497 = vunpack.c.l.b16 %v4910
    %v5498 = vunpack.c.h.b16 %v4910
    %v5499 = vunpack.c.l.b16 %v4911
    %v5500 = vunpack.c.h.b16 %v4911
    %v5501 = vunpack.c.l.b16 %v4912
    %v5502 = vunpack.c.h.b16 %v4912
    %v5503 = vunpack.c.l.b16 %v4913
    %v5504 = vunpack.c.h.b16 %v4913
    %v5505 = vunpack.c.l.b16 %v4914
    %v5506 = vunpack.c.h.b16 %v4914
    %v5507 = vunpack.c.l.b16 %v4915
    %v5508 = vunpack.c.h.b16 %v4915
    %v5509 = vunpack.c.l.b16 %v4916
    %v5510 = vunpack.c.h.b16 %v4916
    %v5511 = vunpack.c.l.b16 %v4917
    %v5512 = vunpack.c.h.b16 %v4917
    %v5513 = vunpack.c.l.b16 %v4918
    %v5514 = vunpack.c.h.b16 %v4918
    %v5515 = vunpack.c.l.b16 %v4919
    %v5516 = vunpack.c.h.b16 %v4919
    %v5517 = vunpack.c.l.b16 %v4920
    %v5518 = vunpack.c.h.b16 %v4920
    %v5519 = vpack.c.b16 %v5139, %v5135
    %v5520 = vpack.c.b16 %v5140, %v5136
    %v5521 = vpack.c.b16 %v5141, %v5137
    %v5522 = vpack.c.b16 %v5142, %v5138
    %v5523 = vpack.c.b16 %v5147, %v5143
    %v5524 = vpack.c.b16 %v5148, %v5144
    %v5525 = vpack.c.b16 %v5149, %v5145
    %v5526 = vpack.c.b16 %v5150, %v5146
    %v5527 = vpack.c.b16 %v5155, %v5151
    %v5528 = vpack.c.b16 %v5156, %v5152
    %v5529 = vpack.c.b16 %v5157, %v5153
    %v5530 = vpack.c.b16 %v5158, %v5154
    %v5531 = vpack.c.b16 %v5163, %v5159
    %v5532 = vpack.c.b16 %v5164, %v5160
    %v5533 = vpack.c.b16 %v5165, %v5161
    %v5534 = vpack.c.b16 %v5166, %v5162
    %v5535 = vpack.c.b16 %v5171, %v5167
    %v5536 = vpack.c.b16 %v5172, %v5168
    %v5537 = vpack.c.b16 %v5173, %v5169
    %v5538 = vpack.c.b16 %v5174, %v5170
    %v5539 = vpack.c.b16 %v5179, %v5175
    %v5540 = vpack.c.b16 %v5180, %v5176
    %v5541 = vpack.c.b16 %v5181, %v5177
    %v5542 = vpack.c.b16 %v5182, %v5178
    %v5543 = vpack.c.b16 %v5187, %v5183
    %v5544 = vpack.c.b16 %v5188, %v5184
    %v5545 = vpack.c.b16 %v5189, %v5185
    %v5546 = vpack.c.b16 %v5190, %v5186
    %v5547 = vpack.c.b16 %v5195, %v5191
    %v5548 = vpack.c.b16 %v5196, %v5192
    %v5549 = vpack.c.b16 %v5197, %v5193
    %v5550 = vpack.c.b16 %v5198, %v5194
    %v5551 = vpack.c.b16 %v5203, %v5199
    %v5552 = vpack.c.b16 %v5204, %v5200
    %v5553 = vpack.c.b16 %v5205, %v5201
    %v5554 = vpack.c.b16 %v5206, %v5202
    %v5555 = vpack.c.b16 %v5211, %v5207
    %v5556 = vpack.c.b16 %v5212, %v5208
    %v5557 = vpack.c.b16 %v5213, %v5209
    %v5558 = vpack.c.b16 %v5214, %v5210
    %v5559 = vpack.c.b16 %v5219, %v5215
    %v5560 = vpack.c.b16 %v5220, %v5216
    %v5561 = vpack.c.b16 %v5221, %v5217
    %v5562 = vpack.c.b16 %v5222, %v5218
    %v5563 = vpack.c.b16 %v5227, %v5223
    %v5564 = vpack.c.b16 %v5228, %v5224
    %v5565 = vpack.c.b16 %v5229, %v5225
    %v5566 = vpack.c.b16 %v5230, %v5226
    %v5567 = vpack.c.b16 %v5235, %v5231
    %v5568 = vpack.c.b16 %v5236, %v5232
    %v5569 = vpack.c.b16 %v5237, %v5233
    %v5570 = vpack.c.b16 %v5238, %v5234
    %v5571 = vpack.c.b16 %v5243, %v5239
    %v5572 = vpack.c.b16 %v5244, %v5240
    %v5573 = vpack.c.b16 %v5245, %v5241
    %v5574 = vpack.c.b16 %v5246, %v5242
    %v5575 = vpack.c.b16 %v5251, %v5247
    %v5576 = vpack.c.b16 %v5252, %v5248
    %v5577 = vpack.c.b16 %v5253, %v5249
    %v5578 = vpack.c.b16 %v5254, %v5250
    %v5579 = vpack.c.b16 %v5259, %v5255
    %v5580 = vpack.c.b16 %v5260, %v5256
    %v5581 = vpack.c.b16 %v5261, %v5257
    %v5582 = vpack.c.b16 %v5262, %v5258
    %v5583 = vpack.c.b16 %v5267, %v5263
    %v5584 = vpack.c.b16 %v5268, %v5264
    %v5585 = vpack.c.b16 %v5269, %v5265
    %v5586 = vpack.c.b16 %v5270, %v5266
    %v5587 = vpack.c.b16 %v5275, %v5271
    %v5588 = vpack.c.b16 %v5276, %v5272
    %v5589 = vpack.c.b16 %v5277, %v5273
    %v5590 = vpack.c.b16 %v5278, %v5274
    %v5591 = vpack.c.b16 %v5283, %v5279
    %v5592 = vpack.c.b16 %v5284, %v5280
    %v5593 = vpack.c.b16 %v5285, %v5281
    %v5594 = vpack.c.b16 %v5286, %v5282
    %v5595 = vpack.c.b16 %v5291, %v5287
    %v5596 = vpack.c.b16 %v5292, %v5288
    %v5597 = vpack.c.b16 %v5293, %v5289
    %v5598 = vpack.c.b16 %v5294, %v5290
    %v5599 = vpack.c.b16 %v5299, %v5295
    %v5600 = vpack.c.b16 %v5300, %v5296
    %v5601 = vpack.c.b16 %v5301, %v5297
    %v5602 = vpack.c.b16 %v5302, %v5298
    %v5603 = vpack.c.b16 %v5307, %v5303
    %v5604 = vpack.c.b16 %v5308, %v5304
    %v5605 = vpack.c.b16 %v5309, %v5305
    %v5606 = vpack.c.b16 %v5310, %v5306
    %v5607 = vpack.c.b16 %v5315, %v5311
    %v5608 = vpack.c.b16 %v5316, %v5312
    %v5609 = vpack.c.b16 %v5317, %v5313
    %v5610 = vpack.c.b16 %v5318, %v5314
    %v5611 = vpack.c.b16 %v5323, %v5319
    %v5612 = vpack.c.b16 %v5324, %v5320
    %v5613 = vpack.c.b16 %v5325, %v5321
    %v5614 = vpack.c.b16 %v5326, %v5322
    %v5615 = vpack.c.b16 %v5331, %v5327
    %v5616 = vpack.c.b16 %v5332, %v5328
    %v5617 = vpack.c.b16 %v5333, %v5329
    %v5618 = vpack.c.b16 %v5334, %v5330
    %v5619 = vpack.c.b16 %v5339, %v5335
    %v5620 = vpack.c.b16 %v5340, %v5336
    %v5621 = vpack.c.b16 %v5341, %v5337
    %v5622 = vpack.c.b16 %v5342, %v5338
    %v5623 = vpack.c.b16 %v5347, %v5343
    %v5624 = vpack.c.b16 %v5348, %v5344
    %v5625 = vpack.c.b16 %v5349, %v5345
    %v5626 = vpack.c.b16 %v5350, %v5346
    %v5627 = vpack.c.b16 %v5355, %v5351
    %v5628 = vpack.c.b16 %v5356, %v5352
    %v5629 = vpack.c.b16 %v5357, %v5353
    %v5630 = vpack.c.b16 %v5358, %v5354
    %v5631 = vpack.c.b16 %v5363, %v5359
    %v5632 = vpack.c.b16 %v5364, %v5360
    %v5633 = vpack.c.b16 %v5365, %v5361
    %v5634 = vpack.c.b16 %v5366, %v5362
    %v5635 = vpack.c.b16 %v5371, %v5367
    %v5636 = vpack.c.b16 %v5372, %v5368
    %v5637 = vpack.c.b16 %v5373, %v5369
    %v5638 = vpack.c.b16 %v5374, %v5370
    %v5639 = vpack.c.b16 %v5379, %v5375
    %v5640 = vpack.c.b16 %v5380, %v5376
    %v5641 = vpack.c.b16 %v5381, %v5377
    %v5642 = vpack.c.b16 %v5382, %v5378
    %v5643 = vpack.c.b16 %v5387, %v5383
    %v5644 = vpack.c.b16 %v5388, %v5384
    %v5645 = vpack.c.b16 %v5389, %v5385
    %v5646 = vpack.c.b16 %v5390, %v5386
    %v5647 = vpack.c.b16 %v5395, %v5391
    %v5648 = vpack.c.b16 %v5396, %v5392
    %v5649 = vpack.c.b16 %v5397, %v5393
    %v5650 = vpack.c.b16 %v5398, %v5394
    %v5651 = vpack.c.b16 %v5403, %v5399
    %v5652 = vpack.c.b16 %v5404, %v5400
    %v5653 = vpack.c.b16 %v5405, %v5401
    %v5654 = vpack.c.b16 %v5406, %v5402
    %v5655 = vpack.c.b16 %v5411, %v5407
    %v5656 = vpack.c.b16 %v5412, %v5408
    %v5657 = vpack.c.b16 %v5413, %v5409
    %v5658 = vpack.c.b16 %v5414, %v5410
    %v5659 = vpack.c.b16 %v5419, %v5415
    %v5660 = vpack.c.b16 %v5420, %v5416
    %v5661 = vpack.c.b16 %v5421, %v5417
    %v5662 = vpack.c.b16 %v5422, %v5418
    %v5663 = vpack.c.b16 %v5427, %v5423
    %v5664 = vpack.c.b16 %v5428, %v5424
    %v5665 = vpack.c.b16 %v5429, %v5425
    %v5666 = vpack.c.b16 %v5430, %v5426
    %v5667 = vpack.c.b16 %v5435, %v5431
    %v5668 = vpack.c.b16 %v5436, %v5432
    %v5669 = vpack.c.b16 %v5437, %v5433
    %v5670 = vpack.c.b16 %v5438, %v5434
    %v5671 = vpack.c.b16 %v5443, %v5439
    %v5672 = vpack.c.b16 %v5444, %v5440
    %v5673 = vpack.c.b16 %v5445, %v5441
    %v5674 = vpack.c.b16 %v5446, %v5442
    %v5675 = vpack.c.b16 %v5451, %v5447
    %v5676 = vpack.c.b16 %v5452, %v5448
    %v5677 = vpack.c.b16 %v5453, %v5449
    %v5678 = vpack.c.b16 %v5454, %v5450
    %v5679 = vpack.c.b16 %v5459, %v5455
    %v5680 = vpack.c.b16 %v5460, %v5456
    %v5681 = vpack.c.b16 %v5461, %v5457
    %v5682 = vpack.c.b16 %v5462, %v5458
    %v5683 = vpack.c.b16 %v5467, %v5463
    %v5684 = vpack.c.b16 %v5468, %v5464
    %v5685 = vpack.c.b16 %v5469, %v5465
    %v5686 = vpack.c.b16 %v5470, %v5466
    %v5687 = vpack.c.b16 %v5475, %v5471
    %v5688 = vpack.c.b16 %v5476, %v5472
    %v5689 = vpack.c.b16 %v5477, %v5473
    %v5690 = vpack.c.b16 %v5478, %v5474
    %v5691 = vpack.c.b16 %v5483, %v5479
    %v5692 = vpack.c.b16 %v5484, %v5480
    %v5693 = vpack.c.b16 %v5485, %v5481
    %v5694 = vpack.c.b16 %v5486, %v5482
    %v5695 = vpack.c.b16 %v5491, %v5487
    %v5696 = vpack.c.b16 %v5492, %v5488
    %v5697 = vpack.c.b16 %v5493, %v5489
    %v5698 = vpack.c.b16 %v5494, %v5490
    %v5699 = vpack.c.b16 %v5499, %v5495
    %v5700 = vpack.c.b16 %v5500, %v5496
    %v5701 = vpack.c.b16 %v5501, %v5497
    %v5702 = vpack.c.b16 %v5502, %v5498
    %v5703 = vpack.c.b16 %v5507, %v5503
    %v5704 = vpack.c.b16 %v5508, %v5504
    %v5705 = vpack.c.b16 %v5509, %v5505
    %v5706 = vpack.c.b16 %v5510, %v5506
    %v5707 = vpack.c.b16 %v5515, %v5511
    %v5708 = vpack.c.b16 %v5516, %v5512
    %v5709 = vpack.c.b16 %v5517, %v5513
    %v5710 = vpack.c.b16 %v5518, %v5514
    %5903 = vmatprep.subr.bf16.mxu0 %v5548
    %5904 = vmatpush1.bf16.msra.mxu0 %v5547
    %5905 = vmatprep.subr.bf16.mxu0 %v5544
    %5906 = vmatpush1.bf16.msra.mxu0 %v5543
    %5907 = vmatprep.subr.bf16.mxu0 %v5540
    %5908 = vmatpush1.bf16.msra.mxu0 %v5539
    %5909 = vmatprep.subr.bf16.mxu0 %v5536
    %5910 = vmatpush1.bf16.msra.mxu0 %v5535
    %5911 = vmatprep.subr.bf16.mxu0 %v5532
    %5912 = vmatpush1.bf16.msra.mxu0 %v5531
    %5913 = vmatprep.subr.bf16.mxu0 %v5528
    %5914 = vmatpush1.bf16.msra.mxu0 %v5527
    %5915 = vmatprep.subr.bf16.mxu0 %v5524
    %5916 = vmatpush1.bf16.msra.mxu0 %v5523
    %5917 = vmatprep.subr.bf16.mxu0 %v5520
    %5918 = vmatpush1.bf16.msra.mxu0 %v5519
    %5919 = vmatprep.subr.bf16.mxu0 %v5580
    %5920 = vmatpush2.bf16.msra.mxu0 %v5579
    %5921 = vmatprep.subr.bf16.mxu0 %v5576
    %5922 = vmatpush2.bf16.msra.mxu0 %v5575
    %5923 = vmatprep.subr.bf16.mxu0 %v5572
    %5924 = vmatpush2.bf16.msra.mxu0 %v5571
    %5925 = vmatprep.subr.bf16.mxu0 %v5568
    %5926 = vmatpush2.bf16.msra.mxu0 %v5567
    %5927 = vmatprep.subr.bf16.mxu0 %v5564
    %5928 = vmatpush2.bf16.msra.mxu0 %v5563
    %5929 = vmatprep.subr.bf16.mxu0 %v5560
    %5930 = vmatpush2.bf16.msra.mxu0 %v5559
    %5931 = vmatprep.subr.bf16.mxu0 %v5556
    %5932 = vmatpush2.bf16.msra.mxu0 %v5555
    %5933 = vmatprep.subr.bf16.mxu0 %v5552
    %5934 = vmatpush2.bf16.msra.mxu0 %v5551
    %5935 = vmatprep.mubr.bf16.mxu0 %v4706
    %5936 = vmatmul.mubr.bf16.gmra.mxu0 %v4705
    %v5937 = vpop.f32.mrf.mxu0
    %v5938 = vadd.f32 %v4926, %v5937
    %v5939 = vpop.f32.mrf.mxu0
    %v5940 = vadd.f32 %v4930, %v5939
    %v5941 = vpop.f32.mrf.mxu0
    %v5942 = vadd.f32 %v4926, %v5941
    %v5943 = vpop.f32.mrf.mxu0
    %v5944 = vadd.f32 %v4930, %v5943
    %5945 = vmatprep.mubr.bf16.mxu0 %v4712
    %5946 = vmatmul.mubr.bf16.gmra.mxu0 %v4711
    %v5947 = vpop.f32.mrf.mxu0
    %v5948 = vadd.f32 %v4926, %v5947
    %v5949 = vpop.f32.mrf.mxu0
    %v5950 = vadd.f32 %v4930, %v5949
    %v5951 = vpop.f32.mrf.mxu0
    %v5952 = vadd.f32 %v4926, %v5951
    %v5953 = vpop.f32.mrf.mxu0
    %v5954 = vadd.f32 %v4930, %v5953
    %5955 = vmatprep.mubr.bf16.mxu0 %v4718
    %5956 = vmatmul.mubr.bf16.gmra.mxu0 %v4717
    %v5957 = vpop.f32.mrf.mxu0
    %v5958 = vadd.f32 %v4926, %v5957
    %v5959 = vpop.f32.mrf.mxu0
    %v5960 = vadd.f32 %v4930, %v5959
    %v5961 = vpop.f32.mrf.mxu0
    %v5962 = vadd.f32 %v4926, %v5961
    %v5963 = vpop.f32.mrf.mxu0
    %v5964 = vadd.f32 %v4930, %v5963
    %5965 = vmatprep.mubr.bf16.mxu0 %v4724
    %5966 = vmatmul.mubr.bf16.gmra.mxu0 %v4723
    %v5967 = vpop.f32.mrf.mxu0
    %v5968 = vadd.f32 %v4926, %v5967
    %v5969 = vpop.f32.mrf.mxu0
    %v5970 = vadd.f32 %v4930, %v5969
    %v5971 = vpop.f32.mrf.mxu0
    %v5972 = vadd.f32 %v4926, %v5971
    %v5973 = vpop.f32.mrf.mxu0
    %v5974 = vadd.f32 %v4930, %v5973
    %5975 = vdwg.mxu0
    %5976 = vmatprep.subr.bf16.mxu0 %v5612
    %5977 = vmatpush1.bf16.msra.mxu0 %v5611
    %5978 = vmatprep.subr.bf16.mxu0 %v5608
    %5979 = vmatpush1.bf16.msra.mxu0 %v5607
    %5980 = vmatprep.subr.bf16.mxu0 %v5604
    %5981 = vmatpush1.bf16.msra.mxu0 %v5603
    %5982 = vmatprep.subr.bf16.mxu0 %v5600
    %5983 = vmatpush1.bf16.msra.mxu0 %v5599
    %5984 = vmatprep.subr.bf16.mxu0 %v5596
    %5985 = vmatpush1.bf16.msra.mxu0 %v5595
    %5986 = vmatprep.subr.bf16.mxu0 %v5592
    %5987 = vmatpush1.bf16.msra.mxu0 %v5591
    %5988 = vmatprep.subr.bf16.mxu0 %v5588
    %5989 = vmatpush1.bf16.msra.mxu0 %v5587
    %5990 = vmatprep.subr.bf16.mxu0 %v5584
    %5991 = vmatpush1.bf16.msra.mxu0 %v5583
    %5992 = vmatprep.subr.bf16.mxu0 %v5644
    %5993 = vmatpush2.bf16.msra.mxu0 %v5643
    %5994 = vmatprep.subr.bf16.mxu0 %v5640
    %5995 = vmatpush2.bf16.msra.mxu0 %v5639
    %5996 = vmatprep.subr.bf16.mxu0 %v5636
    %5997 = vmatpush2.bf16.msra.mxu0 %v5635
    %5998 = vmatprep.subr.bf16.mxu0 %v5632
    %5999 = vmatpush2.bf16.msra.mxu0 %v5631
    %6000 = vmatprep.subr.bf16.mxu0 %v5628
    %6001 = vmatpush2.bf16.msra.mxu0 %v5627
    %6002 = vmatprep.subr.bf16.mxu0 %v5624
    %6003 = vmatpush2.bf16.msra.mxu0 %v5623
    %6004 = vmatprep.subr.bf16.mxu0 %v5620
    %6005 = vmatpush2.bf16.msra.mxu0 %v5619
    %6006 = vmatprep.subr.bf16.mxu0 %v5616
    %6007 = vmatpush2.bf16.msra.mxu0 %v5615
    %6008 = vmatprep.mubr.bf16.mxu0 %v4708
    %6009 = vmatmul.mubr.bf16.gmra.mxu0 %v4707
    %v6010 = vpop.f32.mrf.mxu0
    %v6011 = vadd.f32 %v5938, %v6010
    %v6012 = vpop.f32.mrf.mxu0
    %v6013 = vadd.f32 %v5940, %v6012
    %v6014 = vpop.f32.mrf.mxu0
    %v6015 = vadd.f32 %v5942, %v6014
    %v6016 = vpop.f32.mrf.mxu0
    %v6017 = vadd.f32 %v5944, %v6016
    %6018 = vmatprep.mubr.bf16.mxu0 %v4714
    %6019 = vmatmul.mubr.bf16.gmra.mxu0 %v4713
    %v6020 = vpop.f32.mrf.mxu0
    %v6021 = vadd.f32 %v5948, %v6020
    %v6022 = vpop.f32.mrf.mxu0
    %v6023 = vadd.f32 %v5950, %v6022
    %v6024 = vpop.f32.mrf.mxu0
    %v6025 = vadd.f32 %v5952, %v6024
    %v6026 = vpop.f32.mrf.mxu0
    %v6027 = vadd.f32 %v5954, %v6026
    %6028 = vmatprep.mubr.bf16.mxu0 %v4720
    %6029 = vmatmul.mubr.bf16.gmra.mxu0 %v4719
    %v6030 = vpop.f32.mrf.mxu0
    %v6031 = vadd.f32 %v5958, %v6030
    %v6032 = vpop.f32.mrf.mxu0
    %v6033 = vadd.f32 %v5960, %v6032
    %v6034 = vpop.f32.mrf.mxu0
    %v6035 = vadd.f32 %v5962, %v6034
    %v6036 = vpop.f32.mrf.mxu0
    %v6037 = vadd.f32 %v5964, %v6036
    %6038 = vmatprep.mubr.bf16.mxu0 %v4726
    %6039 = vmatmul.mubr.bf16.gmra.mxu0 %v4725
    %v6040 = vpop.f32.mrf.mxu0
    %v6041 = vadd.f32 %v5968, %v6040
    %v6042 = vpop.f32.mrf.mxu0
    %v6043 = vadd.f32 %v5970, %v6042
    %v6044 = vpop.f32.mrf.mxu0
    %v6045 = vadd.f32 %v5972, %v6044
    %v6046 = vpop.f32.mrf.mxu0
    %v6047 = vadd.f32 %v5974, %v6046
    %6048 = vdwg.mxu0
    %6049 = vmatprep.subr.bf16.mxu0 %v5676
    %6050 = vmatpush1.bf16.msra.mxu0 %v5675
    %6051 = vmatprep.subr.bf16.mxu0 %v5672
    %6052 = vmatpush1.bf16.msra.mxu0 %v5671
    %6053 = vmatprep.subr.bf16.mxu0 %v5668
    %6054 = vmatpush1.bf16.msra.mxu0 %v5667
    %6055 = vmatprep.subr.bf16.mxu0 %v5664
    %6056 = vmatpush1.bf16.msra.mxu0 %v5663
    %6057 = vmatprep.subr.bf16.mxu0 %v5660
    %6058 = vmatpush1.bf16.msra.mxu0 %v5659
    %6059 = vmatprep.subr.bf16.mxu0 %v5656
    %6060 = vmatpush1.bf16.msra.mxu0 %v5655
    %6061 = vmatprep.subr.bf16.mxu0 %v5652
    %6062 = vmatpush1.bf16.msra.mxu0 %v5651
    %6063 = vmatprep.subr.bf16.mxu0 %v5648
    %6064 = vmatpush1.bf16.msra.mxu0 %v5647
    %6065 = vmatprep.subr.bf16.mxu0 %v5708
    %6066 = vmatpush2.bf16.msra.mxu0 %v5707
    %6067 = vmatprep.subr.bf16.mxu0 %v5704
    %6068 = vmatpush2.bf16.msra.mxu0 %v5703
    %6069 = vmatprep.subr.bf16.mxu0 %v5700
    %6070 = vmatpush2.bf16.msra.mxu0 %v5699
    %6071 = vmatprep.subr.bf16.mxu0 %v5696
    %6072 = vmatpush2.bf16.msra.mxu0 %v5695
    %6073 = vmatprep.subr.bf16.mxu0 %v5692
    %6074 = vmatpush2.bf16.msra.mxu0 %v5691
    %6075 = vmatprep.subr.bf16.mxu0 %v5688
    %6076 = vmatpush2.bf16.msra.mxu0 %v5687
    %6077 = vmatprep.subr.bf16.mxu0 %v5684
    %6078 = vmatpush2.bf16.msra.mxu0 %v5683
    %6079 = vmatprep.subr.bf16.mxu0 %v5680
    %6080 = vmatpush2.bf16.msra.mxu0 %v5679
    %6081 = vmatprep.mubr.bf16.mxu0 %v4710
    %6082 = vmatmul.mubr.bf16.gmra.mxu0 %v4709
    %v6083 = vpop.f32.mrf.mxu0
    %v6084 = vadd.f32 %v6011, %v6083
    %v6085 = vpop.f32.mrf.mxu0
    %v6086 = vadd.f32 %v6013, %v6085
    %v6087 = vpop.f32.mrf.mxu0
    %v6088 = vadd.f32 %v6015, %v6087
    %v6089 = vpop.f32.mrf.mxu0
    %v6090 = vadd.f32 %v6017, %v6089
    %6091 = vmatprep.mubr.bf16.mxu0 %v4716
    %6092 = vmatmul.mubr.bf16.gmra.mxu0 %v4715
    %v6093 = vpop.f32.mrf.mxu0
    %v6094 = vadd.f32 %v6021, %v6093
    %v6095 = vpop.f32.mrf.mxu0
    %v6096 = vadd.f32 %v6023, %v6095
    %v6097 = vpop.f32.mrf.mxu0
    %v6098 = vadd.f32 %v6025, %v6097
    %v6099 = vpop.f32.mrf.mxu0
    %v6100 = vadd.f32 %v6027, %v6099
    %6101 = vmatprep.mubr.bf16.mxu0 %v4722
    %6102 = vmatmul.mubr.bf16.gmra.mxu0 %v4721
    %v6103 = vpop.f32.mrf.mxu0
    %v6104 = vadd.f32 %v6031, %v6103
    %v6105 = vpop.f32.mrf.mxu0
    %v6106 = vadd.f32 %v6033, %v6105
    %v6107 = vpop.f32.mrf.mxu0
    %v6108 = vadd.f32 %v6035, %v6107
    %v6109 = vpop.f32.mrf.mxu0
    %v6110 = vadd.f32 %v6037, %v6109
    %6111 = vmatprep.mubr.bf16.mxu0 %v4728
    %6112 = vmatmul.mubr.bf16.gmra.mxu0 %v4727
    %v6113 = vpop.f32.mrf.mxu0
    %v6114 = vadd.f32 %v6041, %v6113
    %v6115 = vpop.f32.mrf.mxu0
    %v6116 = vadd.f32 %v6043, %v6115
    %v6117 = vpop.f32.mrf.mxu0
    %v6118 = vadd.f32 %v6045, %v6117
    %v6119 = vpop.f32.mrf.mxu0
    %v6120 = vadd.f32 %v6047, %v6119
    %6121 = vdwg.mxu0
    %6122 = vmatprep.subr.bf16.mxu0 %v5550
    %6123 = vmatpush1.bf16.msra.mxu0 %v5549
    %6124 = vmatprep.subr.bf16.mxu0 %v5546
    %6125 = vmatpush1.bf16.msra.mxu0 %v5545
    %6126 = vmatprep.subr.bf16.mxu0 %v5542
    %6127 = vmatpush1.bf16.msra.mxu0 %v5541
    %6128 = vmatprep.subr.bf16.mxu0 %v5538
    %6129 = vmatpush1.bf16.msra.mxu0 %v5537
    %6130 = vmatprep.subr.bf16.mxu0 %v5534
    %6131 = vmatpush1.bf16.msra.mxu0 %v5533
    %6132 = vmatprep.subr.bf16.mxu0 %v5530
    %6133 = vmatpush1.bf16.msra.mxu0 %v5529
    %6134 = vmatprep.subr.bf16.mxu0 %v5526
    %6135 = vmatpush1.bf16.msra.mxu0 %v5525
    %6136 = vmatprep.subr.bf16.mxu0 %v5522
    %6137 = vmatpush1.bf16.msra.mxu0 %v5521
    %6138 = vmatprep.subr.bf16.mxu0 %v5582
    %6139 = vmatpush2.bf16.msra.mxu0 %v5581
    %6140 = vmatprep.subr.bf16.mxu0 %v5578
    %6141 = vmatpush2.bf16.msra.mxu0 %v5577
    %6142 = vmatprep.subr.bf16.mxu0 %v5574
    %6143 = vmatpush2.bf16.msra.mxu0 %v5573
    %6144 = vmatprep.subr.bf16.mxu0 %v5570
    %6145 = vmatpush2.bf16.msra.mxu0 %v5569
    %6146 = vmatprep.subr.bf16.mxu0 %v5566
    %6147 = vmatpush2.bf16.msra.mxu0 %v5565
    %6148 = vmatprep.subr.bf16.mxu0 %v5562
    %6149 = vmatpush2.bf16.msra.mxu0 %v5561
    %6150 = vmatprep.subr.bf16.mxu0 %v5558
    %6151 = vmatpush2.bf16.msra.mxu0 %v5557
    %6152 = vmatprep.subr.bf16.mxu0 %v5554
    %6153 = vmatpush2.bf16.msra.mxu0 %v5553
    %6154 = vmatprep.mubr.bf16.mxu0 %v4706
    %6155 = vmatmul.mubr.bf16.gmra.mxu0 %v4705
    %v6156 = vpop.f32.mrf.mxu0
    %v6157 = vadd.f32 %v4934, %v6156
    %v6158 = vpop.f32.mrf.mxu0
    %v6159 = vadd.f32 %v4938, %v6158
    %v6160 = vpop.f32.mrf.mxu0
    %v6161 = vadd.f32 %v4934, %v6160
    %v6162 = vpop.f32.mrf.mxu0
    %v6163 = vadd.f32 %v4938, %v6162
    %6164 = vmatprep.mubr.bf16.mxu0 %v4712
    %6165 = vmatmul.mubr.bf16.gmra.mxu0 %v4711
    %v6166 = vpop.f32.mrf.mxu0
    %v6167 = vadd.f32 %v4934, %v6166
    %v6168 = vpop.f32.mrf.mxu0
    %v6169 = vadd.f32 %v4938, %v6168
    %v6170 = vpop.f32.mrf.mxu0
    %v6171 = vadd.f32 %v4934, %v6170
    %v6172 = vpop.f32.mrf.mxu0
    %v6173 = vadd.f32 %v4938, %v6172
    %6174 = vmatprep.mubr.bf16.mxu0 %v4718
    %6175 = vmatmul.mubr.bf16.gmra.mxu0 %v4717
    %v6176 = vpop.f32.mrf.mxu0
    %v6177 = vadd.f32 %v4934, %v6176
    %v6178 = vpop.f32.mrf.mxu0
    %v6179 = vadd.f32 %v4938, %v6178
    %v6180 = vpop.f32.mrf.mxu0
    %v6181 = vadd.f32 %v4934, %v6180
    %v6182 = vpop.f32.mrf.mxu0
    %v6183 = vadd.f32 %v4938, %v6182
    %6184 = vmatprep.mubr.bf16.mxu0 %v4724
    %6185 = vmatmul.mubr.bf16.gmra.mxu0 %v4723
    %v6186 = vpop.f32.mrf.mxu0
    %v6187 = vadd.f32 %v4934, %v6186
    %v6188 = vpop.f32.mrf.mxu0
    %v6189 = vadd.f32 %v4938, %v6188
    %v6190 = vpop.f32.mrf.mxu0
    %v6191 = vadd.f32 %v4934, %v6190
    %v6192 = vpop.f32.mrf.mxu0
    %v6193 = vadd.f32 %v4938, %v6192
    %6194 = vdwg.mxu0
    %6195 = vmatprep.subr.bf16.mxu0 %v5614
    %6196 = vmatpush1.bf16.msra.mxu0 %v5613
    %6197 = vmatprep.subr.bf16.mxu0 %v5610
    %6198 = vmatpush1.bf16.msra.mxu0 %v5609
    %6199 = vmatprep.subr.bf16.mxu0 %v5606
    %6200 = vmatpush1.bf16.msra.mxu0 %v5605
    %6201 = vmatprep.subr.bf16.mxu0 %v5602
    %6202 = vmatpush1.bf16.msra.mxu0 %v5601
    %6203 = vmatprep.subr.bf16.mxu0 %v5598
    %6204 = vmatpush1.bf16.msra.mxu0 %v5597
    %6205 = vmatprep.subr.bf16.mxu0 %v5594
    %6206 = vmatpush1.bf16.msra.mxu0 %v5593
    %6207 = vmatprep.subr.bf16.mxu0 %v5590
    %6208 = vmatpush1.bf16.msra.mxu0 %v5589
    %6209 = vmatprep.subr.bf16.mxu0 %v5586
    %6210 = vmatpush1.bf16.msra.mxu0 %v5585
    %6211 = vmatprep.subr.bf16.mxu0 %v5646
    %6212 = vmatpush2.bf16.msra.mxu0 %v5645
    %6213 = vmatprep.subr.bf16.mxu0 %v5642
    %6214 = vmatpush2.bf16.msra.mxu0 %v5641
    %6215 = vmatprep.subr.bf16.mxu0 %v5638
    %6216 = vmatpush2.bf16.msra.mxu0 %v5637
    %6217 = vmatprep.subr.bf16.mxu0 %v5634
    %6218 = vmatpush2.bf16.msra.mxu0 %v5633
    %6219 = vmatprep.subr.bf16.mxu0 %v5630
    %6220 = vmatpush2.bf16.msra.mxu0 %v5629
    %6221 = vmatprep.subr.bf16.mxu0 %v5626
    %6222 = vmatpush2.bf16.msra.mxu0 %v5625
    %6223 = vmatprep.subr.bf16.mxu0 %v5622
    %6224 = vmatpush2.bf16.msra.mxu0 %v5621
    %6225 = vmatprep.subr.bf16.mxu0 %v5618
    %6226 = vmatpush2.bf16.msra.mxu0 %v5617
    %6227 = vmatprep.mubr.bf16.mxu0 %v4708
    %6228 = vmatmul.mubr.bf16.gmra.mxu0 %v4707
    %v6229 = vpop.f32.mrf.mxu0
    %v6230 = vadd.f32 %v6157, %v6229
    %v6231 = vpop.f32.mrf.mxu0
    %v6232 = vadd.f32 %v6159, %v6231
    %v6233 = vpop.f32.mrf.mxu0
    %v6234 = vadd.f32 %v6161, %v6233
    %v6235 = vpop.f32.mrf.mxu0
    %v6236 = vadd.f32 %v6163, %v6235
    %6237 = vmatprep.mubr.bf16.mxu0 %v4714
    %6238 = vmatmul.mubr.bf16.gmra.mxu0 %v4713
    %v6239 = vpop.f32.mrf.mxu0
    %v6240 = vadd.f32 %v6167, %v6239
    %v6241 = vpop.f32.mrf.mxu0
    %v6242 = vadd.f32 %v6169, %v6241
    %v6243 = vpop.f32.mrf.mxu0
    %v6244 = vadd.f32 %v6171, %v6243
    %v6245 = vpop.f32.mrf.mxu0
    %v6246 = vadd.f32 %v6173, %v6245
    %6247 = vmatprep.mubr.bf16.mxu0 %v4720
    %6248 = vmatmul.mubr.bf16.gmra.mxu0 %v4719
    %v6249 = vpop.f32.mrf.mxu0
    %v6250 = vadd.f32 %v6177, %v6249
    %v6251 = vpop.f32.mrf.mxu0
    %v6252 = vadd.f32 %v6179, %v6251
    %v6253 = vpop.f32.mrf.mxu0
    %v6254 = vadd.f32 %v6181, %v6253
    %v6255 = vpop.f32.mrf.mxu0
    %v6256 = vadd.f32 %v6183, %v6255
    %6257 = vmatprep.mubr.bf16.mxu0 %v4726
    %6258 = vmatmul.mubr.bf16.gmra.mxu0 %v4725
    %v6259 = vpop.f32.mrf.mxu0
    %v6260 = vadd.f32 %v6187, %v6259
    %v6261 = vpop.f32.mrf.mxu0
    %v6262 = vadd.f32 %v6189, %v6261
    %v6263 = vpop.f32.mrf.mxu0
    %v6264 = vadd.f32 %v6191, %v6263
    %v6265 = vpop.f32.mrf.mxu0
    %v6266 = vadd.f32 %v6193, %v6265
    %6267 = vdwg.mxu0
    %6268 = vmatprep.subr.bf16.mxu0 %v5678
    %6269 = vmatpush1.bf16.msra.mxu0 %v5677
    %6270 = vmatprep.subr.bf16.mxu0 %v5674
    %6271 = vmatpush1.bf16.msra.mxu0 %v5673
    %6272 = vmatprep.subr.bf16.mxu0 %v5670
    %6273 = vmatpush1.bf16.msra.mxu0 %v5669
    %6274 = vmatprep.subr.bf16.mxu0 %v5666
    %6275 = vmatpush1.bf16.msra.mxu0 %v5665
    %6276 = vmatprep.subr.bf16.mxu0 %v5662
    %6277 = vmatpush1.bf16.msra.mxu0 %v5661
    %6278 = vmatprep.subr.bf16.mxu0 %v5658
    %6279 = vmatpush1.bf16.msra.mxu0 %v5657
    %6280 = vmatprep.subr.bf16.mxu0 %v5654
    %6281 = vmatpush1.bf16.msra.mxu0 %v5653
    %6282 = vmatprep.subr.bf16.mxu0 %v5650
    %6283 = vmatpush1.bf16.msra.mxu0 %v5649
    %6284 = vmatprep.subr.bf16.mxu0 %v5710
    %6285 = vmatpush2.bf16.msra.mxu0 %v5709
    %6286 = vmatprep.subr.bf16.mxu0 %v5706
    %6287 = vmatpush2.bf16.msra.mxu0 %v5705
    %6288 = vmatprep.subr.bf16.mxu0 %v5702
    %6289 = vmatpush2.bf16.msra.mxu0 %v5701
    %6290 = vmatprep.subr.bf16.mxu0 %v5698
    %6291 = vmatpush2.bf16.msra.mxu0 %v5697
    %6292 = vmatprep.subr.bf16.mxu0 %v5694
    %6293 = vmatpush2.bf16.msra.mxu0 %v5693
    %6294 = vmatprep.subr.bf16.mxu0 %v5690
    %6295 = vmatpush2.bf16.msra.mxu0 %v5689
    %6296 = vmatprep.subr.bf16.mxu0 %v5686
    %6297 = vmatpush2.bf16.msra.mxu0 %v5685
    %6298 = vmatprep.subr.bf16.mxu0 %v5682
    %6299 = vmatpush2.bf16.msra.mxu0 %v5681
    %6300 = vmatprep.mubr.bf16.mxu0 %v4710
    %6301 = vmatmul.mubr.bf16.gmra.mxu0 %v4709
    %v6302 = vpop.f32.mrf.mxu0
    %v6303 = vadd.f32 %v6230, %v6302
    %v6304 = vpop.f32.mrf.mxu0
    %v6305 = vadd.f32 %v6232, %v6304
    %v6306 = vpop.f32.mrf.mxu0
    %v6307 = vadd.f32 %v6234, %v6306
    %v6308 = vpop.f32.mrf.mxu0
    %v6309 = vadd.f32 %v6236, %v6308
    %6310 = vmatprep.mubr.bf16.mxu0 %v4716
    %6311 = vmatmul.mubr.bf16.gmra.mxu0 %v4715
    %v6312 = vpop.f32.mrf.mxu0
    %v6313 = vadd.f32 %v6240, %v6312
    %v6314 = vpop.f32.mrf.mxu0
    %v6315 = vadd.f32 %v6242, %v6314
    %v6316 = vpop.f32.mrf.mxu0
    %v6317 = vadd.f32 %v6244, %v6316
    %v6318 = vpop.f32.mrf.mxu0
    %v6319 = vadd.f32 %v6246, %v6318
    %6320 = vmatprep.mubr.bf16.mxu0 %v4722
    %6321 = vmatmul.mubr.bf16.gmra.mxu0 %v4721
    %v6322 = vpop.f32.mrf.mxu0
    %v6323 = vadd.f32 %v6250, %v6322
    %v6324 = vpop.f32.mrf.mxu0
    %v6325 = vadd.f32 %v6252, %v6324
    %v6326 = vpop.f32.mrf.mxu0
    %v6327 = vadd.f32 %v6254, %v6326
    %v6328 = vpop.f32.mrf.mxu0
    %v6329 = vadd.f32 %v6256, %v6328
    %6330 = vmatprep.mubr.bf16.mxu0 %v4728
    %6331 = vmatmul.mubr.bf16.gmra.mxu0 %v4727
    %v6332 = vpop.f32.mrf.mxu0
    %v6333 = vadd.f32 %v6260, %v6332
    %v6334 = vpop.f32.mrf.mxu0
    %v6335 = vadd.f32 %v6262, %v6334
    %v6336 = vpop.f32.mrf.mxu0
    %v6337 = vadd.f32 %v6264, %v6336
    %v6338 = vpop.f32.mrf.mxu0
    %v6339 = vadd.f32 %v6266, %v6338
    %6340 = vdwg.mxu0
    %v6341 = vmax.f32 %v6084, 0.0
    %v6342 = vmax.f32 %v6086, 0.0
    %v6343 = vmax.f32 %v6303, 0.0
    %v6344 = vmax.f32 %v6305, 0.0
    %v6345 = vmax.f32 %v6088, 0.0
    %v6346 = vmax.f32 %v6090, 0.0
    %v6347 = vmax.f32 %v6307, 0.0
    %v6348 = vmax.f32 %v6309, 0.0
    %v6349 = vmax.f32 %v6094, 0.0
    %v6350 = vmax.f32 %v6096, 0.0
    %v6351 = vmax.f32 %v6313, 0.0
    %v6352 = vmax.f32 %v6315, 0.0
    %v6353 = vmax.f32 %v6098, 0.0
    %v6354 = vmax.f32 %v6100, 0.0
    %v6355 = vmax.f32 %v6317, 0.0
    %v6356 = vmax.f32 %v6319, 0.0
    %v6357 = vmax.f32 %v6104, 0.0
    %v6358 = vmax.f32 %v6106, 0.0
    %v6359 = vmax.f32 %v6323, 0.0
    %v6360 = vmax.f32 %v6325, 0.0
    %v6361 = vmax.f32 %v6108, 0.0
    %v6362 = vmax.f32 %v6110, 0.0
    %v6363 = vmax.f32 %v6327, 0.0
    %v6364 = vmax.f32 %v6329, 0.0
    %v6365 = vmax.f32 %v6114, 0.0
    %v6366 = vmax.f32 %v6116, 0.0
    %v6367 = vmax.f32 %v6333, 0.0
    %v6368 = vmax.f32 %v6335, 0.0
    %v6369 = vmax.f32 %v6118, 0.0
    %v6370 = vmax.f32 %v6120, 0.0
    %v6371 = vmax.f32 %v6337, 0.0
    %v6372 = vmax.f32 %v6339, 0.0
    %v6373 = vmax.f32 %v6341, %v6343
    %v6374 = vmax.f32 %v6342, %v6344
    %v6375 = vmax.f32 %v6345, %v6347
    %v6376 = vmax.f32 %v6346, %v6348
    %v6377 = vmax.f32 %v6349, %v6351
    %v6378 = vmax.f32 %v6350, %v6352
    %v6379 = vmax.f32 %v6353, %v6355
    %v6380 = vmax.f32 %v6354, %v6356
    %v6381 = vmax.f32 %v6357, %v6359
    %v6382 = vmax.f32 %v6358, %v6360
    %v6383 = vmax.f32 %v6361, %v6363
    %v6384 = vmax.f32 %v6362, %v6364
    %v6385 = vmax.f32 %v6365, %v6367
    %v6386 = vmax.f32 %v6366, %v6368
    %v6387 = vmax.f32 %v6369, %v6371
    %v6388 = vmax.f32 %v6370, %v6372
    %v6405 = vrot.slane %v6373, 1
    %v6406 = vrot.slane %v6375, 1
    %v6407 = vsel %vm111, %v6405, %v6406
    %v6408 = vrot.slane %v6374, 1
    %v6409 = vrot.slane %v6376, 1
    %v6410 = vsel %vm111, %v6408, %v6409
    %v6411 = vrot.slane %v6377, 1
    %v6412 = vsel %vm111, %v6406, %v6411
    %v6413 = vrot.slane %v6378, 1
    %v6414 = vsel %vm111, %v6409, %v6413
    %v6415 = vrot.slane %v6379, 1
    %v6416 = vsel %vm111, %v6411, %v6415
    %v6417 = vrot.slane %v6380, 1
    %v6418 = vsel %vm111, %v6413, %v6417
    %v6419 = vrot.slane %v6381, 1
    %v6420 = vsel %vm111, %v6415, %v6419
    %v6421 = vrot.slane %v6382, 1
    %v6422 = vsel %vm111, %v6417, %v6421
    %v6423 = vrot.slane %v6383, 1
    %v6424 = vsel %vm111, %v6419, %v6423
    %v6425 = vrot.slane %v6384, 1
    %v6426 = vsel %vm111, %v6421, %v6425
    %v6427 = vrot.slane %v6385, 1
    %v6428 = vsel %vm111, %v6423, %v6427
    %v6429 = vrot.slane %v6386, 1
    %v6430 = vsel %vm111, %v6425, %v6429
    %v6431 = vrot.slane %v6387, 1
    %v6432 = vsel %vm111, %v6427, %v6431
    %v6433 = vrot.slane %v6388, 1
    %v6434 = vsel %vm111, %v6429, %v6433
    %v6451 = vmax.f32 %v6373, %v6407
    %v6452 = vmax.f32 %v6374, %v6410
    %v6453 = vmax.f32 %v6375, %v6412
    %v6454 = vmax.f32 %v6376, %v6414
    %v6455 = vmax.f32 %v6377, %v6416
    %v6456 = vmax.f32 %v6378, %v6418
    %v6457 = vmax.f32 %v6379, %v6420
    %v6458 = vmax.f32 %v6380, %v6422
    %v6459 = vmax.f32 %v6381, %v6424
    %v6460 = vmax.f32 %v6382, %v6426
    %v6461 = vmax.f32 %v6383, %v6428
    %v6462 = vmax.f32 %v6384, %v6430
    %v6463 = vmax.f32 %v6385, %v6432
    %v6464 = vmax.f32 %v6386, %v6434
    %v6465 = vmax.f32 %v6387, %v6431
    %v6466 = vmax.f32 %v6388, %v6433
    %v6467 = vld [vmem:[%s9] sm:$0x3f]
    %vm6468 = vcmask 465920
    %v6470 = vsel %vm6468, %v6467, 0
    %v6473 = vsel %vm2041, %v6465, 0
    %v6476 = vsel %vm2041, %v6466, 0
    %6478 = vmatprep.subr.mxu0 0.0
    %6479 = vmatpush1.msra.mxu0 0.0
    %6480 = vmatprep.subr.mxu0 0.0
    %6481 = vmatpush1.msra.mxu0 0.0
    %6482 = vmatprep.subr.mxu0 0.0
    %6483 = vmatpush1.msra.mxu0 0.0
    %6484 = vmatprep.subr.mxu0 0.0
    %6485 = vmatpush1.msra.mxu0 0.0
    %6486 = vmatprep.subr.mxu0 0.0
    %6487 = vmatpush1.msra.mxu0 0.0
    %6488 = vmatprep.subr.mxu0 0.0
    %6489 = vmatpush1.msra.mxu0 0.0
    %6490 = vmatprep.subr.mxu0 0.0
    %6491 = vmatpush1.msra.mxu0 0.0
    %6492 = vmatprep.subr.mxu0 0.0
    %6493 = vmatpush1.msra.mxu0 0.0
    %6494 = vmatprep.subr.mxu0 %v6476
    %6495 = vmatpush1.msra.mxu0 %v6473
    %6496 = vmatprep.subr.mxu0 %v6464
    %6497 = vmatpush1.msra.mxu0 %v6463
    %6498 = vmatprep.subr.mxu0 %v6462
    %6499 = vmatpush1.msra.mxu0 %v6461
    %6500 = vmatprep.subr.mxu0 %v6460
    %6501 = vmatpush1.msra.mxu0 %v6459
    %6502 = vmatprep.subr.mxu0 %v6458
    %6503 = vmatpush1.msra.mxu0 %v6457
    %6504 = vmatprep.subr.mxu0 %v6456
    %6505 = vmatpush1.msra.mxu0 %v6455
    %6506 = vmatprep.subr.mxu0 %v6454
    %6507 = vmatpush1.msra.mxu0 %v6453
    %6508 = vmatprep.subr.mxu0 %v6452
    %6509 = vmatpush1.msra.mxu0 %v6451
    %6510 = vmatprep.subr.mxu0 0.0
    %6511 = vmatpush2.msra.mxu0 0.0
    %6512 = vmatprep.subr.mxu0 0.0
    %6513 = vmatpush2.msra.mxu0 0.0
    %6514 = vmatprep.subr.mxu0 0.0
    %6515 = vmatpush2.msra.mxu0 0.0
    %6516 = vmatprep.subr.mxu0 0.0
    %6517 = vmatpush2.msra.mxu0 0.0
    %6518 = vmatprep.subr.mxu0 0.0
    %6519 = vmatpush2.msra.mxu0 0.0
    %6520 = vmatprep.subr.mxu0 0.0
    %6521 = vmatpush2.msra.mxu0 0.0
    %6522 = vmatprep.subr.mxu0 0.0
    %6523 = vmatpush2.msra.mxu0 0.0
    %6524 = vmatprep.subr.mxu0 0.0
    %6525 = vmatpush2.msra.mxu0 0.0
    %6526 = vmatprep.subr.mxu0 0.0
    %6527 = vmatpush2.msra.mxu0 0.0
    %6528 = vmatprep.subr.mxu0 0.0
    %6529 = vmatpush2.msra.mxu0 0.0
    %6530 = vmatprep.subr.mxu0 0.0
    %6531 = vmatpush2.msra.mxu0 0.0
    %6532 = vmatprep.subr.mxu0 0.0
    %6533 = vmatpush2.msra.mxu0 0.0
    %6534 = vmatprep.subr.mxu0 0.0
    %6535 = vmatpush2.msra.mxu0 0.0
    %6536 = vmatprep.subr.mxu0 0.0
    %6537 = vmatpush2.msra.mxu0 0.0
    %6538 = vmatprep.subr.mxu0 0.0
    %6539 = vmatpush2.msra.mxu0 0.0
    %6540 = vmatprep.subr.mxu0 0.0
    %6541 = vmatpush2.msra.mxu0 0.0
    %6542 = vmatprep.mubr.f32.mxu0 0.0
    %6543 = vmatmul.mubr.f32.gmra.mxu0 %v6470
    %v6544 = vpop.f32.mrf.mxu0
    %v6545 = vadd.f32 0.0, %v6544
    %v6546 = vpop.f32.mrf.mxu0
    %v6547 = vadd.f32 0.0, %v6546
    %6548 = vdwg.mxu0
    %s6549 = scalar_lea.vmem %s9, 8
    %v6550 = vld [vmem:[%s6549] sm:$0x3f]
    %v6552 = vsel %vm6468, %v6550, 0
    %6554 = vmatprep.subr.mxu0 0.0
    %6555 = vmatpush1.msra.mxu0 0.0
    %6556 = vmatprep.subr.mxu0 0.0
    %6557 = vmatpush1.msra.mxu0 0.0
    %6558 = vmatprep.subr.mxu0 0.0
    %6559 = vmatpush1.msra.mxu0 0.0
    %6560 = vmatprep.subr.mxu0 0.0
    %6561 = vmatpush1.msra.mxu0 0.0
    %6562 = vmatprep.subr.mxu0 0.0
    %6563 = vmatpush1.msra.mxu0 0.0
    %6564 = vmatprep.subr.mxu0 0.0
    %6565 = vmatpush1.msra.mxu0 0.0
    %6566 = vmatprep.subr.mxu0 0.0
    %6567 = vmatpush1.msra.mxu0 0.0
    %6568 = vmatprep.subr.mxu0 0.0
    %6569 = vmatpush1.msra.mxu0 0.0
    %6570 = vmatprep.subr.mxu0 %v6476
    %6571 = vmatpush1.msra.mxu0 %v6473
    %6572 = vmatprep.subr.mxu0 %v6464
    %6573 = vmatpush1.msra.mxu0 %v6463
    %6574 = vmatprep.subr.mxu0 %v6462
    %6575 = vmatpush1.msra.mxu0 %v6461
    %6576 = vmatprep.subr.mxu0 %v6460
    %6577 = vmatpush1.msra.mxu0 %v6459
    %6578 = vmatprep.subr.mxu0 %v6458
    %6579 = vmatpush1.msra.mxu0 %v6457
    %6580 = vmatprep.subr.mxu0 %v6456
    %6581 = vmatpush1.msra.mxu0 %v6455
    %6582 = vmatprep.subr.mxu0 %v6454
    %6583 = vmatpush1.msra.mxu0 %v6453
    %6584 = vmatprep.subr.mxu0 %v6452
    %6585 = vmatpush1.msra.mxu0 %v6451
    %6586 = vmatprep.subr.mxu0 0.0
    %6587 = vmatpush2.msra.mxu0 0.0
    %6588 = vmatprep.subr.mxu0 0.0
    %6589 = vmatpush2.msra.mxu0 0.0
    %6590 = vmatprep.subr.mxu0 0.0
    %6591 = vmatpush2.msra.mxu0 0.0
    %6592 = vmatprep.subr.mxu0 0.0
    %6593 = vmatpush2.msra.mxu0 0.0
    %6594 = vmatprep.subr.mxu0 0.0
    %6595 = vmatpush2.msra.mxu0 0.0
    %6596 = vmatprep.subr.mxu0 0.0
    %6597 = vmatpush2.msra.mxu0 0.0
    %6598 = vmatprep.subr.mxu0 0.0
    %6599 = vmatpush2.msra.mxu0 0.0
    %6600 = vmatprep.subr.mxu0 0.0
    %6601 = vmatpush2.msra.mxu0 0.0
    %6602 = vmatprep.subr.mxu0 0.0
    %6603 = vmatpush2.msra.mxu0 0.0
    %6604 = vmatprep.subr.mxu0 0.0
    %6605 = vmatpush2.msra.mxu0 0.0
    %6606 = vmatprep.subr.mxu0 0.0
    %6607 = vmatpush2.msra.mxu0 0.0
    %6608 = vmatprep.subr.mxu0 0.0
    %6609 = vmatpush2.msra.mxu0 0.0
    %6610 = vmatprep.subr.mxu0 0.0
    %6611 = vmatpush2.msra.mxu0 0.0
    %6612 = vmatprep.subr.mxu0 0.0
    %6613 = vmatpush2.msra.mxu0 0.0
    %6614 = vmatprep.subr.mxu0 0.0
    %6615 = vmatpush2.msra.mxu0 0.0
    %6616 = vmatprep.subr.mxu0 0.0
    %6617 = vmatpush2.msra.mxu0 0.0
    %6618 = vmatprep.mubr.f32.mxu0 0.0
    %6619 = vmatmul.mubr.f32.gmra.mxu0 %v6552
    %v6620 = vpop.f32.mrf.mxu0
    %v6621 = vadd.f32 0.0, %v6620
    %v6622 = vpop.f32.mrf.mxu0
    %v6623 = vadd.f32 0.0, %v6622
    %6624 = vdwg.mxu0
    %s6625 = scalar_lea.vmem %s9, 16
    %v6626 = vld [vmem:[%s6625] sm:$0x3f]
    %v6628 = vsel %vm6468, %v6626, 0
    %6630 = vmatprep.subr.mxu0 0.0
    %6631 = vmatpush1.msra.mxu0 0.0
    %6632 = vmatprep.subr.mxu0 0.0
    %6633 = vmatpush1.msra.mxu0 0.0
    %6634 = vmatprep.subr.mxu0 0.0
    %6635 = vmatpush1.msra.mxu0 0.0
    %6636 = vmatprep.subr.mxu0 0.0
    %6637 = vmatpush1.msra.mxu0 0.0
    %6638 = vmatprep.subr.mxu0 0.0
    %6639 = vmatpush1.msra.mxu0 0.0
    %6640 = vmatprep.subr.mxu0 0.0
    %6641 = vmatpush1.msra.mxu0 0.0
    %6642 = vmatprep.subr.mxu0 0.0
    %6643 = vmatpush1.msra.mxu0 0.0
    %6644 = vmatprep.subr.mxu0 0.0
    %6645 = vmatpush1.msra.mxu0 0.0
    %6646 = vmatprep.subr.mxu0 %v6476
    %6647 = vmatpush1.msra.mxu0 %v6473
    %6648 = vmatprep.subr.mxu0 %v6464
    %6649 = vmatpush1.msra.mxu0 %v6463
    %6650 = vmatprep.subr.mxu0 %v6462
    %6651 = vmatpush1.msra.mxu0 %v6461
    %6652 = vmatprep.subr.mxu0 %v6460
    %6653 = vmatpush1.msra.mxu0 %v6459
    %6654 = vmatprep.subr.mxu0 %v6458
    %6655 = vmatpush1.msra.mxu0 %v6457
    %6656 = vmatprep.subr.mxu0 %v6456
    %6657 = vmatpush1.msra.mxu0 %v6455
    %6658 = vmatprep.subr.mxu0 %v6454
    %6659 = vmatpush1.msra.mxu0 %v6453
    %6660 = vmatprep.subr.mxu0 %v6452
    %6661 = vmatpush1.msra.mxu0 %v6451
    %6662 = vmatprep.subr.mxu0 0.0
    %6663 = vmatpush2.msra.mxu0 0.0
    %6664 = vmatprep.subr.mxu0 0.0
    %6665 = vmatpush2.msra.mxu0 0.0
    %6666 = vmatprep.subr.mxu0 0.0
    %6667 = vmatpush2.msra.mxu0 0.0
    %6668 = vmatprep.subr.mxu0 0.0
    %6669 = vmatpush2.msra.mxu0 0.0
    %6670 = vmatprep.subr.mxu0 0.0
    %6671 = vmatpush2.msra.mxu0 0.0
    %6672 = vmatprep.subr.mxu0 0.0
    %6673 = vmatpush2.msra.mxu0 0.0
    %6674 = vmatprep.subr.mxu0 0.0
    %6675 = vmatpush2.msra.mxu0 0.0
    %6676 = vmatprep.subr.mxu0 0.0
    %6677 = vmatpush2.msra.mxu0 0.0
    %6678 = vmatprep.subr.mxu0 0.0
    %6679 = vmatpush2.msra.mxu0 0.0
    %6680 = vmatprep.subr.mxu0 0.0
    %6681 = vmatpush2.msra.mxu0 0.0
    %6682 = vmatprep.subr.mxu0 0.0
    %6683 = vmatpush2.msra.mxu0 0.0
    %6684 = vmatprep.subr.mxu0 0.0
    %6685 = vmatpush2.msra.mxu0 0.0
    %6686 = vmatprep.subr.mxu0 0.0
    %6687 = vmatpush2.msra.mxu0 0.0
    %6688 = vmatprep.subr.mxu0 0.0
    %6689 = vmatpush2.msra.mxu0 0.0
    %6690 = vmatprep.subr.mxu0 0.0
    %6691 = vmatpush2.msra.mxu0 0.0
    %6692 = vmatprep.subr.mxu0 0.0
    %6693 = vmatpush2.msra.mxu0 0.0
    %6694 = vmatprep.mubr.f32.mxu0 0.0
    %6695 = vmatmul.mubr.f32.gmra.mxu0 %v6628
    %v6696 = vpop.f32.mrf.mxu0
    %v6697 = vadd.f32 0.0, %v6696
    %v6698 = vpop.f32.mrf.mxu0
    %v6699 = vadd.f32 0.0, %v6698
    %6700 = vdwg.mxu0
    %s6701 = scalar_lea.vmem %s9, 24
    %v6702 = vld [vmem:[%s6701] sm:$0x3f]
    %v6704 = vsel %vm6468, %v6702, 0
    %6706 = vmatprep.subr.mxu0 0.0
    %6707 = vmatpush1.msra.mxu0 0.0
    %6708 = vmatprep.subr.mxu0 0.0
    %6709 = vmatpush1.msra.mxu0 0.0
    %6710 = vmatprep.subr.mxu0 0.0
    %6711 = vmatpush1.msra.mxu0 0.0
    %6712 = vmatprep.subr.mxu0 0.0
    %6713 = vmatpush1.msra.mxu0 0.0
    %6714 = vmatprep.subr.mxu0 0.0
    %6715 = vmatpush1.msra.mxu0 0.0
    %6716 = vmatprep.subr.mxu0 0.0
    %6717 = vmatpush1.msra.mxu0 0.0
    %6718 = vmatprep.subr.mxu0 0.0
    %6719 = vmatpush1.msra.mxu0 0.0
    %6720 = vmatprep.subr.mxu0 0.0
    %6721 = vmatpush1.msra.mxu0 0.0
    %6722 = vmatprep.subr.mxu0 %v6476
    %6723 = vmatpush1.msra.mxu0 %v6473
    %6724 = vmatprep.subr.mxu0 %v6464
    %6725 = vmatpush1.msra.mxu0 %v6463
    %6726 = vmatprep.subr.mxu0 %v6462
    %6727 = vmatpush1.msra.mxu0 %v6461
    %6728 = vmatprep.subr.mxu0 %v6460
    %6729 = vmatpush1.msra.mxu0 %v6459
    %6730 = vmatprep.subr.mxu0 %v6458
    %6731 = vmatpush1.msra.mxu0 %v6457
    %6732 = vmatprep.subr.mxu0 %v6456
    %6733 = vmatpush1.msra.mxu0 %v6455
    %6734 = vmatprep.subr.mxu0 %v6454
    %6735 = vmatpush1.msra.mxu0 %v6453
    %6736 = vmatprep.subr.mxu0 %v6452
    %6737 = vmatpush1.msra.mxu0 %v6451
    %6738 = vmatprep.subr.mxu0 0.0
    %6739 = vmatpush2.msra.mxu0 0.0
    %6740 = vmatprep.subr.mxu0 0.0
    %6741 = vmatpush2.msra.mxu0 0.0
    %6742 = vmatprep.subr.mxu0 0.0
    %6743 = vmatpush2.msra.mxu0 0.0
    %6744 = vmatprep.subr.mxu0 0.0
    %6745 = vmatpush2.msra.mxu0 0.0
    %6746 = vmatprep.subr.mxu0 0.0
    %6747 = vmatpush2.msra.mxu0 0.0
    %6748 = vmatprep.subr.mxu0 0.0
    %6749 = vmatpush2.msra.mxu0 0.0
    %6750 = vmatprep.subr.mxu0 0.0
    %6751 = vmatpush2.msra.mxu0 0.0
    %6752 = vmatprep.subr.mxu0 0.0
    %6753 = vmatpush2.msra.mxu0 0.0
    %6754 = vmatprep.subr.mxu0 0.0
    %6755 = vmatpush2.msra.mxu0 0.0
    %6756 = vmatprep.subr.mxu0 0.0
    %6757 = vmatpush2.msra.mxu0 0.0
    %6758 = vmatprep.subr.mxu0 0.0
    %6759 = vmatpush2.msra.mxu0 0.0
    %6760 = vmatprep.subr.mxu0 0.0
    %6761 = vmatpush2.msra.mxu0 0.0
    %6762 = vmatprep.subr.mxu0 0.0
    %6763 = vmatpush2.msra.mxu0 0.0
    %6764 = vmatprep.subr.mxu0 0.0
    %6765 = vmatpush2.msra.mxu0 0.0
    %6766 = vmatprep.subr.mxu0 0.0
    %6767 = vmatpush2.msra.mxu0 0.0
    %6768 = vmatprep.subr.mxu0 0.0
    %6769 = vmatpush2.msra.mxu0 0.0
    %6770 = vmatprep.mubr.f32.mxu0 0.0
    %6771 = vmatmul.mubr.f32.gmra.mxu0 %v6704
    %v6772 = vpop.f32.mrf.mxu0
    %v6773 = vadd.f32 0.0, %v6772
    %v6774 = vpop.f32.mrf.mxu0
    %v6775 = vadd.f32 0.0, %v6774
    %6776 = vdwg.mxu0
    %v6777 = vpack.c.bf16 %v6545, %v6545
    %v6778 = vpack.c.bf16 %v6547, %v6547
    %v6779 = vpack.c.bf16 %v6621, %v6621
    %v6780 = vpack.c.bf16 %v6623, %v6623
    %v6781 = vpack.c.bf16 %v6697, %v6697
    %v6782 = vpack.c.bf16 %v6699, %v6699
    %v6783 = vpack.c.bf16 %v6773, %v6773
    %v6784 = vpack.c.bf16 %v6775, %v6775
    %v6785 = vld [vmem:[%s10] sm:$0xf]
    %v6786 = vld [vmem:[%s10 + $0x4] sm:$0xf]
    %v6787 = vld [vmem:[%s10 + $0x8] sm:$0xf]
    %v6788 = vld [vmem:[%s10 + $0xc] sm:$0xf]
    %v6789 = vld [vmem:[%s10 + $0x10] sm:$0xf]
    %v6790 = vld [vmem:[%s10 + $0x14] sm:$0xf]
    %v6791 = vld [vmem:[%s10 + $0x18] sm:$0xf]
    %v6792 = vld [vmem:[%s10 + $0x1c] sm:$0xf]
    %v6793 = vld [vmem:[%s10 + $0x20] sm:$0xf]
    %v6794 = vld [vmem:[%s10 + $0x24] sm:$0xf]
    %v6795 = vld [vmem:[%s10 + $0x28] sm:$0xf]
    %v6796 = vld [vmem:[%s10 + $0x2c] sm:$0xf]
    %v6797 = vld [vmem:[%s10 + $0x30] sm:$0xf]
    %v6798 = vld [vmem:[%s10 + $0x34] sm:$0xf]
    %v6799 = vld [vmem:[%s10 + $0x38] sm:$0xf]
    %v6800 = vld [vmem:[%s10 + $0x3c] sm:$0xf]
    %v6801 = vld [vmem:[%s10 + $0x40] sm:$0xf]
    %v6802 = vld [vmem:[%s10 + $0x44] sm:$0xf]
    %v6803 = vld [vmem:[%s10 + $0x48] sm:$0xf]
    %v6804 = vld [vmem:[%s10 + $0x4c] sm:$0xf]
    %v6805 = vld [vmem:[%s10 + $0x50] sm:$0xf]
    %v6806 = vld [vmem:[%s10 + $0x54] sm:$0xf]
    %v6807 = vld [vmem:[%s10 + $0x58] sm:$0xf]
    %v6808 = vld [vmem:[%s10 + $0x5c] sm:$0xf]
    %v6809 = vld [vmem:[%s10 + $0x60] sm:$0xf]
    %v6810 = vld [vmem:[%s10 + $0x64] sm:$0xf]
    %v6811 = vld [vmem:[%s10 + $0x68] sm:$0xf]
    %v6812 = vld [vmem:[%s10 + $0x6c] sm:$0xf]
    %v6813 = vld [vmem:[%s10 + $0x70] sm:$0xf]
    %v6814 = vld [vmem:[%s10 + $0x74] sm:$0xf]
    %v6815 = vld [vmem:[%s10 + $0x78] sm:$0xf]
    %v6816 = vld [vmem:[%s10 + $0x7c] sm:$0xf]
    %v6817 = vld [vmem:[%s10 + $0x80] sm:$0xf]
    %v6818 = vld [vmem:[%s10 + $0x84] sm:$0xf]
    %v6819 = vld [vmem:[%s10 + $0x88] sm:$0xf]
    %v6820 = vld [vmem:[%s10 + $0x8c] sm:$0xf]
    %v6821 = vld [vmem:[%s10 + $0x90] sm:$0xf]
    %v6822 = vld [vmem:[%s10 + $0x94] sm:$0xf]
    %v6823 = vld [vmem:[%s10 + $0x98] sm:$0xf]
    %v6824 = vld [vmem:[%s10 + $0x9c] sm:$0xf]
    %v6825 = vld [vmem:[%s10 + $0xa0] sm:$0xf]
    %v6826 = vld [vmem:[%s10 + $0xa4] sm:$0xf]
    %v6827 = vld [vmem:[%s10 + $0xa8] sm:$0xf]
    %v6828 = vld [vmem:[%s10 + $0xac] sm:$0xf]
    %v6829 = vld [vmem:[%s10 + $0xb0] sm:$0xf]
    %v6830 = vld [vmem:[%s10 + $0xb4] sm:$0xf]
    %v6831 = vld [vmem:[%s10 + $0xb8] sm:$0xf]
    %v6832 = vld [vmem:[%s10 + $0xbc] sm:$0xf]
    %v6833 = vld [vmem:[%s10 + $0xc0] sm:$0xf]
    %v6834 = vld [vmem:[%s10 + $0xc4] sm:$0xf]
    %v6835 = vld [vmem:[%s10 + $0xc8] sm:$0xf]
    %v6836 = vld [vmem:[%s10 + $0xcc] sm:$0xf]
    %v6837 = vld [vmem:[%s10 + $0xd0] sm:$0xf]
    %v6838 = vld [vmem:[%s10 + $0xd4] sm:$0xf]
    %v6839 = vld [vmem:[%s10 + $0xd8] sm:$0xf]
    %v6840 = vld [vmem:[%s10 + $0xdc] sm:$0xf]
    %v6841 = vld [vmem:[%s10 + $0xe0] sm:$0xf]
    %v6842 = vld [vmem:[%s10 + $0xe4] sm:$0xf]
    %v6843 = vld [vmem:[%s10 + $0xe8] sm:$0xf]
    %v6844 = vld [vmem:[%s10 + $0xec] sm:$0xf]
    %v6845 = vld [vmem:[%s10 + $0xf0] sm:$0xf]
    %v6846 = vld [vmem:[%s10 + $0xf4] sm:$0xf]
    %v6847 = vld [vmem:[%s10 + $0xf8] sm:$0xf]
    %v6848 = vld [vmem:[%s10 + $0xfc] sm:$0xf]
    %v6849 = vld [vmem:[%s10 + $0x100] sm:$0xf]
    %v6850 = vld [vmem:[%s10 + $0x104] sm:$0xf]
    %v6851 = vld [vmem:[%s10 + $0x108] sm:$0xf]
    %v6852 = vld [vmem:[%s10 + $0x10c] sm:$0xf]
    %v6853 = vld [vmem:[%s10 + $0x110] sm:$0xf]
    %v6854 = vld [vmem:[%s10 + $0x114] sm:$0xf]
    %v6855 = vld [vmem:[%s10 + $0x118] sm:$0xf]
    %v6856 = vld [vmem:[%s10 + $0x11c] sm:$0xf]
    %v6857 = vld [vmem:[%s10 + $0x120] sm:$0xf]
    %v6858 = vld [vmem:[%s10 + $0x124] sm:$0xf]
    %v6859 = vld [vmem:[%s10 + $0x128] sm:$0xf]
    %v6860 = vld [vmem:[%s10 + $0x12c] sm:$0xf]
    %v6861 = vld [vmem:[%s10 + $0x130] sm:$0xf]
    %v6862 = vld [vmem:[%s10 + $0x134] sm:$0xf]
    %v6863 = vld [vmem:[%s10 + $0x138] sm:$0xf]
    %v6864 = vld [vmem:[%s10 + $0x13c] sm:$0xf]
    %v6865 = vld [vmem:[%s10 + $0x140] sm:$0xf]
    %v6866 = vld [vmem:[%s10 + $0x144] sm:$0xf]
    %v6867 = vld [vmem:[%s10 + $0x148] sm:$0xf]
    %v6868 = vld [vmem:[%s10 + $0x14c] sm:$0xf]
    %v6869 = vld [vmem:[%s10 + $0x150] sm:$0xf]
    %v6870 = vld [vmem:[%s10 + $0x154] sm:$0xf]
    %v6871 = vld [vmem:[%s10 + $0x158] sm:$0xf]
    %v6872 = vld [vmem:[%s10 + $0x15c] sm:$0xf]
    %v6873 = vld [vmem:[%s10 + $0x160] sm:$0xf]
    %v6874 = vld [vmem:[%s10 + $0x164] sm:$0xf]
    %v6875 = vld [vmem:[%s10 + $0x168] sm:$0xf]
    %v6876 = vld [vmem:[%s10 + $0x16c] sm:$0xf]
    %v6877 = vld [vmem:[%s10 + $0x170] sm:$0xf]
    %v6878 = vld [vmem:[%s10 + $0x174] sm:$0xf]
    %v6879 = vld [vmem:[%s10 + $0x178] sm:$0xf]
    %v6880 = vld [vmem:[%s10 + $0x17c] sm:$0xf]
    %v6881 = vld [vmem:[%s10 + $0x180] sm:$0xf]
    %v6882 = vld [vmem:[%s10 + $0x184] sm:$0xf]
    %v6883 = vld [vmem:[%s10 + $0x188] sm:$0xf]
    %v6884 = vld [vmem:[%s10 + $0x18c] sm:$0xf]
    %v6885 = vld [vmem:[%s10 + $0x190] sm:$0xf]
    %v6886 = vld [vmem:[%s10 + $0x194] sm:$0xf]
    %v6887 = vld [vmem:[%s10 + $0x198] sm:$0xf]
    %v6888 = vld [vmem:[%s10 + $0x19c] sm:$0xf]
    %v6889 = vld [vmem:[%s10 + $0x1a0] sm:$0xf]
    %v6890 = vld [vmem:[%s10 + $0x1a4] sm:$0xf]
    %v6891 = vld [vmem:[%s10 + $0x1a8] sm:$0xf]
    %v6892 = vld [vmem:[%s10 + $0x1ac] sm:$0xf]
    %v6893 = vld [vmem:[%s10 + $0x1b0] sm:$0xf]
    %v6894 = vld [vmem:[%s10 + $0x1b4] sm:$0xf]
    %v6895 = vld [vmem:[%s10 + $0x1b8] sm:$0xf]
    %v6896 = vld [vmem:[%s10 + $0x1bc] sm:$0xf]
    %v6897 = vld [vmem:[%s10 + $0x1c0] sm:$0xf]
    %v6898 = vld [vmem:[%s10 + $0x1c4] sm:$0xf]
    %v6899 = vld [vmem:[%s10 + $0x1c8] sm:$0xf]
    %v6900 = vld [vmem:[%s10 + $0x1cc] sm:$0xf]
    %v6901 = vld [vmem:[%s10 + $0x1d0] sm:$0xf]
    %v6902 = vld [vmem:[%s10 + $0x1d4] sm:$0xf]
    %v6903 = vld [vmem:[%s10 + $0x1d8] sm:$0xf]
    %v6904 = vld [vmem:[%s10 + $0x1dc] sm:$0xf]
    %v6905 = vld [vmem:[%s10 + $0x1e0] sm:$0xf]
    %v6906 = vld [vmem:[%s10 + $0x1e4] sm:$0xf]
    %v6907 = vld [vmem:[%s10 + $0x1e8] sm:$0xf]
    %v6908 = vld [vmem:[%s10 + $0x1ec] sm:$0xf]
    %v6909 = vld [vmem:[%s10 + $0x1f0] sm:$0xf]
    %v6910 = vld [vmem:[%s10 + $0x1f4] sm:$0xf]
    %v6911 = vld [vmem:[%s10 + $0x1f8] sm:$0xf]
    %v6912 = vld [vmem:[%s10 + $0x1fc] sm:$0xf]
    %v6913 = vld [vmem:[%s11] sm:$0x1]
    %v6915 = vlaneseq
    %v6916 = vshrl.u32 %v6915, 7
    %v6917 = vsub.s32 0, %v6916
    %v6918 = vrot.slane %v6913, %v6917
    %v7048 = vunpack.c.l.b16 %v6785
    %v7049 = vunpack.c.l.b16 %v6786
    %v7050 = vunpack.c.l.b16 %v6787
    %v7051 = vunpack.c.l.b16 %v6788
    %v7052 = vunpack.c.l.b16 %v6789
    %v7053 = vunpack.c.l.b16 %v6790
    %v7054 = vunpack.c.l.b16 %v6791
    %v7055 = vunpack.c.l.b16 %v6792
    %v7056 = vunpack.c.l.b16 %v6793
    %v7057 = vunpack.c.l.b16 %v6794
    %v7058 = vunpack.c.l.b16 %v6795
    %v7059 = vunpack.c.l.b16 %v6796
    %v7060 = vunpack.c.l.b16 %v6797
    %v7061 = vunpack.c.l.b16 %v6798
    %v7062 = vunpack.c.l.b16 %v6799
    %v7063 = vunpack.c.l.b16 %v6800
    %v7064 = vunpack.c.l.b16 %v6801
    %v7065 = vunpack.c.l.b16 %v6802
    %v7066 = vunpack.c.l.b16 %v6803
    %v7067 = vunpack.c.l.b16 %v6804
    %v7068 = vunpack.c.l.b16 %v6805
    %v7069 = vunpack.c.l.b16 %v6806
    %v7070 = vunpack.c.l.b16 %v6807
    %v7071 = vunpack.c.l.b16 %v6808
    %v7072 = vunpack.c.l.b16 %v6809
    %v7073 = vunpack.c.l.b16 %v6810
    %v7074 = vunpack.c.l.b16 %v6811
    %v7075 = vunpack.c.l.b16 %v6812
    %v7076 = vunpack.c.l.b16 %v6813
    %v7077 = vunpack.c.l.b16 %v6814
    %v7078 = vunpack.c.l.b16 %v6815
    %v7079 = vunpack.c.l.b16 %v6816
    %v7080 = vunpack.c.l.b16 %v6817
    %v7081 = vunpack.c.l.b16 %v6818
    %v7082 = vunpack.c.l.b16 %v6819
    %v7083 = vunpack.c.l.b16 %v6820
    %v7084 = vunpack.c.l.b16 %v6821
    %v7085 = vunpack.c.l.b16 %v6822
    %v7086 = vunpack.c.l.b16 %v6823
    %v7087 = vunpack.c.l.b16 %v6824
    %v7088 = vunpack.c.l.b16 %v6825
    %v7089 = vunpack.c.l.b16 %v6826
    %v7090 = vunpack.c.l.b16 %v6827
    %v7091 = vunpack.c.l.b16 %v6828
    %v7092 = vunpack.c.l.b16 %v6829
    %v7093 = vunpack.c.l.b16 %v6830
    %v7094 = vunpack.c.l.b16 %v6831
    %v7095 = vunpack.c.l.b16 %v6832
    %v7096 = vunpack.c.l.b16 %v6833
    %v7097 = vunpack.c.l.b16 %v6834
    %v7098 = vunpack.c.l.b16 %v6835
    %v7099 = vunpack.c.l.b16 %v6836
    %v7100 = vunpack.c.l.b16 %v6837
    %v7101 = vunpack.c.l.b16 %v6838
    %v7102 = vunpack.c.l.b16 %v6839
    %v7103 = vunpack.c.l.b16 %v6840
    %v7104 = vunpack.c.l.b16 %v6841
    %v7105 = vunpack.c.l.b16 %v6842
    %v7106 = vunpack.c.l.b16 %v6843
    %v7107 = vunpack.c.l.b16 %v6844
    %v7108 = vunpack.c.l.b16 %v6845
    %v7109 = vunpack.c.l.b16 %v6846
    %v7110 = vunpack.c.l.b16 %v6847
    %v7111 = vunpack.c.l.b16 %v6848
    %v7112 = vunpack.c.l.b16 %v6849
    %v7113 = vunpack.c.l.b16 %v6850
    %v7114 = vunpack.c.l.b16 %v6851
    %v7115 = vunpack.c.l.b16 %v6852
    %v7116 = vunpack.c.l.b16 %v6853
    %v7117 = vunpack.c.l.b16 %v6854
    %v7118 = vunpack.c.l.b16 %v6855
    %v7119 = vunpack.c.l.b16 %v6856
    %v7120 = vunpack.c.l.b16 %v6857
    %v7121 = vunpack.c.l.b16 %v6858
    %v7122 = vunpack.c.l.b16 %v6859
    %v7123 = vunpack.c.l.b16 %v6860
    %v7124 = vunpack.c.l.b16 %v6861
    %v7125 = vunpack.c.l.b16 %v6862
    %v7126 = vunpack.c.l.b16 %v6863
    %v7127 = vunpack.c.l.b16 %v6864
    %v7128 = vunpack.c.l.b16 %v6865
    %v7129 = vunpack.c.l.b16 %v6866
    %v7130 = vunpack.c.l.b16 %v6867
    %v7131 = vunpack.c.l.b16 %v6868
    %v7132 = vunpack.c.l.b16 %v6869
    %v7133 = vunpack.c.l.b16 %v6870
    %v7134 = vunpack.c.l.b16 %v6871
    %v7135 = vunpack.c.l.b16 %v6872
    %v7136 = vunpack.c.l.b16 %v6873
    %v7137 = vunpack.c.l.b16 %v6874
    %v7138 = vunpack.c.l.b16 %v6875
    %v7139 = vunpack.c.l.b16 %v6876
    %v7140 = vunpack.c.l.b16 %v6877
    %v7141 = vunpack.c.l.b16 %v6878
    %v7142 = vunpack.c.l.b16 %v6879
    %v7143 = vunpack.c.l.b16 %v6880
    %v7144 = vunpack.c.l.b16 %v6881
    %v7145 = vunpack.c.l.b16 %v6882
    %v7146 = vunpack.c.l.b16 %v6883
    %v7147 = vunpack.c.l.b16 %v6884
    %v7148 = vunpack.c.l.b16 %v6885
    %v7149 = vunpack.c.l.b16 %v6886
    %v7150 = vunpack.c.l.b16 %v6887
    %v7151 = vunpack.c.l.b16 %v6888
    %v7152 = vunpack.c.l.b16 %v6889
    %v7153 = vunpack.c.l.b16 %v6890
    %v7154 = vunpack.c.l.b16 %v6891
    %v7155 = vunpack.c.l.b16 %v6892
    %v7156 = vunpack.c.l.b16 %v6893
    %v7157 = vunpack.c.l.b16 %v6894
    %v7158 = vunpack.c.l.b16 %v6895
    %v7159 = vunpack.c.l.b16 %v6896
    %v7160 = vunpack.c.l.b16 %v6897
    %v7161 = vunpack.c.l.b16 %v6898
    %v7162 = vunpack.c.l.b16 %v6899
    %v7163 = vunpack.c.l.b16 %v6900
    %v7164 = vunpack.c.l.b16 %v6901
    %v7165 = vunpack.c.l.b16 %v6902
    %v7166 = vunpack.c.l.b16 %v6903
    %v7167 = vunpack.c.l.b16 %v6904
    %v7168 = vunpack.c.l.b16 %v6905
    %v7169 = vunpack.c.l.b16 %v6906
    %v7170 = vunpack.c.l.b16 %v6907
    %v7171 = vunpack.c.l.b16 %v6908
    %v7172 = vunpack.c.l.b16 %v6909
    %v7173 = vunpack.c.l.b16 %v6910
    %v7174 = vunpack.c.l.b16 %v6911
    %v7175 = vunpack.c.l.b16 %v6912
    %v7176 = vpack.c.b16 %v7049, %v7048
    %v7177 = vpack.c.b16 %v7051, %v7050
    %v7178 = vpack.c.b16 %v7053, %v7052
    %v7179 = vpack.c.b16 %v7055, %v7054
    %v7180 = vpack.c.b16 %v7057, %v7056
    %v7181 = vpack.c.b16 %v7059, %v7058
    %v7182 = vpack.c.b16 %v7061, %v7060
    %v7183 = vpack.c.b16 %v7063, %v7062
    %v7184 = vpack.c.b16 %v7065, %v7064
    %v7185 = vpack.c.b16 %v7067, %v7066
    %v7186 = vpack.c.b16 %v7069, %v7068
    %v7187 = vpack.c.b16 %v7071, %v7070
    %v7188 = vpack.c.b16 %v7073, %v7072
    %v7189 = vpack.c.b16 %v7075, %v7074
    %v7190 = vpack.c.b16 %v7077, %v7076
    %v7191 = vpack.c.b16 %v7079, %v7078
    %v7192 = vpack.c.b16 %v7081, %v7080
    %v7193 = vpack.c.b16 %v7083, %v7082
    %v7194 = vpack.c.b16 %v7085, %v7084
    %v7195 = vpack.c.b16 %v7087, %v7086
    %v7196 = vpack.c.b16 %v7089, %v7088
    %v7197 = vpack.c.b16 %v7091, %v7090
    %v7198 = vpack.c.b16 %v7093, %v7092
    %v7199 = vpack.c.b16 %v7095, %v7094
    %v7200 = vpack.c.b16 %v7097, %v7096
    %v7201 = vpack.c.b16 %v7099, %v7098
    %v7202 = vpack.c.b16 %v7101, %v7100
    %v7203 = vpack.c.b16 %v7103, %v7102
    %v7204 = vpack.c.b16 %v7105, %v7104
    %v7205 = vpack.c.b16 %v7107, %v7106
    %v7206 = vpack.c.b16 %v7109, %v7108
    %v7207 = vpack.c.b16 %v7111, %v7110
    %v7208 = vpack.c.b16 %v7113, %v7112
    %v7209 = vpack.c.b16 %v7115, %v7114
    %v7210 = vpack.c.b16 %v7117, %v7116
    %v7211 = vpack.c.b16 %v7119, %v7118
    %v7212 = vpack.c.b16 %v7121, %v7120
    %v7213 = vpack.c.b16 %v7123, %v7122
    %v7214 = vpack.c.b16 %v7125, %v7124
    %v7215 = vpack.c.b16 %v7127, %v7126
    %v7216 = vpack.c.b16 %v7129, %v7128
    %v7217 = vpack.c.b16 %v7131, %v7130
    %v7218 = vpack.c.b16 %v7133, %v7132
    %v7219 = vpack.c.b16 %v7135, %v7134
    %v7220 = vpack.c.b16 %v7137, %v7136
    %v7221 = vpack.c.b16 %v7139, %v7138
    %v7222 = vpack.c.b16 %v7141, %v7140
    %v7223 = vpack.c.b16 %v7143, %v7142
    %v7224 = vpack.c.b16 %v7145, %v7144
    %v7225 = vpack.c.b16 %v7147, %v7146
    %v7226 = vpack.c.b16 %v7149, %v7148
    %v7227 = vpack.c.b16 %v7151, %v7150
    %v7228 = vpack.c.b16 %v7153, %v7152
    %v7229 = vpack.c.b16 %v7155, %v7154
    %v7230 = vpack.c.b16 %v7157, %v7156
    %v7231 = vpack.c.b16 %v7159, %v7158
    %v7232 = vpack.c.b16 %v7161, %v7160
    %v7233 = vpack.c.b16 %v7163, %v7162
    %v7234 = vpack.c.b16 %v7165, %v7164
    %v7235 = vpack.c.b16 %v7167, %v7166
    %v7236 = vpack.c.b16 %v7169, %v7168
    %v7237 = vpack.c.b16 %v7171, %v7170
    %v7238 = vpack.c.b16 %v7173, %v7172
    %v7239 = vpack.c.b16 %v7175, %v7174
    %7304 = vmatprep.subr.bf16.mxu0 0
    %7305 = vmatpush1.bf16.msra.mxu0 %v7183
    %7306 = vmatprep.subr.bf16.mxu0 0
    %7307 = vmatpush1.bf16.msra.mxu0 %v7182
    %7308 = vmatprep.subr.bf16.mxu0 0
    %7309 = vmatpush1.bf16.msra.mxu0 %v7181
    %7310 = vmatprep.subr.bf16.mxu0 0
    %7311 = vmatpush1.bf16.msra.mxu0 %v7180
    %7312 = vmatprep.subr.bf16.mxu0 0
    %7313 = vmatpush1.bf16.msra.mxu0 %v7179
    %7314 = vmatprep.subr.bf16.mxu0 0
    %7315 = vmatpush1.bf16.msra.mxu0 %v7178
    %7316 = vmatprep.subr.bf16.mxu0 0
    %7317 = vmatpush1.bf16.msra.mxu0 %v7177
    %7318 = vmatprep.subr.bf16.mxu0 0
    %7319 = vmatpush1.bf16.msra.mxu0 %v7176
    %7320 = vmatprep.subr.bf16.mxu0 0
    %7321 = vmatpush2.bf16.msra.mxu0 %v7191
    %7322 = vmatprep.subr.bf16.mxu0 0
    %7323 = vmatpush2.bf16.msra.mxu0 %v7190
    %7324 = vmatprep.subr.bf16.mxu0 0
    %7325 = vmatpush2.bf16.msra.mxu0 %v7189
    %7326 = vmatprep.subr.bf16.mxu0 0
    %7327 = vmatpush2.bf16.msra.mxu0 %v7188
    %7328 = vmatprep.subr.bf16.mxu0 0
    %7329 = vmatpush2.bf16.msra.mxu0 %v7187
    %7330 = vmatprep.subr.bf16.mxu0 0
    %7331 = vmatpush2.bf16.msra.mxu0 %v7186
    %7332 = vmatprep.subr.bf16.mxu0 0
    %7333 = vmatpush2.bf16.msra.mxu0 %v7185
    %7334 = vmatprep.subr.bf16.mxu0 0
    %7335 = vmatpush2.bf16.msra.mxu0 %v7184
    %7336 = vmatprep.mubr.bf16.mxu0 %v6778
    %7337 = vmatmul.mubr.bf16.gmra.mxu0 %v6777
    %v7338 = vpop.f32.mrf.mxu0
    %v7339 = vadd.f32 %v6918, %v7338
    %v7340 = vpop.f32.mrf.mxu0
    %v7341 = vpop.f32.mrf.mxu0
    %v7342 = vpop.f32.mrf.mxu0
    %7343 = vdwg.mxu0
    %7344 = vmatprep.subr.bf16.mxu0 0
    %7345 = vmatpush1.bf16.msra.mxu0 %v7199
    %7346 = vmatprep.subr.bf16.mxu0 0
    %7347 = vmatpush1.bf16.msra.mxu0 %v7198
    %7348 = vmatprep.subr.bf16.mxu0 0
    %7349 = vmatpush1.bf16.msra.mxu0 %v7197
    %7350 = vmatprep.subr.bf16.mxu0 0
    %7351 = vmatpush1.bf16.msra.mxu0 %v7196
    %7352 = vmatprep.subr.bf16.mxu0 0
    %7353 = vmatpush1.bf16.msra.mxu0 %v7195
    %7354 = vmatprep.subr.bf16.mxu0 0
    %7355 = vmatpush1.bf16.msra.mxu0 %v7194
    %7356 = vmatprep.subr.bf16.mxu0 0
    %7357 = vmatpush1.bf16.msra.mxu0 %v7193
    %7358 = vmatprep.subr.bf16.mxu0 0
    %7359 = vmatpush1.bf16.msra.mxu0 %v7192
    %7360 = vmatprep.subr.bf16.mxu0 0
    %7361 = vmatpush2.bf16.msra.mxu0 %v7207
    %7362 = vmatprep.subr.bf16.mxu0 0
    %7363 = vmatpush2.bf16.msra.mxu0 %v7206
    %7364 = vmatprep.subr.bf16.mxu0 0
    %7365 = vmatpush2.bf16.msra.mxu0 %v7205
    %7366 = vmatprep.subr.bf16.mxu0 0
    %7367 = vmatpush2.bf16.msra.mxu0 %v7204
    %7368 = vmatprep.subr.bf16.mxu0 0
    %7369 = vmatpush2.bf16.msra.mxu0 %v7203
    %7370 = vmatprep.subr.bf16.mxu0 0
    %7371 = vmatpush2.bf16.msra.mxu0 %v7202
    %7372 = vmatprep.subr.bf16.mxu0 0
    %7373 = vmatpush2.bf16.msra.mxu0 %v7201
    %7374 = vmatprep.subr.bf16.mxu0 0
    %7375 = vmatpush2.bf16.msra.mxu0 %v7200
    %7376 = vmatprep.mubr.bf16.mxu0 %v6780
    %7377 = vmatmul.mubr.bf16.gmra.mxu0 %v6779
    %v7378 = vpop.f32.mrf.mxu0
    %v7379 = vadd.f32 %v7339, %v7378
    %v7380 = vpop.f32.mrf.mxu0
    %v7381 = vpop.f32.mrf.mxu0
    %v7382 = vpop.f32.mrf.mxu0
    %7383 = vdwg.mxu0
    %7384 = vmatprep.subr.bf16.mxu0 0
    %7385 = vmatpush1.bf16.msra.mxu0 %v7215
    %7386 = vmatprep.subr.bf16.mxu0 0
    %7387 = vmatpush1.bf16.msra.mxu0 %v7214
    %7388 = vmatprep.subr.bf16.mxu0 0
    %7389 = vmatpush1.bf16.msra.mxu0 %v7213
    %7390 = vmatprep.subr.bf16.mxu0 0
    %7391 = vmatpush1.bf16.msra.mxu0 %v7212
    %7392 = vmatprep.subr.bf16.mxu0 0
    %7393 = vmatpush1.bf16.msra.mxu0 %v7211
    %7394 = vmatprep.subr.bf16.mxu0 0
    %7395 = vmatpush1.bf16.msra.mxu0 %v7210
    %7396 = vmatprep.subr.bf16.mxu0 0
    %7397 = vmatpush1.bf16.msra.mxu0 %v7209
    %7398 = vmatprep.subr.bf16.mxu0 0
    %7399 = vmatpush1.bf16.msra.mxu0 %v7208
    %7400 = vmatprep.subr.bf16.mxu0 0
    %7401 = vmatpush2.bf16.msra.mxu0 %v7223
    %7402 = vmatprep.subr.bf16.mxu0 0
    %7403 = vmatpush2.bf16.msra.mxu0 %v7222
    %7404 = vmatprep.subr.bf16.mxu0 0
    %7405 = vmatpush2.bf16.msra.mxu0 %v7221
    %7406 = vmatprep.subr.bf16.mxu0 0
    %7407 = vmatpush2.bf16.msra.mxu0 %v7220
    %7408 = vmatprep.subr.bf16.mxu0 0
    %7409 = vmatpush2.bf16.msra.mxu0 %v7219
    %7410 = vmatprep.subr.bf16.mxu0 0
    %7411 = vmatpush2.bf16.msra.mxu0 %v7218
    %7412 = vmatprep.subr.bf16.mxu0 0
    %7413 = vmatpush2.bf16.msra.mxu0 %v7217
    %7414 = vmatprep.subr.bf16.mxu0 0
    %7415 = vmatpush2.bf16.msra.mxu0 %v7216
    %7416 = vmatprep.mubr.bf16.mxu0 %v6782
    %7417 = vmatmul.mubr.bf16.gmra.mxu0 %v6781
    %v7418 = vpop.f32.mrf.mxu0
    %v7419 = vadd.f32 %v7379, %v7418
    %v7420 = vpop.f32.mrf.mxu0
    %v7421 = vpop.f32.mrf.mxu0
    %v7422 = vpop.f32.mrf.mxu0
    %7423 = vdwg.mxu0
    %7424 = vmatprep.subr.bf16.mxu0 0
    %7425 = vmatpush1.bf16.msra.mxu0 %v7231
    %7426 = vmatprep.subr.bf16.mxu0 0
    %7427 = vmatpush1.bf16.msra.mxu0 %v7230
    %7428 = vmatprep.subr.bf16.mxu0 0
    %7429 = vmatpush1.bf16.msra.mxu0 %v7229
    %7430 = vmatprep.subr.bf16.mxu0 0
    %7431 = vmatpush1.bf16.msra.mxu0 %v7228
    %7432 = vmatprep.subr.bf16.mxu0 0
    %7433 = vmatpush1.bf16.msra.mxu0 %v7227
    %7434 = vmatprep.subr.bf16.mxu0 0
    %7435 = vmatpush1.bf16.msra.mxu0 %v7226
    %7436 = vmatprep.subr.bf16.mxu0 0
    %7437 = vmatpush1.bf16.msra.mxu0 %v7225
    %7438 = vmatprep.subr.bf16.mxu0 0
    %7439 = vmatpush1.bf16.msra.mxu0 %v7224
    %7440 = vmatprep.subr.bf16.mxu0 0
    %7441 = vmatpush2.bf16.msra.mxu0 %v7239
    %7442 = vmatprep.subr.bf16.mxu0 0
    %7443 = vmatpush2.bf16.msra.mxu0 %v7238
    %7444 = vmatprep.subr.bf16.mxu0 0
    %7445 = vmatpush2.bf16.msra.mxu0 %v7237
    %7446 = vmatprep.subr.bf16.mxu0 0
    %7447 = vmatpush2.bf16.msra.mxu0 %v7236
    %7448 = vmatprep.subr.bf16.mxu0 0
    %7449 = vmatpush2.bf16.msra.mxu0 %v7235
    %7450 = vmatprep.subr.bf16.mxu0 0
    %7451 = vmatpush2.bf16.msra.mxu0 %v7234
    %7452 = vmatprep.subr.bf16.mxu0 0
    %7453 = vmatpush2.bf16.msra.mxu0 %v7233
    %7454 = vmatprep.subr.bf16.mxu0 0
    %7455 = vmatpush2.bf16.msra.mxu0 %v7232
    %7456 = vmatprep.mubr.bf16.mxu0 %v6784
    %7457 = vmatmul.mubr.bf16.gmra.mxu0 %v6783
    %v7458 = vpop.f32.mrf.mxu0
    %v7459 = vadd.f32 %v7419, %v7458
    %v7460 = vpop.f32.mrf.mxu0
    %v7461 = vpop.f32.mrf.mxu0
    %v7462 = vpop.f32.mrf.mxu0
    %7463 = vdwg.mxu0
    %v7464 = vmax.f32 %v7459, 0.0
    %v7465 = vpack.c.bf16 %v7464, %v7464
    %v7466 = vld [vmem:[%s12] sm:$0xf]
    %v7467 = vld [vmem:[%s12 + $0x4] sm:$0xf]
    %v7468 = vld [vmem:[%s12 + $0x8] sm:$0xf]
    %v7469 = vld [vmem:[%s12 + $0xc] sm:$0xf]
    %v7470 = vld [vmem:[%s12 + $0x10] sm:$0xf]
    %v7471 = vld [vmem:[%s12 + $0x14] sm:$0xf]
    %v7472 = vld [vmem:[%s12 + $0x18] sm:$0xf]
    %v7473 = vld [vmem:[%s12 + $0x1c] sm:$0xf]
    %v7474 = vld [vmem:[%s12 + $0x20] sm:$0xf]
    %v7475 = vld [vmem:[%s12 + $0x24] sm:$0xf]
    %v7476 = vld [vmem:[%s12 + $0x28] sm:$0xf]
    %v7477 = vld [vmem:[%s12 + $0x2c] sm:$0xf]
    %v7478 = vld [vmem:[%s12 + $0x30] sm:$0xf]
    %v7479 = vld [vmem:[%s12 + $0x34] sm:$0xf]
    %v7480 = vld [vmem:[%s12 + $0x38] sm:$0xf]
    %v7481 = vld [vmem:[%s12 + $0x3c] sm:$0xf]
    %v7482 = vld [vmem:[%s13] sm:$0x1]
    %v7484 = vlaneseq
    %v7485 = vshrl.u32 %v7484, 7
    %v7486 = vsub.s32 0, %v7485
    %v7487 = vrot.slane %v7482, %v7486
    %v7505 = vunpack.c.l.b16 %v7466
    %v7506 = vunpack.c.l.b16 %v7467
    %v7507 = vunpack.c.l.b16 %v7468
    %v7508 = vunpack.c.l.b16 %v7469
    %v7509 = vunpack.c.l.b16 %v7470
    %v7510 = vunpack.c.l.b16 %v7471
    %v7511 = vunpack.c.l.b16 %v7472
    %v7512 = vunpack.c.l.b16 %v7473
    %v7513 = vunpack.c.l.b16 %v7474
    %v7514 = vunpack.c.l.b16 %v7475
    %v7515 = vunpack.c.l.b16 %v7476
    %v7516 = vunpack.c.l.b16 %v7477
    %v7517 = vunpack.c.l.b16 %v7478
    %v7518 = vunpack.c.l.b16 %v7479
    %v7519 = vunpack.c.l.b16 %v7480
    %v7520 = vunpack.c.l.b16 %v7481
    %v7521 = vpack.c.b16 %v7506, %v7505
    %v7522 = vpack.c.b16 %v7508, %v7507
    %v7523 = vpack.c.b16 %v7510, %v7509
    %v7524 = vpack.c.b16 %v7512, %v7511
    %v7525 = vpack.c.b16 %v7514, %v7513
    %v7526 = vpack.c.b16 %v7516, %v7515
    %v7527 = vpack.c.b16 %v7518, %v7517
    %v7528 = vpack.c.b16 %v7520, %v7519
    %7537 = vmatprep.subr.bf16.mxu0 0
    %7538 = vmatpush1.bf16.msra.mxu0 %v7528
    %7539 = vmatprep.subr.bf16.mxu0 0
    %7540 = vmatpush1.bf16.msra.mxu0 %v7527
    %7541 = vmatprep.subr.bf16.mxu0 0
    %7542 = vmatpush1.bf16.msra.mxu0 %v7526
    %7543 = vmatprep.subr.bf16.mxu0 0
    %7544 = vmatpush1.bf16.msra.mxu0 %v7525
    %7545 = vmatprep.subr.bf16.mxu0 0
    %7546 = vmatpush1.bf16.msra.mxu0 %v7524
    %7547 = vmatprep.subr.bf16.mxu0 0
    %7548 = vmatpush1.bf16.msra.mxu0 %v7523
    %7549 = vmatprep.subr.bf16.mxu0 0
    %7550 = vmatpush1.bf16.msra.mxu0 %v7522
    %7551 = vmatprep.subr.bf16.mxu0 0
    %7552 = vmatpush1.bf16.msra.mxu0 %v7521
    %7553 = vmatprep.subr.bf16.mxu0 0
    %7554 = vmatpush2.bf16.msra.mxu0 0
    %7555 = vmatprep.subr.bf16.mxu0 0
    %7556 = vmatpush2.bf16.msra.mxu0 0
    %7557 = vmatprep.subr.bf16.mxu0 0
    %7558 = vmatpush2.bf16.msra.mxu0 0
    %7559 = vmatprep.subr.bf16.mxu0 0
    %7560 = vmatpush2.bf16.msra.mxu0 0
    %7561 = vmatprep.subr.bf16.mxu0 0
    %7562 = vmatpush2.bf16.msra.mxu0 0
    %7563 = vmatprep.subr.bf16.mxu0 0
    %7564 = vmatpush2.bf16.msra.mxu0 0
    %7565 = vmatprep.subr.bf16.mxu0 0
    %7566 = vmatpush2.bf16.msra.mxu0 0
    %7567 = vmatprep.subr.bf16.mxu0 0
    %7568 = vmatpush2.bf16.msra.mxu0 0
    %7569 = vmatprep.mubr.bf16.mxu0 0
    %7570 = vmatmul.mubr.bf16.gmra.mxu0 %v7465
    %v7571 = vpop.f32.mrf.mxu0
    %v7572 = vadd.f32 %v7487, %v7571
    %v7573 = vpop.f32.mrf.mxu0
    %v7574 = vpop.f32.mrf.mxu0
    %v7575 = vpop.f32.mrf.mxu0
    %7576 = vdwg.mxu0
    %v7577 = vmax.f32 %v7572, 0.0
    %7578 = vst [vmem:[%s18] sm:$0x3f] %v7577
    %vm7579 = vcmask 1042432
    %v7580 = vsel %vm7579, %v7577, -inf
    %v7581 = vrot.slane %v7580, 4
    %v7582 = vmax.f32 %v7580, %v7581
    %v7583 = vrot.slane %v7582, 2
    %v7584 = vmax.f32 %v7582, %v7583
    %v7585 = vrot.slane %v7584, 1
    %v7586 = vmax.f32 %v7584, %v7585
    %vm7587 = vcmask 1045507
    %v7588 = vsel %vm7587, %v7577, -inf
    %v7589 = vrot.slane %v7588, 4
    %v7590 = vmax.f32 %v7588, %v7589
    %v7591 = vrot.slane %v7590, 2
    %v7592 = vmax.f32 %v7590, %v7591
    %v7593 = vrot.slane %v7592, 1
    %v7594 = vmax.f32 %v7592, %v7593
    %v7595 = vsel %vm2041, %v7586, %v7594
    %7596 = vst [vmem:[#allocation4] sm:$0x3] %v7595
    %v7597 = vpack.c.bf16 %v7595, %v7595
    %v7598 = vld [vmem:[%s14] sm:$0xf]
    %v7599 = vld [vmem:[%s14 + $0x4] sm:$0xf]
    %v7600 = vld [vmem:[%s14 + $0x8] sm:$0xf]
    %v7601 = vld [vmem:[%s14 + $0xc] sm:$0xf]
    %v7602 = vld [vmem:[%s14 + $0x10] sm:$0xf]
    %v7603 = vld [vmem:[%s14 + $0x14] sm:$0xf]
    %v7604 = vld [vmem:[%s14 + $0x18] sm:$0xf]
    %v7605 = vld [vmem:[%s14 + $0x1c] sm:$0xf]
    %v7606 = vld [vmem:[%s14 + $0x20] sm:$0xf]
    %v7607 = vld [vmem:[%s14 + $0x24] sm:$0xf]
    %v7608 = vld [vmem:[%s14 + $0x28] sm:$0xf]
    %v7609 = vld [vmem:[%s14 + $0x2c] sm:$0xf]
    %v7610 = vld [vmem:[%s14 + $0x30] sm:$0xf]
    %v7611 = vld [vmem:[%s14 + $0x34] sm:$0xf]
    %v7612 = vld [vmem:[%s14 + $0x38] sm:$0xf]
    %v7613 = vld [vmem:[%s14 + $0x3c] sm:$0xf]
    %v7614 = vld [vmem:[%s15] sm:$0x1]
    %v7616 = vlaneseq
    %v7617 = vshrl.u32 %v7616, 7
    %v7618 = vsub.s32 0, %v7617
    %v7619 = vrot.slane %v7614, %v7618
    %v7637 = vunpack.c.l.b16 %v7598
    %v7638 = vunpack.c.l.b16 %v7599
    %v7639 = vunpack.c.l.b16 %v7600
    %v7640 = vunpack.c.l.b16 %v7601
    %v7641 = vunpack.c.l.b16 %v7602
    %v7642 = vunpack.c.l.b16 %v7603
    %v7643 = vunpack.c.l.b16 %v7604
    %v7644 = vunpack.c.l.b16 %v7605
    %v7645 = vunpack.c.l.b16 %v7606
    %v7646 = vunpack.c.l.b16 %v7607
    %v7647 = vunpack.c.l.b16 %v7608
    %v7648 = vunpack.c.l.b16 %v7609
    %v7649 = vunpack.c.l.b16 %v7610
    %v7650 = vunpack.c.l.b16 %v7611
    %v7651 = vunpack.c.l.b16 %v7612
    %v7652 = vunpack.c.l.b16 %v7613
    %v7653 = vpack.c.b16 %v7638, %v7637
    %v7654 = vpack.c.b16 %v7640, %v7639
    %v7655 = vpack.c.b16 %v7642, %v7641
    %v7656 = vpack.c.b16 %v7644, %v7643
    %v7657 = vpack.c.b16 %v7646, %v7645
    %v7658 = vpack.c.b16 %v7648, %v7647
    %v7659 = vpack.c.b16 %v7650, %v7649
    %v7660 = vpack.c.b16 %v7652, %v7651
    %7669 = vmatprep.subr.bf16.mxu0 0
    %7670 = vmatpush1.bf16.msra.mxu0 %v7660
    %7671 = vmatprep.subr.bf16.mxu0 0
    %7672 = vmatpush1.bf16.msra.mxu0 %v7659
    %7673 = vmatprep.subr.bf16.mxu0 0
    %7674 = vmatpush1.bf16.msra.mxu0 %v7658
    %7675 = vmatprep.subr.bf16.mxu0 0
    %7676 = vmatpush1.bf16.msra.mxu0 %v7657
    %7677 = vmatprep.subr.bf16.mxu0 0
    %7678 = vmatpush1.bf16.msra.mxu0 %v7656
    %7679 = vmatprep.subr.bf16.mxu0 0
    %7680 = vmatpush1.bf16.msra.mxu0 %v7655
    %7681 = vmatprep.subr.bf16.mxu0 0
    %7682 = vmatpush1.bf16.msra.mxu0 %v7654
    %7683 = vmatprep.subr.bf16.mxu0 0
    %7684 = vmatpush1.bf16.msra.mxu0 %v7653
    %7685 = vmatprep.subr.bf16.mxu0 0
    %7686 = vmatpush2.bf16.msra.mxu0 0
    %7687 = vmatprep.subr.bf16.mxu0 0
    %7688 = vmatpush2.bf16.msra.mxu0 0
    %7689 = vmatprep.subr.bf16.mxu0 0
    %7690 = vmatpush2.bf16.msra.mxu0 0
    %7691 = vmatprep.subr.bf16.mxu0 0
    %7692 = vmatpush2.bf16.msra.mxu0 0
    %7693 = vmatprep.subr.bf16.mxu0 0
    %7694 = vmatpush2.bf16.msra.mxu0 0
    %7695 = vmatprep.subr.bf16.mxu0 0
    %7696 = vmatpush2.bf16.msra.mxu0 0
    %7697 = vmatprep.subr.bf16.mxu0 0
    %7698 = vmatpush2.bf16.msra.mxu0 0
    %7699 = vmatprep.subr.bf16.mxu0 0
    %7700 = vmatpush2.bf16.msra.mxu0 0
    %7701 = vmatprep.mubr.bf16.mxu0 0
    %7702 = vmatmul.mubr.bf16.gmra.mxu0 %v7597
    %v7703 = vpop.f32.mrf.mxu0
    %v7704 = vadd.f32 %v7619, %v7703
    %v7705 = vpop.f32.mrf.mxu0
    %v7706 = vpop.f32.mrf.mxu0
    %v7707 = vpop.f32.mrf.mxu0
    %7708 = vdwg.mxu0
    %7709 = vst [vmem:[#allocation2] sm:$0x3] %v7704
    // Predicated region
    $region66: #{mvcnn_forward.1} parent=1 // pred_check
      _
    $region67: #{mvcnn_forward.1} parent=1 // pred_check_branch
      %7711 = sbr.rel (0) target = $region69
    $region68: #{mvcnn_forward.1} parent=1 // pred_region
      %s7713 = ssub.s32 32, 32
      %7714 = vsyncadd [#allocation3], %s7713
      %s7716 = sshll.u32 [#allocation2], 4
      %s7717 = int_to_ptr.vmem [resolvable:$true] %s7716
      %7719 = dma.vmem_to_hbm [thread:$0]  %s7717, 32, %s16, [#allocation3]
    $region69: #{mvcnn_forward.1} parent=1 // pred_fallthru
      _
    // Predicated region
    $region70: #{mvcnn_forward.1} parent=1 // pred_check
      _
    $region71: #{mvcnn_forward.1} parent=1 // pred_check_branch
      %7721 = sbr.rel (0) target = $region73
    $region72: #{mvcnn_forward.1} parent=1 // pred_region
      %s7723 = ssub.s32 32, 32
      %7724 = vsyncadd [#allocation5], %s7723
      %s7726 = sshll.u32 [#allocation4], 4
      %s7727 = int_to_ptr.vmem [resolvable:$true] %s7726
      %7729 = dma.vmem_to_hbm [thread:$0]  %s7727, 32, %s17, [#allocation5]
    $region73: #{mvcnn_forward.1} parent=1 // pred_fallthru
      _
    // Predicated region
    $region74: #{mvcnn_forward.1} parent=1 // pred_check
      _
    $region75: #{mvcnn_forward.1} parent=1 // pred_check_branch
      %7731 = sbr.rel (0) target = $region77
    $region76: #{mvcnn_forward.1} parent=1 // pred_region
      _
    $region77: #{mvcnn_forward.1} parent=1 // pred_fallthru
      _
    // Predicated region
    $region78: #{mvcnn_forward.1} parent=1 // pred_check
      _
    $region79: #{mvcnn_forward.1} parent=1 // pred_check_branch
      %7733 = sbr.rel (0) target = $region81
    $region80: #{mvcnn_forward.1} parent=1 // pred_region
      %7734 = dma.done [#allocation3], 32
    $region81: #{mvcnn_forward.1} parent=1 // pred_fallthru
      _
    // Predicated region
    $region82: #{mvcnn_forward.1} parent=1 // pred_check
      _
    $region83: #{mvcnn_forward.1} parent=1 // pred_check_branch
      %7736 = sbr.rel (0) target = $region85
    $region84: #{mvcnn_forward.1} parent=1 // pred_region
      %7737 = dma.done [#allocation5], 32
    $region85: #{mvcnn_forward.1} parent=1 // pred_fallthru
      _
    // Predicated region
    $region86: #{mvcnn_forward.1} parent=1 // pred_check
      _
    $region87: #{mvcnn_forward.1} parent=1 // pred_check_branch
      %7739 = sbr.rel (0) target = $region89
    $region88: #{mvcnn_forward.1} parent=1 // pred_region
      _
    $region89: #{mvcnn_forward.1} parent=1 // pred_fallthru
      _
    %7740 = vsyncpa [#allocation3], 1
    %7741 = vsyncpa [#allocation5], 1

</llo_original>
